<compile_context>
chip_gen: v7x
topology: tpu7x:2x2x1
jax: 0.10.0
libtpu: 0.0.40
codegen_flags: <defaults>
</compile_context>

<pallas_src>
import numpy as np

import jax
import jax.numpy as jnp
from jax.experimental import pallas as pl
from jax.experimental.pallas import tpu as pltpu

_EPS = 1e-5


# ---------------------------------------------------------------------------
# Host-side precomputed spatial helpers (numpy)
# ---------------------------------------------------------------------------
def _upsample_matrix(n_in, n_out):
    """1-D linear interpolation matrix (n_out, n_in), align_corners=True."""
    m = np.zeros((n_out, n_in), np.float32)
    if n_out == 1 or n_in == 1:
        m[:, 0] = 1.0
        return m
    scale = (n_in - 1) / (n_out - 1)
    for o in range(n_out):
        src = o * scale
        i0 = min(int(np.floor(src)), n_in - 1)
        frac = src - i0
        i1 = min(i0 + 1, n_in - 1)
        m[o, i0] += 1.0 - frac
        m[o, i1] += frac
    return m


def _shift_matrices_T(h, w, kh, kw):
    """S_tap^T (kh*kw, HW, HW): (X @ S_tap^T)[c, p] = X[c, p shifted] (zero pad)."""
    ph, pw = (kh - 1) // 2, (kw - 1) // 2
    hw = h * w
    mats = np.zeros((kh * kw, hw, hw), np.float32)
    for a in range(kh):
        for b in range(kw):
            dy, dx = a - ph, b - pw
            t = a * kw + b
            for yy in range(h):
                sy = yy + dy
                if sy < 0 or sy >= h:
                    continue
                for xx in range(w):
                    sx = xx + dx
                    if sx < 0 or sx >= w:
                        continue
                    mats[t, sy * w + sx, yy * w + xx] = 1.0
    return mats


def _tap_masks(h, w, kh, kw):
    """(kh*kw, h*w) 0/1 masks: 1 where the tap's source pixel is inside the image."""
    ph, pw = (kh - 1) // 2, (kw - 1) // 2
    m = np.zeros((kh * kw, h * w), np.float32)
    for a in range(kh):
        for b in range(kw):
            dy, dx = a - ph, b - pw
            t = a * kw + b
            for yy in range(h):
                if not (0 <= yy + dy < h):
                    continue
                for xx in range(w):
                    if 0 <= xx + dx < w:
                        m[t, yy * w + xx] = 1.0
    return m


def _tap_offsets(w, k):
    p = (k - 1) // 2
    return [(a - p) * w + (b - p) for a in range(k) for b in range(k)]


# ---------------------------------------------------------------------------
# Pallas kernel factory (entire Focus1 forward; one grid step = block_b samples)
# ---------------------------------------------------------------------------
def _make_kernel(H, W, c1, c2, bt):
    L = bt * H * W
    Lh = bt * (H // 2) * (W // 2)
    f32, bf16 = jnp.float32, jnp.bfloat16
    d3 = _tap_offsets(W, 3)
    d7f = _tap_offsets(W, 7)
    n_ph = 18 * c1            # 9 taps x 2*c1 channels of h products

    def roll_sum(prod, offs, masks, cout, lanes):
        """sum_t mask_t * roll(prod[t*cout:(t+1)*cout], -d_t)  (lane rotate + VPU)."""
        acc = jnp.zeros((cout, lanes), f32)
        for t, d in enumerate(offs):
            piece = prod[t * cout:(t + 1) * cout, :]
            if d != 0:
                piece = pltpu.roll(piece, (-d) % lanes, 1) * masks[t:t + 1, :]
            acc = acc + piece
        return acc

    def kernel(x_ref, y_ref, im_ref, h_ref,
               mup_ref, s7t_ref, m3_ref, m7f_ref,
               wup_ref, wsm_ref, wh_ref, wout_ref, aff_ref,
               ref2_ref, omap_ref,
               pre_sc, yexp_sc):
        x = x_ref[0]                      # (c1, L)   f32
        im = im_ref[0]                    # (1, Lh)   f32
        aff = aff_ref[...]                # (c1, 16)  folded affines
        m3 = m3_ref[...]                  # (9, L)
        m7f = m7f_ref[...]                # (49, L)
        mup = mup_ref[...]                # (Lh, L)   bf16

        def col(k):
            return aff[:, k:k + 1]        # (c1, 1)

        def conv3(act, widx):
            prod = jnp.dot(wsm_ref[widx], act.astype(bf16),
                           preferred_element_type=f32)       # (9*c1, L)
            return roll_sum(prod, d3, m3, c1, L)

        # --- up = ReLU(BN(Conv7x7(y))) at half resolution (expand cin=c2) ----
        y_b = y_ref[0].astype(bf16)                          # (c2, Lh)
        for t in range(49):
            yexp_sc[t * c2:(t + 1) * c2, :] = jnp.dot(
                y_b, s7t_ref[t], preferred_element_type=f32)
        up_h = jnp.dot(wup_ref[...], yexp_sc[...].astype(bf16),
                       preferred_element_type=f32)           # (c1, Lh)
        up_h = jnp.maximum(up_h * col(0) + col(1), 0.0)

        # --- 512-channel halves of conv3_3_1/2 contracted ONCE at half res ---
        ph = jnp.dot(wh_ref[...], h_ref[0],
                     preferred_element_type=f32)             # (18*c1, Lh)

        # --- ONE bilinear-x2 matmul for [h products ; up ; in_map] -----------
        pre_sc[0:n_ph, :] = ph
        pre_sc[n_ph:n_ph + c1, :] = up_h
        pre_sc[n_ph + c1:n_ph + c1 + 1, :] = im
        ups = jnp.dot(pre_sc[...].astype(bf16), mup,
                      preferred_element_type=f32)            # (19*c1 + 1, L)
        up = ups[n_ph:n_ph + c1]
        im_up = ups[n_ph + c1:n_ph + c1 + 1]

        # --- feature fusion ---------------------------------------------------
        f0 = x + up
        b0 = x * jax.nn.sigmoid(im_up)

        # --- octave conv (approx) + residual + ConvBNR 3x3 (c333 / c334) ------
        oc1 = conv3(f0, 0)
        oc2 = conv3(b0, 1)
        f1 = jnp.maximum(conv3(oc1 + f0, 2) * col(2) + col(3), 0.0)
        b1 = jnp.maximum(conv3(oc2 + b0, 3) * col(4) + col(5), 0.0)

        # --- 3x3 of the upsampled h: rolls on the already-upsampled products --
        acc_h = roll_sum(ups, d3, m3, 2 * c1, L)             # (2*c1, L)

        # --- conv3_3_1 / conv3_3_2 (c1-halves) + shared h term + BN + ReLU ----
        fp = jnp.maximum((conv3(f1, 4) + acc_h[:c1]) * col(6) + col(7), 0.0)
        fn = jnp.maximum((conv3(b1, 5) + acc_h[c1:]) * col(8) + col(9), 0.0)

        # --- refine1 / refine2 (alpha, beta, bn1, bn2, relu folded) -----------
        r1 = jnp.maximum(fp * col(10) + col(11), 0.0)
        r2 = jnp.maximum(fn * col(12) + col(13), 0.0)
        ref2_ref[0] = r2

        # --- output_map = Conv7x7(r1 + r2) + bias (tap products + rolls) ------
        p_out = jnp.dot(wout_ref[...], (r1 + r2).astype(bf16),
                        preferred_element_type=f32)          # (49, L)
        out = roll_sum(p_out, d7f, m7f, 1, L)
        omap_ref[0] = out + aff[0:1, 14:15]

    return kernel


# ---------------------------------------------------------------------------
# Parameter init (deterministic, mirrors Focus1.__init__ shapes) and packing
# ---------------------------------------------------------------------------
def init_params(key, c1, c2):
    keys = iter(jax.random.split(key, 64))

    def conv_w(cout, cin, k):
        return (jax.random.normal(next(keys), (cout, cin, k, k), jnp.float32)
                * (1.0 / (cin * k * k) ** 0.5))

    def conv_b(cout):
        return jax.random.normal(next(keys), (cout,), jnp.float32) * 0.05

    def bn_p(c):
        return dict(
            gamma=jax.random.uniform(next(keys), (c,), jnp.float32, 0.5, 1.5),
            beta=jax.random.normal(next(keys), (c,), jnp.float32) * 0.1,
            mean=jax.random.normal(next(keys), (c,), jnp.float32) * 0.1,
            var=jax.random.uniform(next(keys), (c,), jnp.float32, 0.5, 1.5))

    p = {}
    p['up_w'], p['up_b'], p['up_bn'] = conv_w(c1, c2, 7), conv_b(c1), bn_p(c1)
    p['out_w'], p['out_b'] = conv_w(1, c1, 7), conv_b(1)
    p['oct1_w'] = conv_w(c1, c1, 3)
    p['oct2_w'] = conv_w(c1, c1, 3)
    p['alpha'] = jnp.ones((1,), jnp.float32)
    p['beta'] = jnp.ones((1,), jnp.float32)
    p['bn1'], p['bn2'] = bn_p(c1), bn_p(c1)
    p['c331_w'], p['c331_bn'] = conv_w(c1, c1 + 512, 3), bn_p(c1)
    p['c332_w'], p['c332_bn'] = conv_w(c1, c1 + 512, 3), bn_p(c1)
    p['c333_w'], p['c333_bn'] = conv_w(c1, c1, 3), bn_p(c1)
    p['c334_w'], p['c334_bn'] = conv_w(c1, c1, 3), bn_p(c1)
    return p


def pack_params(p, c1, c2, H, W, block_b=1):
    """One-time repacking: bf16 weights, folded BN affines, spatial operators."""
    Hh, Wh = H // 2, W // 2
    bt = block_b
    bf16 = jnp.bfloat16

    # bilinear x2 (align_corners=True) operator, block-diag over lane-stacked samples
    up_mat = np.kron(_upsample_matrix(Hh, H), _upsample_matrix(Wh, W))   # (HW, HWh)
    mupT = np.kron(np.eye(bt, dtype=np.float32), up_mat.T)               # (bt*HWh, bt*HW)

    # half-res 7x7 shift operators (zero padding), block-diag over samples
    s7 = _shift_matrices_T(Hh, Wh, 7, 7)                                 # (49, HWh, HWh)
    if bt > 1:
        eye = np.eye(bt, dtype=np.float32)
        s7 = np.stack([np.kron(eye, s7[t]) for t in range(49)])

    # boundary masks for the roll-based full-res convolutions (tiled per sample)
    m3 = np.tile(_tap_masks(H, W, 3, 3), (1, bt))                        # (9,  bt*HW)
    m7f = np.tile(_tap_masks(H, W, 7, 7), (1, bt))                       # (49, bt*HW)

    def taps(w):   # (cout, cin, kh, kw) -> (kh*kw*cout, cin), tap-major
        cout, cin, kh, kw = w.shape
        return jnp.transpose(w, (2, 3, 0, 1)).reshape(kh * kw * cout, cin)

    def fold(bn, conv_bias=None):
        s = bn['gamma'] / jnp.sqrt(bn['var'] + _EPS)
        b = bn['beta'] - bn['mean'] * s
        if conv_bias is not None:
            b = b + conv_bias * s
        return s, b

    up_s, up_b = fold(p['up_bn'], p['up_b'])
    s333, b333 = fold(p['c333_bn'])
    s334, b334 = fold(p['c334_bn'])
    s331, b331 = fold(p['c331_bn'])
    s332, b332 = fold(p['c332_bn'])
    inv1 = p['bn1']['gamma'] / jnp.sqrt(p['bn1']['var'] + _EPS)
    inv2 = p['bn2']['gamma'] / jnp.sqrt(p['bn2']['var'] + _EPS)
    r1_s = p['alpha'][0] * inv1
    r1_b = p['bn1']['beta'] - p['bn1']['mean'] * inv1
    r2_s = p['beta'][0] * inv2
    r2_b = p['bn2']['beta'] - p['bn2']['mean'] * inv2
    out_b = jnp.full((c1,), p['out_b'][0], jnp.float32)
    aff = jnp.stack([up_s, up_b, s333, b333, s334, b334,
                     s331, b331, s332, b332,
                     r1_s, r1_b, r2_s, r2_b, out_b,
                     jnp.zeros((c1,), jnp.float32)], axis=1).astype(jnp.float32)

    # six small 3x3 tap stacks: oct1, oct2, c333, c334, c331[:, :c1], c332[:, :c1]
    w_small = jnp.stack([taps(p['oct1_w']), taps(p['oct2_w']),
                         taps(p['c333_w']), taps(p['c334_w']),
                         taps(p['c331_w'][:, :c1]),
                         taps(p['c332_w'][:, :c1])]).astype(bf16)        # (6, 9*c1, c1)

    # combined 512-channel halves of c331 / c332 (single bf16 contraction of h)
    w_h = taps(jnp.concatenate([p['c331_w'][:, c1:], p['c332_w'][:, c1:]],
                               axis=0)).astype(bf16)                     # (9*2c1, 512)

    # 7x7 `up` conv flattened to (cout, 49*cin), matching the y expansion order
    w_up = jnp.transpose(p['up_w'], (0, 2, 3, 1)).reshape(c1, 49 * c2).astype(bf16)

    # 7x7 output conv as per-tap channel rows (49, c1)
    w_out = jnp.transpose(p['out_w'][0], (1, 2, 0)).reshape(49, c1).astype(bf16)

    return dict(
        mupT=jnp.asarray(mupT, bf16),
        s7t=jnp.asarray(s7, bf16),
        m3=jnp.asarray(m3, jnp.float32),
        m7f=jnp.asarray(m7f, jnp.float32),
        w_up=w_up, w_small=w_small, w_h=w_h, w_out=w_out, aff=aff)


# ---------------------------------------------------------------------------
# Forward wrapper (single pallas_call, grid over batch blocks)
# ---------------------------------------------------------------------------
def _lane_stack(a, bt):
    """(B, C, S) -> (B//bt, C, bt*S): bt consecutive samples side by side on lanes."""
    B, C, S = a.shape
    nb = B // bt
    return a.reshape(nb, bt, C, S).transpose(0, 2, 1, 3).reshape(nb, C, bt * S)


def _lane_unstack(a, bt, S):
    nb, C, _ = a.shape
    return a.reshape(nb, C, bt, S).transpose(0, 2, 1, 3).reshape(nb * bt, C, S)


def focus1_forward(x, y, in_map, h, packed):
    B, c1, H, W = x.shape
    c2 = y.shape[1]
    ch = h.shape[1]
    HW, HWh = H * W, (H // 2) * (W // 2)
    bt = packed['mupT'].shape[1] // HW          # samples lane-stacked per grid step
    assert B % bt == 0
    nb = B // bt
    L, Lh = bt * HW, bt * HWh

    xs = _lane_stack(x.reshape(B, c1, HW).astype(jnp.float32), bt)
    ys = _lane_stack(y.reshape(B, c2, HWh).astype(jnp.float32), bt)
    ims = _lane_stack(in_map.reshape(B, 1, HWh).astype(jnp.float32), bt)
    hs = _lane_stack(h.reshape(B, ch, HWh).astype(jnp.bfloat16), bt)

    def per_step(arr):
        nd = arr.ndim
        return pl.BlockSpec((1,) + tuple(arr.shape[1:]),
                            lambda g: (g,) + (0,) * (nd - 1))

    def const(arr):
        nd = arr.ndim
        return pl.BlockSpec(tuple(arr.shape), lambda g: (0,) * nd)

    wkeys = ('mupT', 's7t', 'm3', 'm7f', 'w_up', 'w_small', 'w_h', 'w_out', 'aff')
    in_specs = ([per_step(xs), per_step(ys), per_step(ims), per_step(hs)]
                + [const(packed[k]) for k in wkeys])

    kernel = _make_kernel(H, W, c1, c2, bt)

    refine2, omap = pl.pallas_call(
        kernel,
        grid=(nb,),
        in_specs=in_specs,
        out_specs=(pl.BlockSpec((1, c1, L), lambda g: (g, 0, 0)),
                   pl.BlockSpec((1, 1, L), lambda g: (g, 0, 0))),
        out_shape=(jax.ShapeDtypeStruct((nb, c1, L), jnp.float32),
                   jax.ShapeDtypeStruct((nb, 1, L), jnp.float32)),
        scratch_shapes=[pltpu.VMEM((19 * c1 + 1, Lh), jnp.float32),   # [ph ; up ; im]
                        pltpu.VMEM((49 * c2, Lh), jnp.float32)],      # y tap expansion
        compiler_params=pltpu.CompilerParams(
            dimension_semantics=("parallel",),
            vmem_limit_bytes=32 * 1024 * 1024),
    )(xs, ys, ims, hs, *(packed[k] for k in wkeys))

    refine2 = _lane_unstack(refine2, bt, HW).reshape(B, c1, H, W)
    omap = _lane_unstack(omap, bt, HW).reshape(B, 1, H, W)
    return refine2, omap


# ---------------------------------------------------------------------------
if __name__ == "__main__":
    B, C1, C2, H, W = 2, 8, 4, 16, 16        # channel1=8, channel2=4
    key = jax.random.PRNGKey(0)
    k1, k2, k3, k4, kp = jax.random.split(key, 5)
    x = jax.random.normal(k1, (B, C1, H, W), jnp.float32)
    y = jax.random.normal(k2, (B, C2, H // 2, W // 2), jnp.float32)
    in_map = jax.random.normal(k3, (B, 1, H // 2, W // 2), jnp.float32)
    h = jax.random.normal(k4, (B, 512, H // 2, W // 2), jnp.float32)  # 512 ch (hard-coded)

    params = init_params(kp, C1, C2)
    # block_b=1 keeps a 2-step "parallel" grid (one sample per TensorCore on v7x);
    # block_b=2 would lane-stack both samples into one step (higher MXU column
    # occupancy on single-TensorCore v5e/v6e).
    packed = pack_params(params, C1, C2, H, W, block_b=1)

    fwd = jax.jit(focus1_forward)
    refine2_out, output_map = fwd(x, y, in_map, h, packed)
    jax.block_until_ready((refine2_out, output_map))

    assert refine2_out.shape == (B, C1, H, W)
    assert output_map.shape == (B, 1, H, W)
    assert bool(jnp.all(jnp.isfinite(refine2_out)))
    assert bool(jnp.all(jnp.isfinite(output_map)))
    print("KERNEL_OK")
</pallas_src>

<mosaic_0001>
module attributes {stable_mosaic.version = 11 : i64} {
  func.func @kernel(%arg0: i32, %arg1: memref<1x8x256xf32, #tpu.memory_space<vmem>>, %arg2: memref<1x4x64xf32, #tpu.memory_space<vmem>>, %arg3: memref<1x1x64xf32, #tpu.memory_space<vmem>>, %arg4: memref<1x512x64xbf16, #tpu.memory_space<vmem>>, %arg5: memref<64x256xbf16, #tpu.memory_space<vmem>>, %arg6: memref<49x64x64xbf16, #tpu.memory_space<vmem>>, %arg7: memref<9x256xf32, #tpu.memory_space<vmem>>, %arg8: memref<49x256xf32, #tpu.memory_space<vmem>>, %arg9: memref<8x196xbf16, #tpu.memory_space<vmem>>, %arg10: memref<6x72x8xbf16, #tpu.memory_space<vmem>>, %arg11: memref<144x512xbf16, #tpu.memory_space<vmem>>, %arg12: memref<49x8xbf16, #tpu.memory_space<vmem>>, %arg13: memref<8x16xf32, #tpu.memory_space<vmem>>, %arg14: memref<1x8x256xf32, #tpu.memory_space<vmem>>, %arg15: memref<1x1x256xf32, #tpu.memory_space<vmem>>, %arg16: memref<153x64xf32, #tpu.memory_space<vmem>>, %arg17: memref<196x64xf32, #tpu.memory_space<vmem>>) attributes {dimension_semantics = [#tpu.dimension_semantics<parallel>], iteration_bounds = array<i64: 2>, scalar_prefetch = 0 : i64, scratch_operands = 2 : i64, tpu.core_type = #tpu.core_type<tc>, window_params = [{transform_indices = @transform_0, window_bounds = array<i64: 1, 8, 256>}, {transform_indices = @transform_1, window_bounds = array<i64: 1, 4, 64>}, {transform_indices = @transform_2, window_bounds = array<i64: 1, 1, 64>}, {transform_indices = @transform_3, window_bounds = array<i64: 1, 512, 64>}, {pipeline_mode = #tpu.pipeline_mode<synchronous>, transform_indices = @transform_4, window_bounds = array<i64: 64, 256>}, {pipeline_mode = #tpu.pipeline_mode<synchronous>, transform_indices = @transform_5, window_bounds = array<i64: 49, 64, 64>}, {pipeline_mode = #tpu.pipeline_mode<synchronous>, transform_indices = @transform_6, window_bounds = array<i64: 9, 256>}, {pipeline_mode = #tpu.pipeline_mode<synchronous>, transform_indices = @transform_7, window_bounds = array<i64: 49, 256>}, {pipeline_mode = #tpu.pipeline_mode<synchronous>, transform_indices = @transform_8, window_bounds = array<i64: 8, 196>}, {pipeline_mode = #tpu.pipeline_mode<synchronous>, transform_indices = @transform_9, window_bounds = array<i64: 6, 72, 8>}, {pipeline_mode = #tpu.pipeline_mode<synchronous>, transform_indices = @transform_10, window_bounds = array<i64: 144, 512>}, {pipeline_mode = #tpu.pipeline_mode<synchronous>, transform_indices = @transform_11, window_bounds = array<i64: 49, 8>}, {pipeline_mode = #tpu.pipeline_mode<synchronous>, transform_indices = @transform_12, window_bounds = array<i64: 8, 16>}, {transform_indices = @transform_13, window_bounds = array<i64: 1, 8, 256>}, {transform_indices = @transform_14, window_bounds = array<i64: 1, 1, 256>}]} {
    %c0 = arith.constant 0 : index
    %c0_0 = arith.constant 0 : index
    %c0_1 = arith.constant 0 : index
    %0 = vector.load %arg1[%c0, %c0_0, %c0_1] : memref<1x8x256xf32, #tpu.memory_space<vmem>>, vector<1x8x256xf32>
    %1 = vector.shape_cast %0 : vector<1x8x256xf32> to vector<8x256xf32>
    %c0_2 = arith.constant 0 : index
    %c0_3 = arith.constant 0 : index
    %c0_4 = arith.constant 0 : index
    %2 = vector.load %arg3[%c0_2, %c0_3, %c0_4] : memref<1x1x64xf32, #tpu.memory_space<vmem>>, vector<1x1x64xf32>
    %3 = vector.shape_cast %2 : vector<1x1x64xf32> to vector<1x64xf32>
    %c0_5 = arith.constant 0 : index
    %c0_6 = arith.constant 0 : index
    %4 = vector.load %arg13[%c0_5, %c0_6] : memref<8x16xf32, #tpu.memory_space<vmem>>, vector<8x16xf32>
    %c0_7 = arith.constant 0 : index
    %c0_8 = arith.constant 0 : index
    %5 = vector.load %arg7[%c0_7, %c0_8] : memref<9x256xf32, #tpu.memory_space<vmem>>, vector<9x256xf32>
    %c0_9 = arith.constant 0 : index
    %c0_10 = arith.constant 0 : index
    %6 = vector.load %arg8[%c0_9, %c0_10] : memref<49x256xf32, #tpu.memory_space<vmem>>, vector<49x256xf32>
    %c0_11 = arith.constant 0 : index
    %c0_12 = arith.constant 0 : index
    %7 = vector.load %arg5[%c0_11, %c0_12] : memref<64x256xbf16, #tpu.memory_space<vmem>>, vector<64x256xbf16>
    %c0_13 = arith.constant 0 : index
    %c0_14 = arith.constant 0 : index
    %c0_15 = arith.constant 0 : index
    %8 = vector.load %arg2[%c0_13, %c0_14, %c0_15] : memref<1x4x64xf32, #tpu.memory_space<vmem>>, vector<1x4x64xf32>
    %9 = vector.shape_cast %8 : vector<1x4x64xf32> to vector<4x64xf32>
    %10 = arith.truncf %9 : vector<4x64xf32> to vector<4x64xbf16>
    %c0_16 = arith.constant 0 : index
    %c0_17 = arith.constant 0 : index
    %c0_18 = arith.constant 0 : index
    %11 = vector.load %arg6[%c0_16, %c0_17, %c0_18] : memref<49x64x64xbf16, #tpu.memory_space<vmem>>, vector<1x64x64xbf16>
    %12 = vector.shape_cast %11 : vector<1x64x64xbf16> to vector<64x64xbf16>
    %cst = arith.constant dense<0.000000e+00> : vector<4x64xf32>
    %13 = tpu.matmul %10, %12, %cst {dimension_numbers = #tpu.dot_dimension_numbers<[1], [0], [0], [1], [0, 0, 1, 1], [], []>} : vector<4x64xbf16>, vector<64x64xbf16>, vector<4x64xf32> -> vector<4x64xf32>
    %c0_19 = arith.constant 0 : index
    %c0_20 = arith.constant 0 : index
    %14 = vector.load %arg17[%c0_19, %c0_20] : memref<196x64xf32, #tpu.memory_space<vmem>>, vector<4x64xf32>
    tpu.vector_store %arg17[%c0_19, %c0_20], %13 {strides = array<i32>} : memref<196x64xf32, #tpu.memory_space<vmem>>, vector<4x64xf32>,
    %c1 = arith.constant 1 : index
    %c0_21 = arith.constant 0 : index
    %c0_22 = arith.constant 0 : index
    %15 = vector.load %arg6[%c1, %c0_21, %c0_22] : memref<49x64x64xbf16, #tpu.memory_space<vmem>>, vector<1x64x64xbf16>
    %16 = vector.shape_cast %15 : vector<1x64x64xbf16> to vector<64x64xbf16>
    %cst_23 = arith.constant dense<0.000000e+00> : vector<4x64xf32>
    %17 = tpu.matmul %10, %16, %cst_23 {dimension_numbers = #tpu.dot_dimension_numbers<[1], [0], [0], [1], [0, 0, 1, 1], [], []>} : vector<4x64xbf16>, vector<64x64xbf16>, vector<4x64xf32> -> vector<4x64xf32>
    %c4 = arith.constant 4 : index
    %c0_24 = arith.constant 0 : index
    %18 = vector.load %arg17[%c4, %c0_24] : memref<196x64xf32, #tpu.memory_space<vmem>>, vector<4x64xf32>
    tpu.vector_store %arg17[%c4, %c0_24], %17 {strides = array<i32>} : memref<196x64xf32, #tpu.memory_space<vmem>>, vector<4x64xf32>,
    %c2 = arith.constant 2 : index
    %c0_25 = arith.constant 0 : index
    %c0_26 = arith.constant 0 : index
    %19 = vector.load %arg6[%c2, %c0_25, %c0_26] : memref<49x64x64xbf16, #tpu.memory_space<vmem>>, vector<1x64x64xbf16>
    %20 = vector.shape_cast %19 : vector<1x64x64xbf16> to vector<64x64xbf16>
    %cst_27 = arith.constant dense<0.000000e+00> : vector<4x64xf32>
    %21 = tpu.matmul %10, %20, %cst_27 {dimension_numbers = #tpu.dot_dimension_numbers<[1], [0], [0], [1], [0, 0, 1, 1], [], []>} : vector<4x64xbf16>, vector<64x64xbf16>, vector<4x64xf32> -> vector<4x64xf32>
    %c8 = arith.constant 8 : index
    %c0_28 = arith.constant 0 : index
    %22 = vector.load %arg17[%c8, %c0_28] : memref<196x64xf32, #tpu.memory_space<vmem>>, vector<4x64xf32>
    tpu.vector_store %arg17[%c8, %c0_28], %21 {strides = array<i32>} : memref<196x64xf32, #tpu.memory_space<vmem>>, vector<4x64xf32>,
    %c3 = arith.constant 3 : index
    %c0_29 = arith.constant 0 : index
    %c0_30 = arith.constant 0 : index
    %23 = vector.load %arg6[%c3, %c0_29, %c0_30] : memref<49x64x64xbf16, #tpu.memory_space<vmem>>, vector<1x64x64xbf16>
    %24 = vector.shape_cast %23 : vector<1x64x64xbf16> to vector<64x64xbf16>
    %cst_31 = arith.constant dense<0.000000e+00> : vector<4x64xf32>
    %25 = tpu.matmul %10, %24, %cst_31 {dimension_numbers = #tpu.dot_dimension_numbers<[1], [0], [0], [1], [0, 0, 1, 1], [], []>} : vector<4x64xbf16>, vector<64x64xbf16>, vector<4x64xf32> -> vector<4x64xf32>
    %c12 = arith.constant 12 : index
    %c0_32 = arith.constant 0 : index
    %26 = vector.load %arg17[%c12, %c0_32] : memref<196x64xf32, #tpu.memory_space<vmem>>, vector<4x64xf32>
    tpu.vector_store %arg17[%c12, %c0_32], %25 {strides = array<i32>} : memref<196x64xf32, #tpu.memory_space<vmem>>, vector<4x64xf32>,
    %c4_33 = arith.constant 4 : index
    %c0_34 = arith.constant 0 : index
    %c0_35 = arith.constant 0 : index
    %27 = vector.load %arg6[%c4_33, %c0_34, %c0_35] : memref<49x64x64xbf16, #tpu.memory_space<vmem>>, vector<1x64x64xbf16>
    %28 = vector.shape_cast %27 : vector<1x64x64xbf16> to vector<64x64xbf16>
    %cst_36 = arith.constant dense<0.000000e+00> : vector<4x64xf32>
    %29 = tpu.matmul %10, %28, %cst_36 {dimension_numbers = #tpu.dot_dimension_numbers<[1], [0], [0], [1], [0, 0, 1, 1], [], []>} : vector<4x64xbf16>, vector<64x64xbf16>, vector<4x64xf32> -> vector<4x64xf32>
    %c16 = arith.constant 16 : index
    %c0_37 = arith.constant 0 : index
    %30 = vector.load %arg17[%c16, %c0_37] : memref<196x64xf32, #tpu.memory_space<vmem>>, vector<4x64xf32>
    tpu.vector_store %arg17[%c16, %c0_37], %29 {strides = array<i32>} : memref<196x64xf32, #tpu.memory_space<vmem>>, vector<4x64xf32>,
    %c5 = arith.constant 5 : index
    %c0_38 = arith.constant 0 : index
    %c0_39 = arith.constant 0 : index
    %31 = vector.load %arg6[%c5, %c0_38, %c0_39] : memref<49x64x64xbf16, #tpu.memory_space<vmem>>, vector<1x64x64xbf16>
    %32 = vector.shape_cast %31 : vector<1x64x64xbf16> to vector<64x64xbf16>
    %cst_40 = arith.constant dense<0.000000e+00> : vector<4x64xf32>
    %33 = tpu.matmul %10, %32, %cst_40 {dimension_numbers = #tpu.dot_dimension_numbers<[1], [0], [0], [1], [0, 0, 1, 1], [], []>} : vector<4x64xbf16>, vector<64x64xbf16>, vector<4x64xf32> -> vector<4x64xf32>
    %c20 = arith.constant 20 : index
    %c0_41 = arith.constant 0 : index
    %34 = vector.load %arg17[%c20, %c0_41] : memref<196x64xf32, #tpu.memory_space<vmem>>, vector<4x64xf32>
    tpu.vector_store %arg17[%c20, %c0_41], %33 {strides = array<i32>} : memref<196x64xf32, #tpu.memory_space<vmem>>, vector<4x64xf32>,
    %c6 = arith.constant 6 : index
    %c0_42 = arith.constant 0 : index
    %c0_43 = arith.constant 0 : index
    %35 = vector.load %arg6[%c6, %c0_42, %c0_43] : memref<49x64x64xbf16, #tpu.memory_space<vmem>>, vector<1x64x64xbf16>
    %36 = vector.shape_cast %35 : vector<1x64x64xbf16> to vector<64x64xbf16>
    %cst_44 = arith.constant dense<0.000000e+00> : vector<4x64xf32>
    %37 = tpu.matmul %10, %36, %cst_44 {dimension_numbers = #tpu.dot_dimension_numbers<[1], [0], [0], [1], [0, 0, 1, 1], [], []>} : vector<4x64xbf16>, vector<64x64xbf16>, vector<4x64xf32> -> vector<4x64xf32>
    %c24 = arith.constant 24 : index
    %c0_45 = arith.constant 0 : index
    %38 = vector.load %arg17[%c24, %c0_45] : memref<196x64xf32, #tpu.memory_space<vmem>>, vector<4x64xf32>
    tpu.vector_store %arg17[%c24, %c0_45], %37 {strides = array<i32>} : memref<196x64xf32, #tpu.memory_space<vmem>>, vector<4x64xf32>,
    %c7 = arith.constant 7 : index
    %c0_46 = arith.constant 0 : index
    %c0_47 = arith.constant 0 : index
    %39 = vector.load %arg6[%c7, %c0_46, %c0_47] : memref<49x64x64xbf16, #tpu.memory_space<vmem>>, vector<1x64x64xbf16>
    %40 = vector.shape_cast %39 : vector<1x64x64xbf16> to vector<64x64xbf16>
    %cst_48 = arith.constant dense<0.000000e+00> : vector<4x64xf32>
    %41 = tpu.matmul %10, %40, %cst_48 {dimension_numbers = #tpu.dot_dimension_numbers<[1], [0], [0], [1], [0, 0, 1, 1], [], []>} : vector<4x64xbf16>, vector<64x64xbf16>, vector<4x64xf32> -> vector<4x64xf32>
    %c28 = arith.constant 28 : index
    %c0_49 = arith.constant 0 : index
    %42 = vector.load %arg17[%c28, %c0_49] : memref<196x64xf32, #tpu.memory_space<vmem>>, vector<4x64xf32>
    tpu.vector_store %arg17[%c28, %c0_49], %41 {strides = array<i32>} : memref<196x64xf32, #tpu.memory_space<vmem>>, vector<4x64xf32>,
    %c8_50 = arith.constant 8 : index
    %c0_51 = arith.constant 0 : index
    %c0_52 = arith.constant 0 : index
    %43 = vector.load %arg6[%c8_50, %c0_51, %c0_52] : memref<49x64x64xbf16, #tpu.memory_space<vmem>>, vector<1x64x64xbf16>
    %44 = vector.shape_cast %43 : vector<1x64x64xbf16> to vector<64x64xbf16>
    %cst_53 = arith.constant dense<0.000000e+00> : vector<4x64xf32>
    %45 = tpu.matmul %10, %44, %cst_53 {dimension_numbers = #tpu.dot_dimension_numbers<[1], [0], [0], [1], [0, 0, 1, 1], [], []>} : vector<4x64xbf16>, vector<64x64xbf16>, vector<4x64xf32> -> vector<4x64xf32>
    %c32 = arith.constant 32 : index
    %c0_54 = arith.constant 0 : index
    %46 = vector.load %arg17[%c32, %c0_54] : memref<196x64xf32, #tpu.memory_space<vmem>>, vector<4x64xf32>
    tpu.vector_store %arg17[%c32, %c0_54], %45 {strides = array<i32>} : memref<196x64xf32, #tpu.memory_space<vmem>>, vector<4x64xf32>,
    %c9 = arith.constant 9 : index
    %c0_55 = arith.constant 0 : index
    %c0_56 = arith.constant 0 : index
    %47 = vector.load %arg6[%c9, %c0_55, %c0_56] : memref<49x64x64xbf16, #tpu.memory_space<vmem>>, vector<1x64x64xbf16>
    %48 = vector.shape_cast %47 : vector<1x64x64xbf16> to vector<64x64xbf16>
    %cst_57 = arith.constant dense<0.000000e+00> : vector<4x64xf32>
    %49 = tpu.matmul %10, %48, %cst_57 {dimension_numbers = #tpu.dot_dimension_numbers<[1], [0], [0], [1], [0, 0, 1, 1], [], []>} : vector<4x64xbf16>, vector<64x64xbf16>, vector<4x64xf32> -> vector<4x64xf32>
    %c36 = arith.constant 36 : index
    %c0_58 = arith.constant 0 : index
    %50 = vector.load %arg17[%c36, %c0_58] : memref<196x64xf32, #tpu.memory_space<vmem>>, vector<4x64xf32>
    tpu.vector_store %arg17[%c36, %c0_58], %49 {strides = array<i32>} : memref<196x64xf32, #tpu.memory_space<vmem>>, vector<4x64xf32>,
    %c10 = arith.constant 10 : index
    %c0_59 = arith.constant 0 : index
    %c0_60 = arith.constant 0 : index
    %51 = vector.load %arg6[%c10, %c0_59, %c0_60] : memref<49x64x64xbf16, #tpu.memory_space<vmem>>, vector<1x64x64xbf16>
    %52 = vector.shape_cast %51 : vector<1x64x64xbf16> to vector<64x64xbf16>
    %cst_61 = arith.constant dense<0.000000e+00> : vector<4x64xf32>
    %53 = tpu.matmul %10, %52, %cst_61 {dimension_numbers = #tpu.dot_dimension_numbers<[1], [0], [0], [1], [0, 0, 1, 1], [], []>} : vector<4x64xbf16>, vector<64x64xbf16>, vector<4x64xf32> -> vector<4x64xf32>
    %c40 = arith.constant 40 : index
    %c0_62 = arith.constant 0 : index
    %54 = vector.load %arg17[%c40, %c0_62] : memref<196x64xf32, #tpu.memory_space<vmem>>, vector<4x64xf32>
    tpu.vector_store %arg17[%c40, %c0_62], %53 {strides = array<i32>} : memref<196x64xf32, #tpu.memory_space<vmem>>, vector<4x64xf32>,
    %c11 = arith.constant 11 : index
    %c0_63 = arith.constant 0 : index
    %c0_64 = arith.constant 0 : index
    %55 = vector.load %arg6[%c11, %c0_63, %c0_64] : memref<49x64x64xbf16, #tpu.memory_space<vmem>>, vector<1x64x64xbf16>
    %56 = vector.shape_cast %55 : vector<1x64x64xbf16> to vector<64x64xbf16>
    %cst_65 = arith.constant dense<0.000000e+00> : vector<4x64xf32>
    %57 = tpu.matmul %10, %56, %cst_65 {dimension_numbers = #tpu.dot_dimension_numbers<[1], [0], [0], [1], [0, 0, 1, 1], [], []>} : vector<4x64xbf16>, vector<64x64xbf16>, vector<4x64xf32> -> vector<4x64xf32>
    %c44 = arith.constant 44 : index
    %c0_66 = arith.constant 0 : index
    %58 = vector.load %arg17[%c44, %c0_66] : memref<196x64xf32, #tpu.memory_space<vmem>>, vector<4x64xf32>
    tpu.vector_store %arg17[%c44, %c0_66], %57 {strides = array<i32>} : memref<196x64xf32, #tpu.memory_space<vmem>>, vector<4x64xf32>,
    %c12_67 = arith.constant 12 : index
    %c0_68 = arith.constant 0 : index
    %c0_69 = arith.constant 0 : index
    %59 = vector.load %arg6[%c12_67, %c0_68, %c0_69] : memref<49x64x64xbf16, #tpu.memory_space<vmem>>, vector<1x64x64xbf16>
    %60 = vector.shape_cast %59 : vector<1x64x64xbf16> to vector<64x64xbf16>
    %cst_70 = arith.constant dense<0.000000e+00> : vector<4x64xf32>
    %61 = tpu.matmul %10, %60, %cst_70 {dimension_numbers = #tpu.dot_dimension_numbers<[1], [0], [0], [1], [0, 0, 1, 1], [], []>} : vector<4x64xbf16>, vector<64x64xbf16>, vector<4x64xf32> -> vector<4x64xf32>
    %c48 = arith.constant 48 : index
    %c0_71 = arith.constant 0 : index
    %62 = vector.load %arg17[%c48, %c0_71] : memref<196x64xf32, #tpu.memory_space<vmem>>, vector<4x64xf32>
    tpu.vector_store %arg17[%c48, %c0_71], %61 {strides = array<i32>} : memref<196x64xf32, #tpu.memory_space<vmem>>, vector<4x64xf32>,
    %c13 = arith.constant 13 : index
    %c0_72 = arith.constant 0 : index
    %c0_73 = arith.constant 0 : index
    %63 = vector.load %arg6[%c13, %c0_72, %c0_73] : memref<49x64x64xbf16, #tpu.memory_space<vmem>>, vector<1x64x64xbf16>
    %64 = vector.shape_cast %63 : vector<1x64x64xbf16> to vector<64x64xbf16>
    %cst_74 = arith.constant dense<0.000000e+00> : vector<4x64xf32>
    %65 = tpu.matmul %10, %64, %cst_74 {dimension_numbers = #tpu.dot_dimension_numbers<[1], [0], [0], [1], [0, 0, 1, 1], [], []>} : vector<4x64xbf16>, vector<64x64xbf16>, vector<4x64xf32> -> vector<4x64xf32>
    %c52 = arith.constant 52 : index
    %c0_75 = arith.constant 0 : index
    %66 = vector.load %arg17[%c52, %c0_75] : memref<196x64xf32, #tpu.memory_space<vmem>>, vector<4x64xf32>
    tpu.vector_store %arg17[%c52, %c0_75], %65 {strides = array<i32>} : memref<196x64xf32, #tpu.memory_space<vmem>>, vector<4x64xf32>,
    %c14 = arith.constant 14 : index
    %c0_76 = arith.constant 0 : index
    %c0_77 = arith.constant 0 : index
    %67 = vector.load %arg6[%c14, %c0_76, %c0_77] : memref<49x64x64xbf16, #tpu.memory_space<vmem>>, vector<1x64x64xbf16>
    %68 = vector.shape_cast %67 : vector<1x64x64xbf16> to vector<64x64xbf16>
    %cst_78 = arith.constant dense<0.000000e+00> : vector<4x64xf32>
    %69 = tpu.matmul %10, %68, %cst_78 {dimension_numbers = #tpu.dot_dimension_numbers<[1], [0], [0], [1], [0, 0, 1, 1], [], []>} : vector<4x64xbf16>, vector<64x64xbf16>, vector<4x64xf32> -> vector<4x64xf32>
    %c56 = arith.constant 56 : index
    %c0_79 = arith.constant 0 : index
    %70 = vector.load %arg17[%c56, %c0_79] : memref<196x64xf32, #tpu.memory_space<vmem>>, vector<4x64xf32>
    tpu.vector_store %arg17[%c56, %c0_79], %69 {strides = array<i32>} : memref<196x64xf32, #tpu.memory_space<vmem>>, vector<4x64xf32>,
    %c15 = arith.constant 15 : index
    %c0_80 = arith.constant 0 : index
    %c0_81 = arith.constant 0 : index
    %71 = vector.load %arg6[%c15, %c0_80, %c0_81] : memref<49x64x64xbf16, #tpu.memory_space<vmem>>, vector<1x64x64xbf16>
    %72 = vector.shape_cast %71 : vector<1x64x64xbf16> to vector<64x64xbf16>
    %cst_82 = arith.constant dense<0.000000e+00> : vector<4x64xf32>
    %73 = tpu.matmul %10, %72, %cst_82 {dimension_numbers = #tpu.dot_dimension_numbers<[1], [0], [0], [1], [0, 0, 1, 1], [], []>} : vector<4x64xbf16>, vector<64x64xbf16>, vector<4x64xf32> -> vector<4x64xf32>
    %c60 = arith.constant 60 : index
    %c0_83 = arith.constant 0 : index
    %74 = vector.load %arg17[%c60, %c0_83] : memref<196x64xf32, #tpu.memory_space<vmem>>, vector<4x64xf32>
    tpu.vector_store %arg17[%c60, %c0_83], %73 {strides = array<i32>} : memref<196x64xf32, #tpu.memory_space<vmem>>, vector<4x64xf32>,
    %c16_84 = arith.constant 16 : index
    %c0_85 = arith.constant 0 : index
    %c0_86 = arith.constant 0 : index
    %75 = vector.load %arg6[%c16_84, %c0_85, %c0_86] : memref<49x64x64xbf16, #tpu.memory_space<vmem>>, vector<1x64x64xbf16>
    %76 = vector.shape_cast %75 : vector<1x64x64xbf16> to vector<64x64xbf16>
    %cst_87 = arith.constant dense<0.000000e+00> : vector<4x64xf32>
    %77 = tpu.matmul %10, %76, %cst_87 {dimension_numbers = #tpu.dot_dimension_numbers<[1], [0], [0], [1], [0, 0, 1, 1], [], []>} : vector<4x64xbf16>, vector<64x64xbf16>, vector<4x64xf32> -> vector<4x64xf32>
    %c64 = arith.constant 64 : index
    %c0_88 = arith.constant 0 : index
    %78 = vector.load %arg17[%c64, %c0_88] : memref<196x64xf32, #tpu.memory_space<vmem>>, vector<4x64xf32>
    tpu.vector_store %arg17[%c64, %c0_88], %77 {strides = array<i32>} : memref<196x64xf32, #tpu.memory_space<vmem>>, vector<4x64xf32>,
    %c17 = arith.constant 17 : index
    %c0_89 = arith.constant 0 : index
    %c0_90 = arith.constant 0 : index
    %79 = vector.load %arg6[%c17, %c0_89, %c0_90] : memref<49x64x64xbf16, #tpu.memory_space<vmem>>, vector<1x64x64xbf16>
    %80 = vector.shape_cast %79 : vector<1x64x64xbf16> to vector<64x64xbf16>
    %cst_91 = arith.constant dense<0.000000e+00> : vector<4x64xf32>
    %81 = tpu.matmul %10, %80, %cst_91 {dimension_numbers = #tpu.dot_dimension_numbers<[1], [0], [0], [1], [0, 0, 1, 1], [], []>} : vector<4x64xbf16>, vector<64x64xbf16>, vector<4x64xf32> -> vector<4x64xf32>
    %c68 = arith.constant 68 : index
    %c0_92 = arith.constant 0 : index
    %82 = vector.load %arg17[%c68, %c0_92] : memref<196x64xf32, #tpu.memory_space<vmem>>, vector<4x64xf32>
    tpu.vector_store %arg17[%c68, %c0_92], %81 {strides = array<i32>} : memref<196x64xf32, #tpu.memory_space<vmem>>, vector<4x64xf32>,
    %c18 = arith.constant 18 : index
    %c0_93 = arith.constant 0 : index
    %c0_94 = arith.constant 0 : index
    %83 = vector.load %arg6[%c18, %c0_93, %c0_94] : memref<49x64x64xbf16, #tpu.memory_space<vmem>>, vector<1x64x64xbf16>
    %84 = vector.shape_cast %83 : vector<1x64x64xbf16> to vector<64x64xbf16>
    %cst_95 = arith.constant dense<0.000000e+00> : vector<4x64xf32>
    %85 = tpu.matmul %10, %84, %cst_95 {dimension_numbers = #tpu.dot_dimension_numbers<[1], [0], [0], [1], [0, 0, 1, 1], [], []>} : vector<4x64xbf16>, vector<64x64xbf16>, vector<4x64xf32> -> vector<4x64xf32>
    %c72 = arith.constant 72 : index
    %c0_96 = arith.constant 0 : index
    %86 = vector.load %arg17[%c72, %c0_96] : memref<196x64xf32, #tpu.memory_space<vmem>>, vector<4x64xf32>
    tpu.vector_store %arg17[%c72, %c0_96], %85 {strides = array<i32>} : memref<196x64xf32, #tpu.memory_space<vmem>>, vector<4x64xf32>,
    %c19 = arith.constant 19 : index
    %c0_97 = arith.constant 0 : index
    %c0_98 = arith.constant 0 : index
    %87 = vector.load %arg6[%c19, %c0_97, %c0_98] : memref<49x64x64xbf16, #tpu.memory_space<vmem>>, vector<1x64x64xbf16>
    %88 = vector.shape_cast %87 : vector<1x64x64xbf16> to vector<64x64xbf16>
    %cst_99 = arith.constant dense<0.000000e+00> : vector<4x64xf32>
    %89 = tpu.matmul %10, %88, %cst_99 {dimension_numbers = #tpu.dot_dimension_numbers<[1], [0], [0], [1], [0, 0, 1, 1], [], []>} : vector<4x64xbf16>, vector<64x64xbf16>, vector<4x64xf32> -> vector<4x64xf32>
    %c76 = arith.constant 76 : index
    %c0_100 = arith.constant 0 : index
    %90 = vector.load %arg17[%c76, %c0_100] : memref<196x64xf32, #tpu.memory_space<vmem>>, vector<4x64xf32>
    tpu.vector_store %arg17[%c76, %c0_100], %89 {strides = array<i32>} : memref<196x64xf32, #tpu.memory_space<vmem>>, vector<4x64xf32>,
    %c20_101 = arith.constant 20 : index
    %c0_102 = arith.constant 0 : index
    %c0_103 = arith.constant 0 : index
    %91 = vector.load %arg6[%c20_101, %c0_102, %c0_103] : memref<49x64x64xbf16, #tpu.memory_space<vmem>>, vector<1x64x64xbf16>
    %92 = vector.shape_cast %91 : vector<1x64x64xbf16> to vector<64x64xbf16>
    %cst_104 = arith.constant dense<0.000000e+00> : vector<4x64xf32>
    %93 = tpu.matmul %10, %92, %cst_104 {dimension_numbers = #tpu.dot_dimension_numbers<[1], [0], [0], [1], [0, 0, 1, 1], [], []>} : vector<4x64xbf16>, vector<64x64xbf16>, vector<4x64xf32> -> vector<4x64xf32>
    %c80 = arith.constant 80 : index
    %c0_105 = arith.constant 0 : index
    %94 = vector.load %arg17[%c80, %c0_105] : memref<196x64xf32, #tpu.memory_space<vmem>>, vector<4x64xf32>
    tpu.vector_store %arg17[%c80, %c0_105], %93 {strides = array<i32>} : memref<196x64xf32, #tpu.memory_space<vmem>>, vector<4x64xf32>,
    %c21 = arith.constant 21 : index
    %c0_106 = arith.constant 0 : index
    %c0_107 = arith.constant 0 : index
    %95 = vector.load %arg6[%c21, %c0_106, %c0_107] : memref<49x64x64xbf16, #tpu.memory_space<vmem>>, vector<1x64x64xbf16>
    %96 = vector.shape_cast %95 : vector<1x64x64xbf16> to vector<64x64xbf16>
    %cst_108 = arith.constant dense<0.000000e+00> : vector<4x64xf32>
    %97 = tpu.matmul %10, %96, %cst_108 {dimension_numbers = #tpu.dot_dimension_numbers<[1], [0], [0], [1], [0, 0, 1, 1], [], []>} : vector<4x64xbf16>, vector<64x64xbf16>, vector<4x64xf32> -> vector<4x64xf32>
    %c84 = arith.constant 84 : index
    %c0_109 = arith.constant 0 : index
    %98 = vector.load %arg17[%c84, %c0_109] : memref<196x64xf32, #tpu.memory_space<vmem>>, vector<4x64xf32>
    tpu.vector_store %arg17[%c84, %c0_109], %97 {strides = array<i32>} : memref<196x64xf32, #tpu.memory_space<vmem>>, vector<4x64xf32>,
    %c22 = arith.constant 22 : index
    %c0_110 = arith.constant 0 : index
    %c0_111 = arith.constant 0 : index
    %99 = vector.load %arg6[%c22, %c0_110, %c0_111] : memref<49x64x64xbf16, #tpu.memory_space<vmem>>, vector<1x64x64xbf16>
    %100 = vector.shape_cast %99 : vector<1x64x64xbf16> to vector<64x64xbf16>
    %cst_112 = arith.constant dense<0.000000e+00> : vector<4x64xf32>
    %101 = tpu.matmul %10, %100, %cst_112 {dimension_numbers = #tpu.dot_dimension_numbers<[1], [0], [0], [1], [0, 0, 1, 1], [], []>} : vector<4x64xbf16>, vector<64x64xbf16>, vector<4x64xf32> -> vector<4x64xf32>
    %c88 = arith.constant 88 : index
    %c0_113 = arith.constant 0 : index
    %102 = vector.load %arg17[%c88, %c0_113] : memref<196x64xf32, #tpu.memory_space<vmem>>, vector<4x64xf32>
    tpu.vector_store %arg17[%c88, %c0_113], %101 {strides = array<i32>} : memref<196x64xf32, #tpu.memory_space<vmem>>, vector<4x64xf32>,
    %c23 = arith.constant 23 : index
    %c0_114 = arith.constant 0 : index
    %c0_115 = arith.constant 0 : index
    %103 = vector.load %arg6[%c23, %c0_114, %c0_115] : memref<49x64x64xbf16, #tpu.memory_space<vmem>>, vector<1x64x64xbf16>
    %104 = vector.shape_cast %103 : vector<1x64x64xbf16> to vector<64x64xbf16>
    %cst_116 = arith.constant dense<0.000000e+00> : vector<4x64xf32>
    %105 = tpu.matmul %10, %104, %cst_116 {dimension_numbers = #tpu.dot_dimension_numbers<[1], [0], [0], [1], [0, 0, 1, 1], [], []>} : vector<4x64xbf16>, vector<64x64xbf16>, vector<4x64xf32> -> vector<4x64xf32>
    %c92 = arith.constant 92 : index
    %c0_117 = arith.constant 0 : index
    %106 = vector.load %arg17[%c92, %c0_117] : memref<196x64xf32, #tpu.memory_space<vmem>>, vector<4x64xf32>
    tpu.vector_store %arg17[%c92, %c0_117], %105 {strides = array<i32>} : memref<196x64xf32, #tpu.memory_space<vmem>>, vector<4x64xf32>,
    %c24_118 = arith.constant 24 : index
    %c0_119 = arith.constant 0 : index
    %c0_120 = arith.constant 0 : index
    %107 = vector.load %arg6[%c24_118, %c0_119, %c0_120] : memref<49x64x64xbf16, #tpu.memory_space<vmem>>, vector<1x64x64xbf16>
    %108 = vector.shape_cast %107 : vector<1x64x64xbf16> to vector<64x64xbf16>
    %cst_121 = arith.constant dense<0.000000e+00> : vector<4x64xf32>
    %109 = tpu.matmul %10, %108, %cst_121 {dimension_numbers = #tpu.dot_dimension_numbers<[1], [0], [0], [1], [0, 0, 1, 1], [], []>} : vector<4x64xbf16>, vector<64x64xbf16>, vector<4x64xf32> -> vector<4x64xf32>
    %c96 = arith.constant 96 : index
    %c0_122 = arith.constant 0 : index
    %110 = vector.load %arg17[%c96, %c0_122] : memref<196x64xf32, #tpu.memory_space<vmem>>, vector<4x64xf32>
    tpu.vector_store %arg17[%c96, %c0_122], %109 {strides = array<i32>} : memref<196x64xf32, #tpu.memory_space<vmem>>, vector<4x64xf32>,
    %c25 = arith.constant 25 : index
    %c0_123 = arith.constant 0 : index
    %c0_124 = arith.constant 0 : index
    %111 = vector.load %arg6[%c25, %c0_123, %c0_124] : memref<49x64x64xbf16, #tpu.memory_space<vmem>>, vector<1x64x64xbf16>
    %112 = vector.shape_cast %111 : vector<1x64x64xbf16> to vector<64x64xbf16>
    %cst_125 = arith.constant dense<0.000000e+00> : vector<4x64xf32>
    %113 = tpu.matmul %10, %112, %cst_125 {dimension_numbers = #tpu.dot_dimension_numbers<[1], [0], [0], [1], [0, 0, 1, 1], [], []>} : vector<4x64xbf16>, vector<64x64xbf16>, vector<4x64xf32> -> vector<4x64xf32>
    %c100 = arith.constant 100 : index
    %c0_126 = arith.constant 0 : index
    %114 = vector.load %arg17[%c100, %c0_126] : memref<196x64xf32, #tpu.memory_space<vmem>>, vector<4x64xf32>
    tpu.vector_store %arg17[%c100, %c0_126], %113 {strides = array<i32>} : memref<196x64xf32, #tpu.memory_space<vmem>>, vector<4x64xf32>,
    %c26 = arith.constant 26 : index
    %c0_127 = arith.constant 0 : index
    %c0_128 = arith.constant 0 : index
    %115 = vector.load %arg6[%c26, %c0_127, %c0_128] : memref<49x64x64xbf16, #tpu.memory_space<vmem>>, vector<1x64x64xbf16>
    %116 = vector.shape_cast %115 : vector<1x64x64xbf16> to vector<64x64xbf16>
    %cst_129 = arith.constant dense<0.000000e+00> : vector<4x64xf32>
    %117 = tpu.matmul %10, %116, %cst_129 {dimension_numbers = #tpu.dot_dimension_numbers<[1], [0], [0], [1], [0, 0, 1, 1], [], []>} : vector<4x64xbf16>, vector<64x64xbf16>, vector<4x64xf32> -> vector<4x64xf32>
    %c104 = arith.constant 104 : index
    %c0_130 = arith.constant 0 : index
    %118 = vector.load %arg17[%c104, %c0_130] : memref<196x64xf32, #tpu.memory_space<vmem>>, vector<4x64xf32>
    tpu.vector_store %arg17[%c104, %c0_130], %117 {strides = array<i32>} : memref<196x64xf32, #tpu.memory_space<vmem>>, vector<4x64xf32>,
    %c27 = arith.constant 27 : index
    %c0_131 = arith.constant 0 : index
    %c0_132 = arith.constant 0 : index
    %119 = vector.load %arg6[%c27, %c0_131, %c0_132] : memref<49x64x64xbf16, #tpu.memory_space<vmem>>, vector<1x64x64xbf16>
    %120 = vector.shape_cast %119 : vector<1x64x64xbf16> to vector<64x64xbf16>
    %cst_133 = arith.constant dense<0.000000e+00> : vector<4x64xf32>
    %121 = tpu.matmul %10, %120, %cst_133 {dimension_numbers = #tpu.dot_dimension_numbers<[1], [0], [0], [1], [0, 0, 1, 1], [], []>} : vector<4x64xbf16>, vector<64x64xbf16>, vector<4x64xf32> -> vector<4x64xf32>
    %c108 = arith.constant 108 : index
    %c0_134 = arith.constant 0 : index
    %122 = vector.load %arg17[%c108, %c0_134] : memref<196x64xf32, #tpu.memory_space<vmem>>, vector<4x64xf32>
    tpu.vector_store %arg17[%c108, %c0_134], %121 {strides = array<i32>} : memref<196x64xf32, #tpu.memory_space<vmem>>, vector<4x64xf32>,
    %c28_135 = arith.constant 28 : index
    %c0_136 = arith.constant 0 : index
    %c0_137 = arith.constant 0 : index
    %123 = vector.load %arg6[%c28_135, %c0_136, %c0_137] : memref<49x64x64xbf16, #tpu.memory_space<vmem>>, vector<1x64x64xbf16>
    %124 = vector.shape_cast %123 : vector<1x64x64xbf16> to vector<64x64xbf16>
    %cst_138 = arith.constant dense<0.000000e+00> : vector<4x64xf32>
    %125 = tpu.matmul %10, %124, %cst_138 {dimension_numbers = #tpu.dot_dimension_numbers<[1], [0], [0], [1], [0, 0, 1, 1], [], []>} : vector<4x64xbf16>, vector<64x64xbf16>, vector<4x64xf32> -> vector<4x64xf32>
    %c112 = arith.constant 112 : index
    %c0_139 = arith.constant 0 : index
    %126 = vector.load %arg17[%c112, %c0_139] : memref<196x64xf32, #tpu.memory_space<vmem>>, vector<4x64xf32>
    tpu.vector_store %arg17[%c112, %c0_139], %125 {strides = array<i32>} : memref<196x64xf32, #tpu.memory_space<vmem>>, vector<4x64xf32>,
    %c29 = arith.constant 29 : index
    %c0_140 = arith.constant 0 : index
    %c0_141 = arith.constant 0 : index
    %127 = vector.load %arg6[%c29, %c0_140, %c0_141] : memref<49x64x64xbf16, #tpu.memory_space<vmem>>, vector<1x64x64xbf16>
    %128 = vector.shape_cast %127 : vector<1x64x64xbf16> to vector<64x64xbf16>
    %cst_142 = arith.constant dense<0.000000e+00> : vector<4x64xf32>
    %129 = tpu.matmul %10, %128, %cst_142 {dimension_numbers = #tpu.dot_dimension_numbers<[1], [0], [0], [1], [0, 0, 1, 1], [], []>} : vector<4x64xbf16>, vector<64x64xbf16>, vector<4x64xf32> -> vector<4x64xf32>
    %c116 = arith.constant 116 : index
    %c0_143 = arith.constant 0 : index
    %130 = vector.load %arg17[%c116, %c0_143] : memref<196x64xf32, #tpu.memory_space<vmem>>, vector<4x64xf32>
    tpu.vector_store %arg17[%c116, %c0_143], %129 {strides = array<i32>} : memref<196x64xf32, #tpu.memory_space<vmem>>, vector<4x64xf32>,
    %c30 = arith.constant 30 : index
    %c0_144 = arith.constant 0 : index
    %c0_145 = arith.constant 0 : index
    %131 = vector.load %arg6[%c30, %c0_144, %c0_145] : memref<49x64x64xbf16, #tpu.memory_space<vmem>>, vector<1x64x64xbf16>
    %132 = vector.shape_cast %131 : vector<1x64x64xbf16> to vector<64x64xbf16>
    %cst_146 = arith.constant dense<0.000000e+00> : vector<4x64xf32>
    %133 = tpu.matmul %10, %132, %cst_146 {dimension_numbers = #tpu.dot_dimension_numbers<[1], [0], [0], [1], [0, 0, 1, 1], [], []>} : vector<4x64xbf16>, vector<64x64xbf16>, vector<4x64xf32> -> vector<4x64xf32>
    %c120 = arith.constant 120 : index
    %c0_147 = arith.constant 0 : index
    %134 = vector.load %arg17[%c120, %c0_147] : memref<196x64xf32, #tpu.memory_space<vmem>>, vector<4x64xf32>
    tpu.vector_store %arg17[%c120, %c0_147], %133 {strides = array<i32>} : memref<196x64xf32, #tpu.memory_space<vmem>>, vector<4x64xf32>,
    %c31 = arith.constant 31 : index
    %c0_148 = arith.constant 0 : index
    %c0_149 = arith.constant 0 : index
    %135 = vector.load %arg6[%c31, %c0_148, %c0_149] : memref<49x64x64xbf16, #tpu.memory_space<vmem>>, vector<1x64x64xbf16>
    %136 = vector.shape_cast %135 : vector<1x64x64xbf16> to vector<64x64xbf16>
    %cst_150 = arith.constant dense<0.000000e+00> : vector<4x64xf32>
    %137 = tpu.matmul %10, %136, %cst_150 {dimension_numbers = #tpu.dot_dimension_numbers<[1], [0], [0], [1], [0, 0, 1, 1], [], []>} : vector<4x64xbf16>, vector<64x64xbf16>, vector<4x64xf32> -> vector<4x64xf32>
    %c124 = arith.constant 124 : index
    %c0_151 = arith.constant 0 : index
    %138 = vector.load %arg17[%c124, %c0_151] : memref<196x64xf32, #tpu.memory_space<vmem>>, vector<4x64xf32>
    tpu.vector_store %arg17[%c124, %c0_151], %137 {strides = array<i32>} : memref<196x64xf32, #tpu.memory_space<vmem>>, vector<4x64xf32>,
    %c32_152 = arith.constant 32 : index
    %c0_153 = arith.constant 0 : index
    %c0_154 = arith.constant 0 : index
    %139 = vector.load %arg6[%c32_152, %c0_153, %c0_154] : memref<49x64x64xbf16, #tpu.memory_space<vmem>>, vector<1x64x64xbf16>
    %140 = vector.shape_cast %139 : vector<1x64x64xbf16> to vector<64x64xbf16>
    %cst_155 = arith.constant dense<0.000000e+00> : vector<4x64xf32>
    %141 = tpu.matmul %10, %140, %cst_155 {dimension_numbers = #tpu.dot_dimension_numbers<[1], [0], [0], [1], [0, 0, 1, 1], [], []>} : vector<4x64xbf16>, vector<64x64xbf16>, vector<4x64xf32> -> vector<4x64xf32>
    %c128 = arith.constant 128 : index
    %c0_156 = arith.constant 0 : index
    %142 = vector.load %arg17[%c128, %c0_156] : memref<196x64xf32, #tpu.memory_space<vmem>>, vector<4x64xf32>
    tpu.vector_store %arg17[%c128, %c0_156], %141 {strides = array<i32>} : memref<196x64xf32, #tpu.memory_space<vmem>>, vector<4x64xf32>,
    %c33 = arith.constant 33 : index
    %c0_157 = arith.constant 0 : index
    %c0_158 = arith.constant 0 : index
    %143 = vector.load %arg6[%c33, %c0_157, %c0_158] : memref<49x64x64xbf16, #tpu.memory_space<vmem>>, vector<1x64x64xbf16>
    %144 = vector.shape_cast %143 : vector<1x64x64xbf16> to vector<64x64xbf16>
    %cst_159 = arith.constant dense<0.000000e+00> : vector<4x64xf32>
    %145 = tpu.matmul %10, %144, %cst_159 {dimension_numbers = #tpu.dot_dimension_numbers<[1], [0], [0], [1], [0, 0, 1, 1], [], []>} : vector<4x64xbf16>, vector<64x64xbf16>, vector<4x64xf32> -> vector<4x64xf32>
    %c132 = arith.constant 132 : index
    %c0_160 = arith.constant 0 : index
    %146 = vector.load %arg17[%c132, %c0_160] : memref<196x64xf32, #tpu.memory_space<vmem>>, vector<4x64xf32>
    tpu.vector_store %arg17[%c132, %c0_160], %145 {strides = array<i32>} : memref<196x64xf32, #tpu.memory_space<vmem>>, vector<4x64xf32>,
    %c34 = arith.constant 34 : index
    %c0_161 = arith.constant 0 : index
    %c0_162 = arith.constant 0 : index
    %147 = vector.load %arg6[%c34, %c0_161, %c0_162] : memref<49x64x64xbf16, #tpu.memory_space<vmem>>, vector<1x64x64xbf16>
    %148 = vector.shape_cast %147 : vector<1x64x64xbf16> to vector<64x64xbf16>
    %cst_163 = arith.constant dense<0.000000e+00> : vector<4x64xf32>
    %149 = tpu.matmul %10, %148, %cst_163 {dimension_numbers = #tpu.dot_dimension_numbers<[1], [0], [0], [1], [0, 0, 1, 1], [], []>} : vector<4x64xbf16>, vector<64x64xbf16>, vector<4x64xf32> -> vector<4x64xf32>
    %c136 = arith.constant 136 : index
    %c0_164 = arith.constant 0 : index
    %150 = vector.load %arg17[%c136, %c0_164] : memref<196x64xf32, #tpu.memory_space<vmem>>, vector<4x64xf32>
    tpu.vector_store %arg17[%c136, %c0_164], %149 {strides = array<i32>} : memref<196x64xf32, #tpu.memory_space<vmem>>, vector<4x64xf32>,
    %c35 = arith.constant 35 : index
    %c0_165 = arith.constant 0 : index
    %c0_166 = arith.constant 0 : index
    %151 = vector.load %arg6[%c35, %c0_165, %c0_166] : memref<49x64x64xbf16, #tpu.memory_space<vmem>>, vector<1x64x64xbf16>
    %152 = vector.shape_cast %151 : vector<1x64x64xbf16> to vector<64x64xbf16>
    %cst_167 = arith.constant dense<0.000000e+00> : vector<4x64xf32>
    %153 = tpu.matmul %10, %152, %cst_167 {dimension_numbers = #tpu.dot_dimension_numbers<[1], [0], [0], [1], [0, 0, 1, 1], [], []>} : vector<4x64xbf16>, vector<64x64xbf16>, vector<4x64xf32> -> vector<4x64xf32>
    %c140 = arith.constant 140 : index
    %c0_168 = arith.constant 0 : index
    %154 = vector.load %arg17[%c140, %c0_168] : memref<196x64xf32, #tpu.memory_space<vmem>>, vector<4x64xf32>
    tpu.vector_store %arg17[%c140, %c0_168], %153 {strides = array<i32>} : memref<196x64xf32, #tpu.memory_space<vmem>>, vector<4x64xf32>,
    %c36_169 = arith.constant 36 : index
    %c0_170 = arith.constant 0 : index
    %c0_171 = arith.constant 0 : index
    %155 = vector.load %arg6[%c36_169, %c0_170, %c0_171] : memref<49x64x64xbf16, #tpu.memory_space<vmem>>, vector<1x64x64xbf16>
    %156 = vector.shape_cast %155 : vector<1x64x64xbf16> to vector<64x64xbf16>
    %cst_172 = arith.constant dense<0.000000e+00> : vector<4x64xf32>
    %157 = tpu.matmul %10, %156, %cst_172 {dimension_numbers = #tpu.dot_dimension_numbers<[1], [0], [0], [1], [0, 0, 1, 1], [], []>} : vector<4x64xbf16>, vector<64x64xbf16>, vector<4x64xf32> -> vector<4x64xf32>
    %c144 = arith.constant 144 : index
    %c0_173 = arith.constant 0 : index
    %158 = vector.load %arg17[%c144, %c0_173] : memref<196x64xf32, #tpu.memory_space<vmem>>, vector<4x64xf32>
    tpu.vector_store %arg17[%c144, %c0_173], %157 {strides = array<i32>} : memref<196x64xf32, #tpu.memory_space<vmem>>, vector<4x64xf32>,
    %c37 = arith.constant 37 : index
    %c0_174 = arith.constant 0 : index
    %c0_175 = arith.constant 0 : index
    %159 = vector.load %arg6[%c37, %c0_174, %c0_175] : memref<49x64x64xbf16, #tpu.memory_space<vmem>>, vector<1x64x64xbf16>
    %160 = vector.shape_cast %159 : vector<1x64x64xbf16> to vector<64x64xbf16>
    %cst_176 = arith.constant dense<0.000000e+00> : vector<4x64xf32>
    %161 = tpu.matmul %10, %160, %cst_176 {dimension_numbers = #tpu.dot_dimension_numbers<[1], [0], [0], [1], [0, 0, 1, 1], [], []>} : vector<4x64xbf16>, vector<64x64xbf16>, vector<4x64xf32> -> vector<4x64xf32>
    %c148 = arith.constant 148 : index
    %c0_177 = arith.constant 0 : index
    %162 = vector.load %arg17[%c148, %c0_177] : memref<196x64xf32, #tpu.memory_space<vmem>>, vector<4x64xf32>
    tpu.vector_store %arg17[%c148, %c0_177], %161 {strides = array<i32>} : memref<196x64xf32, #tpu.memory_space<vmem>>, vector<4x64xf32>,
    %c38 = arith.constant 38 : index
    %c0_178 = arith.constant 0 : index
    %c0_179 = arith.constant 0 : index
    %163 = vector.load %arg6[%c38, %c0_178, %c0_179] : memref<49x64x64xbf16, #tpu.memory_space<vmem>>, vector<1x64x64xbf16>
    %164 = vector.shape_cast %163 : vector<1x64x64xbf16> to vector<64x64xbf16>
    %cst_180 = arith.constant dense<0.000000e+00> : vector<4x64xf32>
    %165 = tpu.matmul %10, %164, %cst_180 {dimension_numbers = #tpu.dot_dimension_numbers<[1], [0], [0], [1], [0, 0, 1, 1], [], []>} : vector<4x64xbf16>, vector<64x64xbf16>, vector<4x64xf32> -> vector<4x64xf32>
    %c152 = arith.constant 152 : index
    %c0_181 = arith.constant 0 : index
    %166 = vector.load %arg17[%c152, %c0_181] : memref<196x64xf32, #tpu.memory_space<vmem>>, vector<4x64xf32>
    tpu.vector_store %arg17[%c152, %c0_181], %165 {strides = array<i32>} : memref<196x64xf32, #tpu.memory_space<vmem>>, vector<4x64xf32>,
    %c39 = arith.constant 39 : index
    %c0_182 = arith.constant 0 : index
    %c0_183 = arith.constant 0 : index
    %167 = vector.load %arg6[%c39, %c0_182, %c0_183] : memref<49x64x64xbf16, #tpu.memory_space<vmem>>, vector<1x64x64xbf16>
    %168 = vector.shape_cast %167 : vector<1x64x64xbf16> to vector<64x64xbf16>
    %cst_184 = arith.constant dense<0.000000e+00> : vector<4x64xf32>
    %169 = tpu.matmul %10, %168, %cst_184 {dimension_numbers = #tpu.dot_dimension_numbers<[1], [0], [0], [1], [0, 0, 1, 1], [], []>} : vector<4x64xbf16>, vector<64x64xbf16>, vector<4x64xf32> -> vector<4x64xf32>
    %c156 = arith.constant 156 : index
    %c0_185 = arith.constant 0 : index
    %170 = vector.load %arg17[%c156, %c0_185] : memref<196x64xf32, #tpu.memory_space<vmem>>, vector<4x64xf32>
    tpu.vector_store %arg17[%c156, %c0_185], %169 {strides = array<i32>} : memref<196x64xf32, #tpu.memory_space<vmem>>, vector<4x64xf32>,
    %c40_186 = arith.constant 40 : index
    %c0_187 = arith.constant 0 : index
    %c0_188 = arith.constant 0 : index
    %171 = vector.load %arg6[%c40_186, %c0_187, %c0_188] : memref<49x64x64xbf16, #tpu.memory_space<vmem>>, vector<1x64x64xbf16>
    %172 = vector.shape_cast %171 : vector<1x64x64xbf16> to vector<64x64xbf16>
    %cst_189 = arith.constant dense<0.000000e+00> : vector<4x64xf32>
    %173 = tpu.matmul %10, %172, %cst_189 {dimension_numbers = #tpu.dot_dimension_numbers<[1], [0], [0], [1], [0, 0, 1, 1], [], []>} : vector<4x64xbf16>, vector<64x64xbf16>, vector<4x64xf32> -> vector<4x64xf32>
    %c160 = arith.constant 160 : index
    %c0_190 = arith.constant 0 : index
    %174 = vector.load %arg17[%c160, %c0_190] : memref<196x64xf32, #tpu.memory_space<vmem>>, vector<4x64xf32>
    tpu.vector_store %arg17[%c160, %c0_190], %173 {strides = array<i32>} : memref<196x64xf32, #tpu.memory_space<vmem>>, vector<4x64xf32>,
    %c41 = arith.constant 41 : index
    %c0_191 = arith.constant 0 : index
    %c0_192 = arith.constant 0 : index
    %175 = vector.load %arg6[%c41, %c0_191, %c0_192] : memref<49x64x64xbf16, #tpu.memory_space<vmem>>, vector<1x64x64xbf16>
    %176 = vector.shape_cast %175 : vector<1x64x64xbf16> to vector<64x64xbf16>
    %cst_193 = arith.constant dense<0.000000e+00> : vector<4x64xf32>
    %177 = tpu.matmul %10, %176, %cst_193 {dimension_numbers = #tpu.dot_dimension_numbers<[1], [0], [0], [1], [0, 0, 1, 1], [], []>} : vector<4x64xbf16>, vector<64x64xbf16>, vector<4x64xf32> -> vector<4x64xf32>
    %c164 = arith.constant 164 : index
    %c0_194 = arith.constant 0 : index
    %178 = vector.load %arg17[%c164, %c0_194] : memref<196x64xf32, #tpu.memory_space<vmem>>, vector<4x64xf32>
    tpu.vector_store %arg17[%c164, %c0_194], %177 {strides = array<i32>} : memref<196x64xf32, #tpu.memory_space<vmem>>, vector<4x64xf32>,
    %c42 = arith.constant 42 : index
    %c0_195 = arith.constant 0 : index
    %c0_196 = arith.constant 0 : index
    %179 = vector.load %arg6[%c42, %c0_195, %c0_196] : memref<49x64x64xbf16, #tpu.memory_space<vmem>>, vector<1x64x64xbf16>
    %180 = vector.shape_cast %179 : vector<1x64x64xbf16> to vector<64x64xbf16>
    %cst_197 = arith.constant dense<0.000000e+00> : vector<4x64xf32>
    %181 = tpu.matmul %10, %180, %cst_197 {dimension_numbers = #tpu.dot_dimension_numbers<[1], [0], [0], [1], [0, 0, 1, 1], [], []>} : vector<4x64xbf16>, vector<64x64xbf16>, vector<4x64xf32> -> vector<4x64xf32>
    %c168 = arith.constant 168 : index
    %c0_198 = arith.constant 0 : index
    %182 = vector.load %arg17[%c168, %c0_198] : memref<196x64xf32, #tpu.memory_space<vmem>>, vector<4x64xf32>
    tpu.vector_store %arg17[%c168, %c0_198], %181 {strides = array<i32>} : memref<196x64xf32, #tpu.memory_space<vmem>>, vector<4x64xf32>,
    %c43 = arith.constant 43 : index
    %c0_199 = arith.constant 0 : index
    %c0_200 = arith.constant 0 : index
    %183 = vector.load %arg6[%c43, %c0_199, %c0_200] : memref<49x64x64xbf16, #tpu.memory_space<vmem>>, vector<1x64x64xbf16>
    %184 = vector.shape_cast %183 : vector<1x64x64xbf16> to vector<64x64xbf16>
    %cst_201 = arith.constant dense<0.000000e+00> : vector<4x64xf32>
    %185 = tpu.matmul %10, %184, %cst_201 {dimension_numbers = #tpu.dot_dimension_numbers<[1], [0], [0], [1], [0, 0, 1, 1], [], []>} : vector<4x64xbf16>, vector<64x64xbf16>, vector<4x64xf32> -> vector<4x64xf32>
    %c172 = arith.constant 172 : index
    %c0_202 = arith.constant 0 : index
    %186 = vector.load %arg17[%c172, %c0_202] : memref<196x64xf32, #tpu.memory_space<vmem>>, vector<4x64xf32>
    tpu.vector_store %arg17[%c172, %c0_202], %185 {strides = array<i32>} : memref<196x64xf32, #tpu.memory_space<vmem>>, vector<4x64xf32>,
    %c44_203 = arith.constant 44 : index
    %c0_204 = arith.constant 0 : index
    %c0_205 = arith.constant 0 : index
    %187 = vector.load %arg6[%c44_203, %c0_204, %c0_205] : memref<49x64x64xbf16, #tpu.memory_space<vmem>>, vector<1x64x64xbf16>
    %188 = vector.shape_cast %187 : vector<1x64x64xbf16> to vector<64x64xbf16>
    %cst_206 = arith.constant dense<0.000000e+00> : vector<4x64xf32>
    %189 = tpu.matmul %10, %188, %cst_206 {dimension_numbers = #tpu.dot_dimension_numbers<[1], [0], [0], [1], [0, 0, 1, 1], [], []>} : vector<4x64xbf16>, vector<64x64xbf16>, vector<4x64xf32> -> vector<4x64xf32>
    %c176 = arith.constant 176 : index
    %c0_207 = arith.constant 0 : index
    %190 = vector.load %arg17[%c176, %c0_207] : memref<196x64xf32, #tpu.memory_space<vmem>>, vector<4x64xf32>
    tpu.vector_store %arg17[%c176, %c0_207], %189 {strides = array<i32>} : memref<196x64xf32, #tpu.memory_space<vmem>>, vector<4x64xf32>,
    %c45 = arith.constant 45 : index
    %c0_208 = arith.constant 0 : index
    %c0_209 = arith.constant 0 : index
    %191 = vector.load %arg6[%c45, %c0_208, %c0_209] : memref<49x64x64xbf16, #tpu.memory_space<vmem>>, vector<1x64x64xbf16>
    %192 = vector.shape_cast %191 : vector<1x64x64xbf16> to vector<64x64xbf16>
    %cst_210 = arith.constant dense<0.000000e+00> : vector<4x64xf32>
    %193 = tpu.matmul %10, %192, %cst_210 {dimension_numbers = #tpu.dot_dimension_numbers<[1], [0], [0], [1], [0, 0, 1, 1], [], []>} : vector<4x64xbf16>, vector<64x64xbf16>, vector<4x64xf32> -> vector<4x64xf32>
    %c180 = arith.constant 180 : index
    %c0_211 = arith.constant 0 : index
    %194 = vector.load %arg17[%c180, %c0_211] : memref<196x64xf32, #tpu.memory_space<vmem>>, vector<4x64xf32>
    tpu.vector_store %arg17[%c180, %c0_211], %193 {strides = array<i32>} : memref<196x64xf32, #tpu.memory_space<vmem>>, vector<4x64xf32>,
    %c46 = arith.constant 46 : index
    %c0_212 = arith.constant 0 : index
    %c0_213 = arith.constant 0 : index
    %195 = vector.load %arg6[%c46, %c0_212, %c0_213] : memref<49x64x64xbf16, #tpu.memory_space<vmem>>, vector<1x64x64xbf16>
    %196 = vector.shape_cast %195 : vector<1x64x64xbf16> to vector<64x64xbf16>
    %cst_214 = arith.constant dense<0.000000e+00> : vector<4x64xf32>
    %197 = tpu.matmul %10, %196, %cst_214 {dimension_numbers = #tpu.dot_dimension_numbers<[1], [0], [0], [1], [0, 0, 1, 1], [], []>} : vector<4x64xbf16>, vector<64x64xbf16>, vector<4x64xf32> -> vector<4x64xf32>
    %c184 = arith.constant 184 : index
    %c0_215 = arith.constant 0 : index
    %198 = vector.load %arg17[%c184, %c0_215] : memref<196x64xf32, #tpu.memory_space<vmem>>, vector<4x64xf32>
    tpu.vector_store %arg17[%c184, %c0_215], %197 {strides = array<i32>} : memref<196x64xf32, #tpu.memory_space<vmem>>, vector<4x64xf32>,
    %c47 = arith.constant 47 : index
    %c0_216 = arith.constant 0 : index
    %c0_217 = arith.constant 0 : index
    %199 = vector.load %arg6[%c47, %c0_216, %c0_217] : memref<49x64x64xbf16, #tpu.memory_space<vmem>>, vector<1x64x64xbf16>
    %200 = vector.shape_cast %199 : vector<1x64x64xbf16> to vector<64x64xbf16>
    %cst_218 = arith.constant dense<0.000000e+00> : vector<4x64xf32>
    %201 = tpu.matmul %10, %200, %cst_218 {dimension_numbers = #tpu.dot_dimension_numbers<[1], [0], [0], [1], [0, 0, 1, 1], [], []>} : vector<4x64xbf16>, vector<64x64xbf16>, vector<4x64xf32> -> vector<4x64xf32>
    %c188 = arith.constant 188 : index
    %c0_219 = arith.constant 0 : index
    %202 = vector.load %arg17[%c188, %c0_219] : memref<196x64xf32, #tpu.memory_space<vmem>>, vector<4x64xf32>
    tpu.vector_store %arg17[%c188, %c0_219], %201 {strides = array<i32>} : memref<196x64xf32, #tpu.memory_space<vmem>>, vector<4x64xf32>,
    %c48_220 = arith.constant 48 : index
    %c0_221 = arith.constant 0 : index
    %c0_222 = arith.constant 0 : index
    %203 = vector.load %arg6[%c48_220, %c0_221, %c0_222] : memref<49x64x64xbf16, #tpu.memory_space<vmem>>, vector<1x64x64xbf16>
    %204 = vector.shape_cast %203 : vector<1x64x64xbf16> to vector<64x64xbf16>
    %cst_223 = arith.constant dense<0.000000e+00> : vector<4x64xf32>
    %205 = tpu.matmul %10, %204, %cst_223 {dimension_numbers = #tpu.dot_dimension_numbers<[1], [0], [0], [1], [0, 0, 1, 1], [], []>} : vector<4x64xbf16>, vector<64x64xbf16>, vector<4x64xf32> -> vector<4x64xf32>
    %c192 = arith.constant 192 : index
    %c0_224 = arith.constant 0 : index
    %206 = vector.load %arg17[%c192, %c0_224] : memref<196x64xf32, #tpu.memory_space<vmem>>, vector<4x64xf32>
    tpu.vector_store %arg17[%c192, %c0_224], %205 {strides = array<i32>} : memref<196x64xf32, #tpu.memory_space<vmem>>, vector<4x64xf32>,
    %c0_225 = arith.constant 0 : index
    %c0_226 = arith.constant 0 : index
    %207 = vector.load %arg9[%c0_225, %c0_226] : memref<8x196xbf16, #tpu.memory_space<vmem>>, vector<8x196xbf16>
    %c0_227 = arith.constant 0 : index
    %c0_228 = arith.constant 0 : index
    %208 = vector.load %arg17[%c0_227, %c0_228] : memref<196x64xf32, #tpu.memory_space<vmem>>, vector<196x64xf32>
    %209 = arith.truncf %208 : vector<196x64xf32> to vector<196x64xbf16>
    %cst_229 = arith.constant dense<0.000000e+00> : vector<8x64xf32>
    %210 = tpu.matmul %207, %209, %cst_229 {dimension_numbers = #tpu.dot_dimension_numbers<[1], [0], [0], [1], [0, 0, 1, 1], [], []>} : vector<8x196xbf16>, vector<196x64xbf16>, vector<8x64xf32> -> vector<8x64xf32>
    %211 = vector.extract_strided_slice %4 {offsets = [0, 0], sizes = [8, 1], strides = [1, 1]} : vector<8x16xf32> to vector<8x1xf32>
    %212 = vector.broadcast %211 : vector<8x1xf32> to vector<8x64xf32>
    %213 = arith.mulf %210, %212 : vector<8x64xf32>
    %214 = vector.extract_strided_slice %4 {offsets = [0, 1], sizes = [8, 1], strides = [1, 1]} : vector<8x16xf32> to vector<8x1xf32>
    %215 = vector.broadcast %214 : vector<8x1xf32> to vector<8x64xf32>
    %216 = arith.addf %213, %215 : vector<8x64xf32>
    %cst_230 = arith.constant 0.000000e+00 : f32
    %217 = vector.broadcast %cst_230 : f32 to vector<8x64xf32>
    %218 = arith.maximumf %216, %217 : vector<8x64xf32>
    %c0_231 = arith.constant 0 : index
    %c0_232 = arith.constant 0 : index
    %219 = vector.load %arg11[%c0_231, %c0_232] : memref<144x512xbf16, #tpu.memory_space<vmem>>, vector<144x512xbf16>
    %c0_233 = arith.constant 0 : index
    %c0_234 = arith.constant 0 : index
    %c0_235 = arith.constant 0 : index
    %220 = vector.load %arg4[%c0_233, %c0_234, %c0_235] : memref<1x512x64xbf16, #tpu.memory_space<vmem>>, vector<1x512x64xbf16>
    %221 = vector.shape_cast %220 : vector<1x512x64xbf16> to vector<512x64xbf16>
    %cst_236 = arith.constant dense<0.000000e+00> : vector<144x64xf32>
    %222 = tpu.matmul %219, %221, %cst_236 {dimension_numbers = #tpu.dot_dimension_numbers<[1], [0], [0], [1], [0, 0, 1, 1], [], []>} : vector<144x512xbf16>, vector<512x64xbf16>, vector<144x64xf32> -> vector<144x64xf32>
    %c0_237 = arith.constant 0 : index
    %c0_238 = arith.constant 0 : index
    %223 = vector.load %arg16[%c0_237, %c0_238] : memref<153x64xf32, #tpu.memory_space<vmem>>, vector<144x64xf32>
    tpu.vector_store %arg16[%c0_237, %c0_238], %222 {strides = array<i32>} : memref<153x64xf32, #tpu.memory_space<vmem>>, vector<144x64xf32>,
    %c144_239 = arith.constant 144 : index
    %c0_240 = arith.constant 0 : index
    %224 = vector.load %arg16[%c144_239, %c0_240] : memref<153x64xf32, #tpu.memory_space<vmem>>, vector<8x64xf32>
    tpu.vector_store %arg16[%c144_239, %c0_240], %218 {strides = array<i32>} : memref<153x64xf32, #tpu.memory_space<vmem>>, vector<8x64xf32>,
    %c152_241 = arith.constant 152 : index
    %c0_242 = arith.constant 0 : index
    %225 = vector.load %arg16[%c152_241, %c0_242] : memref<153x64xf32, #tpu.memory_space<vmem>>, vector<1x64xf32>
    tpu.vector_store %arg16[%c152_241, %c0_242], %3 {strides = array<i32>} : memref<153x64xf32, #tpu.memory_space<vmem>>, vector<1x64xf32>,
    %c0_243 = arith.constant 0 : index
    %c0_244 = arith.constant 0 : index
    %226 = vector.load %arg16[%c0_243, %c0_244] : memref<153x64xf32, #tpu.memory_space<vmem>>, vector<153x64xf32>
    %227 = arith.truncf %226 : vector<153x64xf32> to vector<153x64xbf16>
    %cst_245 = arith.constant dense<0.000000e+00> : vector<153x256xf32>
    %228 = tpu.matmul %227, %7, %cst_245 {dimension_numbers = #tpu.dot_dimension_numbers<[1], [0], [0], [1], [0, 0, 1, 1], [], []>} : vector<153x64xbf16>, vector<64x256xbf16>, vector<153x256xf32> -> vector<153x256xf32>
    %229 = vector.extract_strided_slice %228 {offsets = [144, 0], sizes = [8, 256], strides = [1, 1]} : vector<153x256xf32> to vector<8x256xf32>
    %230 = vector.extract_strided_slice %228 {offsets = [152, 0], sizes = [1, 256], strides = [1, 1]} : vector<153x256xf32> to vector<1x256xf32>
    %231 = arith.addf %1, %229 : vector<8x256xf32>
    %232 = arith.negf %230 : vector<1x256xf32>
    %233 = math.exp %232 : vector<1x256xf32>
    %cst_246 = arith.constant 1.000000e+00 : f32
    %234 = vector.broadcast %cst_246 : f32 to vector<1x256xf32>
    %235 = arith.addf %234, %233 : vector<1x256xf32>
    %236 = arith.divf %234, %235 : vector<1x256xf32>
    %237 = vector.broadcast %236 : vector<1x256xf32> to vector<8x256xf32>
    %238 = arith.mulf %1, %237 : vector<8x256xf32>
    %c0_247 = arith.constant 0 : index
    %c0_248 = arith.constant 0 : index
    %c0_249 = arith.constant 0 : index
    %239 = vector.load %arg10[%c0_247, %c0_248, %c0_249] : memref<6x72x8xbf16, #tpu.memory_space<vmem>>, vector<1x72x8xbf16>
    %240 = vector.shape_cast %239 : vector<1x72x8xbf16> to vector<72x8xbf16>
    %241 = arith.truncf %231 : vector<8x256xf32> to vector<8x256xbf16>
    %cst_250 = arith.constant dense<0.000000e+00> : vector<72x256xf32>
    %242 = tpu.matmul %240, %241, %cst_250 {dimension_numbers = #tpu.dot_dimension_numbers<[1], [0], [0], [1], [0, 0, 1, 1], [], []>} : vector<72x8xbf16>, vector<8x256xbf16>, vector<72x256xf32> -> vector<72x256xf32>
    %cst_251 = arith.constant 0.000000e+00 : f32
    %243 = vector.broadcast %cst_251 : f32 to vector<8x256xf32>
    %244 = vector.extract_strided_slice %242 {offsets = [0, 0], sizes = [8, 256], strides = [1, 1]} : vector<72x256xf32> to vector<8x256xf32>
    %c17_i32 = arith.constant 17 : i32
    %245 = tpu.dynamic_rotate %244 by %c17_i32 dim 1 : vector<8x256xf32>, i32 -> vector<8x256xf32>
    %246 = vector.extract_strided_slice %5 {offsets = [0, 0], sizes = [1, 256], strides = [1, 1]} : vector<9x256xf32> to vector<1x256xf32>
    %247 = vector.broadcast %246 : vector<1x256xf32> to vector<8x256xf32>
    %248 = arith.mulf %245, %247 : vector<8x256xf32>
    %249 = arith.addf %243, %248 : vector<8x256xf32>
    %250 = vector.extract_strided_slice %242 {offsets = [8, 0], sizes = [8, 256], strides = [1, 1]} : vector<72x256xf32> to vector<8x256xf32>
    %c16_i32 = arith.constant 16 : i32
    %251 = tpu.dynamic_rotate %250 by %c16_i32 dim 1 : vector<8x256xf32>, i32 -> vector<8x256xf32>
    %252 = vector.extract_strided_slice %5 {offsets = [1, 0], sizes = [1, 256], strides = [1, 1]} : vector<9x256xf32> to vector<1x256xf32>
    %253 = vector.broadcast %252 : vector<1x256xf32> to vector<8x256xf32>
    %254 = arith.mulf %251, %253 : vector<8x256xf32>
    %255 = arith.addf %249, %254 : vector<8x256xf32>
    %256 = vector.extract_strided_slice %242 {offsets = [16, 0], sizes = [8, 256], strides = [1, 1]} : vector<72x256xf32> to vector<8x256xf32>
    %c15_i32 = arith.constant 15 : i32
    %257 = tpu.dynamic_rotate %256 by %c15_i32 dim 1 : vector<8x256xf32>, i32 -> vector<8x256xf32>
    %258 = vector.extract_strided_slice %5 {offsets = [2, 0], sizes = [1, 256], strides = [1, 1]} : vector<9x256xf32> to vector<1x256xf32>
    %259 = vector.broadcast %258 : vector<1x256xf32> to vector<8x256xf32>
    %260 = arith.mulf %257, %259 : vector<8x256xf32>
    %261 = arith.addf %255, %260 : vector<8x256xf32>
    %262 = vector.extract_strided_slice %242 {offsets = [24, 0], sizes = [8, 256], strides = [1, 1]} : vector<72x256xf32> to vector<8x256xf32>
    %c1_i32 = arith.constant 1 : i32
    %263 = tpu.dynamic_rotate %262 by %c1_i32 dim 1 : vector<8x256xf32>, i32 -> vector<8x256xf32>
    %264 = vector.extract_strided_slice %5 {offsets = [3, 0], sizes = [1, 256], strides = [1, 1]} : vector<9x256xf32> to vector<1x256xf32>
    %265 = vector.broadcast %264 : vector<1x256xf32> to vector<8x256xf32>
    %266 = arith.mulf %263, %265 : vector<8x256xf32>
    %267 = arith.addf %261, %266 : vector<8x256xf32>
    %268 = vector.extract_strided_slice %242 {offsets = [32, 0], sizes = [8, 256], strides = [1, 1]} : vector<72x256xf32> to vector<8x256xf32>
    %269 = arith.addf %267, %268 : vector<8x256xf32>
    %270 = vector.extract_strided_slice %242 {offsets = [40, 0], sizes = [8, 256], strides = [1, 1]} : vector<72x256xf32> to vector<8x256xf32>
    %c255_i32 = arith.constant 255 : i32
    %271 = tpu.dynamic_rotate %270 by %c255_i32 dim 1 : vector<8x256xf32>, i32 -> vector<8x256xf32>
    %272 = vector.extract_strided_slice %5 {offsets = [5, 0], sizes = [1, 256], strides = [1, 1]} : vector<9x256xf32> to vector<1x256xf32>
    %273 = vector.broadcast %272 : vector<1x256xf32> to vector<8x256xf32>
    %274 = arith.mulf %271, %273 : vector<8x256xf32>
    %275 = arith.addf %269, %274 : vector<8x256xf32>
    %276 = vector.extract_strided_slice %242 {offsets = [48, 0], sizes = [8, 256], strides = [1, 1]} : vector<72x256xf32> to vector<8x256xf32>
    %c241_i32 = arith.constant 241 : i32
    %277 = tpu.dynamic_rotate %276 by %c241_i32 dim 1 : vector<8x256xf32>, i32 -> vector<8x256xf32>
    %278 = vector.extract_strided_slice %5 {offsets = [6, 0], sizes = [1, 256], strides = [1, 1]} : vector<9x256xf32> to vector<1x256xf32>
    %279 = vector.broadcast %278 : vector<1x256xf32> to vector<8x256xf32>
    %280 = arith.mulf %277, %279 : vector<8x256xf32>
    %281 = arith.addf %275, %280 : vector<8x256xf32>
    %282 = vector.extract_strided_slice %242 {offsets = [56, 0], sizes = [8, 256], strides = [1, 1]} : vector<72x256xf32> to vector<8x256xf32>
    %c240_i32 = arith.constant 240 : i32
    %283 = tpu.dynamic_rotate %282 by %c240_i32 dim 1 : vector<8x256xf32>, i32 -> vector<8x256xf32>
    %284 = vector.extract_strided_slice %5 {offsets = [7, 0], sizes = [1, 256], strides = [1, 1]} : vector<9x256xf32> to vector<1x256xf32>
    %285 = vector.broadcast %284 : vector<1x256xf32> to vector<8x256xf32>
    %286 = arith.mulf %283, %285 : vector<8x256xf32>
    %287 = arith.addf %281, %286 : vector<8x256xf32>
    %288 = vector.extract_strided_slice %242 {offsets = [64, 0], sizes = [8, 256], strides = [1, 1]} : vector<72x256xf32> to vector<8x256xf32>
    %c239_i32 = arith.constant 239 : i32
    %289 = tpu.dynamic_rotate %288 by %c239_i32 dim 1 : vector<8x256xf32>, i32 -> vector<8x256xf32>
    %290 = vector.extract_strided_slice %5 {offsets = [8, 0], sizes = [1, 256], strides = [1, 1]} : vector<9x256xf32> to vector<1x256xf32>
    %291 = vector.broadcast %290 : vector<1x256xf32> to vector<8x256xf32>
    %292 = arith.mulf %289, %291 : vector<8x256xf32>
    %293 = arith.addf %287, %292 : vector<8x256xf32>
    %c1_252 = arith.constant 1 : index
    %c0_253 = arith.constant 0 : index
    %c0_254 = arith.constant 0 : index
    %294 = vector.load %arg10[%c1_252, %c0_253, %c0_254] : memref<6x72x8xbf16, #tpu.memory_space<vmem>>, vector<1x72x8xbf16>
    %295 = vector.shape_cast %294 : vector<1x72x8xbf16> to vector<72x8xbf16>
    %296 = arith.truncf %238 : vector<8x256xf32> to vector<8x256xbf16>
    %cst_255 = arith.constant dense<0.000000e+00> : vector<72x256xf32>
    %297 = tpu.matmul %295, %296, %cst_255 {dimension_numbers = #tpu.dot_dimension_numbers<[1], [0], [0], [1], [0, 0, 1, 1], [], []>} : vector<72x8xbf16>, vector<8x256xbf16>, vector<72x256xf32> -> vector<72x256xf32>
    %cst_256 = arith.constant 0.000000e+00 : f32
    %298 = vector.broadcast %cst_256 : f32 to vector<8x256xf32>
    %299 = vector.extract_strided_slice %297 {offsets = [0, 0], sizes = [8, 256], strides = [1, 1]} : vector<72x256xf32> to vector<8x256xf32>
    %c17_i32_257 = arith.constant 17 : i32
    %300 = tpu.dynamic_rotate %299 by %c17_i32_257 dim 1 : vector<8x256xf32>, i32 -> vector<8x256xf32>
    %301 = vector.extract_strided_slice %5 {offsets = [0, 0], sizes = [1, 256], strides = [1, 1]} : vector<9x256xf32> to vector<1x256xf32>
    %302 = vector.broadcast %301 : vector<1x256xf32> to vector<8x256xf32>
    %303 = arith.mulf %300, %302 : vector<8x256xf32>
    %304 = arith.addf %298, %303 : vector<8x256xf32>
    %305 = vector.extract_strided_slice %297 {offsets = [8, 0], sizes = [8, 256], strides = [1, 1]} : vector<72x256xf32> to vector<8x256xf32>
    %c16_i32_258 = arith.constant 16 : i32
    %306 = tpu.dynamic_rotate %305 by %c16_i32_258 dim 1 : vector<8x256xf32>, i32 -> vector<8x256xf32>
    %307 = vector.extract_strided_slice %5 {offsets = [1, 0], sizes = [1, 256], strides = [1, 1]} : vector<9x256xf32> to vector<1x256xf32>
    %308 = vector.broadcast %307 : vector<1x256xf32> to vector<8x256xf32>
    %309 = arith.mulf %306, %308 : vector<8x256xf32>
    %310 = arith.addf %304, %309 : vector<8x256xf32>
    %311 = vector.extract_strided_slice %297 {offsets = [16, 0], sizes = [8, 256], strides = [1, 1]} : vector<72x256xf32> to vector<8x256xf32>
    %c15_i32_259 = arith.constant 15 : i32
    %312 = tpu.dynamic_rotate %311 by %c15_i32_259 dim 1 : vector<8x256xf32>, i32 -> vector<8x256xf32>
    %313 = vector.extract_strided_slice %5 {offsets = [2, 0], sizes = [1, 256], strides = [1, 1]} : vector<9x256xf32> to vector<1x256xf32>
    %314 = vector.broadcast %313 : vector<1x256xf32> to vector<8x256xf32>
    %315 = arith.mulf %312, %314 : vector<8x256xf32>
    %316 = arith.addf %310, %315 : vector<8x256xf32>
    %317 = vector.extract_strided_slice %297 {offsets = [24, 0], sizes = [8, 256], strides = [1, 1]} : vector<72x256xf32> to vector<8x256xf32>
    %c1_i32_260 = arith.constant 1 : i32
    %318 = tpu.dynamic_rotate %317 by %c1_i32_260 dim 1 : vector<8x256xf32>, i32 -> vector<8x256xf32>
    %319 = vector.extract_strided_slice %5 {offsets = [3, 0], sizes = [1, 256], strides = [1, 1]} : vector<9x256xf32> to vector<1x256xf32>
    %320 = vector.broadcast %319 : vector<1x256xf32> to vector<8x256xf32>
    %321 = arith.mulf %318, %320 : vector<8x256xf32>
    %322 = arith.addf %316, %321 : vector<8x256xf32>
    %323 = vector.extract_strided_slice %297 {offsets = [32, 0], sizes = [8, 256], strides = [1, 1]} : vector<72x256xf32> to vector<8x256xf32>
    %324 = arith.addf %322, %323 : vector<8x256xf32>
    %325 = vector.extract_strided_slice %297 {offsets = [40, 0], sizes = [8, 256], strides = [1, 1]} : vector<72x256xf32> to vector<8x256xf32>
    %c255_i32_261 = arith.constant 255 : i32
    %326 = tpu.dynamic_rotate %325 by %c255_i32_261 dim 1 : vector<8x256xf32>, i32 -> vector<8x256xf32>
    %327 = vector.extract_strided_slice %5 {offsets = [5, 0], sizes = [1, 256], strides = [1, 1]} : vector<9x256xf32> to vector<1x256xf32>
    %328 = vector.broadcast %327 : vector<1x256xf32> to vector<8x256xf32>
    %329 = arith.mulf %326, %328 : vector<8x256xf32>
    %330 = arith.addf %324, %329 : vector<8x256xf32>
    %331 = vector.extract_strided_slice %297 {offsets = [48, 0], sizes = [8, 256], strides = [1, 1]} : vector<72x256xf32> to vector<8x256xf32>
    %c241_i32_262 = arith.constant 241 : i32
    %332 = tpu.dynamic_rotate %331 by %c241_i32_262 dim 1 : vector<8x256xf32>, i32 -> vector<8x256xf32>
    %333 = vector.extract_strided_slice %5 {offsets = [6, 0], sizes = [1, 256], strides = [1, 1]} : vector<9x256xf32> to vector<1x256xf32>
    %334 = vector.broadcast %333 : vector<1x256xf32> to vector<8x256xf32>
    %335 = arith.mulf %332, %334 : vector<8x256xf32>
    %336 = arith.addf %330, %335 : vector<8x256xf32>
    %337 = vector.extract_strided_slice %297 {offsets = [56, 0], sizes = [8, 256], strides = [1, 1]} : vector<72x256xf32> to vector<8x256xf32>
    %c240_i32_263 = arith.constant 240 : i32
    %338 = tpu.dynamic_rotate %337 by %c240_i32_263 dim 1 : vector<8x256xf32>, i32 -> vector<8x256xf32>
    %339 = vector.extract_strided_slice %5 {offsets = [7, 0], sizes = [1, 256], strides = [1, 1]} : vector<9x256xf32> to vector<1x256xf32>
    %340 = vector.broadcast %339 : vector<1x256xf32> to vector<8x256xf32>
    %341 = arith.mulf %338, %340 : vector<8x256xf32>
    %342 = arith.addf %336, %341 : vector<8x256xf32>
    %343 = vector.extract_strided_slice %297 {offsets = [64, 0], sizes = [8, 256], strides = [1, 1]} : vector<72x256xf32> to vector<8x256xf32>
    %c239_i32_264 = arith.constant 239 : i32
    %344 = tpu.dynamic_rotate %343 by %c239_i32_264 dim 1 : vector<8x256xf32>, i32 -> vector<8x256xf32>
    %345 = vector.extract_strided_slice %5 {offsets = [8, 0], sizes = [1, 256], strides = [1, 1]} : vector<9x256xf32> to vector<1x256xf32>
    %346 = vector.broadcast %345 : vector<1x256xf32> to vector<8x256xf32>
    %347 = arith.mulf %344, %346 : vector<8x256xf32>
    %348 = arith.addf %342, %347 : vector<8x256xf32>
    %349 = arith.addf %293, %231 : vector<8x256xf32>
    %c2_265 = arith.constant 2 : index
    %c0_266 = arith.constant 0 : index
    %c0_267 = arith.constant 0 : index
    %350 = vector.load %arg10[%c2_265, %c0_266, %c0_267] : memref<6x72x8xbf16, #tpu.memory_space<vmem>>, vector<1x72x8xbf16>
    %351 = vector.shape_cast %350 : vector<1x72x8xbf16> to vector<72x8xbf16>
    %352 = arith.truncf %349 : vector<8x256xf32> to vector<8x256xbf16>
    %cst_268 = arith.constant dense<0.000000e+00> : vector<72x256xf32>
    %353 = tpu.matmul %351, %352, %cst_268 {dimension_numbers = #tpu.dot_dimension_numbers<[1], [0], [0], [1], [0, 0, 1, 1], [], []>} : vector<72x8xbf16>, vector<8x256xbf16>, vector<72x256xf32> -> vector<72x256xf32>
    %cst_269 = arith.constant 0.000000e+00 : f32
    %354 = vector.broadcast %cst_269 : f32 to vector<8x256xf32>
    %355 = vector.extract_strided_slice %353 {offsets = [0, 0], sizes = [8, 256], strides = [1, 1]} : vector<72x256xf32> to vector<8x256xf32>
    %c17_i32_270 = arith.constant 17 : i32
    %356 = tpu.dynamic_rotate %355 by %c17_i32_270 dim 1 : vector<8x256xf32>, i32 -> vector<8x256xf32>
    %357 = vector.extract_strided_slice %5 {offsets = [0, 0], sizes = [1, 256], strides = [1, 1]} : vector<9x256xf32> to vector<1x256xf32>
    %358 = vector.broadcast %357 : vector<1x256xf32> to vector<8x256xf32>
    %359 = arith.mulf %356, %358 : vector<8x256xf32>
    %360 = arith.addf %354, %359 : vector<8x256xf32>
    %361 = vector.extract_strided_slice %353 {offsets = [8, 0], sizes = [8, 256], strides = [1, 1]} : vector<72x256xf32> to vector<8x256xf32>
    %c16_i32_271 = arith.constant 16 : i32
    %362 = tpu.dynamic_rotate %361 by %c16_i32_271 dim 1 : vector<8x256xf32>, i32 -> vector<8x256xf32>
    %363 = vector.extract_strided_slice %5 {offsets = [1, 0], sizes = [1, 256], strides = [1, 1]} : vector<9x256xf32> to vector<1x256xf32>
    %364 = vector.broadcast %363 : vector<1x256xf32> to vector<8x256xf32>
    %365 = arith.mulf %362, %364 : vector<8x256xf32>
    %366 = arith.addf %360, %365 : vector<8x256xf32>
    %367 = vector.extract_strided_slice %353 {offsets = [16, 0], sizes = [8, 256], strides = [1, 1]} : vector<72x256xf32> to vector<8x256xf32>
    %c15_i32_272 = arith.constant 15 : i32
    %368 = tpu.dynamic_rotate %367 by %c15_i32_272 dim 1 : vector<8x256xf32>, i32 -> vector<8x256xf32>
    %369 = vector.extract_strided_slice %5 {offsets = [2, 0], sizes = [1, 256], strides = [1, 1]} : vector<9x256xf32> to vector<1x256xf32>
    %370 = vector.broadcast %369 : vector<1x256xf32> to vector<8x256xf32>
    %371 = arith.mulf %368, %370 : vector<8x256xf32>
    %372 = arith.addf %366, %371 : vector<8x256xf32>
    %373 = vector.extract_strided_slice %353 {offsets = [24, 0], sizes = [8, 256], strides = [1, 1]} : vector<72x256xf32> to vector<8x256xf32>
    %c1_i32_273 = arith.constant 1 : i32
    %374 = tpu.dynamic_rotate %373 by %c1_i32_273 dim 1 : vector<8x256xf32>, i32 -> vector<8x256xf32>
    %375 = vector.extract_strided_slice %5 {offsets = [3, 0], sizes = [1, 256], strides = [1, 1]} : vector<9x256xf32> to vector<1x256xf32>
    %376 = vector.broadcast %375 : vector<1x256xf32> to vector<8x256xf32>
    %377 = arith.mulf %374, %376 : vector<8x256xf32>
    %378 = arith.addf %372, %377 : vector<8x256xf32>
    %379 = vector.extract_strided_slice %353 {offsets = [32, 0], sizes = [8, 256], strides = [1, 1]} : vector<72x256xf32> to vector<8x256xf32>
    %380 = arith.addf %378, %379 : vector<8x256xf32>
    %381 = vector.extract_strided_slice %353 {offsets = [40, 0], sizes = [8, 256], strides = [1, 1]} : vector<72x256xf32> to vector<8x256xf32>
    %c255_i32_274 = arith.constant 255 : i32
    %382 = tpu.dynamic_rotate %381 by %c255_i32_274 dim 1 : vector<8x256xf32>, i32 -> vector<8x256xf32>
    %383 = vector.extract_strided_slice %5 {offsets = [5, 0], sizes = [1, 256], strides = [1, 1]} : vector<9x256xf32> to vector<1x256xf32>
    %384 = vector.broadcast %383 : vector<1x256xf32> to vector<8x256xf32>
    %385 = arith.mulf %382, %384 : vector<8x256xf32>
    %386 = arith.addf %380, %385 : vector<8x256xf32>
    %387 = vector.extract_strided_slice %353 {offsets = [48, 0], sizes = [8, 256], strides = [1, 1]} : vector<72x256xf32> to vector<8x256xf32>
    %c241_i32_275 = arith.constant 241 : i32
    %388 = tpu.dynamic_rotate %387 by %c241_i32_275 dim 1 : vector<8x256xf32>, i32 -> vector<8x256xf32>
    %389 = vector.extract_strided_slice %5 {offsets = [6, 0], sizes = [1, 256], strides = [1, 1]} : vector<9x256xf32> to vector<1x256xf32>
    %390 = vector.broadcast %389 : vector<1x256xf32> to vector<8x256xf32>
    %391 = arith.mulf %388, %390 : vector<8x256xf32>
    %392 = arith.addf %386, %391 : vector<8x256xf32>
    %393 = vector.extract_strided_slice %353 {offsets = [56, 0], sizes = [8, 256], strides = [1, 1]} : vector<72x256xf32> to vector<8x256xf32>
    %c240_i32_276 = arith.constant 240 : i32
    %394 = tpu.dynamic_rotate %393 by %c240_i32_276 dim 1 : vector<8x256xf32>, i32 -> vector<8x256xf32>
    %395 = vector.extract_strided_slice %5 {offsets = [7, 0], sizes = [1, 256], strides = [1, 1]} : vector<9x256xf32> to vector<1x256xf32>
    %396 = vector.broadcast %395 : vector<1x256xf32> to vector<8x256xf32>
    %397 = arith.mulf %394, %396 : vector<8x256xf32>
    %398 = arith.addf %392, %397 : vector<8x256xf32>
    %399 = vector.extract_strided_slice %353 {offsets = [64, 0], sizes = [8, 256], strides = [1, 1]} : vector<72x256xf32> to vector<8x256xf32>
    %c239_i32_277 = arith.constant 239 : i32
    %400 = tpu.dynamic_rotate %399 by %c239_i32_277 dim 1 : vector<8x256xf32>, i32 -> vector<8x256xf32>
    %401 = vector.extract_strided_slice %5 {offsets = [8, 0], sizes = [1, 256], strides = [1, 1]} : vector<9x256xf32> to vector<1x256xf32>
    %402 = vector.broadcast %401 : vector<1x256xf32> to vector<8x256xf32>
    %403 = arith.mulf %400, %402 : vector<8x256xf32>
    %404 = arith.addf %398, %403 : vector<8x256xf32>
    %405 = vector.extract_strided_slice %4 {offsets = [0, 2], sizes = [8, 1], strides = [1, 1]} : vector<8x16xf32> to vector<8x1xf32>
    %406 = vector.broadcast %405 : vector<8x1xf32> to vector<8x256xf32>
    %407 = arith.mulf %404, %406 : vector<8x256xf32>
    %408 = vector.extract_strided_slice %4 {offsets = [0, 3], sizes = [8, 1], strides = [1, 1]} : vector<8x16xf32> to vector<8x1xf32>
    %409 = vector.broadcast %408 : vector<8x1xf32> to vector<8x256xf32>
    %410 = arith.addf %407, %409 : vector<8x256xf32>
    %cst_278 = arith.constant 0.000000e+00 : f32
    %411 = vector.broadcast %cst_278 : f32 to vector<8x256xf32>
    %412 = arith.maximumf %410, %411 : vector<8x256xf32>
    %413 = arith.addf %348, %238 : vector<8x256xf32>
    %c3_279 = arith.constant 3 : index
    %c0_280 = arith.constant 0 : index
    %c0_281 = arith.constant 0 : index
    %414 = vector.load %arg10[%c3_279, %c0_280, %c0_281] : memref<6x72x8xbf16, #tpu.memory_space<vmem>>, vector<1x72x8xbf16>
    %415 = vector.shape_cast %414 : vector<1x72x8xbf16> to vector<72x8xbf16>
    %416 = arith.truncf %413 : vector<8x256xf32> to vector<8x256xbf16>
    %cst_282 = arith.constant dense<0.000000e+00> : vector<72x256xf32>
    %417 = tpu.matmul %415, %416, %cst_282 {dimension_numbers = #tpu.dot_dimension_numbers<[1], [0], [0], [1], [0, 0, 1, 1], [], []>} : vector<72x8xbf16>, vector<8x256xbf16>, vector<72x256xf32> -> vector<72x256xf32>
    %cst_283 = arith.constant 0.000000e+00 : f32
    %418 = vector.broadcast %cst_283 : f32 to vector<8x256xf32>
    %419 = vector.extract_strided_slice %417 {offsets = [0, 0], sizes = [8, 256], strides = [1, 1]} : vector<72x256xf32> to vector<8x256xf32>
    %c17_i32_284 = arith.constant 17 : i32
    %420 = tpu.dynamic_rotate %419 by %c17_i32_284 dim 1 : vector<8x256xf32>, i32 -> vector<8x256xf32>
    %421 = vector.extract_strided_slice %5 {offsets = [0, 0], sizes = [1, 256], strides = [1, 1]} : vector<9x256xf32> to vector<1x256xf32>
    %422 = vector.broadcast %421 : vector<1x256xf32> to vector<8x256xf32>
    %423 = arith.mulf %420, %422 : vector<8x256xf32>
    %424 = arith.addf %418, %423 : vector<8x256xf32>
    %425 = vector.extract_strided_slice %417 {offsets = [8, 0], sizes = [8, 256], strides = [1, 1]} : vector<72x256xf32> to vector<8x256xf32>
    %c16_i32_285 = arith.constant 16 : i32
    %426 = tpu.dynamic_rotate %425 by %c16_i32_285 dim 1 : vector<8x256xf32>, i32 -> vector<8x256xf32>
    %427 = vector.extract_strided_slice %5 {offsets = [1, 0], sizes = [1, 256], strides = [1, 1]} : vector<9x256xf32> to vector<1x256xf32>
    %428 = vector.broadcast %427 : vector<1x256xf32> to vector<8x256xf32>
    %429 = arith.mulf %426, %428 : vector<8x256xf32>
    %430 = arith.addf %424, %429 : vector<8x256xf32>
    %431 = vector.extract_strided_slice %417 {offsets = [16, 0], sizes = [8, 256], strides = [1, 1]} : vector<72x256xf32> to vector<8x256xf32>
    %c15_i32_286 = arith.constant 15 : i32
    %432 = tpu.dynamic_rotate %431 by %c15_i32_286 dim 1 : vector<8x256xf32>, i32 -> vector<8x256xf32>
    %433 = vector.extract_strided_slice %5 {offsets = [2, 0], sizes = [1, 256], strides = [1, 1]} : vector<9x256xf32> to vector<1x256xf32>
    %434 = vector.broadcast %433 : vector<1x256xf32> to vector<8x256xf32>
    %435 = arith.mulf %432, %434 : vector<8x256xf32>
    %436 = arith.addf %430, %435 : vector<8x256xf32>
    %437 = vector.extract_strided_slice %417 {offsets = [24, 0], sizes = [8, 256], strides = [1, 1]} : vector<72x256xf32> to vector<8x256xf32>
    %c1_i32_287 = arith.constant 1 : i32
    %438 = tpu.dynamic_rotate %437 by %c1_i32_287 dim 1 : vector<8x256xf32>, i32 -> vector<8x256xf32>
    %439 = vector.extract_strided_slice %5 {offsets = [3, 0], sizes = [1, 256], strides = [1, 1]} : vector<9x256xf32> to vector<1x256xf32>
    %440 = vector.broadcast %439 : vector<1x256xf32> to vector<8x256xf32>
    %441 = arith.mulf %438, %440 : vector<8x256xf32>
    %442 = arith.addf %436, %441 : vector<8x256xf32>
    %443 = vector.extract_strided_slice %417 {offsets = [32, 0], sizes = [8, 256], strides = [1, 1]} : vector<72x256xf32> to vector<8x256xf32>
    %444 = arith.addf %442, %443 : vector<8x256xf32>
    %445 = vector.extract_strided_slice %417 {offsets = [40, 0], sizes = [8, 256], strides = [1, 1]} : vector<72x256xf32> to vector<8x256xf32>
    %c255_i32_288 = arith.constant 255 : i32
    %446 = tpu.dynamic_rotate %445 by %c255_i32_288 dim 1 : vector<8x256xf32>, i32 -> vector<8x256xf32>
    %447 = vector.extract_strided_slice %5 {offsets = [5, 0], sizes = [1, 256], strides = [1, 1]} : vector<9x256xf32> to vector<1x256xf32>
    %448 = vector.broadcast %447 : vector<1x256xf32> to vector<8x256xf32>
    %449 = arith.mulf %446, %448 : vector<8x256xf32>
    %450 = arith.addf %444, %449 : vector<8x256xf32>
    %451 = vector.extract_strided_slice %417 {offsets = [48, 0], sizes = [8, 256], strides = [1, 1]} : vector<72x256xf32> to vector<8x256xf32>
    %c241_i32_289 = arith.constant 241 : i32
    %452 = tpu.dynamic_rotate %451 by %c241_i32_289 dim 1 : vector<8x256xf32>, i32 -> vector<8x256xf32>
    %453 = vector.extract_strided_slice %5 {offsets = [6, 0], sizes = [1, 256], strides = [1, 1]} : vector<9x256xf32> to vector<1x256xf32>
    %454 = vector.broadcast %453 : vector<1x256xf32> to vector<8x256xf32>
    %455 = arith.mulf %452, %454 : vector<8x256xf32>
    %456 = arith.addf %450, %455 : vector<8x256xf32>
    %457 = vector.extract_strided_slice %417 {offsets = [56, 0], sizes = [8, 256], strides = [1, 1]} : vector<72x256xf32> to vector<8x256xf32>
    %c240_i32_290 = arith.constant 240 : i32
    %458 = tpu.dynamic_rotate %457 by %c240_i32_290 dim 1 : vector<8x256xf32>, i32 -> vector<8x256xf32>
    %459 = vector.extract_strided_slice %5 {offsets = [7, 0], sizes = [1, 256], strides = [1, 1]} : vector<9x256xf32> to vector<1x256xf32>
    %460 = vector.broadcast %459 : vector<1x256xf32> to vector<8x256xf32>
    %461 = arith.mulf %458, %460 : vector<8x256xf32>
    %462 = arith.addf %456, %461 : vector<8x256xf32>
    %463 = vector.extract_strided_slice %417 {offsets = [64, 0], sizes = [8, 256], strides = [1, 1]} : vector<72x256xf32> to vector<8x256xf32>
    %c239_i32_291 = arith.constant 239 : i32
    %464 = tpu.dynamic_rotate %463 by %c239_i32_291 dim 1 : vector<8x256xf32>, i32 -> vector<8x256xf32>
    %465 = vector.extract_strided_slice %5 {offsets = [8, 0], sizes = [1, 256], strides = [1, 1]} : vector<9x256xf32> to vector<1x256xf32>
    %466 = vector.broadcast %465 : vector<1x256xf32> to vector<8x256xf32>
    %467 = arith.mulf %464, %466 : vector<8x256xf32>
    %468 = arith.addf %462, %467 : vector<8x256xf32>
    %469 = vector.extract_strided_slice %4 {offsets = [0, 4], sizes = [8, 1], strides = [1, 1]} : vector<8x16xf32> to vector<8x1xf32>
    %470 = vector.broadcast %469 : vector<8x1xf32> to vector<8x256xf32>
    %471 = arith.mulf %468, %470 : vector<8x256xf32>
    %472 = vector.extract_strided_slice %4 {offsets = [0, 5], sizes = [8, 1], strides = [1, 1]} : vector<8x16xf32> to vector<8x1xf32>
    %473 = vector.broadcast %472 : vector<8x1xf32> to vector<8x256xf32>
    %474 = arith.addf %471, %473 : vector<8x256xf32>
    %cst_292 = arith.constant 0.000000e+00 : f32
    %475 = vector.broadcast %cst_292 : f32 to vector<8x256xf32>
    %476 = arith.maximumf %474, %475 : vector<8x256xf32>
    %cst_293 = arith.constant 0.000000e+00 : f32
    %477 = vector.broadcast %cst_293 : f32 to vector<16x256xf32>
    %478 = vector.extract_strided_slice %228 {offsets = [0, 0], sizes = [16, 256], strides = [1, 1]} : vector<153x256xf32> to vector<16x256xf32>
    %c17_i32_294 = arith.constant 17 : i32
    %479 = tpu.dynamic_rotate %478 by %c17_i32_294 dim 1 : vector<16x256xf32>, i32 -> vector<16x256xf32>
    %480 = vector.extract_strided_slice %5 {offsets = [0, 0], sizes = [1, 256], strides = [1, 1]} : vector<9x256xf32> to vector<1x256xf32>
    %481 = vector.broadcast %480 : vector<1x256xf32> to vector<16x256xf32>
    %482 = arith.mulf %479, %481 : vector<16x256xf32>
    %483 = arith.addf %477, %482 : vector<16x256xf32>
    %484 = vector.extract_strided_slice %228 {offsets = [16, 0], sizes = [16, 256], strides = [1, 1]} : vector<153x256xf32> to vector<16x256xf32>
    %c16_i32_295 = arith.constant 16 : i32
    %485 = tpu.dynamic_rotate %484 by %c16_i32_295 dim 1 : vector<16x256xf32>, i32 -> vector<16x256xf32>
    %486 = vector.extract_strided_slice %5 {offsets = [1, 0], sizes = [1, 256], strides = [1, 1]} : vector<9x256xf32> to vector<1x256xf32>
    %487 = vector.broadcast %486 : vector<1x256xf32> to vector<16x256xf32>
    %488 = arith.mulf %485, %487 : vector<16x256xf32>
    %489 = arith.addf %483, %488 : vector<16x256xf32>
    %490 = vector.extract_strided_slice %228 {offsets = [32, 0], sizes = [16, 256], strides = [1, 1]} : vector<153x256xf32> to vector<16x256xf32>
    %c15_i32_296 = arith.constant 15 : i32
    %491 = tpu.dynamic_rotate %490 by %c15_i32_296 dim 1 : vector<16x256xf32>, i32 -> vector<16x256xf32>
    %492 = vector.extract_strided_slice %5 {offsets = [2, 0], sizes = [1, 256], strides = [1, 1]} : vector<9x256xf32> to vector<1x256xf32>
    %493 = vector.broadcast %492 : vector<1x256xf32> to vector<16x256xf32>
    %494 = arith.mulf %491, %493 : vector<16x256xf32>
    %495 = arith.addf %489, %494 : vector<16x256xf32>
    %496 = vector.extract_strided_slice %228 {offsets = [48, 0], sizes = [16, 256], strides = [1, 1]} : vector<153x256xf32> to vector<16x256xf32>
    %c1_i32_297 = arith.constant 1 : i32
    %497 = tpu.dynamic_rotate %496 by %c1_i32_297 dim 1 : vector<16x256xf32>, i32 -> vector<16x256xf32>
    %498 = vector.extract_strided_slice %5 {offsets = [3, 0], sizes = [1, 256], strides = [1, 1]} : vector<9x256xf32> to vector<1x256xf32>
    %499 = vector.broadcast %498 : vector<1x256xf32> to vector<16x256xf32>
    %500 = arith.mulf %497, %499 : vector<16x256xf32>
    %501 = arith.addf %495, %500 : vector<16x256xf32>
    %502 = vector.extract_strided_slice %228 {offsets = [64, 0], sizes = [16, 256], strides = [1, 1]} : vector<153x256xf32> to vector<16x256xf32>
    %503 = arith.addf %501, %502 : vector<16x256xf32>
    %504 = vector.extract_strided_slice %228 {offsets = [80, 0], sizes = [16, 256], strides = [1, 1]} : vector<153x256xf32> to vector<16x256xf32>
    %c255_i32_298 = arith.constant 255 : i32
    %505 = tpu.dynamic_rotate %504 by %c255_i32_298 dim 1 : vector<16x256xf32>, i32 -> vector<16x256xf32>
    %506 = vector.extract_strided_slice %5 {offsets = [5, 0], sizes = [1, 256], strides = [1, 1]} : vector<9x256xf32> to vector<1x256xf32>
    %507 = vector.broadcast %506 : vector<1x256xf32> to vector<16x256xf32>
    %508 = arith.mulf %505, %507 : vector<16x256xf32>
    %509 = arith.addf %503, %508 : vector<16x256xf32>
    %510 = vector.extract_strided_slice %228 {offsets = [96, 0], sizes = [16, 256], strides = [1, 1]} : vector<153x256xf32> to vector<16x256xf32>
    %c241_i32_299 = arith.constant 241 : i32
    %511 = tpu.dynamic_rotate %510 by %c241_i32_299 dim 1 : vector<16x256xf32>, i32 -> vector<16x256xf32>
    %512 = vector.extract_strided_slice %5 {offsets = [6, 0], sizes = [1, 256], strides = [1, 1]} : vector<9x256xf32> to vector<1x256xf32>
    %513 = vector.broadcast %512 : vector<1x256xf32> to vector<16x256xf32>
    %514 = arith.mulf %511, %513 : vector<16x256xf32>
    %515 = arith.addf %509, %514 : vector<16x256xf32>
    %516 = vector.extract_strided_slice %228 {offsets = [112, 0], sizes = [16, 256], strides = [1, 1]} : vector<153x256xf32> to vector<16x256xf32>
    %c240_i32_300 = arith.constant 240 : i32
    %517 = tpu.dynamic_rotate %516 by %c240_i32_300 dim 1 : vector<16x256xf32>, i32 -> vector<16x256xf32>
    %518 = vector.extract_strided_slice %5 {offsets = [7, 0], sizes = [1, 256], strides = [1, 1]} : vector<9x256xf32> to vector<1x256xf32>
    %519 = vector.broadcast %518 : vector<1x256xf32> to vector<16x256xf32>
    %520 = arith.mulf %517, %519 : vector<16x256xf32>
    %521 = arith.addf %515, %520 : vector<16x256xf32>
    %522 = vector.extract_strided_slice %228 {offsets = [128, 0], sizes = [16, 256], strides = [1, 1]} : vector<153x256xf32> to vector<16x256xf32>
    %c239_i32_301 = arith.constant 239 : i32
    %523 = tpu.dynamic_rotate %522 by %c239_i32_301 dim 1 : vector<16x256xf32>, i32 -> vector<16x256xf32>
    %524 = vector.extract_strided_slice %5 {offsets = [8, 0], sizes = [1, 256], strides = [1, 1]} : vector<9x256xf32> to vector<1x256xf32>
    %525 = vector.broadcast %524 : vector<1x256xf32> to vector<16x256xf32>
    %526 = arith.mulf %523, %525 : vector<16x256xf32>
    %527 = arith.addf %521, %526 : vector<16x256xf32>
    %c4_302 = arith.constant 4 : index
    %c0_303 = arith.constant 0 : index
    %c0_304 = arith.constant 0 : index
    %528 = vector.load %arg10[%c4_302, %c0_303, %c0_304] : memref<6x72x8xbf16, #tpu.memory_space<vmem>>, vector<1x72x8xbf16>
    %529 = vector.shape_cast %528 : vector<1x72x8xbf16> to vector<72x8xbf16>
    %530 = arith.truncf %412 : vector<8x256xf32> to vector<8x256xbf16>
    %cst_305 = arith.constant dense<0.000000e+00> : vector<72x256xf32>
    %531 = tpu.matmul %529, %530, %cst_305 {dimension_numbers = #tpu.dot_dimension_numbers<[1], [0], [0], [1], [0, 0, 1, 1], [], []>} : vector<72x8xbf16>, vector<8x256xbf16>, vector<72x256xf32> -> vector<72x256xf32>
    %cst_306 = arith.constant 0.000000e+00 : f32
    %532 = vector.broadcast %cst_306 : f32 to vector<8x256xf32>
    %533 = vector.extract_strided_slice %531 {offsets = [0, 0], sizes = [8, 256], strides = [1, 1]} : vector<72x256xf32> to vector<8x256xf32>
    %c17_i32_307 = arith.constant 17 : i32
    %534 = tpu.dynamic_rotate %533 by %c17_i32_307 dim 1 : vector<8x256xf32>, i32 -> vector<8x256xf32>
    %535 = vector.extract_strided_slice %5 {offsets = [0, 0], sizes = [1, 256], strides = [1, 1]} : vector<9x256xf32> to vector<1x256xf32>
    %536 = vector.broadcast %535 : vector<1x256xf32> to vector<8x256xf32>
    %537 = arith.mulf %534, %536 : vector<8x256xf32>
    %538 = arith.addf %532, %537 : vector<8x256xf32>
    %539 = vector.extract_strided_slice %531 {offsets = [8, 0], sizes = [8, 256], strides = [1, 1]} : vector<72x256xf32> to vector<8x256xf32>
    %c16_i32_308 = arith.constant 16 : i32
    %540 = tpu.dynamic_rotate %539 by %c16_i32_308 dim 1 : vector<8x256xf32>, i32 -> vector<8x256xf32>
    %541 = vector.extract_strided_slice %5 {offsets = [1, 0], sizes = [1, 256], strides = [1, 1]} : vector<9x256xf32> to vector<1x256xf32>
    %542 = vector.broadcast %541 : vector<1x256xf32> to vector<8x256xf32>
    %543 = arith.mulf %540, %542 : vector<8x256xf32>
    %544 = arith.addf %538, %543 : vector<8x256xf32>
    %545 = vector.extract_strided_slice %531 {offsets = [16, 0], sizes = [8, 256], strides = [1, 1]} : vector<72x256xf32> to vector<8x256xf32>
    %c15_i32_309 = arith.constant 15 : i32
    %546 = tpu.dynamic_rotate %545 by %c15_i32_309 dim 1 : vector<8x256xf32>, i32 -> vector<8x256xf32>
    %547 = vector.extract_strided_slice %5 {offsets = [2, 0], sizes = [1, 256], strides = [1, 1]} : vector<9x256xf32> to vector<1x256xf32>
    %548 = vector.broadcast %547 : vector<1x256xf32> to vector<8x256xf32>
    %549 = arith.mulf %546, %548 : vector<8x256xf32>
    %550 = arith.addf %544, %549 : vector<8x256xf32>
    %551 = vector.extract_strided_slice %531 {offsets = [24, 0], sizes = [8, 256], strides = [1, 1]} : vector<72x256xf32> to vector<8x256xf32>
    %c1_i32_310 = arith.constant 1 : i32
    %552 = tpu.dynamic_rotate %551 by %c1_i32_310 dim 1 : vector<8x256xf32>, i32 -> vector<8x256xf32>
    %553 = vector.extract_strided_slice %5 {offsets = [3, 0], sizes = [1, 256], strides = [1, 1]} : vector<9x256xf32> to vector<1x256xf32>
    %554 = vector.broadcast %553 : vector<1x256xf32> to vector<8x256xf32>
    %555 = arith.mulf %552, %554 : vector<8x256xf32>
    %556 = arith.addf %550, %555 : vector<8x256xf32>
    %557 = vector.extract_strided_slice %531 {offsets = [32, 0], sizes = [8, 256], strides = [1, 1]} : vector<72x256xf32> to vector<8x256xf32>
    %558 = arith.addf %556, %557 : vector<8x256xf32>
    %559 = vector.extract_strided_slice %531 {offsets = [40, 0], sizes = [8, 256], strides = [1, 1]} : vector<72x256xf32> to vector<8x256xf32>
    %c255_i32_311 = arith.constant 255 : i32
    %560 = tpu.dynamic_rotate %559 by %c255_i32_311 dim 1 : vector<8x256xf32>, i32 -> vector<8x256xf32>
    %561 = vector.extract_strided_slice %5 {offsets = [5, 0], sizes = [1, 256], strides = [1, 1]} : vector<9x256xf32> to vector<1x256xf32>
    %562 = vector.broadcast %561 : vector<1x256xf32> to vector<8x256xf32>
    %563 = arith.mulf %560, %562 : vector<8x256xf32>
    %564 = arith.addf %558, %563 : vector<8x256xf32>
    %565 = vector.extract_strided_slice %531 {offsets = [48, 0], sizes = [8, 256], strides = [1, 1]} : vector<72x256xf32> to vector<8x256xf32>
    %c241_i32_312 = arith.constant 241 : i32
    %566 = tpu.dynamic_rotate %565 by %c241_i32_312 dim 1 : vector<8x256xf32>, i32 -> vector<8x256xf32>
    %567 = vector.extract_strided_slice %5 {offsets = [6, 0], sizes = [1, 256], strides = [1, 1]} : vector<9x256xf32> to vector<1x256xf32>
    %568 = vector.broadcast %567 : vector<1x256xf32> to vector<8x256xf32>
    %569 = arith.mulf %566, %568 : vector<8x256xf32>
    %570 = arith.addf %564, %569 : vector<8x256xf32>
    %571 = vector.extract_strided_slice %531 {offsets = [56, 0], sizes = [8, 256], strides = [1, 1]} : vector<72x256xf32> to vector<8x256xf32>
    %c240_i32_313 = arith.constant 240 : i32
    %572 = tpu.dynamic_rotate %571 by %c240_i32_313 dim 1 : vector<8x256xf32>, i32 -> vector<8x256xf32>
    %573 = vector.extract_strided_slice %5 {offsets = [7, 0], sizes = [1, 256], strides = [1, 1]} : vector<9x256xf32> to vector<1x256xf32>
    %574 = vector.broadcast %573 : vector<1x256xf32> to vector<8x256xf32>
    %575 = arith.mulf %572, %574 : vector<8x256xf32>
    %576 = arith.addf %570, %575 : vector<8x256xf32>
    %577 = vector.extract_strided_slice %531 {offsets = [64, 0], sizes = [8, 256], strides = [1, 1]} : vector<72x256xf32> to vector<8x256xf32>
    %c239_i32_314 = arith.constant 239 : i32
    %578 = tpu.dynamic_rotate %577 by %c239_i32_314 dim 1 : vector<8x256xf32>, i32 -> vector<8x256xf32>
    %579 = vector.extract_strided_slice %5 {offsets = [8, 0], sizes = [1, 256], strides = [1, 1]} : vector<9x256xf32> to vector<1x256xf32>
    %580 = vector.broadcast %579 : vector<1x256xf32> to vector<8x256xf32>
    %581 = arith.mulf %578, %580 : vector<8x256xf32>
    %582 = arith.addf %576, %581 : vector<8x256xf32>
    %583 = vector.extract_strided_slice %527 {offsets = [0, 0], sizes = [8, 256], strides = [1, 1]} : vector<16x256xf32> to vector<8x256xf32>
    %584 = arith.addf %582, %583 : vector<8x256xf32>
    %585 = vector.extract_strided_slice %4 {offsets = [0, 6], sizes = [8, 1], strides = [1, 1]} : vector<8x16xf32> to vector<8x1xf32>
    %586 = vector.broadcast %585 : vector<8x1xf32> to vector<8x256xf32>
    %587 = arith.mulf %584, %586 : vector<8x256xf32>
    %588 = vector.extract_strided_slice %4 {offsets = [0, 7], sizes = [8, 1], strides = [1, 1]} : vector<8x16xf32> to vector<8x1xf32>
    %589 = vector.broadcast %588 : vector<8x1xf32> to vector<8x256xf32>
    %590 = arith.addf %587, %589 : vector<8x256xf32>
    %cst_315 = arith.constant 0.000000e+00 : f32
    %591 = vector.broadcast %cst_315 : f32 to vector<8x256xf32>
    %592 = arith.maximumf %590, %591 : vector<8x256xf32>
    %c5_316 = arith.constant 5 : index
    %c0_317 = arith.constant 0 : index
    %c0_318 = arith.constant 0 : index
    %593 = vector.load %arg10[%c5_316, %c0_317, %c0_318] : memref<6x72x8xbf16, #tpu.memory_space<vmem>>, vector<1x72x8xbf16>
    %594 = vector.shape_cast %593 : vector<1x72x8xbf16> to vector<72x8xbf16>
    %595 = arith.truncf %476 : vector<8x256xf32> to vector<8x256xbf16>
    %cst_319 = arith.constant dense<0.000000e+00> : vector<72x256xf32>
    %596 = tpu.matmul %594, %595, %cst_319 {dimension_numbers = #tpu.dot_dimension_numbers<[1], [0], [0], [1], [0, 0, 1, 1], [], []>} : vector<72x8xbf16>, vector<8x256xbf16>, vector<72x256xf32> -> vector<72x256xf32>
    %cst_320 = arith.constant 0.000000e+00 : f32
    %597 = vector.broadcast %cst_320 : f32 to vector<8x256xf32>
    %598 = vector.extract_strided_slice %596 {offsets = [0, 0], sizes = [8, 256], strides = [1, 1]} : vector<72x256xf32> to vector<8x256xf32>
    %c17_i32_321 = arith.constant 17 : i32
    %599 = tpu.dynamic_rotate %598 by %c17_i32_321 dim 1 : vector<8x256xf32>, i32 -> vector<8x256xf32>
    %600 = vector.extract_strided_slice %5 {offsets = [0, 0], sizes = [1, 256], strides = [1, 1]} : vector<9x256xf32> to vector<1x256xf32>
    %601 = vector.broadcast %600 : vector<1x256xf32> to vector<8x256xf32>
    %602 = arith.mulf %599, %601 : vector<8x256xf32>
    %603 = arith.addf %597, %602 : vector<8x256xf32>
    %604 = vector.extract_strided_slice %596 {offsets = [8, 0], sizes = [8, 256], strides = [1, 1]} : vector<72x256xf32> to vector<8x256xf32>
    %c16_i32_322 = arith.constant 16 : i32
    %605 = tpu.dynamic_rotate %604 by %c16_i32_322 dim 1 : vector<8x256xf32>, i32 -> vector<8x256xf32>
    %606 = vector.extract_strided_slice %5 {offsets = [1, 0], sizes = [1, 256], strides = [1, 1]} : vector<9x256xf32> to vector<1x256xf32>
    %607 = vector.broadcast %606 : vector<1x256xf32> to vector<8x256xf32>
    %608 = arith.mulf %605, %607 : vector<8x256xf32>
    %609 = arith.addf %603, %608 : vector<8x256xf32>
    %610 = vector.extract_strided_slice %596 {offsets = [16, 0], sizes = [8, 256], strides = [1, 1]} : vector<72x256xf32> to vector<8x256xf32>
    %c15_i32_323 = arith.constant 15 : i32
    %611 = tpu.dynamic_rotate %610 by %c15_i32_323 dim 1 : vector<8x256xf32>, i32 -> vector<8x256xf32>
    %612 = vector.extract_strided_slice %5 {offsets = [2, 0], sizes = [1, 256], strides = [1, 1]} : vector<9x256xf32> to vector<1x256xf32>
    %613 = vector.broadcast %612 : vector<1x256xf32> to vector<8x256xf32>
    %614 = arith.mulf %611, %613 : vector<8x256xf32>
    %615 = arith.addf %609, %614 : vector<8x256xf32>
    %616 = vector.extract_strided_slice %596 {offsets = [24, 0], sizes = [8, 256], strides = [1, 1]} : vector<72x256xf32> to vector<8x256xf32>
    %c1_i32_324 = arith.constant 1 : i32
    %617 = tpu.dynamic_rotate %616 by %c1_i32_324 dim 1 : vector<8x256xf32>, i32 -> vector<8x256xf32>
    %618 = vector.extract_strided_slice %5 {offsets = [3, 0], sizes = [1, 256], strides = [1, 1]} : vector<9x256xf32> to vector<1x256xf32>
    %619 = vector.broadcast %618 : vector<1x256xf32> to vector<8x256xf32>
    %620 = arith.mulf %617, %619 : vector<8x256xf32>
    %621 = arith.addf %615, %620 : vector<8x256xf32>
    %622 = vector.extract_strided_slice %596 {offsets = [32, 0], sizes = [8, 256], strides = [1, 1]} : vector<72x256xf32> to vector<8x256xf32>
    %623 = arith.addf %621, %622 : vector<8x256xf32>
    %624 = vector.extract_strided_slice %596 {offsets = [40, 0], sizes = [8, 256], strides = [1, 1]} : vector<72x256xf32> to vector<8x256xf32>
    %c255_i32_325 = arith.constant 255 : i32
    %625 = tpu.dynamic_rotate %624 by %c255_i32_325 dim 1 : vector<8x256xf32>, i32 -> vector<8x256xf32>
    %626 = vector.extract_strided_slice %5 {offsets = [5, 0], sizes = [1, 256], strides = [1, 1]} : vector<9x256xf32> to vector<1x256xf32>
    %627 = vector.broadcast %626 : vector<1x256xf32> to vector<8x256xf32>
    %628 = arith.mulf %625, %627 : vector<8x256xf32>
    %629 = arith.addf %623, %628 : vector<8x256xf32>
    %630 = vector.extract_strided_slice %596 {offsets = [48, 0], sizes = [8, 256], strides = [1, 1]} : vector<72x256xf32> to vector<8x256xf32>
    %c241_i32_326 = arith.constant 241 : i32
    %631 = tpu.dynamic_rotate %630 by %c241_i32_326 dim 1 : vector<8x256xf32>, i32 -> vector<8x256xf32>
    %632 = vector.extract_strided_slice %5 {offsets = [6, 0], sizes = [1, 256], strides = [1, 1]} : vector<9x256xf32> to vector<1x256xf32>
    %633 = vector.broadcast %632 : vector<1x256xf32> to vector<8x256xf32>
    %634 = arith.mulf %631, %633 : vector<8x256xf32>
    %635 = arith.addf %629, %634 : vector<8x256xf32>
    %636 = vector.extract_strided_slice %596 {offsets = [56, 0], sizes = [8, 256], strides = [1, 1]} : vector<72x256xf32> to vector<8x256xf32>
    %c240_i32_327 = arith.constant 240 : i32
    %637 = tpu.dynamic_rotate %636 by %c240_i32_327 dim 1 : vector<8x256xf32>, i32 -> vector<8x256xf32>
    %638 = vector.extract_strided_slice %5 {offsets = [7, 0], sizes = [1, 256], strides = [1, 1]} : vector<9x256xf32> to vector<1x256xf32>
    %639 = vector.broadcast %638 : vector<1x256xf32> to vector<8x256xf32>
    %640 = arith.mulf %637, %639 : vector<8x256xf32>
    %641 = arith.addf %635, %640 : vector<8x256xf32>
    %642 = vector.extract_strided_slice %596 {offsets = [64, 0], sizes = [8, 256], strides = [1, 1]} : vector<72x256xf32> to vector<8x256xf32>
    %c239_i32_328 = arith.constant 239 : i32
    %643 = tpu.dynamic_rotate %642 by %c239_i32_328 dim 1 : vector<8x256xf32>, i32 -> vector<8x256xf32>
    %644 = vector.extract_strided_slice %5 {offsets = [8, 0], sizes = [1, 256], strides = [1, 1]} : vector<9x256xf32> to vector<1x256xf32>
    %645 = vector.broadcast %644 : vector<1x256xf32> to vector<8x256xf32>
    %646 = arith.mulf %643, %645 : vector<8x256xf32>
    %647 = arith.addf %641, %646 : vector<8x256xf32>
    %648 = vector.extract_strided_slice %527 {offsets = [8, 0], sizes = [8, 256], strides = [1, 1]} : vector<16x256xf32> to vector<8x256xf32>
    %649 = arith.addf %647, %648 : vector<8x256xf32>
    %650 = vector.extract_strided_slice %4 {offsets = [0, 8], sizes = [8, 1], strides = [1, 1]} : vector<8x16xf32> to vector<8x1xf32>
    %651 = vector.broadcast %650 : vector<8x1xf32> to vector<8x256xf32>
    %652 = arith.mulf %649, %651 : vector<8x256xf32>
    %653 = vector.extract_strided_slice %4 {offsets = [0, 9], sizes = [8, 1], strides = [1, 1]} : vector<8x16xf32> to vector<8x1xf32>
    %654 = vector.broadcast %653 : vector<8x1xf32> to vector<8x256xf32>
    %655 = arith.addf %652, %654 : vector<8x256xf32>
    %cst_329 = arith.constant 0.000000e+00 : f32
    %656 = vector.broadcast %cst_329 : f32 to vector<8x256xf32>
    %657 = arith.maximumf %655, %656 : vector<8x256xf32>
    %658 = vector.extract_strided_slice %4 {offsets = [0, 10], sizes = [8, 1], strides = [1, 1]} : vector<8x16xf32> to vector<8x1xf32>
    %659 = vector.broadcast %658 : vector<8x1xf32> to vector<8x256xf32>
    %660 = arith.mulf %592, %659 : vector<8x256xf32>
    %661 = vector.extract_strided_slice %4 {offsets = [0, 11], sizes = [8, 1], strides = [1, 1]} : vector<8x16xf32> to vector<8x1xf32>
    %662 = vector.broadcast %661 : vector<8x1xf32> to vector<8x256xf32>
    %663 = arith.addf %660, %662 : vector<8x256xf32>
    %cst_330 = arith.constant 0.000000e+00 : f32
    %664 = vector.broadcast %cst_330 : f32 to vector<8x256xf32>
    %665 = arith.maximumf %663, %664 : vector<8x256xf32>
    %666 = vector.extract_strided_slice %4 {offsets = [0, 12], sizes = [8, 1], strides = [1, 1]} : vector<8x16xf32> to vector<8x1xf32>
    %667 = vector.broadcast %666 : vector<8x1xf32> to vector<8x256xf32>
    %668 = arith.mulf %657, %667 : vector<8x256xf32>
    %669 = vector.extract_strided_slice %4 {offsets = [0, 13], sizes = [8, 1], strides = [1, 1]} : vector<8x16xf32> to vector<8x1xf32>
    %670 = vector.broadcast %669 : vector<8x1xf32> to vector<8x256xf32>
    %671 = arith.addf %668, %670 : vector<8x256xf32>
    %cst_331 = arith.constant 0.000000e+00 : f32
    %672 = vector.broadcast %cst_331 : f32 to vector<8x256xf32>
    %673 = arith.maximumf %671, %672 : vector<8x256xf32>
    %c0_332 = arith.constant 0 : index
    %c0_333 = arith.constant 0 : index
    %c0_334 = arith.constant 0 : index
    %674 = vector.load %arg14[%c0_332, %c0_333, %c0_334] : memref<1x8x256xf32, #tpu.memory_space<vmem>>, vector<1x8x256xf32>
    %675 = vector.shape_cast %674 : vector<1x8x256xf32> to vector<8x256xf32>
    %676 = vector.shape_cast %673 : vector<8x256xf32> to vector<1x8x256xf32>
    tpu.vector_store %arg14[%c0_332, %c0_333, %c0_334], %676 {strides = array<i32>} : memref<1x8x256xf32, #tpu.memory_space<vmem>>, vector<1x8x256xf32>,
    %c0_335 = arith.constant 0 : index
    %c0_336 = arith.constant 0 : index
    %677 = vector.load %arg12[%c0_335, %c0_336] : memref<49x8xbf16, #tpu.memory_space<vmem>>, vector<49x8xbf16>
    %678 = arith.addf %665, %673 : vector<8x256xf32>
    %679 = arith.truncf %678 : vector<8x256xf32> to vector<8x256xbf16>
    %cst_337 = arith.constant dense<0.000000e+00> : vector<49x256xf32>
    %680 = tpu.matmul %677, %679, %cst_337 {dimension_numbers = #tpu.dot_dimension_numbers<[1], [0], [0], [1], [0, 0, 1, 1], [], []>} : vector<49x8xbf16>, vector<8x256xbf16>, vector<49x256xf32> -> vector<49x256xf32>
    %cst_338 = arith.constant 0.000000e+00 : f32
    %681 = vector.broadcast %cst_338 : f32 to vector<1x256xf32>
    %682 = vector.extract_strided_slice %680 {offsets = [0, 0], sizes = [1, 256], strides = [1, 1]} : vector<49x256xf32> to vector<1x256xf32>
    %c51_i32 = arith.constant 51 : i32
    %683 = tpu.dynamic_rotate %682 by %c51_i32 dim 1 : vector<1x256xf32>, i32 -> vector<1x256xf32>
    %684 = vector.extract_strided_slice %6 {offsets = [0, 0], sizes = [1, 256], strides = [1, 1]} : vector<49x256xf32> to vector<1x256xf32>
    %685 = arith.mulf %683, %684 : vector<1x256xf32>
    %686 = arith.addf %681, %685 : vector<1x256xf32>
    %687 = vector.extract_strided_slice %680 {offsets = [1, 0], sizes = [1, 256], strides = [1, 1]} : vector<49x256xf32> to vector<1x256xf32>
    %c50_i32 = arith.constant 50 : i32
    %688 = tpu.dynamic_rotate %687 by %c50_i32 dim 1 : vector<1x256xf32>, i32 -> vector<1x256xf32>
    %689 = vector.extract_strided_slice %6 {offsets = [1, 0], sizes = [1, 256], strides = [1, 1]} : vector<49x256xf32> to vector<1x256xf32>
    %690 = arith.mulf %688, %689 : vector<1x256xf32>
    %691 = arith.addf %686, %690 : vector<1x256xf32>
    %692 = vector.extract_strided_slice %680 {offsets = [2, 0], sizes = [1, 256], strides = [1, 1]} : vector<49x256xf32> to vector<1x256xf32>
    %c49_i32 = arith.constant 49 : i32
    %693 = tpu.dynamic_rotate %692 by %c49_i32 dim 1 : vector<1x256xf32>, i32 -> vector<1x256xf32>
    %694 = vector.extract_strided_slice %6 {offsets = [2, 0], sizes = [1, 256], strides = [1, 1]} : vector<49x256xf32> to vector<1x256xf32>
    %695 = arith.mulf %693, %694 : vector<1x256xf32>
    %696 = arith.addf %691, %695 : vector<1x256xf32>
    %697 = vector.extract_strided_slice %680 {offsets = [3, 0], sizes = [1, 256], strides = [1, 1]} : vector<49x256xf32> to vector<1x256xf32>
    %c48_i32 = arith.constant 48 : i32
    %698 = tpu.dynamic_rotate %697 by %c48_i32 dim 1 : vector<1x256xf32>, i32 -> vector<1x256xf32>
    %699 = vector.extract_strided_slice %6 {offsets = [3, 0], sizes = [1, 256], strides = [1, 1]} : vector<49x256xf32> to vector<1x256xf32>
    %700 = arith.mulf %698, %699 : vector<1x256xf32>
    %701 = arith.addf %696, %700 : vector<1x256xf32>
    %702 = vector.extract_strided_slice %680 {offsets = [4, 0], sizes = [1, 256], strides = [1, 1]} : vector<49x256xf32> to vector<1x256xf32>
    %c47_i32 = arith.constant 47 : i32
    %703 = tpu.dynamic_rotate %702 by %c47_i32 dim 1 : vector<1x256xf32>, i32 -> vector<1x256xf32>
    %704 = vector.extract_strided_slice %6 {offsets = [4, 0], sizes = [1, 256], strides = [1, 1]} : vector<49x256xf32> to vector<1x256xf32>
    %705 = arith.mulf %703, %704 : vector<1x256xf32>
    %706 = arith.addf %701, %705 : vector<1x256xf32>
    %707 = vector.extract_strided_slice %680 {offsets = [5, 0], sizes = [1, 256], strides = [1, 1]} : vector<49x256xf32> to vector<1x256xf32>
    %c46_i32 = arith.constant 46 : i32
    %708 = tpu.dynamic_rotate %707 by %c46_i32 dim 1 : vector<1x256xf32>, i32 -> vector<1x256xf32>
    %709 = vector.extract_strided_slice %6 {offsets = [5, 0], sizes = [1, 256], strides = [1, 1]} : vector<49x256xf32> to vector<1x256xf32>
    %710 = arith.mulf %708, %709 : vector<1x256xf32>
    %711 = arith.addf %706, %710 : vector<1x256xf32>
    %712 = vector.extract_strided_slice %680 {offsets = [6, 0], sizes = [1, 256], strides = [1, 1]} : vector<49x256xf32> to vector<1x256xf32>
    %c45_i32 = arith.constant 45 : i32
    %713 = tpu.dynamic_rotate %712 by %c45_i32 dim 1 : vector<1x256xf32>, i32 -> vector<1x256xf32>
    %714 = vector.extract_strided_slice %6 {offsets = [6, 0], sizes = [1, 256], strides = [1, 1]} : vector<49x256xf32> to vector<1x256xf32>
    %715 = arith.mulf %713, %714 : vector<1x256xf32>
    %716 = arith.addf %711, %715 : vector<1x256xf32>
    %717 = vector.extract_strided_slice %680 {offsets = [7, 0], sizes = [1, 256], strides = [1, 1]} : vector<49x256xf32> to vector<1x256xf32>
    %c35_i32 = arith.constant 35 : i32
    %718 = tpu.dynamic_rotate %717 by %c35_i32 dim 1 : vector<1x256xf32>, i32 -> vector<1x256xf32>
    %719 = vector.extract_strided_slice %6 {offsets = [7, 0], sizes = [1, 256], strides = [1, 1]} : vector<49x256xf32> to vector<1x256xf32>
    %720 = arith.mulf %718, %719 : vector<1x256xf32>
    %721 = arith.addf %716, %720 : vector<1x256xf32>
    %722 = vector.extract_strided_slice %680 {offsets = [8, 0], sizes = [1, 256], strides = [1, 1]} : vector<49x256xf32> to vector<1x256xf32>
    %c34_i32 = arith.constant 34 : i32
    %723 = tpu.dynamic_rotate %722 by %c34_i32 dim 1 : vector<1x256xf32>, i32 -> vector<1x256xf32>
    %724 = vector.extract_strided_slice %6 {offsets = [8, 0], sizes = [1, 256], strides = [1, 1]} : vector<49x256xf32> to vector<1x256xf32>
    %725 = arith.mulf %723, %724 : vector<1x256xf32>
    %726 = arith.addf %721, %725 : vector<1x256xf32>
    %727 = vector.extract_strided_slice %680 {offsets = [9, 0], sizes = [1, 256], strides = [1, 1]} : vector<49x256xf32> to vector<1x256xf32>
    %c33_i32 = arith.constant 33 : i32
    %728 = tpu.dynamic_rotate %727 by %c33_i32 dim 1 : vector<1x256xf32>, i32 -> vector<1x256xf32>
    %729 = vector.extract_strided_slice %6 {offsets = [9, 0], sizes = [1, 256], strides = [1, 1]} : vector<49x256xf32> to vector<1x256xf32>
    %730 = arith.mulf %728, %729 : vector<1x256xf32>
    %731 = arith.addf %726, %730 : vector<1x256xf32>
    %732 = vector.extract_strided_slice %680 {offsets = [10, 0], sizes = [1, 256], strides = [1, 1]} : vector<49x256xf32> to vector<1x256xf32>
    %c32_i32 = arith.constant 32 : i32
    %733 = tpu.dynamic_rotate %732 by %c32_i32 dim 1 : vector<1x256xf32>, i32 -> vector<1x256xf32>
    %734 = vector.extract_strided_slice %6 {offsets = [10, 0], sizes = [1, 256], strides = [1, 1]} : vector<49x256xf32> to vector<1x256xf32>
    %735 = arith.mulf %733, %734 : vector<1x256xf32>
    %736 = arith.addf %731, %735 : vector<1x256xf32>
    %737 = vector.extract_strided_slice %680 {offsets = [11, 0], sizes = [1, 256], strides = [1, 1]} : vector<49x256xf32> to vector<1x256xf32>
    %c31_i32 = arith.constant 31 : i32
    %738 = tpu.dynamic_rotate %737 by %c31_i32 dim 1 : vector<1x256xf32>, i32 -> vector<1x256xf32>
    %739 = vector.extract_strided_slice %6 {offsets = [11, 0], sizes = [1, 256], strides = [1, 1]} : vector<49x256xf32> to vector<1x256xf32>
    %740 = arith.mulf %738, %739 : vector<1x256xf32>
    %741 = arith.addf %736, %740 : vector<1x256xf32>
    %742 = vector.extract_strided_slice %680 {offsets = [12, 0], sizes = [1, 256], strides = [1, 1]} : vector<49x256xf32> to vector<1x256xf32>
    %c30_i32 = arith.constant 30 : i32
    %743 = tpu.dynamic_rotate %742 by %c30_i32 dim 1 : vector<1x256xf32>, i32 -> vector<1x256xf32>
    %744 = vector.extract_strided_slice %6 {offsets = [12, 0], sizes = [1, 256], strides = [1, 1]} : vector<49x256xf32> to vector<1x256xf32>
    %745 = arith.mulf %743, %744 : vector<1x256xf32>
    %746 = arith.addf %741, %745 : vector<1x256xf32>
    %747 = vector.extract_strided_slice %680 {offsets = [13, 0], sizes = [1, 256], strides = [1, 1]} : vector<49x256xf32> to vector<1x256xf32>
    %c29_i32 = arith.constant 29 : i32
    %748 = tpu.dynamic_rotate %747 by %c29_i32 dim 1 : vector<1x256xf32>, i32 -> vector<1x256xf32>
    %749 = vector.extract_strided_slice %6 {offsets = [13, 0], sizes = [1, 256], strides = [1, 1]} : vector<49x256xf32> to vector<1x256xf32>
    %750 = arith.mulf %748, %749 : vector<1x256xf32>
    %751 = arith.addf %746, %750 : vector<1x256xf32>
    %752 = vector.extract_strided_slice %680 {offsets = [14, 0], sizes = [1, 256], strides = [1, 1]} : vector<49x256xf32> to vector<1x256xf32>
    %c19_i32 = arith.constant 19 : i32
    %753 = tpu.dynamic_rotate %752 by %c19_i32 dim 1 : vector<1x256xf32>, i32 -> vector<1x256xf32>
    %754 = vector.extract_strided_slice %6 {offsets = [14, 0], sizes = [1, 256], strides = [1, 1]} : vector<49x256xf32> to vector<1x256xf32>
    %755 = arith.mulf %753, %754 : vector<1x256xf32>
    %756 = arith.addf %751, %755 : vector<1x256xf32>
    %757 = vector.extract_strided_slice %680 {offsets = [15, 0], sizes = [1, 256], strides = [1, 1]} : vector<49x256xf32> to vector<1x256xf32>
    %c18_i32 = arith.constant 18 : i32
    %758 = tpu.dynamic_rotate %757 by %c18_i32 dim 1 : vector<1x256xf32>, i32 -> vector<1x256xf32>
    %759 = vector.extract_strided_slice %6 {offsets = [15, 0], sizes = [1, 256], strides = [1, 1]} : vector<49x256xf32> to vector<1x256xf32>
    %760 = arith.mulf %758, %759 : vector<1x256xf32>
    %761 = arith.addf %756, %760 : vector<1x256xf32>
    %762 = vector.extract_strided_slice %680 {offsets = [16, 0], sizes = [1, 256], strides = [1, 1]} : vector<49x256xf32> to vector<1x256xf32>
    %c17_i32_339 = arith.constant 17 : i32
    %763 = tpu.dynamic_rotate %762 by %c17_i32_339 dim 1 : vector<1x256xf32>, i32 -> vector<1x256xf32>
    %764 = vector.extract_strided_slice %6 {offsets = [16, 0], sizes = [1, 256], strides = [1, 1]} : vector<49x256xf32> to vector<1x256xf32>
    %765 = arith.mulf %763, %764 : vector<1x256xf32>
    %766 = arith.addf %761, %765 : vector<1x256xf32>
    %767 = vector.extract_strided_slice %680 {offsets = [17, 0], sizes = [1, 256], strides = [1, 1]} : vector<49x256xf32> to vector<1x256xf32>
    %c16_i32_340 = arith.constant 16 : i32
    %768 = tpu.dynamic_rotate %767 by %c16_i32_340 dim 1 : vector<1x256xf32>, i32 -> vector<1x256xf32>
    %769 = vector.extract_strided_slice %6 {offsets = [17, 0], sizes = [1, 256], strides = [1, 1]} : vector<49x256xf32> to vector<1x256xf32>
    %770 = arith.mulf %768, %769 : vector<1x256xf32>
    %771 = arith.addf %766, %770 : vector<1x256xf32>
    %772 = vector.extract_strided_slice %680 {offsets = [18, 0], sizes = [1, 256], strides = [1, 1]} : vector<49x256xf32> to vector<1x256xf32>
    %c15_i32_341 = arith.constant 15 : i32
    %773 = tpu.dynamic_rotate %772 by %c15_i32_341 dim 1 : vector<1x256xf32>, i32 -> vector<1x256xf32>
    %774 = vector.extract_strided_slice %6 {offsets = [18, 0], sizes = [1, 256], strides = [1, 1]} : vector<49x256xf32> to vector<1x256xf32>
    %775 = arith.mulf %773, %774 : vector<1x256xf32>
    %776 = arith.addf %771, %775 : vector<1x256xf32>
    %777 = vector.extract_strided_slice %680 {offsets = [19, 0], sizes = [1, 256], strides = [1, 1]} : vector<49x256xf32> to vector<1x256xf32>
    %c14_i32 = arith.constant 14 : i32
    %778 = tpu.dynamic_rotate %777 by %c14_i32 dim 1 : vector<1x256xf32>, i32 -> vector<1x256xf32>
    %779 = vector.extract_strided_slice %6 {offsets = [19, 0], sizes = [1, 256], strides = [1, 1]} : vector<49x256xf32> to vector<1x256xf32>
    %780 = arith.mulf %778, %779 : vector<1x256xf32>
    %781 = arith.addf %776, %780 : vector<1x256xf32>
    %782 = vector.extract_strided_slice %680 {offsets = [20, 0], sizes = [1, 256], strides = [1, 1]} : vector<49x256xf32> to vector<1x256xf32>
    %c13_i32 = arith.constant 13 : i32
    %783 = tpu.dynamic_rotate %782 by %c13_i32 dim 1 : vector<1x256xf32>, i32 -> vector<1x256xf32>
    %784 = vector.extract_strided_slice %6 {offsets = [20, 0], sizes = [1, 256], strides = [1, 1]} : vector<49x256xf32> to vector<1x256xf32>
    %785 = arith.mulf %783, %784 : vector<1x256xf32>
    %786 = arith.addf %781, %785 : vector<1x256xf32>
    %787 = vector.extract_strided_slice %680 {offsets = [21, 0], sizes = [1, 256], strides = [1, 1]} : vector<49x256xf32> to vector<1x256xf32>
    %c3_i32 = arith.constant 3 : i32
    %788 = tpu.dynamic_rotate %787 by %c3_i32 dim 1 : vector<1x256xf32>, i32 -> vector<1x256xf32>
    %789 = vector.extract_strided_slice %6 {offsets = [21, 0], sizes = [1, 256], strides = [1, 1]} : vector<49x256xf32> to vector<1x256xf32>
    %790 = arith.mulf %788, %789 : vector<1x256xf32>
    %791 = arith.addf %786, %790 : vector<1x256xf32>
    %792 = vector.extract_strided_slice %680 {offsets = [22, 0], sizes = [1, 256], strides = [1, 1]} : vector<49x256xf32> to vector<1x256xf32>
    %c2_i32 = arith.constant 2 : i32
    %793 = tpu.dynamic_rotate %792 by %c2_i32 dim 1 : vector<1x256xf32>, i32 -> vector<1x256xf32>
    %794 = vector.extract_strided_slice %6 {offsets = [22, 0], sizes = [1, 256], strides = [1, 1]} : vector<49x256xf32> to vector<1x256xf32>
    %795 = arith.mulf %793, %794 : vector<1x256xf32>
    %796 = arith.addf %791, %795 : vector<1x256xf32>
    %797 = vector.extract_strided_slice %680 {offsets = [23, 0], sizes = [1, 256], strides = [1, 1]} : vector<49x256xf32> to vector<1x256xf32>
    %c1_i32_342 = arith.constant 1 : i32
    %798 = tpu.dynamic_rotate %797 by %c1_i32_342 dim 1 : vector<1x256xf32>, i32 -> vector<1x256xf32>
    %799 = vector.extract_strided_slice %6 {offsets = [23, 0], sizes = [1, 256], strides = [1, 1]} : vector<49x256xf32> to vector<1x256xf32>
    %800 = arith.mulf %798, %799 : vector<1x256xf32>
    %801 = arith.addf %796, %800 : vector<1x256xf32>
    %802 = vector.extract_strided_slice %680 {offsets = [24, 0], sizes = [1, 256], strides = [1, 1]} : vector<49x256xf32> to vector<1x256xf32>
    %803 = arith.addf %801, %802 : vector<1x256xf32>
    %804 = vector.extract_strided_slice %680 {offsets = [25, 0], sizes = [1, 256], strides = [1, 1]} : vector<49x256xf32> to vector<1x256xf32>
    %c255_i32_343 = arith.constant 255 : i32
    %805 = tpu.dynamic_rotate %804 by %c255_i32_343 dim 1 : vector<1x256xf32>, i32 -> vector<1x256xf32>
    %806 = vector.extract_strided_slice %6 {offsets = [25, 0], sizes = [1, 256], strides = [1, 1]} : vector<49x256xf32> to vector<1x256xf32>
    %807 = arith.mulf %805, %806 : vector<1x256xf32>
    %808 = arith.addf %803, %807 : vector<1x256xf32>
    %809 = vector.extract_strided_slice %680 {offsets = [26, 0], sizes = [1, 256], strides = [1, 1]} : vector<49x256xf32> to vector<1x256xf32>
    %c254_i32 = arith.constant 254 : i32
    %810 = tpu.dynamic_rotate %809 by %c254_i32 dim 1 : vector<1x256xf32>, i32 -> vector<1x256xf32>
    %811 = vector.extract_strided_slice %6 {offsets = [26, 0], sizes = [1, 256], strides = [1, 1]} : vector<49x256xf32> to vector<1x256xf32>
    %812 = arith.mulf %810, %811 : vector<1x256xf32>
    %813 = arith.addf %808, %812 : vector<1x256xf32>
    %814 = vector.extract_strided_slice %680 {offsets = [27, 0], sizes = [1, 256], strides = [1, 1]} : vector<49x256xf32> to vector<1x256xf32>
    %c253_i32 = arith.constant 253 : i32
    %815 = tpu.dynamic_rotate %814 by %c253_i32 dim 1 : vector<1x256xf32>, i32 -> vector<1x256xf32>
    %816 = vector.extract_strided_slice %6 {offsets = [27, 0], sizes = [1, 256], strides = [1, 1]} : vector<49x256xf32> to vector<1x256xf32>
    %817 = arith.mulf %815, %816 : vector<1x256xf32>
    %818 = arith.addf %813, %817 : vector<1x256xf32>
    %819 = vector.extract_strided_slice %680 {offsets = [28, 0], sizes = [1, 256], strides = [1, 1]} : vector<49x256xf32> to vector<1x256xf32>
    %c243_i32 = arith.constant 243 : i32
    %820 = tpu.dynamic_rotate %819 by %c243_i32 dim 1 : vector<1x256xf32>, i32 -> vector<1x256xf32>
    %821 = vector.extract_strided_slice %6 {offsets = [28, 0], sizes = [1, 256], strides = [1, 1]} : vector<49x256xf32> to vector<1x256xf32>
    %822 = arith.mulf %820, %821 : vector<1x256xf32>
    %823 = arith.addf %818, %822 : vector<1x256xf32>
    %824 = vector.extract_strided_slice %680 {offsets = [29, 0], sizes = [1, 256], strides = [1, 1]} : vector<49x256xf32> to vector<1x256xf32>
    %c242_i32 = arith.constant 242 : i32
    %825 = tpu.dynamic_rotate %824 by %c242_i32 dim 1 : vector<1x256xf32>, i32 -> vector<1x256xf32>
    %826 = vector.extract_strided_slice %6 {offsets = [29, 0], sizes = [1, 256], strides = [1, 1]} : vector<49x256xf32> to vector<1x256xf32>
    %827 = arith.mulf %825, %826 : vector<1x256xf32>
    %828 = arith.addf %823, %827 : vector<1x256xf32>
    %829 = vector.extract_strided_slice %680 {offsets = [30, 0], sizes = [1, 256], strides = [1, 1]} : vector<49x256xf32> to vector<1x256xf32>
    %c241_i32_344 = arith.constant 241 : i32
    %830 = tpu.dynamic_rotate %829 by %c241_i32_344 dim 1 : vector<1x256xf32>, i32 -> vector<1x256xf32>
    %831 = vector.extract_strided_slice %6 {offsets = [30, 0], sizes = [1, 256], strides = [1, 1]} : vector<49x256xf32> to vector<1x256xf32>
    %832 = arith.mulf %830, %831 : vector<1x256xf32>
    %833 = arith.addf %828, %832 : vector<1x256xf32>
    %834 = vector.extract_strided_slice %680 {offsets = [31, 0], sizes = [1, 256], strides = [1, 1]} : vector<49x256xf32> to vector<1x256xf32>
    %c240_i32_345 = arith.constant 240 : i32
    %835 = tpu.dynamic_rotate %834 by %c240_i32_345 dim 1 : vector<1x256xf32>, i32 -> vector<1x256xf32>
    %836 = vector.extract_strided_slice %6 {offsets = [31, 0], sizes = [1, 256], strides = [1, 1]} : vector<49x256xf32> to vector<1x256xf32>
    %837 = arith.mulf %835, %836 : vector<1x256xf32>
    %838 = arith.addf %833, %837 : vector<1x256xf32>
    %839 = vector.extract_strided_slice %680 {offsets = [32, 0], sizes = [1, 256], strides = [1, 1]} : vector<49x256xf32> to vector<1x256xf32>
    %c239_i32_346 = arith.constant 239 : i32
    %840 = tpu.dynamic_rotate %839 by %c239_i32_346 dim 1 : vector<1x256xf32>, i32 -> vector<1x256xf32>
    %841 = vector.extract_strided_slice %6 {offsets = [32, 0], sizes = [1, 256], strides = [1, 1]} : vector<49x256xf32> to vector<1x256xf32>
    %842 = arith.mulf %840, %841 : vector<1x256xf32>
    %843 = arith.addf %838, %842 : vector<1x256xf32>
    %844 = vector.extract_strided_slice %680 {offsets = [33, 0], sizes = [1, 256], strides = [1, 1]} : vector<49x256xf32> to vector<1x256xf32>
    %c238_i32 = arith.constant 238 : i32
    %845 = tpu.dynamic_rotate %844 by %c238_i32 dim 1 : vector<1x256xf32>, i32 -> vector<1x256xf32>
    %846 = vector.extract_strided_slice %6 {offsets = [33, 0], sizes = [1, 256], strides = [1, 1]} : vector<49x256xf32> to vector<1x256xf32>
    %847 = arith.mulf %845, %846 : vector<1x256xf32>
    %848 = arith.addf %843, %847 : vector<1x256xf32>
    %849 = vector.extract_strided_slice %680 {offsets = [34, 0], sizes = [1, 256], strides = [1, 1]} : vector<49x256xf32> to vector<1x256xf32>
    %c237_i32 = arith.constant 237 : i32
    %850 = tpu.dynamic_rotate %849 by %c237_i32 dim 1 : vector<1x256xf32>, i32 -> vector<1x256xf32>
    %851 = vector.extract_strided_slice %6 {offsets = [34, 0], sizes = [1, 256], strides = [1, 1]} : vector<49x256xf32> to vector<1x256xf32>
    %852 = arith.mulf %850, %851 : vector<1x256xf32>
    %853 = arith.addf %848, %852 : vector<1x256xf32>
    %854 = vector.extract_strided_slice %680 {offsets = [35, 0], sizes = [1, 256], strides = [1, 1]} : vector<49x256xf32> to vector<1x256xf32>
    %c227_i32 = arith.constant 227 : i32
    %855 = tpu.dynamic_rotate %854 by %c227_i32 dim 1 : vector<1x256xf32>, i32 -> vector<1x256xf32>
    %856 = vector.extract_strided_slice %6 {offsets = [35, 0], sizes = [1, 256], strides = [1, 1]} : vector<49x256xf32> to vector<1x256xf32>
    %857 = arith.mulf %855, %856 : vector<1x256xf32>
    %858 = arith.addf %853, %857 : vector<1x256xf32>
    %859 = vector.extract_strided_slice %680 {offsets = [36, 0], sizes = [1, 256], strides = [1, 1]} : vector<49x256xf32> to vector<1x256xf32>
    %c226_i32 = arith.constant 226 : i32
    %860 = tpu.dynamic_rotate %859 by %c226_i32 dim 1 : vector<1x256xf32>, i32 -> vector<1x256xf32>
    %861 = vector.extract_strided_slice %6 {offsets = [36, 0], sizes = [1, 256], strides = [1, 1]} : vector<49x256xf32> to vector<1x256xf32>
    %862 = arith.mulf %860, %861 : vector<1x256xf32>
    %863 = arith.addf %858, %862 : vector<1x256xf32>
    %864 = vector.extract_strided_slice %680 {offsets = [37, 0], sizes = [1, 256], strides = [1, 1]} : vector<49x256xf32> to vector<1x256xf32>
    %c225_i32 = arith.constant 225 : i32
    %865 = tpu.dynamic_rotate %864 by %c225_i32 dim 1 : vector<1x256xf32>, i32 -> vector<1x256xf32>
    %866 = vector.extract_strided_slice %6 {offsets = [37, 0], sizes = [1, 256], strides = [1, 1]} : vector<49x256xf32> to vector<1x256xf32>
    %867 = arith.mulf %865, %866 : vector<1x256xf32>
    %868 = arith.addf %863, %867 : vector<1x256xf32>
    %869 = vector.extract_strided_slice %680 {offsets = [38, 0], sizes = [1, 256], strides = [1, 1]} : vector<49x256xf32> to vector<1x256xf32>
    %c224_i32 = arith.constant 224 : i32
    %870 = tpu.dynamic_rotate %869 by %c224_i32 dim 1 : vector<1x256xf32>, i32 -> vector<1x256xf32>
    %871 = vector.extract_strided_slice %6 {offsets = [38, 0], sizes = [1, 256], strides = [1, 1]} : vector<49x256xf32> to vector<1x256xf32>
    %872 = arith.mulf %870, %871 : vector<1x256xf32>
    %873 = arith.addf %868, %872 : vector<1x256xf32>
    %874 = vector.extract_strided_slice %680 {offsets = [39, 0], sizes = [1, 256], strides = [1, 1]} : vector<49x256xf32> to vector<1x256xf32>
    %c223_i32 = arith.constant 223 : i32
    %875 = tpu.dynamic_rotate %874 by %c223_i32 dim 1 : vector<1x256xf32>, i32 -> vector<1x256xf32>
    %876 = vector.extract_strided_slice %6 {offsets = [39, 0], sizes = [1, 256], strides = [1, 1]} : vector<49x256xf32> to vector<1x256xf32>
    %877 = arith.mulf %875, %876 : vector<1x256xf32>
    %878 = arith.addf %873, %877 : vector<1x256xf32>
    %879 = vector.extract_strided_slice %680 {offsets = [40, 0], sizes = [1, 256], strides = [1, 1]} : vector<49x256xf32> to vector<1x256xf32>
    %c222_i32 = arith.constant 222 : i32
    %880 = tpu.dynamic_rotate %879 by %c222_i32 dim 1 : vector<1x256xf32>, i32 -> vector<1x256xf32>
    %881 = vector.extract_strided_slice %6 {offsets = [40, 0], sizes = [1, 256], strides = [1, 1]} : vector<49x256xf32> to vector<1x256xf32>
    %882 = arith.mulf %880, %881 : vector<1x256xf32>
    %883 = arith.addf %878, %882 : vector<1x256xf32>
    %884 = vector.extract_strided_slice %680 {offsets = [41, 0], sizes = [1, 256], strides = [1, 1]} : vector<49x256xf32> to vector<1x256xf32>
    %c221_i32 = arith.constant 221 : i32
    %885 = tpu.dynamic_rotate %884 by %c221_i32 dim 1 : vector<1x256xf32>, i32 -> vector<1x256xf32>
    %886 = vector.extract_strided_slice %6 {offsets = [41, 0], sizes = [1, 256], strides = [1, 1]} : vector<49x256xf32> to vector<1x256xf32>
    %887 = arith.mulf %885, %886 : vector<1x256xf32>
    %888 = arith.addf %883, %887 : vector<1x256xf32>
    %889 = vector.extract_strided_slice %680 {offsets = [42, 0], sizes = [1, 256], strides = [1, 1]} : vector<49x256xf32> to vector<1x256xf32>
    %c211_i32 = arith.constant 211 : i32
    %890 = tpu.dynamic_rotate %889 by %c211_i32 dim 1 : vector<1x256xf32>, i32 -> vector<1x256xf32>
    %891 = vector.extract_strided_slice %6 {offsets = [42, 0], sizes = [1, 256], strides = [1, 1]} : vector<49x256xf32> to vector<1x256xf32>
    %892 = arith.mulf %890, %891 : vector<1x256xf32>
    %893 = arith.addf %888, %892 : vector<1x256xf32>
    %894 = vector.extract_strided_slice %680 {offsets = [43, 0], sizes = [1, 256], strides = [1, 1]} : vector<49x256xf32> to vector<1x256xf32>
    %c210_i32 = arith.constant 210 : i32
    %895 = tpu.dynamic_rotate %894 by %c210_i32 dim 1 : vector<1x256xf32>, i32 -> vector<1x256xf32>
    %896 = vector.extract_strided_slice %6 {offsets = [43, 0], sizes = [1, 256], strides = [1, 1]} : vector<49x256xf32> to vector<1x256xf32>
    %897 = arith.mulf %895, %896 : vector<1x256xf32>
    %898 = arith.addf %893, %897 : vector<1x256xf32>
    %899 = vector.extract_strided_slice %680 {offsets = [44, 0], sizes = [1, 256], strides = [1, 1]} : vector<49x256xf32> to vector<1x256xf32>
    %c209_i32 = arith.constant 209 : i32
    %900 = tpu.dynamic_rotate %899 by %c209_i32 dim 1 : vector<1x256xf32>, i32 -> vector<1x256xf32>
    %901 = vector.extract_strided_slice %6 {offsets = [44, 0], sizes = [1, 256], strides = [1, 1]} : vector<49x256xf32> to vector<1x256xf32>
    %902 = arith.mulf %900, %901 : vector<1x256xf32>
    %903 = arith.addf %898, %902 : vector<1x256xf32>
    %904 = vector.extract_strided_slice %680 {offsets = [45, 0], sizes = [1, 256], strides = [1, 1]} : vector<49x256xf32> to vector<1x256xf32>
    %c208_i32 = arith.constant 208 : i32
    %905 = tpu.dynamic_rotate %904 by %c208_i32 dim 1 : vector<1x256xf32>, i32 -> vector<1x256xf32>
    %906 = vector.extract_strided_slice %6 {offsets = [45, 0], sizes = [1, 256], strides = [1, 1]} : vector<49x256xf32> to vector<1x256xf32>
    %907 = arith.mulf %905, %906 : vector<1x256xf32>
    %908 = arith.addf %903, %907 : vector<1x256xf32>
    %909 = vector.extract_strided_slice %680 {offsets = [46, 0], sizes = [1, 256], strides = [1, 1]} : vector<49x256xf32> to vector<1x256xf32>
    %c207_i32 = arith.constant 207 : i32
    %910 = tpu.dynamic_rotate %909 by %c207_i32 dim 1 : vector<1x256xf32>, i32 -> vector<1x256xf32>
    %911 = vector.extract_strided_slice %6 {offsets = [46, 0], sizes = [1, 256], strides = [1, 1]} : vector<49x256xf32> to vector<1x256xf32>
    %912 = arith.mulf %910, %911 : vector<1x256xf32>
    %913 = arith.addf %908, %912 : vector<1x256xf32>
    %914 = vector.extract_strided_slice %680 {offsets = [47, 0], sizes = [1, 256], strides = [1, 1]} : vector<49x256xf32> to vector<1x256xf32>
    %c206_i32 = arith.constant 206 : i32
    %915 = tpu.dynamic_rotate %914 by %c206_i32 dim 1 : vector<1x256xf32>, i32 -> vector<1x256xf32>
    %916 = vector.extract_strided_slice %6 {offsets = [47, 0], sizes = [1, 256], strides = [1, 1]} : vector<49x256xf32> to vector<1x256xf32>
    %917 = arith.mulf %915, %916 : vector<1x256xf32>
    %918 = arith.addf %913, %917 : vector<1x256xf32>
    %919 = vector.extract_strided_slice %680 {offsets = [48, 0], sizes = [1, 256], strides = [1, 1]} : vector<49x256xf32> to vector<1x256xf32>
    %c205_i32 = arith.constant 205 : i32
    %920 = tpu.dynamic_rotate %919 by %c205_i32 dim 1 : vector<1x256xf32>, i32 -> vector<1x256xf32>
    %921 = vector.extract_strided_slice %6 {offsets = [48, 0], sizes = [1, 256], strides = [1, 1]} : vector<49x256xf32> to vector<1x256xf32>
    %922 = arith.mulf %920, %921 : vector<1x256xf32>
    %923 = arith.addf %918, %922 : vector<1x256xf32>
    %924 = vector.extract_strided_slice %4 {offsets = [0, 14], sizes = [1, 1], strides = [1, 1]} : vector<8x16xf32> to vector<1x1xf32>
    %925 = vector.broadcast %924 : vector<1x1xf32> to vector<1x256xf32>
    %926 = arith.addf %923, %925 : vector<1x256xf32>
    %c0_347 = arith.constant 0 : index
    %c0_348 = arith.constant 0 : index
    %c0_349 = arith.constant 0 : index
    %927 = vector.load %arg15[%c0_347, %c0_348, %c0_349] : memref<1x1x256xf32, #tpu.memory_space<vmem>>, vector<1x1x256xf32>
    %928 = vector.shape_cast %927 : vector<1x1x256xf32> to vector<1x256xf32>
    %929 = vector.shape_cast %926 : vector<1x256xf32> to vector<1x1x256xf32>
    tpu.vector_store %arg15[%c0_347, %c0_348, %c0_349], %929 {strides = array<i32>} : memref<1x1x256xf32, #tpu.memory_space<vmem>>, vector<1x1x256xf32>,
    return
  }
  func.func @transform_0(%arg0: i32) -> (i32, i32, i32) {
    %c0_i32 = arith.constant 0 : i32
    %c0_i32_0 = arith.constant 0 : i32
    %c0_i32_1 = arith.constant 0 : i32
    return %arg0, %c0_i32, %c0_i32_0 : i32, i32, i32
  }
  func.func @transform_1(%arg0: i32) -> (i32, i32, i32) {
    %c0_i32 = arith.constant 0 : i32
    %c0_i32_0 = arith.constant 0 : i32
    %c0_i32_1 = arith.constant 0 : i32
    return %arg0, %c0_i32, %c0_i32_0 : i32, i32, i32
  }
  func.func @transform_2(%arg0: i32) -> (i32, i32, i32) {
    %c0_i32 = arith.constant 0 : i32
    %c0_i32_0 = arith.constant 0 : i32
    %c0_i32_1 = arith.constant 0 : i32
    return %arg0, %c0_i32, %c0_i32_0 : i32, i32, i32
  }
  func.func @transform_3(%arg0: i32) -> (i32, i32, i32) {
    %c0_i32 = arith.constant 0 : i32
    %c0_i32_0 = arith.constant 0 : i32
    %c0_i32_1 = arith.constant 0 : i32
    return %arg0, %c0_i32, %c0_i32_0 : i32, i32, i32
  }
  func.func @transform_4(%arg0: i32) -> (i32, i32) {
    %c0_i32 = arith.constant 0 : i32
    %c0_i32_0 = arith.constant 0 : i32
    %c0_i32_1 = arith.constant 0 : i32
    return %c0_i32, %c0_i32_0 : i32, i32
  }
  func.func @transform_5(%arg0: i32) -> (i32, i32, i32) {
    %c0_i32 = arith.constant 0 : i32
    %c0_i32_0 = arith.constant 0 : i32
    %c0_i32_1 = arith.constant 0 : i32
    %c0_i32_2 = arith.constant 0 : i32
    return %c0_i32, %c0_i32_0, %c0_i32_1 : i32, i32, i32
  }
  func.func @transform_6(%arg0: i32) -> (i32, i32) {
    %c0_i32 = arith.constant 0 : i32
    %c0_i32_0 = arith.constant 0 : i32
    %c0_i32_1 = arith.constant 0 : i32
    return %c0_i32, %c0_i32_0 : i32, i32
  }
  func.func @transform_7(%arg0: i32) -> (i32, i32) {
    %c0_i32 = arith.constant 0 : i32
    %c0_i32_0 = arith.constant 0 : i32
    %c0_i32_1 = arith.constant 0 : i32
    return %c0_i32, %c0_i32_0 : i32, i32
  }
  func.func @transform_8(%arg0: i32) -> (i32, i32) {
    %c0_i32 = arith.constant 0 : i32
    %c0_i32_0 = arith.constant 0 : i32
    %c0_i32_1 = arith.constant 0 : i32
    return %c0_i32, %c0_i32_0 : i32, i32
  }
  func.func @transform_9(%arg0: i32) -> (i32, i32, i32) {
    %c0_i32 = arith.constant 0 : i32
    %c0_i32_0 = arith.constant 0 : i32
    %c0_i32_1 = arith.constant 0 : i32
    %c0_i32_2 = arith.constant 0 : i32
    return %c0_i32, %c0_i32_0, %c0_i32_1 : i32, i32, i32
  }
  func.func @transform_10(%arg0: i32) -> (i32, i32) {
    %c0_i32 = arith.constant 0 : i32
    %c0_i32_0 = arith.constant 0 : i32
    %c0_i32_1 = arith.constant 0 : i32
    return %c0_i32, %c0_i32_0 : i32, i32
  }
  func.func @transform_11(%arg0: i32) -> (i32, i32) {
    %c0_i32 = arith.constant 0 : i32
    %c0_i32_0 = arith.constant 0 : i32
    %c0_i32_1 = arith.constant 0 : i32
    return %c0_i32, %c0_i32_0 : i32, i32
  }
  func.func @transform_12(%arg0: i32) -> (i32, i32) {
    %c0_i32 = arith.constant 0 : i32
    %c0_i32_0 = arith.constant 0 : i32
    %c0_i32_1 = arith.constant 0 : i32
    return %c0_i32, %c0_i32_0 : i32, i32
  }
  func.func @transform_13(%arg0: i32) -> (i32, i32, i32) {
    %c0_i32 = arith.constant 0 : i32
    %c0_i32_0 = arith.constant 0 : i32
    %c0_i32_1 = arith.constant 0 : i32
    return %arg0, %c0_i32, %c0_i32_0 : i32, i32, i32
  }
  func.func @transform_14(%arg0: i32) -> (i32, i32, i32) {
    %c0_i32 = arith.constant 0 : i32
    %c0_i32_0 = arith.constant 0 : i32
    %c0_i32_1 = arith.constant 0 : i32
    return %arg0, %c0_i32, %c0_i32_0 : i32, i32, i32
  }
}

</mosaic_0001>

<llo_original>
// kernel: focus1_forward.1
$region0: #{focus1_forward.1}
  #allocation0 [shape = 'u32[]', space=smem, size = 0x4, offset = 0x4, fixed_abs, tag = 'smem constant byte address 0x4 - core index']
  #allocation1 [shape = 'u32[144,128]{1,0:T(1,128)}', space=vmem, size = 0x12000, scoped, tag = 'internal scratch']
  #allocation2 [shape = 'f32[153,64]{1,0:T(8,128)}', space=vmem, size = 0x14000, scoped, tag = 'scratch operand']
  #allocation3 [shape = 'f32[196,64]{1,0:T(8,128)}', space=vmem, size = 0x19000, scoped, tag = 'scratch operand']
  %s0 = inlined_call_operand.vmem [shape: f32[2,8,256], index: 0, kind: input, shape index: {}]
  %s1 = inlined_call_operand.vmem [shape: f32[2,4,64], index: 1, kind: input, shape index: {}]
  %s2 = inlined_call_operand.vmem [shape: f32[2,1,64], index: 2, kind: input, shape index: {}]
  %s3 = inlined_call_operand.vmem [shape: bf16[2,512,64], index: 3, kind: input, shape index: {}]
  %s4 = inlined_call_operand.vmem [shape: bf16[64,256], index: 4, kind: input, shape index: {}]
  %s5 = inlined_call_operand.vmem [shape: bf16[49,64,64], index: 5, kind: input, shape index: {}]
  %s6 = inlined_call_operand.vmem [shape: f32[9,256], index: 6, kind: input, shape index: {}]
  %s7 = inlined_call_operand.hbm [shape: f32[49,256], index: 7, kind: input, shape index: {}]
  %s8 = inlined_call_operand.hbm [shape: bf16[8,196], index: 8, kind: input, shape index: {}]
  %s9 = inlined_call_operand.vmem [shape: bf16[6,72,8], index: 9, kind: input, shape index: {}]
  %s10 = inlined_call_operand.vmem [shape: bf16[144,512], index: 10, kind: input, shape index: {}]
  %s11 = inlined_call_operand.vmem [shape: bf16[49,8], index: 11, kind: input, shape index: {}]
  %s12 = inlined_call_operand.hbm [shape: f32[8,16], index: 12, kind: input, shape index: {}]
  %s13 = inlined_call_operand.vmem [shape: f32[2,8,256], index: 13, kind: output, shape index: {0}]
  %s14 = inlined_call_operand.vmem [shape: f32[2,1,256], index: 14, kind: output, shape index: {1}]
  %15 = xla_tuple %s13, %s14
  %s16 = sld [smem:[#allocation0]]
  $region105: #{focus1_forward.1} parent=0
    _
  %s18 = ssub.s32 1, %s16
  %s19 = scalar_select 0, %s18, %s16
  $region1: #{focus1_forward.1} parent=0
    #allocation4 [shape = 'u8[57344]{0}', space=vmem, size = 0xe000, scoped, tag = 'input window, operand 7, single buffered']
    #allocation5 [shape = 's32[2]{0}', space=sflag, size = 0x8, scoped, tag = 'scoped memory for focus1_forward.1']
    #allocation6 [shape = 'u8[4096]{0}', space=vmem, size = 0x1000, scoped, tag = 'input window, operand 8, single buffered']
    #allocation7 [shape = 's32[1]{0}', space=sflag, size = 0x4, scoped, tag = 'scoped memory for focus1_forward.1']
    #allocation8 [shape = 'u8[4096]{0}', space=vmem, size = 0x1000, scoped, tag = 'input window, operand 12, single buffered']
    %20 = vsyncpa [#allocation5], 0
    %21 = vsyncpa [#allocation7], 0
    loop: start=0, step=1, limit=4
    $region2: #{focus1_forward.1} parent=1 // loop_pre_header
      _
    $region3: #{focus1_forward.1} parent=1 // loop_header
      %s23 = sphi 0, %s27
      %p24 = scmp.ge.s32.totalorder %s23, 4
      %s33 = sphi 0, %s35
      %s36 = sphi 0, %s33
      %s37 = sphi 0, %s36
      %s53 = sphi 0, %s37
      %s59 = sphi 0, %s61
      %s62 = sphi 0, %s59
      %s63 = sphi 0, %s62
      %s79 = sphi 0, %s63
      %s85 = sphi 0, %s87
      %s88 = sphi 0, %s85
      %s89 = sphi 0, %s88
      %s105 = sphi 0, %s89
      %s111 = sphi 0, %s113
      %s114 = sphi 0, %s111
      %s115 = sphi 0, %s114
      %s131 = sphi 0, %s115
      %s135 = sphi 0, %s135
      %s137 = sphi 0, %s135
      %s138 = sphi 0, %s137
      %s152 = sphi 0, %s138
      %s156 = sphi 0, %s156
      %s158 = sphi 0, %s156
      %s159 = sphi 0, %s158
      %s173 = sphi 0, %s159
      %s177 = sphi 0, %s177
      %s179 = sphi 0, %s177
      %s180 = sphi 0, %s179
      %s194 = sphi 0, %s180
      %s198 = sphi 0, %s198
      %s200 = sphi 0, %s198
      %s201 = sphi 0, %s200
      %s215 = sphi 0, %s201
      %s219 = sphi 0, %s219
      %s221 = sphi 0, %s219
      %s222 = sphi 0, %s221
      %s236 = sphi 0, %s222
      %s240 = sphi 0, %s240
      %s242 = sphi 0, %s240
      %s243 = sphi 0, %s242
      %s257 = sphi 0, %s243
      %s261 = sphi 0, %s261
      %s263 = sphi 0, %s261
      %s264 = sphi 0, %s263
      %s278 = sphi 0, %s264
      %s282 = sphi 0, %s282
      %s284 = sphi 0, %s282
      %s285 = sphi 0, %s284
      %s299 = sphi 0, %s285
      %s303 = sphi 0, %s303
      %s305 = sphi 0, %s303
      %s306 = sphi 0, %s305
      %s320 = sphi 0, %s306
      %s326 = sphi 0, %s328
      %s329 = sphi 0, %s326
      %s330 = sphi 0, %s329
      %s346 = sphi 0, %s330
      %s352 = sphi 0, %s354
      %s355 = sphi 0, %s352
      %s356 = sphi 0, %s355
      %s372 = sphi 0, %s356
    $region4: #{focus1_forward.1} parent=1 // loop_header_branch
      %26 = sbr.rel (%p24) target = $region8
    $region5: #{focus1_forward.1} parent=1 // loop_body
      %s28 = ssub.s32 %s23, 1
      %s29 = ssub.s32 %s23, 2
      %s30 = sadd.s32 %s23, 1
      %s31 = ssub.s32 %s23, %s30
      %p32 = scmp.eq.s32.totalorder %s31, 0
      %s34 = sadd.s32 %s33, 1
      %s35 = scalar_select %p32, %s33, %s34
      %p38 = pneg %p32
      %p39 = scmp.eq.s32.totalorder %s23, 1
      %p40 = por %p38, %p39
      %p41 = scmp.ne.s32.totalorder %s33, %s36
      %p42 = scmp.eq.s32.totalorder %s23, 0
      %p43 = por %p41, %p42
      %p44 = scmp.ne.s32.totalorder %s33, %s36
      %p45 = scmp.eq.s32.totalorder %s28, 1
      %p46 = por %p44, %p45
      %p47 = scmp.ne.s32.totalorder %s36, %s37
      %p48 = scmp.eq.s32.totalorder %s28, 0
      %p49 = por %p47, %p48
      %p50 = scmp.ne.s32.totalorder %s36, %s37
      %p51 = scmp.eq.s32.totalorder %s29, 1
      %p52 = por %p50, %p51
      %p54 = scmp.ne.s32.totalorder %s37, %s53
      %p55 = scmp.eq.s32.totalorder %s29, 0
      %p56 = por %p54, %p55
      %s57 = ssub.s32 %s23, %s30
      %p58 = scmp.eq.s32.totalorder %s57, 0
      %s60 = sadd.s32 %s59, 1
      %s61 = scalar_select %p58, %s59, %s60
      %p64 = pneg %p58
      %p65 = scmp.eq.s32.totalorder %s23, 1
      %p66 = por %p64, %p65
      %p67 = scmp.ne.s32.totalorder %s59, %s62
      %p68 = scmp.eq.s32.totalorder %s23, 0
      %p69 = por %p67, %p68
      %p70 = scmp.ne.s32.totalorder %s59, %s62
      %p71 = scmp.eq.s32.totalorder %s28, 1
      %p72 = por %p70, %p71
      %p73 = scmp.ne.s32.totalorder %s62, %s63
      %p74 = scmp.eq.s32.totalorder %s28, 0
      %p75 = por %p73, %p74
      %p76 = scmp.ne.s32.totalorder %s62, %s63
      %p77 = scmp.eq.s32.totalorder %s29, 1
      %p78 = por %p76, %p77
      %p80 = scmp.ne.s32.totalorder %s63, %s79
      %p81 = scmp.eq.s32.totalorder %s29, 0
      %p82 = por %p80, %p81
      %s83 = ssub.s32 %s23, %s30
      %p84 = scmp.eq.s32.totalorder %s83, 0
      %s86 = sadd.s32 %s85, 1
      %s87 = scalar_select %p84, %s85, %s86
      %p90 = pneg %p84
      %p91 = scmp.eq.s32.totalorder %s23, 1
      %p92 = por %p90, %p91
      %p93 = scmp.ne.s32.totalorder %s85, %s88
      %p94 = scmp.eq.s32.totalorder %s23, 0
      %p95 = por %p93, %p94
      %p96 = scmp.ne.s32.totalorder %s85, %s88
      %p97 = scmp.eq.s32.totalorder %s28, 1
      %p98 = por %p96, %p97
      %p99 = scmp.ne.s32.totalorder %s88, %s89
      %p100 = scmp.eq.s32.totalorder %s28, 0
      %p101 = por %p99, %p100
      %p102 = scmp.ne.s32.totalorder %s88, %s89
      %p103 = scmp.eq.s32.totalorder %s29, 1
      %p104 = por %p102, %p103
      %p106 = scmp.ne.s32.totalorder %s89, %s105
      %p107 = scmp.eq.s32.totalorder %s29, 0
      %p108 = por %p106, %p107
      %s109 = ssub.s32 %s23, %s30
      %p110 = scmp.eq.s32.totalorder %s109, 0
      %s112 = sadd.s32 %s111, 1
      %s113 = scalar_select %p110, %s111, %s112
      %p116 = pneg %p110
      %p117 = scmp.eq.s32.totalorder %s23, 1
      %p118 = por %p116, %p117
      %p119 = scmp.ne.s32.totalorder %s111, %s114
      %p120 = scmp.eq.s32.totalorder %s23, 0
      %p121 = por %p119, %p120
      %p122 = scmp.ne.s32.totalorder %s111, %s114
      %p123 = scmp.eq.s32.totalorder %s28, 1
      %p124 = por %p122, %p123
      %p125 = scmp.ne.s32.totalorder %s114, %s115
      %p126 = scmp.eq.s32.totalorder %s28, 0
      %p127 = por %p125, %p126
      %p128 = scmp.ne.s32.totalorder %s114, %s115
      %p129 = scmp.eq.s32.totalorder %s29, 1
      %p130 = por %p128, %p129
      %p132 = scmp.ne.s32.totalorder %s115, %s131
      %p133 = scmp.eq.s32.totalorder %s29, 0
      %p134 = por %p132, %p133
      %s136 = sadd.s32 %s135, 1
      %p139 = scmp.eq.s32.totalorder %s23, 1
      %p140 = scmp.ne.s32.totalorder %s135, %s137
      %p141 = scmp.eq.s32.totalorder %s23, 0
      %p142 = por %p140, %p141
      %p143 = scmp.ne.s32.totalorder %s135, %s137
      %p144 = scmp.eq.s32.totalorder %s28, 1
      %p145 = por %p143, %p144
      %p146 = scmp.ne.s32.totalorder %s137, %s138
      %p147 = scmp.eq.s32.totalorder %s28, 0
      %p148 = por %p146, %p147
      %p149 = scmp.ne.s32.totalorder %s137, %s138
      %p150 = scmp.eq.s32.totalorder %s29, 1
      %p151 = por %p149, %p150
      %p153 = scmp.ne.s32.totalorder %s138, %s152
      %p154 = scmp.eq.s32.totalorder %s29, 0
      %p155 = por %p153, %p154
      %s157 = sadd.s32 %s156, 1
      %p160 = scmp.eq.s32.totalorder %s23, 1
      %p161 = scmp.ne.s32.totalorder %s156, %s158
      %p162 = scmp.eq.s32.totalorder %s23, 0
      %p163 = por %p161, %p162
      %p164 = scmp.ne.s32.totalorder %s156, %s158
      %p165 = scmp.eq.s32.totalorder %s28, 1
      %p166 = por %p164, %p165
      %p167 = scmp.ne.s32.totalorder %s158, %s159
      %p168 = scmp.eq.s32.totalorder %s28, 0
      %p169 = por %p167, %p168
      %p170 = scmp.ne.s32.totalorder %s158, %s159
      %p171 = scmp.eq.s32.totalorder %s29, 1
      %p172 = por %p170, %p171
      %p174 = scmp.ne.s32.totalorder %s159, %s173
      %p175 = scmp.eq.s32.totalorder %s29, 0
      %p176 = por %p174, %p175
      %s178 = sadd.s32 %s177, 1
      %p181 = scmp.eq.s32.totalorder %s23, 1
      %p182 = scmp.ne.s32.totalorder %s177, %s179
      %p183 = scmp.eq.s32.totalorder %s23, 0
      %p184 = por %p182, %p183
      %p185 = scmp.ne.s32.totalorder %s177, %s179
      %p186 = scmp.eq.s32.totalorder %s28, 1
      %p187 = por %p185, %p186
      %p188 = scmp.ne.s32.totalorder %s179, %s180
      %p189 = scmp.eq.s32.totalorder %s28, 0
      %p190 = por %p188, %p189
      %p191 = scmp.ne.s32.totalorder %s179, %s180
      %p192 = scmp.eq.s32.totalorder %s29, 1
      %p193 = por %p191, %p192
      %p195 = scmp.ne.s32.totalorder %s180, %s194
      %p196 = scmp.eq.s32.totalorder %s29, 0
      %p197 = por %p195, %p196
      %s199 = sadd.s32 %s198, 1
      %p202 = scmp.eq.s32.totalorder %s23, 1
      %p203 = scmp.ne.s32.totalorder %s198, %s200
      %p204 = scmp.eq.s32.totalorder %s23, 0
      %p205 = por %p203, %p204
      %p206 = scmp.ne.s32.totalorder %s198, %s200
      %p207 = scmp.eq.s32.totalorder %s28, 1
      %p208 = por %p206, %p207
      %p209 = scmp.ne.s32.totalorder %s200, %s201
      %p210 = scmp.eq.s32.totalorder %s28, 0
      %p211 = por %p209, %p210
      %p212 = scmp.ne.s32.totalorder %s200, %s201
      %p213 = scmp.eq.s32.totalorder %s29, 1
      %p214 = por %p212, %p213
      %p216 = scmp.ne.s32.totalorder %s201, %s215
      %p217 = scmp.eq.s32.totalorder %s29, 0
      %p218 = por %p216, %p217
      %s220 = sadd.s32 %s219, 1
      %p223 = scmp.eq.s32.totalorder %s23, 1
      %p224 = scmp.ne.s32.totalorder %s219, %s221
      %p225 = scmp.eq.s32.totalorder %s23, 0
      %p226 = por %p224, %p225
      %p227 = scmp.ne.s32.totalorder %s219, %s221
      %p228 = scmp.eq.s32.totalorder %s28, 1
      %p229 = por %p227, %p228
      %p230 = scmp.ne.s32.totalorder %s221, %s222
      %p231 = scmp.eq.s32.totalorder %s28, 0
      %p232 = por %p230, %p231
      %p233 = scmp.ne.s32.totalorder %s221, %s222
      %p234 = scmp.eq.s32.totalorder %s29, 1
      %p235 = por %p233, %p234
      %p237 = scmp.ne.s32.totalorder %s222, %s236
      %p238 = scmp.eq.s32.totalorder %s29, 0
      %p239 = por %p237, %p238
      %s241 = sadd.s32 %s240, 1
      %p244 = scmp.eq.s32.totalorder %s23, 1
      %p245 = scmp.ne.s32.totalorder %s240, %s242
      %p246 = scmp.eq.s32.totalorder %s23, 0
      %p247 = por %p245, %p246
      %p248 = scmp.ne.s32.totalorder %s240, %s242
      %p249 = scmp.eq.s32.totalorder %s28, 1
      %p250 = por %p248, %p249
      %p251 = scmp.ne.s32.totalorder %s242, %s243
      %p252 = scmp.eq.s32.totalorder %s28, 0
      %p253 = por %p251, %p252
      %p254 = scmp.ne.s32.totalorder %s242, %s243
      %p255 = scmp.eq.s32.totalorder %s29, 1
      %p256 = por %p254, %p255
      %p258 = scmp.ne.s32.totalorder %s243, %s257
      %p259 = scmp.eq.s32.totalorder %s29, 0
      %p260 = por %p258, %p259
      %s262 = sadd.s32 %s261, 1
      %p265 = scmp.eq.s32.totalorder %s23, 1
      %p266 = scmp.ne.s32.totalorder %s261, %s263
      %p267 = scmp.eq.s32.totalorder %s23, 0
      %p268 = por %p266, %p267
      %p269 = scmp.ne.s32.totalorder %s261, %s263
      %p270 = scmp.eq.s32.totalorder %s28, 1
      %p271 = por %p269, %p270
      %p272 = scmp.ne.s32.totalorder %s263, %s264
      %p273 = scmp.eq.s32.totalorder %s28, 0
      %p274 = por %p272, %p273
      %p275 = scmp.ne.s32.totalorder %s263, %s264
      %p276 = scmp.eq.s32.totalorder %s29, 1
      %p277 = por %p275, %p276
      %p279 = scmp.ne.s32.totalorder %s264, %s278
      %p280 = scmp.eq.s32.totalorder %s29, 0
      %p281 = por %p279, %p280
      %s283 = sadd.s32 %s282, 1
      %p286 = scmp.eq.s32.totalorder %s23, 1
      %p287 = scmp.ne.s32.totalorder %s282, %s284
      %p288 = scmp.eq.s32.totalorder %s23, 0
      %p289 = por %p287, %p288
      %p290 = scmp.ne.s32.totalorder %s282, %s284
      %p291 = scmp.eq.s32.totalorder %s28, 1
      %p292 = por %p290, %p291
      %p293 = scmp.ne.s32.totalorder %s284, %s285
      %p294 = scmp.eq.s32.totalorder %s28, 0
      %p295 = por %p293, %p294
      %p296 = scmp.ne.s32.totalorder %s284, %s285
      %p297 = scmp.eq.s32.totalorder %s29, 1
      %p298 = por %p296, %p297
      %p300 = scmp.ne.s32.totalorder %s285, %s299
      %p301 = scmp.eq.s32.totalorder %s29, 0
      %p302 = por %p300, %p301
      %s304 = sadd.s32 %s303, 1
      %p307 = scmp.eq.s32.totalorder %s23, 1
      %p308 = scmp.ne.s32.totalorder %s303, %s305
      %p309 = scmp.eq.s32.totalorder %s23, 0
      %p310 = por %p308, %p309
      %p311 = scmp.ne.s32.totalorder %s303, %s305
      %p312 = scmp.eq.s32.totalorder %s28, 1
      %p313 = por %p311, %p312
      %p314 = scmp.ne.s32.totalorder %s305, %s306
      %p315 = scmp.eq.s32.totalorder %s28, 0
      %p316 = por %p314, %p315
      %p317 = scmp.ne.s32.totalorder %s305, %s306
      %p318 = scmp.eq.s32.totalorder %s29, 1
      %p319 = por %p317, %p318
      %p321 = scmp.ne.s32.totalorder %s306, %s320
      %p322 = scmp.eq.s32.totalorder %s29, 0
      %p323 = por %p321, %p322
      %s324 = ssub.s32 %s23, %s30
      %p325 = scmp.eq.s32.totalorder %s324, 0
      %s327 = sadd.s32 %s326, 1
      %s328 = scalar_select %p325, %s326, %s327
      %p331 = pneg %p325
      %p332 = scmp.eq.s32.totalorder %s23, 1
      %p333 = por %p331, %p332
      %p334 = scmp.ne.s32.totalorder %s326, %s329
      %p335 = scmp.eq.s32.totalorder %s23, 0
      %p336 = por %p334, %p335
      %p337 = scmp.ne.s32.totalorder %s326, %s329
      %p338 = scmp.eq.s32.totalorder %s28, 1
      %p339 = por %p337, %p338
      %p340 = scmp.ne.s32.totalorder %s329, %s330
      %p341 = scmp.eq.s32.totalorder %s28, 0
      %p342 = por %p340, %p341
      %p343 = scmp.ne.s32.totalorder %s329, %s330
      %p344 = scmp.eq.s32.totalorder %s29, 1
      %p345 = por %p343, %p344
      %p347 = scmp.ne.s32.totalorder %s330, %s346
      %p348 = scmp.eq.s32.totalorder %s29, 0
      %p349 = por %p347, %p348
      %s350 = ssub.s32 %s23, %s30
      %p351 = scmp.eq.s32.totalorder %s350, 0
      %s353 = sadd.s32 %s352, 1
      %s354 = scalar_select %p351, %s352, %s353
      %p357 = pneg %p351
      %p358 = scmp.eq.s32.totalorder %s23, 1
      %p359 = por %p357, %p358
      %p360 = scmp.ne.s32.totalorder %s352, %s355
      %p361 = scmp.eq.s32.totalorder %s23, 0
      %p362 = por %p360, %p361
      %p363 = scmp.ne.s32.totalorder %s352, %s355
      %p364 = scmp.eq.s32.totalorder %s28, 1
      %p365 = por %p363, %p364
      %p366 = scmp.ne.s32.totalorder %s355, %s356
      %p367 = scmp.eq.s32.totalorder %s28, 0
      %p368 = por %p366, %p367
      %p369 = scmp.ne.s32.totalorder %s355, %s356
      %p370 = scmp.eq.s32.totalorder %s29, 1
      %p371 = por %p369, %p370
      %p373 = scmp.ne.s32.totalorder %s356, %s372
      %p374 = scmp.eq.s32.totalorder %s29, 0
      %p375 = por %p373, %p374
      %p376 = scmp.le.s32.totalorder 1, %s23
      %p377 = scmp.lt.s32.totalorder %s23, 3
      %p378 = pnand %p376, %p377
      %p379 = pneg %p378
      // Predicated region
      $region9: #{focus1_forward.1} parent=5 // pred_check
        _
      $region10: #{focus1_forward.1} parent=5 // pred_check_branch
        %381 = sbr.rel (%p378) target = $region12
      $region11: #{focus1_forward.1} parent=5 // pred_region
        %s382 = ssub.s32 %s23, 1
        // Predicated region
        $region13: #{focus1_forward.1} parent=11 // pred_check
          %p383 = pneg %p148
        $region14: #{focus1_forward.1} parent=11 // pred_check_branch
          %385 = sbr.rel (%p383) target = $region16
        $region15: #{focus1_forward.1} parent=11 // pred_region
          _
        $region16: #{focus1_forward.1} parent=11 // pred_fallthru
          _
        // Predicated region
        $region17: #{focus1_forward.1} parent=11 // pred_check
          %p386 = pneg %p169
        $region18: #{focus1_forward.1} parent=11 // pred_check_branch
          %388 = sbr.rel (%p386) target = $region20
        $region19: #{focus1_forward.1} parent=11 // pred_region
          _
        $region20: #{focus1_forward.1} parent=11 // pred_fallthru
          _
        // Predicated region
        $region21: #{focus1_forward.1} parent=11 // pred_check
          %p389 = pneg %p190
        $region22: #{focus1_forward.1} parent=11 // pred_check_branch
          %391 = sbr.rel (%p389) target = $region24
        $region23: #{focus1_forward.1} parent=11 // pred_region
          _
        $region24: #{focus1_forward.1} parent=11 // pred_fallthru
          _
        // Predicated region
        $region25: #{focus1_forward.1} parent=11 // pred_check
          %p392 = pneg %p211
        $region26: #{focus1_forward.1} parent=11 // pred_check_branch
          %394 = sbr.rel (%p392) target = $region28
        $region27: #{focus1_forward.1} parent=11 // pred_region
          %s396 = ssub.s32 1792, 1792
          %397 = vsyncadd [#allocation5], %s396
          %s398 = sshll.u32 [#allocation4], 4
          %s399 = int_to_ptr.vmem [resolvable:$true] %s398
          %404 = dma.hbm_to_vmem [thread:$0]  %s7, 1792, %s399, [#allocation5], 256, 256, 16
        $region28: #{focus1_forward.1} parent=11 // pred_fallthru
          _
        // Predicated region
        $region29: #{focus1_forward.1} parent=11 // pred_check
          %p405 = pneg %p232
        $region30: #{focus1_forward.1} parent=11 // pred_check_branch
          %407 = sbr.rel (%p405) target = $region32
        $region31: #{focus1_forward.1} parent=11 // pred_region
          %s409 = ssub.s32 128, 128
          %410 = vsyncadd [#allocation7], %s409
          %s412 = sshll.u32 [#allocation6], 4
          %s413 = int_to_ptr.vmem [resolvable:$true] %s412
          %415 = dma.hbm_to_vmem [thread:$0]  %s8, 128, %s413, [#allocation7]
        $region32: #{focus1_forward.1} parent=11 // pred_fallthru
          _
        // Predicated region
        $region33: #{focus1_forward.1} parent=11 // pred_check
          %p416 = pneg %p253
        $region34: #{focus1_forward.1} parent=11 // pred_check_branch
          %418 = sbr.rel (%p416) target = $region36
        $region35: #{focus1_forward.1} parent=11 // pred_region
          _
        $region36: #{focus1_forward.1} parent=11 // pred_fallthru
          _
        // Predicated region
        $region37: #{focus1_forward.1} parent=11 // pred_check
          %p419 = pneg %p274
        $region38: #{focus1_forward.1} parent=11 // pred_check_branch
          %421 = sbr.rel (%p419) target = $region40
        $region39: #{focus1_forward.1} parent=11 // pred_region
          _
        $region40: #{focus1_forward.1} parent=11 // pred_fallthru
          _
        // Predicated region
        $region41: #{focus1_forward.1} parent=11 // pred_check
          %p422 = pneg %p295
        $region42: #{focus1_forward.1} parent=11 // pred_check_branch
          %424 = sbr.rel (%p422) target = $region44
        $region43: #{focus1_forward.1} parent=11 // pred_region
          _
        $region44: #{focus1_forward.1} parent=11 // pred_fallthru
          _
        // Predicated region
        $region45: #{focus1_forward.1} parent=11 // pred_check
          %p425 = pneg %p316
        $region46: #{focus1_forward.1} parent=11 // pred_check_branch
          %427 = sbr.rel (%p425) target = $region48
        $region47: #{focus1_forward.1} parent=11 // pred_region
          %s429 = ssub.s32 128, 128
          %430 = vsyncadd [#allocation7], %s429
          %s432 = sshll.u32 [#allocation8], 4
          %s433 = int_to_ptr.vmem [resolvable:$true] %s432
          %435 = dma.hbm_to_vmem [thread:$0]  %s12, 128, %s433, [#allocation7]
        $region48: #{focus1_forward.1} parent=11 // pred_fallthru
          _
      $region12: #{focus1_forward.1} parent=5 // pred_fallthru
        _
      %p436 = scmp.lt.s32.totalorder %s23, 2
      // Predicated region
      $region49: #{focus1_forward.1} parent=5 // pred_check
        %p437 = pneg %p436
      $region50: #{focus1_forward.1} parent=5 // pred_check_branch
        %439 = sbr.rel (%p437) target = $region52
      $region51: #{focus1_forward.1} parent=5 // pred_region
        // Predicated region
        $region53: #{focus1_forward.1} parent=51 // pred_check
          %p440 = pneg %p43
        $region54: #{focus1_forward.1} parent=51 // pred_check_branch
          %442 = sbr.rel (%p440) target = $region56
        $region55: #{focus1_forward.1} parent=51 // pred_region
          %p443 = scmp.lt.s32.totalorder %s23, 1
          %s444 = scalar_select %p443, %s23, 1
          %s445 = smul.addr %s444, 2
          %s446 = smul.addr %s445, 8
          %s447 = scalar_lea.vmem %s0, %s446
        $region56: #{focus1_forward.1} parent=51 // pred_fallthru
          _
        // Predicated region
        $region57: #{focus1_forward.1} parent=51 // pred_check
          %p448 = pneg %p69
        $region58: #{focus1_forward.1} parent=51 // pred_check_branch
          %450 = sbr.rel (%p448) target = $region60
        $region59: #{focus1_forward.1} parent=51 // pred_region
          %p451 = scmp.lt.s32.totalorder %s23, 1
          %s452 = scalar_select %p451, %s23, 1
          %s453 = smul.addr %s452, 4
          %s454 = scalar_lea.vmem %s1, %s453
        $region60: #{focus1_forward.1} parent=51 // pred_fallthru
          _
        // Predicated region
        $region61: #{focus1_forward.1} parent=51 // pred_check
          %p455 = pneg %p95
        $region62: #{focus1_forward.1} parent=51 // pred_check_branch
          %457 = sbr.rel (%p455) target = $region64
        $region63: #{focus1_forward.1} parent=51 // pred_region
          %p458 = scmp.lt.s32.totalorder %s23, 1
          %s459 = scalar_select %p458, %s23, 1
          %s460 = scalar_lea.vmem %s2, %s459
        $region64: #{focus1_forward.1} parent=51 // pred_fallthru
          _
        // Predicated region
        $region65: #{focus1_forward.1} parent=51 // pred_check
          %p461 = pneg %p121
        $region66: #{focus1_forward.1} parent=51 // pred_check_branch
          %463 = sbr.rel (%p461) target = $region68
        $region67: #{focus1_forward.1} parent=51 // pred_region
          %p464 = scmp.lt.s32.totalorder %s23, 1
          %s465 = scalar_select %p464, %s23, 1
          %s466 = smul.addr %s465, 64
          %s467 = smul.addr %s466, 4
          %s468 = scalar_lea.vmem %s3, %s467
        $region68: #{focus1_forward.1} parent=51 // pred_fallthru
          _
      $region52: #{focus1_forward.1} parent=5 // pred_fallthru
        _
      %p469 = scmp.le.s32.totalorder 1, %s23
      %p470 = scmp.lt.s32.totalorder %s23, 3
      %p471 = pnand %p469, %p470
      %p472 = pneg %p471
      // Predicated region
      $region69: #{focus1_forward.1} parent=5 // pred_check
        _
      $region70: #{focus1_forward.1} parent=5 // pred_check_branch
        %474 = sbr.rel (%p471) target = $region72
      $region71: #{focus1_forward.1} parent=5 // pred_region
        %s475 = ssub.s32 %s23, 1
        // Predicated region
        $region73: #{focus1_forward.1} parent=71 // pred_check
          %p476 = pneg %p211
        $region74: #{focus1_forward.1} parent=71 // pred_check_branch
          %478 = sbr.rel (%p476) target = $region76
        $region75: #{focus1_forward.1} parent=71 // pred_region
          %479 = dma.done [#allocation5], 1792
        $region76: #{focus1_forward.1} parent=71 // pred_fallthru
          _
        // Predicated region
        $region77: #{focus1_forward.1} parent=71 // pred_check
          %p480 = pneg %p232
        $region78: #{focus1_forward.1} parent=71 // pred_check_branch
          %482 = sbr.rel (%p480) target = $region80
        $region79: #{focus1_forward.1} parent=71 // pred_region
          %483 = dma.done [#allocation7], 128
        $region80: #{focus1_forward.1} parent=71 // pred_fallthru
          _
        // Predicated region
        $region81: #{focus1_forward.1} parent=71 // pred_check
          %p484 = pneg %p316
        $region82: #{focus1_forward.1} parent=71 // pred_check_branch
          %486 = sbr.rel (%p484) target = $region84
        $region83: #{focus1_forward.1} parent=71 // pred_region
          %487 = dma.done [#allocation7], 128
        $region84: #{focus1_forward.1} parent=71 // pred_fallthru
          _
        %p488 = scmp.lt.s32.totalorder %s28, 1
        %s489 = scalar_select %p488, %s28, 1
        %s490 = smul.addr %s489, 2
        %s491 = smul.addr %s490, 8
        %s492 = scalar_lea.vmem %s0, %s491
        %p493 = pneg %p49
        %p494 = pneg %p46
        %p495 = scmp.lt.s32.totalorder %s28, 1
        %s496 = scalar_select %p495, %s28, 1
        %s497 = smul.addr %s496, 4
        %s498 = scalar_lea.vmem %s1, %s497
        %p499 = pneg %p75
        %p500 = pneg %p72
        %p501 = scmp.lt.s32.totalorder %s28, 1
        %s502 = scalar_select %p501, %s28, 1
        %s503 = scalar_lea.vmem %s2, %s502
        %p504 = pneg %p101
        %p505 = pneg %p98
        %p506 = scmp.lt.s32.totalorder %s28, 1
        %s507 = scalar_select %p506, %s28, 1
        %s508 = smul.addr %s507, 64
        %s509 = smul.addr %s508, 4
        %s510 = scalar_lea.vmem %s3, %s509
        %p511 = pneg %p127
        %p512 = pneg %p124
        %p513 = pneg %p148
        %p514 = pneg %p145
        %p515 = pneg %p169
        %p516 = pneg %p166
        %p517 = pneg %p190
        %p518 = pneg %p187
        %p519 = pneg %p211
        %p520 = pneg %p208
        %p521 = pneg %p232
        %p522 = pneg %p229
        %p523 = pneg %p253
        %p524 = pneg %p250
        %p525 = pneg %p274
        %p526 = pneg %p271
        %p527 = pneg %p295
        %p528 = pneg %p292
        %p529 = pneg %p316
        %p530 = pneg %p313
        %p531 = pneg %p342
        %p532 = pneg %p339
        %p533 = scmp.lt.s32.totalorder %s28, 1
        %s534 = scalar_select %p533, %s28, 1
        %s535 = smul.addr %s534, 2
        %s536 = smul.addr %s535, 8
        %s537 = scalar_lea.vmem %s13, %s536
        %p538 = pneg %p368
        %p539 = pneg %p365
        %p540 = scmp.lt.s32.totalorder %s28, 1
        %s541 = scalar_select %p540, %s28, 1
        %s542 = smul.addr %s541, 2
        %s543 = scalar_lea.vmem %s14, %s542
        %p544 = scmp.lt.s32.totalorder %s28, 1
        %s545 = scalar_select %p544, %s28, 1
        %s546 = smul.addr %s545, 2
        %s547 = smul.addr %s546, 8
        %s548 = scalar_lea.vmem %s0, %s547
        %p549 = scmp.lt.s32.totalorder %s28, 1
        %s550 = scalar_select %p549, %s28, 1
        %s551 = smul.addr %s550, 4
        %s552 = scalar_lea.vmem %s1, %s551
        %p553 = scmp.lt.s32.totalorder %s28, 1
        %s554 = scalar_select %p553, %s28, 1
        %s555 = scalar_lea.vmem %s2, %s554
        %p556 = scmp.lt.s32.totalorder %s28, 1
        %s557 = scalar_select %p556, %s28, 1
        %s558 = smul.addr %s557, 64
        %s559 = smul.addr %s558, 4
        %s560 = scalar_lea.vmem %s3, %s559
        %p561 = scmp.lt.s32.totalorder %s28, 1
        %s562 = scalar_select %p561, %s28, 1
        %s563 = smul.addr %s562, 2
        %s564 = smul.addr %s563, 8
        %s565 = scalar_lea.vmem %s13, %s564
        %p566 = scmp.lt.s32.totalorder %s28, 1
        %s567 = scalar_select %p566, %s28, 1
        %s568 = smul.addr %s567, 2
        %s569 = scalar_lea.vmem %s14, %s568
        %v571 = vld [vmem:[%s548] sm:$0xff]
        %v572 = vld [vmem:[%s548 + $0x8] sm:$0xff]
        %v573 = vld [vmem:[%s555] sm:$0x1]
        %v574 = vld [vmem:[#allocation8] sm:$0xff]
        %v575 = vld [vmem:[%s6] sm:$0xff]
        %v576 = vld [vmem:[%s6 + $0x8] sm:$0xff]
        %v577 = vld [vmem:[%s6 + $0x10] sm:$0x1]
        %v578 = vld [vmem:[%s6 + $0x18] sm:$0x1]
        %v579 = vld [vmem:[#allocation4] sm:$0xff]
        %v580 = vld [vmem:[#allocation4 + $0x8] sm:$0xff]
        %v581 = vld [vmem:[#allocation4 + $0x10] sm:$0xff]
        %v582 = vld [vmem:[#allocation4 + $0x18] sm:$0xff]
        %v583 = vld [vmem:[#allocation4 + $0x20] sm:$0xff]
        %v584 = vld [vmem:[#allocation4 + $0x28] sm:$0xff]
        %v585 = vld [vmem:[#allocation4 + $0x30] sm:$0xff]
        %v586 = vld [vmem:[#allocation4 + $0x38] sm:$0xff]
        %v587 = vld [vmem:[#allocation4 + $0x40] sm:$0xff]
        %v588 = vld [vmem:[#allocation4 + $0x48] sm:$0xff]
        %v589 = vld [vmem:[#allocation4 + $0x50] sm:$0xff]
        %v590 = vld [vmem:[#allocation4 + $0x58] sm:$0xff]
        %v591 = vld [vmem:[#allocation4 + $0x60] sm:$0x1]
        %v592 = vld [vmem:[#allocation4 + $0x68] sm:$0x1]
        %v593 = vld [vmem:[%s4] sm:$0xff]
        %v594 = vld [vmem:[%s4 + $0x8] sm:$0xff]
        %v595 = vld [vmem:[%s4 + $0x10] sm:$0xff]
        %v596 = vld [vmem:[%s4 + $0x18] sm:$0xff]
        %v597 = vld [vmem:[%s4 + $0x20] sm:$0xff]
        %v598 = vld [vmem:[%s4 + $0x28] sm:$0xff]
        %v599 = vld [vmem:[%s4 + $0x30] sm:$0xff]
        %v600 = vld [vmem:[%s4 + $0x38] sm:$0xff]
        %v601 = vld [vmem:[%s552] sm:$0xf]
        %v602 = vpack.c.bf16 %v601, %v601
        %v603 = vld [vmem:[%s5] sm:$0xf]
        %v604 = vld [vmem:[%s5 + $0x4] sm:$0xf]
        %v605 = vld [vmem:[%s5 + $0x8] sm:$0xf]
        %v606 = vld [vmem:[%s5 + $0xc] sm:$0xf]
        %v607 = vld [vmem:[%s5 + $0x10] sm:$0xf]
        %v608 = vld [vmem:[%s5 + $0x14] sm:$0xf]
        %v609 = vld [vmem:[%s5 + $0x18] sm:$0xf]
        %v610 = vld [vmem:[%s5 + $0x1c] sm:$0xf]
        %v619 = vunpack.c.l.b16 %v603
        %v620 = vunpack.c.l.b16 %v604
        %v621 = vunpack.c.l.b16 %v605
        %v622 = vunpack.c.l.b16 %v606
        %v623 = vunpack.c.l.b16 %v607
        %v624 = vunpack.c.l.b16 %v608
        %v625 = vunpack.c.l.b16 %v609
        %v626 = vunpack.c.l.b16 %v610
        %v627 = vpack.c.b16 %v620, %v619
        %v628 = vpack.c.b16 %v622, %v621
        %v629 = vpack.c.b16 %v624, %v623
        %v630 = vpack.c.b16 %v626, %v625
        %vm635 = vcmask 523264
        %v637 = vsel %vm635, %v602, 0
        %639 = vmatprep.subr.bf16.mxu0 0
        %640 = vmatpush1.bf16.msra.mxu0 %v627
        %641 = vmatprep.subr.bf16.mxu0 0
        %642 = vmatpush1.bf16.msra.mxu0 %v628
        %643 = vmatprep.subr.bf16.mxu0 0
        %644 = vmatpush1.bf16.msra.mxu0 %v629
        %645 = vmatprep.subr.bf16.mxu0 0
        %646 = vmatpush1.bf16.msra.mxu0 %v630
        %647 = vmatprep.subr.bf16.mxu0 0
        %648 = vmatpush1.bf16.msra.mxu0 0
        %649 = vmatprep.subr.bf16.mxu0 0
        %650 = vmatpush1.bf16.msra.mxu0 0
        %651 = vmatprep.subr.bf16.mxu0 0
        %652 = vmatpush1.bf16.msra.mxu0 0
        %653 = vmatprep.subr.bf16.mxu0 0
        %654 = vmatpush1.bf16.msra.mxu0 0
        %655 = vmatprep.subr.bf16.mxu0 0
        %656 = vmatpush1.bf16.msra.mxu0 0
        %657 = vmatprep.subr.bf16.mxu0 0
        %658 = vmatpush1.bf16.msra.mxu0 0
        %659 = vmatprep.subr.bf16.mxu0 0
        %660 = vmatpush1.bf16.msra.mxu0 0
        %661 = vmatprep.subr.bf16.mxu0 0
        %662 = vmatpush1.bf16.msra.mxu0 0
        %663 = vmatprep.subr.bf16.mxu0 0
        %664 = vmatpush1.bf16.msra.mxu0 0
        %665 = vmatprep.subr.bf16.mxu0 0
        %666 = vmatpush1.bf16.msra.mxu0 0
        %667 = vmatprep.subr.bf16.mxu0 0
        %668 = vmatpush1.bf16.msra.mxu0 0
        %669 = vmatprep.subr.bf16.mxu0 0
        %670 = vmatpush1.bf16.msra.mxu0 0
        %671 = vmatprep.mubr.bf16.mxu0 0
        %672 = vmatmul.mubr.bf16.gmra.mrb[0].mxu0 %v637
        %v673 = vpop.f32.mrb[0].mxu0
        %v674 = vadd.f32 0.0, %v673
        %v675 = vpop.f32.mrb[0].mxu0
        %v676 = vpop.f32.mrb[0].mxu0
        %v677 = vpop.f32.mrb[0].mxu0
        %678 = vdwg.mxu0
        %vm679 = vcmask 519168
        %680 = vst.msk [vmem:[#allocation3] sm:$0xf] %vm679, %v674
        %s681 = scalar_lea.vmem %s5, 32
        %v682 = vld [vmem:[%s681] sm:$0xf]
        %v683 = vld [vmem:[%s681 + $0x4] sm:$0xf]
        %v684 = vld [vmem:[%s681 + $0x8] sm:$0xf]
        %v685 = vld [vmem:[%s681 + $0xc] sm:$0xf]
        %v686 = vld [vmem:[%s681 + $0x10] sm:$0xf]
        %v687 = vld [vmem:[%s681 + $0x14] sm:$0xf]
        %v688 = vld [vmem:[%s681 + $0x18] sm:$0xf]
        %v689 = vld [vmem:[%s681 + $0x1c] sm:$0xf]
        %v698 = vunpack.c.l.b16 %v682
        %v699 = vunpack.c.l.b16 %v683
        %v700 = vunpack.c.l.b16 %v684
        %v701 = vunpack.c.l.b16 %v685
        %v702 = vunpack.c.l.b16 %v686
        %v703 = vunpack.c.l.b16 %v687
        %v704 = vunpack.c.l.b16 %v688
        %v705 = vunpack.c.l.b16 %v689
        %v706 = vpack.c.b16 %v699, %v698
        %v707 = vpack.c.b16 %v701, %v700
        %v708 = vpack.c.b16 %v703, %v702
        %v709 = vpack.c.b16 %v705, %v704
        %714 = vmatprep.subr.bf16.mxu0 0
        %715 = vmatpush1.bf16.msra.mxu0 %v706
        %716 = vmatprep.subr.bf16.mxu0 0
        %717 = vmatpush1.bf16.msra.mxu0 %v707
        %718 = vmatprep.subr.bf16.mxu0 0
        %719 = vmatpush1.bf16.msra.mxu0 %v708
        %720 = vmatprep.subr.bf16.mxu0 0
        %721 = vmatpush1.bf16.msra.mxu0 %v709
        %722 = vmatprep.subr.bf16.mxu0 0
        %723 = vmatpush1.bf16.msra.mxu0 0
        %724 = vmatprep.subr.bf16.mxu0 0
        %725 = vmatpush1.bf16.msra.mxu0 0
        %726 = vmatprep.subr.bf16.mxu0 0
        %727 = vmatpush1.bf16.msra.mxu0 0
        %728 = vmatprep.subr.bf16.mxu0 0
        %729 = vmatpush1.bf16.msra.mxu0 0
        %730 = vmatprep.subr.bf16.mxu0 0
        %731 = vmatpush1.bf16.msra.mxu0 0
        %732 = vmatprep.subr.bf16.mxu0 0
        %733 = vmatpush1.bf16.msra.mxu0 0
        %734 = vmatprep.subr.bf16.mxu0 0
        %735 = vmatpush1.bf16.msra.mxu0 0
        %736 = vmatprep.subr.bf16.mxu0 0
        %737 = vmatpush1.bf16.msra.mxu0 0
        %738 = vmatprep.subr.bf16.mxu0 0
        %739 = vmatpush1.bf16.msra.mxu0 0
        %740 = vmatprep.subr.bf16.mxu0 0
        %741 = vmatpush1.bf16.msra.mxu0 0
        %742 = vmatprep.subr.bf16.mxu0 0
        %743 = vmatpush1.bf16.msra.mxu0 0
        %744 = vmatprep.subr.bf16.mxu0 0
        %745 = vmatpush1.bf16.msra.mxu0 0
        %746 = vmatprep.mubr.bf16.mxu0 0
        %747 = vmatmul.mubr.bf16.gmra.mrb[0].mxu0 %v637
        %v748 = vpop.f32.mrb[0].mxu0
        %v749 = vadd.f32 0.0, %v748
        %v750 = vpop.f32.mrb[0].mxu0
        %v751 = vpop.f32.mrb[0].mxu0
        %v752 = vpop.f32.mrb[0].mxu0
        %753 = vdwg.mxu0
        %754 = vst.msk [vmem:[#allocation3 + $0x4] sm:$0xf] %vm679, %v749
        %s755 = scalar_lea.vmem %s5, 64
        %v756 = vld [vmem:[%s755] sm:$0xf]
        %v757 = vld [vmem:[%s755 + $0x4] sm:$0xf]
        %v758 = vld [vmem:[%s755 + $0x8] sm:$0xf]
        %v759 = vld [vmem:[%s755 + $0xc] sm:$0xf]
        %v760 = vld [vmem:[%s755 + $0x10] sm:$0xf]
        %v761 = vld [vmem:[%s755 + $0x14] sm:$0xf]
        %v762 = vld [vmem:[%s755 + $0x18] sm:$0xf]
        %v763 = vld [vmem:[%s755 + $0x1c] sm:$0xf]
        %v772 = vunpack.c.l.b16 %v756
        %v773 = vunpack.c.l.b16 %v757
        %v774 = vunpack.c.l.b16 %v758
        %v775 = vunpack.c.l.b16 %v759
        %v776 = vunpack.c.l.b16 %v760
        %v777 = vunpack.c.l.b16 %v761
        %v778 = vunpack.c.l.b16 %v762
        %v779 = vunpack.c.l.b16 %v763
        %v780 = vpack.c.b16 %v773, %v772
        %v781 = vpack.c.b16 %v775, %v774
        %v782 = vpack.c.b16 %v777, %v776
        %v783 = vpack.c.b16 %v779, %v778
        %788 = vmatprep.subr.bf16.mxu0 0
        %789 = vmatpush1.bf16.msra.mxu0 %v780
        %790 = vmatprep.subr.bf16.mxu0 0
        %791 = vmatpush1.bf16.msra.mxu0 %v781
        %792 = vmatprep.subr.bf16.mxu0 0
        %793 = vmatpush1.bf16.msra.mxu0 %v782
        %794 = vmatprep.subr.bf16.mxu0 0
        %795 = vmatpush1.bf16.msra.mxu0 %v783
        %796 = vmatprep.subr.bf16.mxu0 0
        %797 = vmatpush1.bf16.msra.mxu0 0
        %798 = vmatprep.subr.bf16.mxu0 0
        %799 = vmatpush1.bf16.msra.mxu0 0
        %800 = vmatprep.subr.bf16.mxu0 0
        %801 = vmatpush1.bf16.msra.mxu0 0
        %802 = vmatprep.subr.bf16.mxu0 0
        %803 = vmatpush1.bf16.msra.mxu0 0
        %804 = vmatprep.subr.bf16.mxu0 0
        %805 = vmatpush1.bf16.msra.mxu0 0
        %806 = vmatprep.subr.bf16.mxu0 0
        %807 = vmatpush1.bf16.msra.mxu0 0
        %808 = vmatprep.subr.bf16.mxu0 0
        %809 = vmatpush1.bf16.msra.mxu0 0
        %810 = vmatprep.subr.bf16.mxu0 0
        %811 = vmatpush1.bf16.msra.mxu0 0
        %812 = vmatprep.subr.bf16.mxu0 0
        %813 = vmatpush1.bf16.msra.mxu0 0
        %814 = vmatprep.subr.bf16.mxu0 0
        %815 = vmatpush1.bf16.msra.mxu0 0
        %816 = vmatprep.subr.bf16.mxu0 0
        %817 = vmatpush1.bf16.msra.mxu0 0
        %818 = vmatprep.subr.bf16.mxu0 0
        %819 = vmatpush1.bf16.msra.mxu0 0
        %820 = vmatprep.mubr.bf16.mxu0 0
        %821 = vmatmul.mubr.bf16.gmra.mrb[0].mxu0 %v637
        %v822 = vpop.f32.mrb[0].mxu0
        %v823 = vadd.f32 0.0, %v822
        %v824 = vpop.f32.mrb[0].mxu0
        %v825 = vpop.f32.mrb[0].mxu0
        %v826 = vpop.f32.mrb[0].mxu0
        %827 = vdwg.mxu0
        %828 = vst.msk [vmem:[#allocation3 + $0x8] sm:$0xf] %vm679, %v823
        %s829 = scalar_lea.vmem %s5, 96
        %v830 = vld [vmem:[%s829] sm:$0xf]
        %v831 = vld [vmem:[%s829 + $0x4] sm:$0xf]
        %v832 = vld [vmem:[%s829 + $0x8] sm:$0xf]
        %v833 = vld [vmem:[%s829 + $0xc] sm:$0xf]
        %v834 = vld [vmem:[%s829 + $0x10] sm:$0xf]
        %v835 = vld [vmem:[%s829 + $0x14] sm:$0xf]
        %v836 = vld [vmem:[%s829 + $0x18] sm:$0xf]
        %v837 = vld [vmem:[%s829 + $0x1c] sm:$0xf]
        %v846 = vunpack.c.l.b16 %v830
        %v847 = vunpack.c.l.b16 %v831
        %v848 = vunpack.c.l.b16 %v832
        %v849 = vunpack.c.l.b16 %v833
        %v850 = vunpack.c.l.b16 %v834
        %v851 = vunpack.c.l.b16 %v835
        %v852 = vunpack.c.l.b16 %v836
        %v853 = vunpack.c.l.b16 %v837
        %v854 = vpack.c.b16 %v847, %v846
        %v855 = vpack.c.b16 %v849, %v848
        %v856 = vpack.c.b16 %v851, %v850
        %v857 = vpack.c.b16 %v853, %v852
        %862 = vmatprep.subr.bf16.mxu0 0
        %863 = vmatpush1.bf16.msra.mxu0 %v854
        %864 = vmatprep.subr.bf16.mxu0 0
        %865 = vmatpush1.bf16.msra.mxu0 %v855
        %866 = vmatprep.subr.bf16.mxu0 0
        %867 = vmatpush1.bf16.msra.mxu0 %v856
        %868 = vmatprep.subr.bf16.mxu0 0
        %869 = vmatpush1.bf16.msra.mxu0 %v857
        %870 = vmatprep.subr.bf16.mxu0 0
        %871 = vmatpush1.bf16.msra.mxu0 0
        %872 = vmatprep.subr.bf16.mxu0 0
        %873 = vmatpush1.bf16.msra.mxu0 0
        %874 = vmatprep.subr.bf16.mxu0 0
        %875 = vmatpush1.bf16.msra.mxu0 0
        %876 = vmatprep.subr.bf16.mxu0 0
        %877 = vmatpush1.bf16.msra.mxu0 0
        %878 = vmatprep.subr.bf16.mxu0 0
        %879 = vmatpush1.bf16.msra.mxu0 0
        %880 = vmatprep.subr.bf16.mxu0 0
        %881 = vmatpush1.bf16.msra.mxu0 0
        %882 = vmatprep.subr.bf16.mxu0 0
        %883 = vmatpush1.bf16.msra.mxu0 0
        %884 = vmatprep.subr.bf16.mxu0 0
        %885 = vmatpush1.bf16.msra.mxu0 0
        %886 = vmatprep.subr.bf16.mxu0 0
        %887 = vmatpush1.bf16.msra.mxu0 0
        %888 = vmatprep.subr.bf16.mxu0 0
        %889 = vmatpush1.bf16.msra.mxu0 0
        %890 = vmatprep.subr.bf16.mxu0 0
        %891 = vmatpush1.bf16.msra.mxu0 0
        %892 = vmatprep.subr.bf16.mxu0 0
        %893 = vmatpush1.bf16.msra.mxu0 0
        %894 = vmatprep.mubr.bf16.mxu0 0
        %895 = vmatmul.mubr.bf16.gmra.mrb[0].mxu0 %v637
        %v896 = vpop.f32.mrb[0].mxu0
        %v897 = vadd.f32 0.0, %v896
        %v898 = vpop.f32.mrb[0].mxu0
        %v899 = vpop.f32.mrb[0].mxu0
        %v900 = vpop.f32.mrb[0].mxu0
        %901 = vdwg.mxu0
        %902 = vst.msk [vmem:[#allocation3 + $0xc] sm:$0xf] %vm679, %v897
        %s903 = scalar_lea.vmem %s5, 128
        %v904 = vld [vmem:[%s903] sm:$0xf]
        %v905 = vld [vmem:[%s903 + $0x4] sm:$0xf]
        %v906 = vld [vmem:[%s903 + $0x8] sm:$0xf]
        %v907 = vld [vmem:[%s903 + $0xc] sm:$0xf]
        %v908 = vld [vmem:[%s903 + $0x10] sm:$0xf]
        %v909 = vld [vmem:[%s903 + $0x14] sm:$0xf]
        %v910 = vld [vmem:[%s903 + $0x18] sm:$0xf]
        %v911 = vld [vmem:[%s903 + $0x1c] sm:$0xf]
        %v920 = vunpack.c.l.b16 %v904
        %v921 = vunpack.c.l.b16 %v905
        %v922 = vunpack.c.l.b16 %v906
        %v923 = vunpack.c.l.b16 %v907
        %v924 = vunpack.c.l.b16 %v908
        %v925 = vunpack.c.l.b16 %v909
        %v926 = vunpack.c.l.b16 %v910
        %v927 = vunpack.c.l.b16 %v911
        %v928 = vpack.c.b16 %v921, %v920
        %v929 = vpack.c.b16 %v923, %v922
        %v930 = vpack.c.b16 %v925, %v924
        %v931 = vpack.c.b16 %v927, %v926
        %936 = vmatprep.subr.bf16.mxu0 0
        %937 = vmatpush1.bf16.msra.mxu0 %v928
        %938 = vmatprep.subr.bf16.mxu0 0
        %939 = vmatpush1.bf16.msra.mxu0 %v929
        %940 = vmatprep.subr.bf16.mxu0 0
        %941 = vmatpush1.bf16.msra.mxu0 %v930
        %942 = vmatprep.subr.bf16.mxu0 0
        %943 = vmatpush1.bf16.msra.mxu0 %v931
        %944 = vmatprep.subr.bf16.mxu0 0
        %945 = vmatpush1.bf16.msra.mxu0 0
        %946 = vmatprep.subr.bf16.mxu0 0
        %947 = vmatpush1.bf16.msra.mxu0 0
        %948 = vmatprep.subr.bf16.mxu0 0
        %949 = vmatpush1.bf16.msra.mxu0 0
        %950 = vmatprep.subr.bf16.mxu0 0
        %951 = vmatpush1.bf16.msra.mxu0 0
        %952 = vmatprep.subr.bf16.mxu0 0
        %953 = vmatpush1.bf16.msra.mxu0 0
        %954 = vmatprep.subr.bf16.mxu0 0
        %955 = vmatpush1.bf16.msra.mxu0 0
        %956 = vmatprep.subr.bf16.mxu0 0
        %957 = vmatpush1.bf16.msra.mxu0 0
        %958 = vmatprep.subr.bf16.mxu0 0
        %959 = vmatpush1.bf16.msra.mxu0 0
        %960 = vmatprep.subr.bf16.mxu0 0
        %961 = vmatpush1.bf16.msra.mxu0 0
        %962 = vmatprep.subr.bf16.mxu0 0
        %963 = vmatpush1.bf16.msra.mxu0 0
        %964 = vmatprep.subr.bf16.mxu0 0
        %965 = vmatpush1.bf16.msra.mxu0 0
        %966 = vmatprep.subr.bf16.mxu0 0
        %967 = vmatpush1.bf16.msra.mxu0 0
        %968 = vmatprep.mubr.bf16.mxu0 0
        %969 = vmatmul.mubr.bf16.gmra.mrb[0].mxu0 %v637
        %v970 = vpop.f32.mrb[0].mxu0
        %v971 = vadd.f32 0.0, %v970
        %v972 = vpop.f32.mrb[0].mxu0
        %v973 = vpop.f32.mrb[0].mxu0
        %v974 = vpop.f32.mrb[0].mxu0
        %975 = vdwg.mxu0
        %976 = vst.msk [vmem:[#allocation3 + $0x10] sm:$0xf] %vm679, %v971
        %s977 = scalar_lea.vmem %s5, 160
        %v978 = vld [vmem:[%s977] sm:$0xf]
        %v979 = vld [vmem:[%s977 + $0x4] sm:$0xf]
        %v980 = vld [vmem:[%s977 + $0x8] sm:$0xf]
        %v981 = vld [vmem:[%s977 + $0xc] sm:$0xf]
        %v982 = vld [vmem:[%s977 + $0x10] sm:$0xf]
        %v983 = vld [vmem:[%s977 + $0x14] sm:$0xf]
        %v984 = vld [vmem:[%s977 + $0x18] sm:$0xf]
        %v985 = vld [vmem:[%s977 + $0x1c] sm:$0xf]
        %v994 = vunpack.c.l.b16 %v978
        %v995 = vunpack.c.l.b16 %v979
        %v996 = vunpack.c.l.b16 %v980
        %v997 = vunpack.c.l.b16 %v981
        %v998 = vunpack.c.l.b16 %v982
        %v999 = vunpack.c.l.b16 %v983
        %v1000 = vunpack.c.l.b16 %v984
        %v1001 = vunpack.c.l.b16 %v985
        %v1002 = vpack.c.b16 %v995, %v994
        %v1003 = vpack.c.b16 %v997, %v996
        %v1004 = vpack.c.b16 %v999, %v998
        %v1005 = vpack.c.b16 %v1001, %v1000
        %1010 = vmatprep.subr.bf16.mxu0 0
        %1011 = vmatpush1.bf16.msra.mxu0 %v1002
        %1012 = vmatprep.subr.bf16.mxu0 0
        %1013 = vmatpush1.bf16.msra.mxu0 %v1003
        %1014 = vmatprep.subr.bf16.mxu0 0
        %1015 = vmatpush1.bf16.msra.mxu0 %v1004
        %1016 = vmatprep.subr.bf16.mxu0 0
        %1017 = vmatpush1.bf16.msra.mxu0 %v1005
        %1018 = vmatprep.subr.bf16.mxu0 0
        %1019 = vmatpush1.bf16.msra.mxu0 0
        %1020 = vmatprep.subr.bf16.mxu0 0
        %1021 = vmatpush1.bf16.msra.mxu0 0
        %1022 = vmatprep.subr.bf16.mxu0 0
        %1023 = vmatpush1.bf16.msra.mxu0 0
        %1024 = vmatprep.subr.bf16.mxu0 0
        %1025 = vmatpush1.bf16.msra.mxu0 0
        %1026 = vmatprep.subr.bf16.mxu0 0
        %1027 = vmatpush1.bf16.msra.mxu0 0
        %1028 = vmatprep.subr.bf16.mxu0 0
        %1029 = vmatpush1.bf16.msra.mxu0 0
        %1030 = vmatprep.subr.bf16.mxu0 0
        %1031 = vmatpush1.bf16.msra.mxu0 0
        %1032 = vmatprep.subr.bf16.mxu0 0
        %1033 = vmatpush1.bf16.msra.mxu0 0
        %1034 = vmatprep.subr.bf16.mxu0 0
        %1035 = vmatpush1.bf16.msra.mxu0 0
        %1036 = vmatprep.subr.bf16.mxu0 0
        %1037 = vmatpush1.bf16.msra.mxu0 0
        %1038 = vmatprep.subr.bf16.mxu0 0
        %1039 = vmatpush1.bf16.msra.mxu0 0
        %1040 = vmatprep.subr.bf16.mxu0 0
        %1041 = vmatpush1.bf16.msra.mxu0 0
        %1042 = vmatprep.mubr.bf16.mxu0 0
        %1043 = vmatmul.mubr.bf16.gmra.mrb[0].mxu0 %v637
        %v1044 = vpop.f32.mrb[0].mxu0
        %v1045 = vadd.f32 0.0, %v1044
        %v1046 = vpop.f32.mrb[0].mxu0
        %v1047 = vpop.f32.mrb[0].mxu0
        %v1048 = vpop.f32.mrb[0].mxu0
        %1049 = vdwg.mxu0
        %1050 = vst.msk [vmem:[#allocation3 + $0x14] sm:$0xf] %vm679, %v1045
        %s1051 = scalar_lea.vmem %s5, 192
        %v1052 = vld [vmem:[%s1051] sm:$0xf]
        %v1053 = vld [vmem:[%s1051 + $0x4] sm:$0xf]
        %v1054 = vld [vmem:[%s1051 + $0x8] sm:$0xf]
        %v1055 = vld [vmem:[%s1051 + $0xc] sm:$0xf]
        %v1056 = vld [vmem:[%s1051 + $0x10] sm:$0xf]
        %v1057 = vld [vmem:[%s1051 + $0x14] sm:$0xf]
        %v1058 = vld [vmem:[%s1051 + $0x18] sm:$0xf]
        %v1059 = vld [vmem:[%s1051 + $0x1c] sm:$0xf]
        %v1068 = vunpack.c.l.b16 %v1052
        %v1069 = vunpack.c.l.b16 %v1053
        %v1070 = vunpack.c.l.b16 %v1054
        %v1071 = vunpack.c.l.b16 %v1055
        %v1072 = vunpack.c.l.b16 %v1056
        %v1073 = vunpack.c.l.b16 %v1057
        %v1074 = vunpack.c.l.b16 %v1058
        %v1075 = vunpack.c.l.b16 %v1059
        %v1076 = vpack.c.b16 %v1069, %v1068
        %v1077 = vpack.c.b16 %v1071, %v1070
        %v1078 = vpack.c.b16 %v1073, %v1072
        %v1079 = vpack.c.b16 %v1075, %v1074
        %1084 = vmatprep.subr.bf16.mxu0 0
        %1085 = vmatpush1.bf16.msra.mxu0 %v1076
        %1086 = vmatprep.subr.bf16.mxu0 0
        %1087 = vmatpush1.bf16.msra.mxu0 %v1077
        %1088 = vmatprep.subr.bf16.mxu0 0
        %1089 = vmatpush1.bf16.msra.mxu0 %v1078
        %1090 = vmatprep.subr.bf16.mxu0 0
        %1091 = vmatpush1.bf16.msra.mxu0 %v1079
        %1092 = vmatprep.subr.bf16.mxu0 0
        %1093 = vmatpush1.bf16.msra.mxu0 0
        %1094 = vmatprep.subr.bf16.mxu0 0
        %1095 = vmatpush1.bf16.msra.mxu0 0
        %1096 = vmatprep.subr.bf16.mxu0 0
        %1097 = vmatpush1.bf16.msra.mxu0 0
        %1098 = vmatprep.subr.bf16.mxu0 0
        %1099 = vmatpush1.bf16.msra.mxu0 0
        %1100 = vmatprep.subr.bf16.mxu0 0
        %1101 = vmatpush1.bf16.msra.mxu0 0
        %1102 = vmatprep.subr.bf16.mxu0 0
        %1103 = vmatpush1.bf16.msra.mxu0 0
        %1104 = vmatprep.subr.bf16.mxu0 0
        %1105 = vmatpush1.bf16.msra.mxu0 0
        %1106 = vmatprep.subr.bf16.mxu0 0
        %1107 = vmatpush1.bf16.msra.mxu0 0
        %1108 = vmatprep.subr.bf16.mxu0 0
        %1109 = vmatpush1.bf16.msra.mxu0 0
        %1110 = vmatprep.subr.bf16.mxu0 0
        %1111 = vmatpush1.bf16.msra.mxu0 0
        %1112 = vmatprep.subr.bf16.mxu0 0
        %1113 = vmatpush1.bf16.msra.mxu0 0
        %1114 = vmatprep.subr.bf16.mxu0 0
        %1115 = vmatpush1.bf16.msra.mxu0 0
        %1116 = vmatprep.mubr.bf16.mxu0 0
        %1117 = vmatmul.mubr.bf16.gmra.mrb[0].mxu0 %v637
        %v1118 = vpop.f32.mrb[0].mxu0
        %v1119 = vadd.f32 0.0, %v1118
        %v1120 = vpop.f32.mrb[0].mxu0
        %v1121 = vpop.f32.mrb[0].mxu0
        %v1122 = vpop.f32.mrb[0].mxu0
        %1123 = vdwg.mxu0
        %1124 = vst.msk [vmem:[#allocation3 + $0x18] sm:$0xf] %vm679, %v1119
        %s1125 = scalar_lea.vmem %s5, 224
        %v1126 = vld [vmem:[%s1125] sm:$0xf]
        %v1127 = vld [vmem:[%s1125 + $0x4] sm:$0xf]
        %v1128 = vld [vmem:[%s1125 + $0x8] sm:$0xf]
        %v1129 = vld [vmem:[%s1125 + $0xc] sm:$0xf]
        %v1130 = vld [vmem:[%s1125 + $0x10] sm:$0xf]
        %v1131 = vld [vmem:[%s1125 + $0x14] sm:$0xf]
        %v1132 = vld [vmem:[%s1125 + $0x18] sm:$0xf]
        %v1133 = vld [vmem:[%s1125 + $0x1c] sm:$0xf]
        %v1142 = vunpack.c.l.b16 %v1126
        %v1143 = vunpack.c.l.b16 %v1127
        %v1144 = vunpack.c.l.b16 %v1128
        %v1145 = vunpack.c.l.b16 %v1129
        %v1146 = vunpack.c.l.b16 %v1130
        %v1147 = vunpack.c.l.b16 %v1131
        %v1148 = vunpack.c.l.b16 %v1132
        %v1149 = vunpack.c.l.b16 %v1133
        %v1150 = vpack.c.b16 %v1143, %v1142
        %v1151 = vpack.c.b16 %v1145, %v1144
        %v1152 = vpack.c.b16 %v1147, %v1146
        %v1153 = vpack.c.b16 %v1149, %v1148
        %1158 = vmatprep.subr.bf16.mxu0 0
        %1159 = vmatpush1.bf16.msra.mxu0 %v1150
        %1160 = vmatprep.subr.bf16.mxu0 0
        %1161 = vmatpush1.bf16.msra.mxu0 %v1151
        %1162 = vmatprep.subr.bf16.mxu0 0
        %1163 = vmatpush1.bf16.msra.mxu0 %v1152
        %1164 = vmatprep.subr.bf16.mxu0 0
        %1165 = vmatpush1.bf16.msra.mxu0 %v1153
        %1166 = vmatprep.subr.bf16.mxu0 0
        %1167 = vmatpush1.bf16.msra.mxu0 0
        %1168 = vmatprep.subr.bf16.mxu0 0
        %1169 = vmatpush1.bf16.msra.mxu0 0
        %1170 = vmatprep.subr.bf16.mxu0 0
        %1171 = vmatpush1.bf16.msra.mxu0 0
        %1172 = vmatprep.subr.bf16.mxu0 0
        %1173 = vmatpush1.bf16.msra.mxu0 0
        %1174 = vmatprep.subr.bf16.mxu0 0
        %1175 = vmatpush1.bf16.msra.mxu0 0
        %1176 = vmatprep.subr.bf16.mxu0 0
        %1177 = vmatpush1.bf16.msra.mxu0 0
        %1178 = vmatprep.subr.bf16.mxu0 0
        %1179 = vmatpush1.bf16.msra.mxu0 0
        %1180 = vmatprep.subr.bf16.mxu0 0
        %1181 = vmatpush1.bf16.msra.mxu0 0
        %1182 = vmatprep.subr.bf16.mxu0 0
        %1183 = vmatpush1.bf16.msra.mxu0 0
        %1184 = vmatprep.subr.bf16.mxu0 0
        %1185 = vmatpush1.bf16.msra.mxu0 0
        %1186 = vmatprep.subr.bf16.mxu0 0
        %1187 = vmatpush1.bf16.msra.mxu0 0
        %1188 = vmatprep.subr.bf16.mxu0 0
        %1189 = vmatpush1.bf16.msra.mxu0 0
        %1190 = vmatprep.mubr.bf16.mxu0 0
        %1191 = vmatmul.mubr.bf16.gmra.mrb[0].mxu0 %v637
        %v1192 = vpop.f32.mrb[0].mxu0
        %v1193 = vadd.f32 0.0, %v1192
        %v1194 = vpop.f32.mrb[0].mxu0
        %v1195 = vpop.f32.mrb[0].mxu0
        %v1196 = vpop.f32.mrb[0].mxu0
        %1197 = vdwg.mxu0
        %1198 = vst.msk [vmem:[#allocation3 + $0x1c] sm:$0xf] %vm679, %v1193
        %s1199 = scalar_lea.vmem %s5, 256
        %v1200 = vld [vmem:[%s1199] sm:$0xf]
        %v1201 = vld [vmem:[%s1199 + $0x4] sm:$0xf]
        %v1202 = vld [vmem:[%s1199 + $0x8] sm:$0xf]
        %v1203 = vld [vmem:[%s1199 + $0xc] sm:$0xf]
        %v1204 = vld [vmem:[%s1199 + $0x10] sm:$0xf]
        %v1205 = vld [vmem:[%s1199 + $0x14] sm:$0xf]
        %v1206 = vld [vmem:[%s1199 + $0x18] sm:$0xf]
        %v1207 = vld [vmem:[%s1199 + $0x1c] sm:$0xf]
        %v1216 = vunpack.c.l.b16 %v1200
        %v1217 = vunpack.c.l.b16 %v1201
        %v1218 = vunpack.c.l.b16 %v1202
        %v1219 = vunpack.c.l.b16 %v1203
        %v1220 = vunpack.c.l.b16 %v1204
        %v1221 = vunpack.c.l.b16 %v1205
        %v1222 = vunpack.c.l.b16 %v1206
        %v1223 = vunpack.c.l.b16 %v1207
        %v1224 = vpack.c.b16 %v1217, %v1216
        %v1225 = vpack.c.b16 %v1219, %v1218
        %v1226 = vpack.c.b16 %v1221, %v1220
        %v1227 = vpack.c.b16 %v1223, %v1222
        %1232 = vmatprep.subr.bf16.mxu0 0
        %1233 = vmatpush1.bf16.msra.mxu0 %v1224
        %1234 = vmatprep.subr.bf16.mxu0 0
        %1235 = vmatpush1.bf16.msra.mxu0 %v1225
        %1236 = vmatprep.subr.bf16.mxu0 0
        %1237 = vmatpush1.bf16.msra.mxu0 %v1226
        %1238 = vmatprep.subr.bf16.mxu0 0
        %1239 = vmatpush1.bf16.msra.mxu0 %v1227
        %1240 = vmatprep.subr.bf16.mxu0 0
        %1241 = vmatpush1.bf16.msra.mxu0 0
        %1242 = vmatprep.subr.bf16.mxu0 0
        %1243 = vmatpush1.bf16.msra.mxu0 0
        %1244 = vmatprep.subr.bf16.mxu0 0
        %1245 = vmatpush1.bf16.msra.mxu0 0
        %1246 = vmatprep.subr.bf16.mxu0 0
        %1247 = vmatpush1.bf16.msra.mxu0 0
        %1248 = vmatprep.subr.bf16.mxu0 0
        %1249 = vmatpush1.bf16.msra.mxu0 0
        %1250 = vmatprep.subr.bf16.mxu0 0
        %1251 = vmatpush1.bf16.msra.mxu0 0
        %1252 = vmatprep.subr.bf16.mxu0 0
        %1253 = vmatpush1.bf16.msra.mxu0 0
        %1254 = vmatprep.subr.bf16.mxu0 0
        %1255 = vmatpush1.bf16.msra.mxu0 0
        %1256 = vmatprep.subr.bf16.mxu0 0
        %1257 = vmatpush1.bf16.msra.mxu0 0
        %1258 = vmatprep.subr.bf16.mxu0 0
        %1259 = vmatpush1.bf16.msra.mxu0 0
        %1260 = vmatprep.subr.bf16.mxu0 0
        %1261 = vmatpush1.bf16.msra.mxu0 0
        %1262 = vmatprep.subr.bf16.mxu0 0
        %1263 = vmatpush1.bf16.msra.mxu0 0
        %1264 = vmatprep.mubr.bf16.mxu0 0
        %1265 = vmatmul.mubr.bf16.gmra.mrb[0].mxu0 %v637
        %v1266 = vpop.f32.mrb[0].mxu0
        %v1267 = vadd.f32 0.0, %v1266
        %v1268 = vpop.f32.mrb[0].mxu0
        %v1269 = vpop.f32.mrb[0].mxu0
        %v1270 = vpop.f32.mrb[0].mxu0
        %1271 = vdwg.mxu0
        %1272 = vst.msk [vmem:[#allocation3 + $0x20] sm:$0xf] %vm679, %v1267
        %s1273 = scalar_lea.vmem %s5, 288
        %v1274 = vld [vmem:[%s1273] sm:$0xf]
        %v1275 = vld [vmem:[%s1273 + $0x4] sm:$0xf]
        %v1276 = vld [vmem:[%s1273 + $0x8] sm:$0xf]
        %v1277 = vld [vmem:[%s1273 + $0xc] sm:$0xf]
        %v1278 = vld [vmem:[%s1273 + $0x10] sm:$0xf]
        %v1279 = vld [vmem:[%s1273 + $0x14] sm:$0xf]
        %v1280 = vld [vmem:[%s1273 + $0x18] sm:$0xf]
        %v1281 = vld [vmem:[%s1273 + $0x1c] sm:$0xf]
        %v1290 = vunpack.c.l.b16 %v1274
        %v1291 = vunpack.c.l.b16 %v1275
        %v1292 = vunpack.c.l.b16 %v1276
        %v1293 = vunpack.c.l.b16 %v1277
        %v1294 = vunpack.c.l.b16 %v1278
        %v1295 = vunpack.c.l.b16 %v1279
        %v1296 = vunpack.c.l.b16 %v1280
        %v1297 = vunpack.c.l.b16 %v1281
        %v1298 = vpack.c.b16 %v1291, %v1290
        %v1299 = vpack.c.b16 %v1293, %v1292
        %v1300 = vpack.c.b16 %v1295, %v1294
        %v1301 = vpack.c.b16 %v1297, %v1296
        %1306 = vmatprep.subr.bf16.mxu0 0
        %1307 = vmatpush1.bf16.msra.mxu0 %v1298
        %1308 = vmatprep.subr.bf16.mxu0 0
        %1309 = vmatpush1.bf16.msra.mxu0 %v1299
        %1310 = vmatprep.subr.bf16.mxu0 0
        %1311 = vmatpush1.bf16.msra.mxu0 %v1300
        %1312 = vmatprep.subr.bf16.mxu0 0
        %1313 = vmatpush1.bf16.msra.mxu0 %v1301
        %1314 = vmatprep.subr.bf16.mxu0 0
        %1315 = vmatpush1.bf16.msra.mxu0 0
        %1316 = vmatprep.subr.bf16.mxu0 0
        %1317 = vmatpush1.bf16.msra.mxu0 0
        %1318 = vmatprep.subr.bf16.mxu0 0
        %1319 = vmatpush1.bf16.msra.mxu0 0
        %1320 = vmatprep.subr.bf16.mxu0 0
        %1321 = vmatpush1.bf16.msra.mxu0 0
        %1322 = vmatprep.subr.bf16.mxu0 0
        %1323 = vmatpush1.bf16.msra.mxu0 0
        %1324 = vmatprep.subr.bf16.mxu0 0
        %1325 = vmatpush1.bf16.msra.mxu0 0
        %1326 = vmatprep.subr.bf16.mxu0 0
        %1327 = vmatpush1.bf16.msra.mxu0 0
        %1328 = vmatprep.subr.bf16.mxu0 0
        %1329 = vmatpush1.bf16.msra.mxu0 0
        %1330 = vmatprep.subr.bf16.mxu0 0
        %1331 = vmatpush1.bf16.msra.mxu0 0
        %1332 = vmatprep.subr.bf16.mxu0 0
        %1333 = vmatpush1.bf16.msra.mxu0 0
        %1334 = vmatprep.subr.bf16.mxu0 0
        %1335 = vmatpush1.bf16.msra.mxu0 0
        %1336 = vmatprep.subr.bf16.mxu0 0
        %1337 = vmatpush1.bf16.msra.mxu0 0
        %1338 = vmatprep.mubr.bf16.mxu0 0
        %1339 = vmatmul.mubr.bf16.gmra.mrb[0].mxu0 %v637
        %v1340 = vpop.f32.mrb[0].mxu0
        %v1341 = vadd.f32 0.0, %v1340
        %v1342 = vpop.f32.mrb[0].mxu0
        %v1343 = vpop.f32.mrb[0].mxu0
        %v1344 = vpop.f32.mrb[0].mxu0
        %1345 = vdwg.mxu0
        %1346 = vst.msk [vmem:[#allocation3 + $0x24] sm:$0xf] %vm679, %v1341
        %s1347 = scalar_lea.vmem %s5, 320
        %v1348 = vld [vmem:[%s1347] sm:$0xf]
        %v1349 = vld [vmem:[%s1347 + $0x4] sm:$0xf]
        %v1350 = vld [vmem:[%s1347 + $0x8] sm:$0xf]
        %v1351 = vld [vmem:[%s1347 + $0xc] sm:$0xf]
        %v1352 = vld [vmem:[%s1347 + $0x10] sm:$0xf]
        %v1353 = vld [vmem:[%s1347 + $0x14] sm:$0xf]
        %v1354 = vld [vmem:[%s1347 + $0x18] sm:$0xf]
        %v1355 = vld [vmem:[%s1347 + $0x1c] sm:$0xf]
        %v1364 = vunpack.c.l.b16 %v1348
        %v1365 = vunpack.c.l.b16 %v1349
        %v1366 = vunpack.c.l.b16 %v1350
        %v1367 = vunpack.c.l.b16 %v1351
        %v1368 = vunpack.c.l.b16 %v1352
        %v1369 = vunpack.c.l.b16 %v1353
        %v1370 = vunpack.c.l.b16 %v1354
        %v1371 = vunpack.c.l.b16 %v1355
        %v1372 = vpack.c.b16 %v1365, %v1364
        %v1373 = vpack.c.b16 %v1367, %v1366
        %v1374 = vpack.c.b16 %v1369, %v1368
        %v1375 = vpack.c.b16 %v1371, %v1370
        %1380 = vmatprep.subr.bf16.mxu0 0
        %1381 = vmatpush1.bf16.msra.mxu0 %v1372
        %1382 = vmatprep.subr.bf16.mxu0 0
        %1383 = vmatpush1.bf16.msra.mxu0 %v1373
        %1384 = vmatprep.subr.bf16.mxu0 0
        %1385 = vmatpush1.bf16.msra.mxu0 %v1374
        %1386 = vmatprep.subr.bf16.mxu0 0
        %1387 = vmatpush1.bf16.msra.mxu0 %v1375
        %1388 = vmatprep.subr.bf16.mxu0 0
        %1389 = vmatpush1.bf16.msra.mxu0 0
        %1390 = vmatprep.subr.bf16.mxu0 0
        %1391 = vmatpush1.bf16.msra.mxu0 0
        %1392 = vmatprep.subr.bf16.mxu0 0
        %1393 = vmatpush1.bf16.msra.mxu0 0
        %1394 = vmatprep.subr.bf16.mxu0 0
        %1395 = vmatpush1.bf16.msra.mxu0 0
        %1396 = vmatprep.subr.bf16.mxu0 0
        %1397 = vmatpush1.bf16.msra.mxu0 0
        %1398 = vmatprep.subr.bf16.mxu0 0
        %1399 = vmatpush1.bf16.msra.mxu0 0
        %1400 = vmatprep.subr.bf16.mxu0 0
        %1401 = vmatpush1.bf16.msra.mxu0 0
        %1402 = vmatprep.subr.bf16.mxu0 0
        %1403 = vmatpush1.bf16.msra.mxu0 0
        %1404 = vmatprep.subr.bf16.mxu0 0
        %1405 = vmatpush1.bf16.msra.mxu0 0
        %1406 = vmatprep.subr.bf16.mxu0 0
        %1407 = vmatpush1.bf16.msra.mxu0 0
        %1408 = vmatprep.subr.bf16.mxu0 0
        %1409 = vmatpush1.bf16.msra.mxu0 0
        %1410 = vmatprep.subr.bf16.mxu0 0
        %1411 = vmatpush1.bf16.msra.mxu0 0
        %1412 = vmatprep.mubr.bf16.mxu0 0
        %1413 = vmatmul.mubr.bf16.gmra.mrb[0].mxu0 %v637
        %v1414 = vpop.f32.mrb[0].mxu0
        %v1415 = vadd.f32 0.0, %v1414
        %v1416 = vpop.f32.mrb[0].mxu0
        %v1417 = vpop.f32.mrb[0].mxu0
        %v1418 = vpop.f32.mrb[0].mxu0
        %1419 = vdwg.mxu0
        %1420 = vst.msk [vmem:[#allocation3 + $0x28] sm:$0xf] %vm679, %v1415
        %s1421 = scalar_lea.vmem %s5, 352
        %v1422 = vld [vmem:[%s1421] sm:$0xf]
        %v1423 = vld [vmem:[%s1421 + $0x4] sm:$0xf]
        %v1424 = vld [vmem:[%s1421 + $0x8] sm:$0xf]
        %v1425 = vld [vmem:[%s1421 + $0xc] sm:$0xf]
        %v1426 = vld [vmem:[%s1421 + $0x10] sm:$0xf]
        %v1427 = vld [vmem:[%s1421 + $0x14] sm:$0xf]
        %v1428 = vld [vmem:[%s1421 + $0x18] sm:$0xf]
        %v1429 = vld [vmem:[%s1421 + $0x1c] sm:$0xf]
        %v1438 = vunpack.c.l.b16 %v1422
        %v1439 = vunpack.c.l.b16 %v1423
        %v1440 = vunpack.c.l.b16 %v1424
        %v1441 = vunpack.c.l.b16 %v1425
        %v1442 = vunpack.c.l.b16 %v1426
        %v1443 = vunpack.c.l.b16 %v1427
        %v1444 = vunpack.c.l.b16 %v1428
        %v1445 = vunpack.c.l.b16 %v1429
        %v1446 = vpack.c.b16 %v1439, %v1438
        %v1447 = vpack.c.b16 %v1441, %v1440
        %v1448 = vpack.c.b16 %v1443, %v1442
        %v1449 = vpack.c.b16 %v1445, %v1444
        %1454 = vmatprep.subr.bf16.mxu0 0
        %1455 = vmatpush1.bf16.msra.mxu0 %v1446
        %1456 = vmatprep.subr.bf16.mxu0 0
        %1457 = vmatpush1.bf16.msra.mxu0 %v1447
        %1458 = vmatprep.subr.bf16.mxu0 0
        %1459 = vmatpush1.bf16.msra.mxu0 %v1448
        %1460 = vmatprep.subr.bf16.mxu0 0
        %1461 = vmatpush1.bf16.msra.mxu0 %v1449
        %1462 = vmatprep.subr.bf16.mxu0 0
        %1463 = vmatpush1.bf16.msra.mxu0 0
        %1464 = vmatprep.subr.bf16.mxu0 0
        %1465 = vmatpush1.bf16.msra.mxu0 0
        %1466 = vmatprep.subr.bf16.mxu0 0
        %1467 = vmatpush1.bf16.msra.mxu0 0
        %1468 = vmatprep.subr.bf16.mxu0 0
        %1469 = vmatpush1.bf16.msra.mxu0 0
        %1470 = vmatprep.subr.bf16.mxu0 0
        %1471 = vmatpush1.bf16.msra.mxu0 0
        %1472 = vmatprep.subr.bf16.mxu0 0
        %1473 = vmatpush1.bf16.msra.mxu0 0
        %1474 = vmatprep.subr.bf16.mxu0 0
        %1475 = vmatpush1.bf16.msra.mxu0 0
        %1476 = vmatprep.subr.bf16.mxu0 0
        %1477 = vmatpush1.bf16.msra.mxu0 0
        %1478 = vmatprep.subr.bf16.mxu0 0
        %1479 = vmatpush1.bf16.msra.mxu0 0
        %1480 = vmatprep.subr.bf16.mxu0 0
        %1481 = vmatpush1.bf16.msra.mxu0 0
        %1482 = vmatprep.subr.bf16.mxu0 0
        %1483 = vmatpush1.bf16.msra.mxu0 0
        %1484 = vmatprep.subr.bf16.mxu0 0
        %1485 = vmatpush1.bf16.msra.mxu0 0
        %1486 = vmatprep.mubr.bf16.mxu0 0
        %1487 = vmatmul.mubr.bf16.gmra.mrb[0].mxu0 %v637
        %v1488 = vpop.f32.mrb[0].mxu0
        %v1489 = vadd.f32 0.0, %v1488
        %v1490 = vpop.f32.mrb[0].mxu0
        %v1491 = vpop.f32.mrb[0].mxu0
        %v1492 = vpop.f32.mrb[0].mxu0
        %1493 = vdwg.mxu0
        %1494 = vst.msk [vmem:[#allocation3 + $0x2c] sm:$0xf] %vm679, %v1489
        %s1495 = scalar_lea.vmem %s5, 384
        %v1496 = vld [vmem:[%s1495] sm:$0xf]
        %v1497 = vld [vmem:[%s1495 + $0x4] sm:$0xf]
        %v1498 = vld [vmem:[%s1495 + $0x8] sm:$0xf]
        %v1499 = vld [vmem:[%s1495 + $0xc] sm:$0xf]
        %v1500 = vld [vmem:[%s1495 + $0x10] sm:$0xf]
        %v1501 = vld [vmem:[%s1495 + $0x14] sm:$0xf]
        %v1502 = vld [vmem:[%s1495 + $0x18] sm:$0xf]
        %v1503 = vld [vmem:[%s1495 + $0x1c] sm:$0xf]
        %v1512 = vunpack.c.l.b16 %v1496
        %v1513 = vunpack.c.l.b16 %v1497
        %v1514 = vunpack.c.l.b16 %v1498
        %v1515 = vunpack.c.l.b16 %v1499
        %v1516 = vunpack.c.l.b16 %v1500
        %v1517 = vunpack.c.l.b16 %v1501
        %v1518 = vunpack.c.l.b16 %v1502
        %v1519 = vunpack.c.l.b16 %v1503
        %v1520 = vpack.c.b16 %v1513, %v1512
        %v1521 = vpack.c.b16 %v1515, %v1514
        %v1522 = vpack.c.b16 %v1517, %v1516
        %v1523 = vpack.c.b16 %v1519, %v1518
        %1528 = vmatprep.subr.bf16.mxu0 0
        %1529 = vmatpush1.bf16.msra.mxu0 %v1520
        %1530 = vmatprep.subr.bf16.mxu0 0
        %1531 = vmatpush1.bf16.msra.mxu0 %v1521
        %1532 = vmatprep.subr.bf16.mxu0 0
        %1533 = vmatpush1.bf16.msra.mxu0 %v1522
        %1534 = vmatprep.subr.bf16.mxu0 0
        %1535 = vmatpush1.bf16.msra.mxu0 %v1523
        %1536 = vmatprep.subr.bf16.mxu0 0
        %1537 = vmatpush1.bf16.msra.mxu0 0
        %1538 = vmatprep.subr.bf16.mxu0 0
        %1539 = vmatpush1.bf16.msra.mxu0 0
        %1540 = vmatprep.subr.bf16.mxu0 0
        %1541 = vmatpush1.bf16.msra.mxu0 0
        %1542 = vmatprep.subr.bf16.mxu0 0
        %1543 = vmatpush1.bf16.msra.mxu0 0
        %1544 = vmatprep.subr.bf16.mxu0 0
        %1545 = vmatpush1.bf16.msra.mxu0 0
        %1546 = vmatprep.subr.bf16.mxu0 0
        %1547 = vmatpush1.bf16.msra.mxu0 0
        %1548 = vmatprep.subr.bf16.mxu0 0
        %1549 = vmatpush1.bf16.msra.mxu0 0
        %1550 = vmatprep.subr.bf16.mxu0 0
        %1551 = vmatpush1.bf16.msra.mxu0 0
        %1552 = vmatprep.subr.bf16.mxu0 0
        %1553 = vmatpush1.bf16.msra.mxu0 0
        %1554 = vmatprep.subr.bf16.mxu0 0
        %1555 = vmatpush1.bf16.msra.mxu0 0
        %1556 = vmatprep.subr.bf16.mxu0 0
        %1557 = vmatpush1.bf16.msra.mxu0 0
        %1558 = vmatprep.subr.bf16.mxu0 0
        %1559 = vmatpush1.bf16.msra.mxu0 0
        %1560 = vmatprep.mubr.bf16.mxu0 0
        %1561 = vmatmul.mubr.bf16.gmra.mrb[0].mxu0 %v637
        %v1562 = vpop.f32.mrb[0].mxu0
        %v1563 = vadd.f32 0.0, %v1562
        %v1564 = vpop.f32.mrb[0].mxu0
        %v1565 = vpop.f32.mrb[0].mxu0
        %v1566 = vpop.f32.mrb[0].mxu0
        %1567 = vdwg.mxu0
        %1568 = vst.msk [vmem:[#allocation3 + $0x30] sm:$0xf] %vm679, %v1563
        %s1569 = scalar_lea.vmem %s5, 416
        %v1570 = vld [vmem:[%s1569] sm:$0xf]
        %v1571 = vld [vmem:[%s1569 + $0x4] sm:$0xf]
        %v1572 = vld [vmem:[%s1569 + $0x8] sm:$0xf]
        %v1573 = vld [vmem:[%s1569 + $0xc] sm:$0xf]
        %v1574 = vld [vmem:[%s1569 + $0x10] sm:$0xf]
        %v1575 = vld [vmem:[%s1569 + $0x14] sm:$0xf]
        %v1576 = vld [vmem:[%s1569 + $0x18] sm:$0xf]
        %v1577 = vld [vmem:[%s1569 + $0x1c] sm:$0xf]
        %v1586 = vunpack.c.l.b16 %v1570
        %v1587 = vunpack.c.l.b16 %v1571
        %v1588 = vunpack.c.l.b16 %v1572
        %v1589 = vunpack.c.l.b16 %v1573
        %v1590 = vunpack.c.l.b16 %v1574
        %v1591 = vunpack.c.l.b16 %v1575
        %v1592 = vunpack.c.l.b16 %v1576
        %v1593 = vunpack.c.l.b16 %v1577
        %v1594 = vpack.c.b16 %v1587, %v1586
        %v1595 = vpack.c.b16 %v1589, %v1588
        %v1596 = vpack.c.b16 %v1591, %v1590
        %v1597 = vpack.c.b16 %v1593, %v1592
        %1602 = vmatprep.subr.bf16.mxu0 0
        %1603 = vmatpush1.bf16.msra.mxu0 %v1594
        %1604 = vmatprep.subr.bf16.mxu0 0
        %1605 = vmatpush1.bf16.msra.mxu0 %v1595
        %1606 = vmatprep.subr.bf16.mxu0 0
        %1607 = vmatpush1.bf16.msra.mxu0 %v1596
        %1608 = vmatprep.subr.bf16.mxu0 0
        %1609 = vmatpush1.bf16.msra.mxu0 %v1597
        %1610 = vmatprep.subr.bf16.mxu0 0
        %1611 = vmatpush1.bf16.msra.mxu0 0
        %1612 = vmatprep.subr.bf16.mxu0 0
        %1613 = vmatpush1.bf16.msra.mxu0 0
        %1614 = vmatprep.subr.bf16.mxu0 0
        %1615 = vmatpush1.bf16.msra.mxu0 0
        %1616 = vmatprep.subr.bf16.mxu0 0
        %1617 = vmatpush1.bf16.msra.mxu0 0
        %1618 = vmatprep.subr.bf16.mxu0 0
        %1619 = vmatpush1.bf16.msra.mxu0 0
        %1620 = vmatprep.subr.bf16.mxu0 0
        %1621 = vmatpush1.bf16.msra.mxu0 0
        %1622 = vmatprep.subr.bf16.mxu0 0
        %1623 = vmatpush1.bf16.msra.mxu0 0
        %1624 = vmatprep.subr.bf16.mxu0 0
        %1625 = vmatpush1.bf16.msra.mxu0 0
        %1626 = vmatprep.subr.bf16.mxu0 0
        %1627 = vmatpush1.bf16.msra.mxu0 0
        %1628 = vmatprep.subr.bf16.mxu0 0
        %1629 = vmatpush1.bf16.msra.mxu0 0
        %1630 = vmatprep.subr.bf16.mxu0 0
        %1631 = vmatpush1.bf16.msra.mxu0 0
        %1632 = vmatprep.subr.bf16.mxu0 0
        %1633 = vmatpush1.bf16.msra.mxu0 0
        %1634 = vmatprep.mubr.bf16.mxu0 0
        %1635 = vmatmul.mubr.bf16.gmra.mrb[0].mxu0 %v637
        %v1636 = vpop.f32.mrb[0].mxu0
        %v1637 = vadd.f32 0.0, %v1636
        %v1638 = vpop.f32.mrb[0].mxu0
        %v1639 = vpop.f32.mrb[0].mxu0
        %v1640 = vpop.f32.mrb[0].mxu0
        %1641 = vdwg.mxu0
        %1642 = vst.msk [vmem:[#allocation3 + $0x34] sm:$0xf] %vm679, %v1637
        %s1643 = scalar_lea.vmem %s5, 448
        %v1644 = vld [vmem:[%s1643] sm:$0xf]
        %v1645 = vld [vmem:[%s1643 + $0x4] sm:$0xf]
        %v1646 = vld [vmem:[%s1643 + $0x8] sm:$0xf]
        %v1647 = vld [vmem:[%s1643 + $0xc] sm:$0xf]
        %v1648 = vld [vmem:[%s1643 + $0x10] sm:$0xf]
        %v1649 = vld [vmem:[%s1643 + $0x14] sm:$0xf]
        %v1650 = vld [vmem:[%s1643 + $0x18] sm:$0xf]
        %v1651 = vld [vmem:[%s1643 + $0x1c] sm:$0xf]
        %v1660 = vunpack.c.l.b16 %v1644
        %v1661 = vunpack.c.l.b16 %v1645
        %v1662 = vunpack.c.l.b16 %v1646
        %v1663 = vunpack.c.l.b16 %v1647
        %v1664 = vunpack.c.l.b16 %v1648
        %v1665 = vunpack.c.l.b16 %v1649
        %v1666 = vunpack.c.l.b16 %v1650
        %v1667 = vunpack.c.l.b16 %v1651
        %v1668 = vpack.c.b16 %v1661, %v1660
        %v1669 = vpack.c.b16 %v1663, %v1662
        %v1670 = vpack.c.b16 %v1665, %v1664
        %v1671 = vpack.c.b16 %v1667, %v1666
        %1676 = vmatprep.subr.bf16.mxu0 0
        %1677 = vmatpush1.bf16.msra.mxu0 %v1668
        %1678 = vmatprep.subr.bf16.mxu0 0
        %1679 = vmatpush1.bf16.msra.mxu0 %v1669
        %1680 = vmatprep.subr.bf16.mxu0 0
        %1681 = vmatpush1.bf16.msra.mxu0 %v1670
        %1682 = vmatprep.subr.bf16.mxu0 0
        %1683 = vmatpush1.bf16.msra.mxu0 %v1671
        %1684 = vmatprep.subr.bf16.mxu0 0
        %1685 = vmatpush1.bf16.msra.mxu0 0
        %1686 = vmatprep.subr.bf16.mxu0 0
        %1687 = vmatpush1.bf16.msra.mxu0 0
        %1688 = vmatprep.subr.bf16.mxu0 0
        %1689 = vmatpush1.bf16.msra.mxu0 0
        %1690 = vmatprep.subr.bf16.mxu0 0
        %1691 = vmatpush1.bf16.msra.mxu0 0
        %1692 = vmatprep.subr.bf16.mxu0 0
        %1693 = vmatpush1.bf16.msra.mxu0 0
        %1694 = vmatprep.subr.bf16.mxu0 0
        %1695 = vmatpush1.bf16.msra.mxu0 0
        %1696 = vmatprep.subr.bf16.mxu0 0
        %1697 = vmatpush1.bf16.msra.mxu0 0
        %1698 = vmatprep.subr.bf16.mxu0 0
        %1699 = vmatpush1.bf16.msra.mxu0 0
        %1700 = vmatprep.subr.bf16.mxu0 0
        %1701 = vmatpush1.bf16.msra.mxu0 0
        %1702 = vmatprep.subr.bf16.mxu0 0
        %1703 = vmatpush1.bf16.msra.mxu0 0
        %1704 = vmatprep.subr.bf16.mxu0 0
        %1705 = vmatpush1.bf16.msra.mxu0 0
        %1706 = vmatprep.subr.bf16.mxu0 0
        %1707 = vmatpush1.bf16.msra.mxu0 0
        %1708 = vmatprep.mubr.bf16.mxu0 0
        %1709 = vmatmul.mubr.bf16.gmra.mrb[0].mxu0 %v637
        %v1710 = vpop.f32.mrb[0].mxu0
        %v1711 = vadd.f32 0.0, %v1710
        %v1712 = vpop.f32.mrb[0].mxu0
        %v1713 = vpop.f32.mrb[0].mxu0
        %v1714 = vpop.f32.mrb[0].mxu0
        %1715 = vdwg.mxu0
        %1716 = vst.msk [vmem:[#allocation3 + $0x38] sm:$0xf] %vm679, %v1711
        %s1717 = scalar_lea.vmem %s5, 480
        %v1718 = vld [vmem:[%s1717] sm:$0xf]
        %v1719 = vld [vmem:[%s1717 + $0x4] sm:$0xf]
        %v1720 = vld [vmem:[%s1717 + $0x8] sm:$0xf]
        %v1721 = vld [vmem:[%s1717 + $0xc] sm:$0xf]
        %v1722 = vld [vmem:[%s1717 + $0x10] sm:$0xf]
        %v1723 = vld [vmem:[%s1717 + $0x14] sm:$0xf]
        %v1724 = vld [vmem:[%s1717 + $0x18] sm:$0xf]
        %v1725 = vld [vmem:[%s1717 + $0x1c] sm:$0xf]
        %v1734 = vunpack.c.l.b16 %v1718
        %v1735 = vunpack.c.l.b16 %v1719
        %v1736 = vunpack.c.l.b16 %v1720
        %v1737 = vunpack.c.l.b16 %v1721
        %v1738 = vunpack.c.l.b16 %v1722
        %v1739 = vunpack.c.l.b16 %v1723
        %v1740 = vunpack.c.l.b16 %v1724
        %v1741 = vunpack.c.l.b16 %v1725
        %v1742 = vpack.c.b16 %v1735, %v1734
        %v1743 = vpack.c.b16 %v1737, %v1736
        %v1744 = vpack.c.b16 %v1739, %v1738
        %v1745 = vpack.c.b16 %v1741, %v1740
        %1750 = vmatprep.subr.bf16.mxu0 0
        %1751 = vmatpush1.bf16.msra.mxu0 %v1742
        %1752 = vmatprep.subr.bf16.mxu0 0
        %1753 = vmatpush1.bf16.msra.mxu0 %v1743
        %1754 = vmatprep.subr.bf16.mxu0 0
        %1755 = vmatpush1.bf16.msra.mxu0 %v1744
        %1756 = vmatprep.subr.bf16.mxu0 0
        %1757 = vmatpush1.bf16.msra.mxu0 %v1745
        %1758 = vmatprep.subr.bf16.mxu0 0
        %1759 = vmatpush1.bf16.msra.mxu0 0
        %1760 = vmatprep.subr.bf16.mxu0 0
        %1761 = vmatpush1.bf16.msra.mxu0 0
        %1762 = vmatprep.subr.bf16.mxu0 0
        %1763 = vmatpush1.bf16.msra.mxu0 0
        %1764 = vmatprep.subr.bf16.mxu0 0
        %1765 = vmatpush1.bf16.msra.mxu0 0
        %1766 = vmatprep.subr.bf16.mxu0 0
        %1767 = vmatpush1.bf16.msra.mxu0 0
        %1768 = vmatprep.subr.bf16.mxu0 0
        %1769 = vmatpush1.bf16.msra.mxu0 0
        %1770 = vmatprep.subr.bf16.mxu0 0
        %1771 = vmatpush1.bf16.msra.mxu0 0
        %1772 = vmatprep.subr.bf16.mxu0 0
        %1773 = vmatpush1.bf16.msra.mxu0 0
        %1774 = vmatprep.subr.bf16.mxu0 0
        %1775 = vmatpush1.bf16.msra.mxu0 0
        %1776 = vmatprep.subr.bf16.mxu0 0
        %1777 = vmatpush1.bf16.msra.mxu0 0
        %1778 = vmatprep.subr.bf16.mxu0 0
        %1779 = vmatpush1.bf16.msra.mxu0 0
        %1780 = vmatprep.subr.bf16.mxu0 0
        %1781 = vmatpush1.bf16.msra.mxu0 0
        %1782 = vmatprep.mubr.bf16.mxu0 0
        %1783 = vmatmul.mubr.bf16.gmra.mrb[0].mxu0 %v637
        %v1784 = vpop.f32.mrb[0].mxu0
        %v1785 = vadd.f32 0.0, %v1784
        %v1786 = vpop.f32.mrb[0].mxu0
        %v1787 = vpop.f32.mrb[0].mxu0
        %v1788 = vpop.f32.mrb[0].mxu0
        %1789 = vdwg.mxu0
        %1790 = vst.msk [vmem:[#allocation3 + $0x3c] sm:$0xf] %vm679, %v1785
        %s1791 = scalar_lea.vmem %s5, 512
        %v1792 = vld [vmem:[%s1791] sm:$0xf]
        %v1793 = vld [vmem:[%s1791 + $0x4] sm:$0xf]
        %v1794 = vld [vmem:[%s1791 + $0x8] sm:$0xf]
        %v1795 = vld [vmem:[%s1791 + $0xc] sm:$0xf]
        %v1796 = vld [vmem:[%s1791 + $0x10] sm:$0xf]
        %v1797 = vld [vmem:[%s1791 + $0x14] sm:$0xf]
        %v1798 = vld [vmem:[%s1791 + $0x18] sm:$0xf]
        %v1799 = vld [vmem:[%s1791 + $0x1c] sm:$0xf]
        %v1808 = vunpack.c.l.b16 %v1792
        %v1809 = vunpack.c.l.b16 %v1793
        %v1810 = vunpack.c.l.b16 %v1794
        %v1811 = vunpack.c.l.b16 %v1795
        %v1812 = vunpack.c.l.b16 %v1796
        %v1813 = vunpack.c.l.b16 %v1797
        %v1814 = vunpack.c.l.b16 %v1798
        %v1815 = vunpack.c.l.b16 %v1799
        %v1816 = vpack.c.b16 %v1809, %v1808
        %v1817 = vpack.c.b16 %v1811, %v1810
        %v1818 = vpack.c.b16 %v1813, %v1812
        %v1819 = vpack.c.b16 %v1815, %v1814
        %1824 = vmatprep.subr.bf16.mxu0 0
        %1825 = vmatpush1.bf16.msra.mxu0 %v1816
        %1826 = vmatprep.subr.bf16.mxu0 0
        %1827 = vmatpush1.bf16.msra.mxu0 %v1817
        %1828 = vmatprep.subr.bf16.mxu0 0
        %1829 = vmatpush1.bf16.msra.mxu0 %v1818
        %1830 = vmatprep.subr.bf16.mxu0 0
        %1831 = vmatpush1.bf16.msra.mxu0 %v1819
        %1832 = vmatprep.subr.bf16.mxu0 0
        %1833 = vmatpush1.bf16.msra.mxu0 0
        %1834 = vmatprep.subr.bf16.mxu0 0
        %1835 = vmatpush1.bf16.msra.mxu0 0
        %1836 = vmatprep.subr.bf16.mxu0 0
        %1837 = vmatpush1.bf16.msra.mxu0 0
        %1838 = vmatprep.subr.bf16.mxu0 0
        %1839 = vmatpush1.bf16.msra.mxu0 0
        %1840 = vmatprep.subr.bf16.mxu0 0
        %1841 = vmatpush1.bf16.msra.mxu0 0
        %1842 = vmatprep.subr.bf16.mxu0 0
        %1843 = vmatpush1.bf16.msra.mxu0 0
        %1844 = vmatprep.subr.bf16.mxu0 0
        %1845 = vmatpush1.bf16.msra.mxu0 0
        %1846 = vmatprep.subr.bf16.mxu0 0
        %1847 = vmatpush1.bf16.msra.mxu0 0
        %1848 = vmatprep.subr.bf16.mxu0 0
        %1849 = vmatpush1.bf16.msra.mxu0 0
        %1850 = vmatprep.subr.bf16.mxu0 0
        %1851 = vmatpush1.bf16.msra.mxu0 0
        %1852 = vmatprep.subr.bf16.mxu0 0
        %1853 = vmatpush1.bf16.msra.mxu0 0
        %1854 = vmatprep.subr.bf16.mxu0 0
        %1855 = vmatpush1.bf16.msra.mxu0 0
        %1856 = vmatprep.mubr.bf16.mxu0 0
        %1857 = vmatmul.mubr.bf16.gmra.mrb[0].mxu0 %v637
        %v1858 = vpop.f32.mrb[0].mxu0
        %v1859 = vadd.f32 0.0, %v1858
        %v1860 = vpop.f32.mrb[0].mxu0
        %v1861 = vpop.f32.mrb[0].mxu0
        %v1862 = vpop.f32.mrb[0].mxu0
        %1863 = vdwg.mxu0
        %1864 = vst.msk [vmem:[#allocation3 + $0x40] sm:$0xf] %vm679, %v1859
        %s1865 = scalar_lea.vmem %s5, 544
        %v1866 = vld [vmem:[%s1865] sm:$0xf]
        %v1867 = vld [vmem:[%s1865 + $0x4] sm:$0xf]
        %v1868 = vld [vmem:[%s1865 + $0x8] sm:$0xf]
        %v1869 = vld [vmem:[%s1865 + $0xc] sm:$0xf]
        %v1870 = vld [vmem:[%s1865 + $0x10] sm:$0xf]
        %v1871 = vld [vmem:[%s1865 + $0x14] sm:$0xf]
        %v1872 = vld [vmem:[%s1865 + $0x18] sm:$0xf]
        %v1873 = vld [vmem:[%s1865 + $0x1c] sm:$0xf]
        %v1882 = vunpack.c.l.b16 %v1866
        %v1883 = vunpack.c.l.b16 %v1867
        %v1884 = vunpack.c.l.b16 %v1868
        %v1885 = vunpack.c.l.b16 %v1869
        %v1886 = vunpack.c.l.b16 %v1870
        %v1887 = vunpack.c.l.b16 %v1871
        %v1888 = vunpack.c.l.b16 %v1872
        %v1889 = vunpack.c.l.b16 %v1873
        %v1890 = vpack.c.b16 %v1883, %v1882
        %v1891 = vpack.c.b16 %v1885, %v1884
        %v1892 = vpack.c.b16 %v1887, %v1886
        %v1893 = vpack.c.b16 %v1889, %v1888
        %1898 = vmatprep.subr.bf16.mxu0 0
        %1899 = vmatpush1.bf16.msra.mxu0 %v1890
        %1900 = vmatprep.subr.bf16.mxu0 0
        %1901 = vmatpush1.bf16.msra.mxu0 %v1891
        %1902 = vmatprep.subr.bf16.mxu0 0
        %1903 = vmatpush1.bf16.msra.mxu0 %v1892
        %1904 = vmatprep.subr.bf16.mxu0 0
        %1905 = vmatpush1.bf16.msra.mxu0 %v1893
        %1906 = vmatprep.subr.bf16.mxu0 0
        %1907 = vmatpush1.bf16.msra.mxu0 0
        %1908 = vmatprep.subr.bf16.mxu0 0
        %1909 = vmatpush1.bf16.msra.mxu0 0
        %1910 = vmatprep.subr.bf16.mxu0 0
        %1911 = vmatpush1.bf16.msra.mxu0 0
        %1912 = vmatprep.subr.bf16.mxu0 0
        %1913 = vmatpush1.bf16.msra.mxu0 0
        %1914 = vmatprep.subr.bf16.mxu0 0
        %1915 = vmatpush1.bf16.msra.mxu0 0
        %1916 = vmatprep.subr.bf16.mxu0 0
        %1917 = vmatpush1.bf16.msra.mxu0 0
        %1918 = vmatprep.subr.bf16.mxu0 0
        %1919 = vmatpush1.bf16.msra.mxu0 0
        %1920 = vmatprep.subr.bf16.mxu0 0
        %1921 = vmatpush1.bf16.msra.mxu0 0
        %1922 = vmatprep.subr.bf16.mxu0 0
        %1923 = vmatpush1.bf16.msra.mxu0 0
        %1924 = vmatprep.subr.bf16.mxu0 0
        %1925 = vmatpush1.bf16.msra.mxu0 0
        %1926 = vmatprep.subr.bf16.mxu0 0
        %1927 = vmatpush1.bf16.msra.mxu0 0
        %1928 = vmatprep.subr.bf16.mxu0 0
        %1929 = vmatpush1.bf16.msra.mxu0 0
        %1930 = vmatprep.mubr.bf16.mxu0 0
        %1931 = vmatmul.mubr.bf16.gmra.mrb[0].mxu0 %v637
        %v1932 = vpop.f32.mrb[0].mxu0
        %v1933 = vadd.f32 0.0, %v1932
        %v1934 = vpop.f32.mrb[0].mxu0
        %v1935 = vpop.f32.mrb[0].mxu0
        %v1936 = vpop.f32.mrb[0].mxu0
        %1937 = vdwg.mxu0
        %1938 = vst.msk [vmem:[#allocation3 + $0x44] sm:$0xf] %vm679, %v1933
        %s1939 = scalar_lea.vmem %s5, 576
        %v1940 = vld [vmem:[%s1939] sm:$0xf]
        %v1941 = vld [vmem:[%s1939 + $0x4] sm:$0xf]
        %v1942 = vld [vmem:[%s1939 + $0x8] sm:$0xf]
        %v1943 = vld [vmem:[%s1939 + $0xc] sm:$0xf]
        %v1944 = vld [vmem:[%s1939 + $0x10] sm:$0xf]
        %v1945 = vld [vmem:[%s1939 + $0x14] sm:$0xf]
        %v1946 = vld [vmem:[%s1939 + $0x18] sm:$0xf]
        %v1947 = vld [vmem:[%s1939 + $0x1c] sm:$0xf]
        %v1956 = vunpack.c.l.b16 %v1940
        %v1957 = vunpack.c.l.b16 %v1941
        %v1958 = vunpack.c.l.b16 %v1942
        %v1959 = vunpack.c.l.b16 %v1943
        %v1960 = vunpack.c.l.b16 %v1944
        %v1961 = vunpack.c.l.b16 %v1945
        %v1962 = vunpack.c.l.b16 %v1946
        %v1963 = vunpack.c.l.b16 %v1947
        %v1964 = vpack.c.b16 %v1957, %v1956
        %v1965 = vpack.c.b16 %v1959, %v1958
        %v1966 = vpack.c.b16 %v1961, %v1960
        %v1967 = vpack.c.b16 %v1963, %v1962
        %1972 = vmatprep.subr.bf16.mxu0 0
        %1973 = vmatpush1.bf16.msra.mxu0 %v1964
        %1974 = vmatprep.subr.bf16.mxu0 0
        %1975 = vmatpush1.bf16.msra.mxu0 %v1965
        %1976 = vmatprep.subr.bf16.mxu0 0
        %1977 = vmatpush1.bf16.msra.mxu0 %v1966
        %1978 = vmatprep.subr.bf16.mxu0 0
        %1979 = vmatpush1.bf16.msra.mxu0 %v1967
        %1980 = vmatprep.subr.bf16.mxu0 0
        %1981 = vmatpush1.bf16.msra.mxu0 0
        %1982 = vmatprep.subr.bf16.mxu0 0
        %1983 = vmatpush1.bf16.msra.mxu0 0
        %1984 = vmatprep.subr.bf16.mxu0 0
        %1985 = vmatpush1.bf16.msra.mxu0 0
        %1986 = vmatprep.subr.bf16.mxu0 0
        %1987 = vmatpush1.bf16.msra.mxu0 0
        %1988 = vmatprep.subr.bf16.mxu0 0
        %1989 = vmatpush1.bf16.msra.mxu0 0
        %1990 = vmatprep.subr.bf16.mxu0 0
        %1991 = vmatpush1.bf16.msra.mxu0 0
        %1992 = vmatprep.subr.bf16.mxu0 0
        %1993 = vmatpush1.bf16.msra.mxu0 0
        %1994 = vmatprep.subr.bf16.mxu0 0
        %1995 = vmatpush1.bf16.msra.mxu0 0
        %1996 = vmatprep.subr.bf16.mxu0 0
        %1997 = vmatpush1.bf16.msra.mxu0 0
        %1998 = vmatprep.subr.bf16.mxu0 0
        %1999 = vmatpush1.bf16.msra.mxu0 0
        %2000 = vmatprep.subr.bf16.mxu0 0
        %2001 = vmatpush1.bf16.msra.mxu0 0
        %2002 = vmatprep.subr.bf16.mxu0 0
        %2003 = vmatpush1.bf16.msra.mxu0 0
        %2004 = vmatprep.mubr.bf16.mxu0 0
        %2005 = vmatmul.mubr.bf16.gmra.mrb[0].mxu0 %v637
        %v2006 = vpop.f32.mrb[0].mxu0
        %v2007 = vadd.f32 0.0, %v2006
        %v2008 = vpop.f32.mrb[0].mxu0
        %v2009 = vpop.f32.mrb[0].mxu0
        %v2010 = vpop.f32.mrb[0].mxu0
        %2011 = vdwg.mxu0
        %2012 = vst.msk [vmem:[#allocation3 + $0x48] sm:$0xf] %vm679, %v2007
        %s2013 = scalar_lea.vmem %s5, 608
        %v2014 = vld [vmem:[%s2013] sm:$0xf]
        %v2015 = vld [vmem:[%s2013 + $0x4] sm:$0xf]
        %v2016 = vld [vmem:[%s2013 + $0x8] sm:$0xf]
        %v2017 = vld [vmem:[%s2013 + $0xc] sm:$0xf]
        %v2018 = vld [vmem:[%s2013 + $0x10] sm:$0xf]
        %v2019 = vld [vmem:[%s2013 + $0x14] sm:$0xf]
        %v2020 = vld [vmem:[%s2013 + $0x18] sm:$0xf]
        %v2021 = vld [vmem:[%s2013 + $0x1c] sm:$0xf]
        %v2030 = vunpack.c.l.b16 %v2014
        %v2031 = vunpack.c.l.b16 %v2015
        %v2032 = vunpack.c.l.b16 %v2016
        %v2033 = vunpack.c.l.b16 %v2017
        %v2034 = vunpack.c.l.b16 %v2018
        %v2035 = vunpack.c.l.b16 %v2019
        %v2036 = vunpack.c.l.b16 %v2020
        %v2037 = vunpack.c.l.b16 %v2021
        %v2038 = vpack.c.b16 %v2031, %v2030
        %v2039 = vpack.c.b16 %v2033, %v2032
        %v2040 = vpack.c.b16 %v2035, %v2034
        %v2041 = vpack.c.b16 %v2037, %v2036
        %2046 = vmatprep.subr.bf16.mxu0 0
        %2047 = vmatpush1.bf16.msra.mxu0 %v2038
        %2048 = vmatprep.subr.bf16.mxu0 0
        %2049 = vmatpush1.bf16.msra.mxu0 %v2039
        %2050 = vmatprep.subr.bf16.mxu0 0
        %2051 = vmatpush1.bf16.msra.mxu0 %v2040
        %2052 = vmatprep.subr.bf16.mxu0 0
        %2053 = vmatpush1.bf16.msra.mxu0 %v2041
        %2054 = vmatprep.subr.bf16.mxu0 0
        %2055 = vmatpush1.bf16.msra.mxu0 0
        %2056 = vmatprep.subr.bf16.mxu0 0
        %2057 = vmatpush1.bf16.msra.mxu0 0
        %2058 = vmatprep.subr.bf16.mxu0 0
        %2059 = vmatpush1.bf16.msra.mxu0 0
        %2060 = vmatprep.subr.bf16.mxu0 0
        %2061 = vmatpush1.bf16.msra.mxu0 0
        %2062 = vmatprep.subr.bf16.mxu0 0
        %2063 = vmatpush1.bf16.msra.mxu0 0
        %2064 = vmatprep.subr.bf16.mxu0 0
        %2065 = vmatpush1.bf16.msra.mxu0 0
        %2066 = vmatprep.subr.bf16.mxu0 0
        %2067 = vmatpush1.bf16.msra.mxu0 0
        %2068 = vmatprep.subr.bf16.mxu0 0
        %2069 = vmatpush1.bf16.msra.mxu0 0
        %2070 = vmatprep.subr.bf16.mxu0 0
        %2071 = vmatpush1.bf16.msra.mxu0 0
        %2072 = vmatprep.subr.bf16.mxu0 0
        %2073 = vmatpush1.bf16.msra.mxu0 0
        %2074 = vmatprep.subr.bf16.mxu0 0
        %2075 = vmatpush1.bf16.msra.mxu0 0
        %2076 = vmatprep.subr.bf16.mxu0 0
        %2077 = vmatpush1.bf16.msra.mxu0 0
        %2078 = vmatprep.mubr.bf16.mxu0 0
        %2079 = vmatmul.mubr.bf16.gmra.mrb[0].mxu0 %v637
        %v2080 = vpop.f32.mrb[0].mxu0
        %v2081 = vadd.f32 0.0, %v2080
        %v2082 = vpop.f32.mrb[0].mxu0
        %v2083 = vpop.f32.mrb[0].mxu0
        %v2084 = vpop.f32.mrb[0].mxu0
        %2085 = vdwg.mxu0
        %2086 = vst.msk [vmem:[#allocation3 + $0x4c] sm:$0xf] %vm679, %v2081
        %s2087 = scalar_lea.vmem %s5, 640
        %v2088 = vld [vmem:[%s2087] sm:$0xf]
        %v2089 = vld [vmem:[%s2087 + $0x4] sm:$0xf]
        %v2090 = vld [vmem:[%s2087 + $0x8] sm:$0xf]
        %v2091 = vld [vmem:[%s2087 + $0xc] sm:$0xf]
        %v2092 = vld [vmem:[%s2087 + $0x10] sm:$0xf]
        %v2093 = vld [vmem:[%s2087 + $0x14] sm:$0xf]
        %v2094 = vld [vmem:[%s2087 + $0x18] sm:$0xf]
        %v2095 = vld [vmem:[%s2087 + $0x1c] sm:$0xf]
        %v2104 = vunpack.c.l.b16 %v2088
        %v2105 = vunpack.c.l.b16 %v2089
        %v2106 = vunpack.c.l.b16 %v2090
        %v2107 = vunpack.c.l.b16 %v2091
        %v2108 = vunpack.c.l.b16 %v2092
        %v2109 = vunpack.c.l.b16 %v2093
        %v2110 = vunpack.c.l.b16 %v2094
        %v2111 = vunpack.c.l.b16 %v2095
        %v2112 = vpack.c.b16 %v2105, %v2104
        %v2113 = vpack.c.b16 %v2107, %v2106
        %v2114 = vpack.c.b16 %v2109, %v2108
        %v2115 = vpack.c.b16 %v2111, %v2110
        %2120 = vmatprep.subr.bf16.mxu0 0
        %2121 = vmatpush1.bf16.msra.mxu0 %v2112
        %2122 = vmatprep.subr.bf16.mxu0 0
        %2123 = vmatpush1.bf16.msra.mxu0 %v2113
        %2124 = vmatprep.subr.bf16.mxu0 0
        %2125 = vmatpush1.bf16.msra.mxu0 %v2114
        %2126 = vmatprep.subr.bf16.mxu0 0
        %2127 = vmatpush1.bf16.msra.mxu0 %v2115
        %2128 = vmatprep.subr.bf16.mxu0 0
        %2129 = vmatpush1.bf16.msra.mxu0 0
        %2130 = vmatprep.subr.bf16.mxu0 0
        %2131 = vmatpush1.bf16.msra.mxu0 0
        %2132 = vmatprep.subr.bf16.mxu0 0
        %2133 = vmatpush1.bf16.msra.mxu0 0
        %2134 = vmatprep.subr.bf16.mxu0 0
        %2135 = vmatpush1.bf16.msra.mxu0 0
        %2136 = vmatprep.subr.bf16.mxu0 0
        %2137 = vmatpush1.bf16.msra.mxu0 0
        %2138 = vmatprep.subr.bf16.mxu0 0
        %2139 = vmatpush1.bf16.msra.mxu0 0
        %2140 = vmatprep.subr.bf16.mxu0 0
        %2141 = vmatpush1.bf16.msra.mxu0 0
        %2142 = vmatprep.subr.bf16.mxu0 0
        %2143 = vmatpush1.bf16.msra.mxu0 0
        %2144 = vmatprep.subr.bf16.mxu0 0
        %2145 = vmatpush1.bf16.msra.mxu0 0
        %2146 = vmatprep.subr.bf16.mxu0 0
        %2147 = vmatpush1.bf16.msra.mxu0 0
        %2148 = vmatprep.subr.bf16.mxu0 0
        %2149 = vmatpush1.bf16.msra.mxu0 0
        %2150 = vmatprep.subr.bf16.mxu0 0
        %2151 = vmatpush1.bf16.msra.mxu0 0
        %2152 = vmatprep.mubr.bf16.mxu0 0
        %2153 = vmatmul.mubr.bf16.gmra.mrb[0].mxu0 %v637
        %v2154 = vpop.f32.mrb[0].mxu0
        %v2155 = vadd.f32 0.0, %v2154
        %v2156 = vpop.f32.mrb[0].mxu0
        %v2157 = vpop.f32.mrb[0].mxu0
        %v2158 = vpop.f32.mrb[0].mxu0
        %2159 = vdwg.mxu0
        %2160 = vst.msk [vmem:[#allocation3 + $0x50] sm:$0xf] %vm679, %v2155
        %s2161 = scalar_lea.vmem %s5, 672
        %v2162 = vld [vmem:[%s2161] sm:$0xf]
        %v2163 = vld [vmem:[%s2161 + $0x4] sm:$0xf]
        %v2164 = vld [vmem:[%s2161 + $0x8] sm:$0xf]
        %v2165 = vld [vmem:[%s2161 + $0xc] sm:$0xf]
        %v2166 = vld [vmem:[%s2161 + $0x10] sm:$0xf]
        %v2167 = vld [vmem:[%s2161 + $0x14] sm:$0xf]
        %v2168 = vld [vmem:[%s2161 + $0x18] sm:$0xf]
        %v2169 = vld [vmem:[%s2161 + $0x1c] sm:$0xf]
        %v2178 = vunpack.c.l.b16 %v2162
        %v2179 = vunpack.c.l.b16 %v2163
        %v2180 = vunpack.c.l.b16 %v2164
        %v2181 = vunpack.c.l.b16 %v2165
        %v2182 = vunpack.c.l.b16 %v2166
        %v2183 = vunpack.c.l.b16 %v2167
        %v2184 = vunpack.c.l.b16 %v2168
        %v2185 = vunpack.c.l.b16 %v2169
        %v2186 = vpack.c.b16 %v2179, %v2178
        %v2187 = vpack.c.b16 %v2181, %v2180
        %v2188 = vpack.c.b16 %v2183, %v2182
        %v2189 = vpack.c.b16 %v2185, %v2184
        %2194 = vmatprep.subr.bf16.mxu0 0
        %2195 = vmatpush1.bf16.msra.mxu0 %v2186
        %2196 = vmatprep.subr.bf16.mxu0 0
        %2197 = vmatpush1.bf16.msra.mxu0 %v2187
        %2198 = vmatprep.subr.bf16.mxu0 0
        %2199 = vmatpush1.bf16.msra.mxu0 %v2188
        %2200 = vmatprep.subr.bf16.mxu0 0
        %2201 = vmatpush1.bf16.msra.mxu0 %v2189
        %2202 = vmatprep.subr.bf16.mxu0 0
        %2203 = vmatpush1.bf16.msra.mxu0 0
        %2204 = vmatprep.subr.bf16.mxu0 0
        %2205 = vmatpush1.bf16.msra.mxu0 0
        %2206 = vmatprep.subr.bf16.mxu0 0
        %2207 = vmatpush1.bf16.msra.mxu0 0
        %2208 = vmatprep.subr.bf16.mxu0 0
        %2209 = vmatpush1.bf16.msra.mxu0 0
        %2210 = vmatprep.subr.bf16.mxu0 0
        %2211 = vmatpush1.bf16.msra.mxu0 0
        %2212 = vmatprep.subr.bf16.mxu0 0
        %2213 = vmatpush1.bf16.msra.mxu0 0
        %2214 = vmatprep.subr.bf16.mxu0 0
        %2215 = vmatpush1.bf16.msra.mxu0 0
        %2216 = vmatprep.subr.bf16.mxu0 0
        %2217 = vmatpush1.bf16.msra.mxu0 0
        %2218 = vmatprep.subr.bf16.mxu0 0
        %2219 = vmatpush1.bf16.msra.mxu0 0
        %2220 = vmatprep.subr.bf16.mxu0 0
        %2221 = vmatpush1.bf16.msra.mxu0 0
        %2222 = vmatprep.subr.bf16.mxu0 0
        %2223 = vmatpush1.bf16.msra.mxu0 0
        %2224 = vmatprep.subr.bf16.mxu0 0
        %2225 = vmatpush1.bf16.msra.mxu0 0
        %2226 = vmatprep.mubr.bf16.mxu0 0
        %2227 = vmatmul.mubr.bf16.gmra.mrb[0].mxu0 %v637
        %v2228 = vpop.f32.mrb[0].mxu0
        %v2229 = vadd.f32 0.0, %v2228
        %v2230 = vpop.f32.mrb[0].mxu0
        %v2231 = vpop.f32.mrb[0].mxu0
        %v2232 = vpop.f32.mrb[0].mxu0
        %2233 = vdwg.mxu0
        %2234 = vst.msk [vmem:[#allocation3 + $0x54] sm:$0xf] %vm679, %v2229
        %s2235 = scalar_lea.vmem %s5, 704
        %v2236 = vld [vmem:[%s2235] sm:$0xf]
        %v2237 = vld [vmem:[%s2235 + $0x4] sm:$0xf]
        %v2238 = vld [vmem:[%s2235 + $0x8] sm:$0xf]
        %v2239 = vld [vmem:[%s2235 + $0xc] sm:$0xf]
        %v2240 = vld [vmem:[%s2235 + $0x10] sm:$0xf]
        %v2241 = vld [vmem:[%s2235 + $0x14] sm:$0xf]
        %v2242 = vld [vmem:[%s2235 + $0x18] sm:$0xf]
        %v2243 = vld [vmem:[%s2235 + $0x1c] sm:$0xf]
        %v2252 = vunpack.c.l.b16 %v2236
        %v2253 = vunpack.c.l.b16 %v2237
        %v2254 = vunpack.c.l.b16 %v2238
        %v2255 = vunpack.c.l.b16 %v2239
        %v2256 = vunpack.c.l.b16 %v2240
        %v2257 = vunpack.c.l.b16 %v2241
        %v2258 = vunpack.c.l.b16 %v2242
        %v2259 = vunpack.c.l.b16 %v2243
        %v2260 = vpack.c.b16 %v2253, %v2252
        %v2261 = vpack.c.b16 %v2255, %v2254
        %v2262 = vpack.c.b16 %v2257, %v2256
        %v2263 = vpack.c.b16 %v2259, %v2258
        %2268 = vmatprep.subr.bf16.mxu0 0
        %2269 = vmatpush1.bf16.msra.mxu0 %v2260
        %2270 = vmatprep.subr.bf16.mxu0 0
        %2271 = vmatpush1.bf16.msra.mxu0 %v2261
        %2272 = vmatprep.subr.bf16.mxu0 0
        %2273 = vmatpush1.bf16.msra.mxu0 %v2262
        %2274 = vmatprep.subr.bf16.mxu0 0
        %2275 = vmatpush1.bf16.msra.mxu0 %v2263
        %2276 = vmatprep.subr.bf16.mxu0 0
        %2277 = vmatpush1.bf16.msra.mxu0 0
        %2278 = vmatprep.subr.bf16.mxu0 0
        %2279 = vmatpush1.bf16.msra.mxu0 0
        %2280 = vmatprep.subr.bf16.mxu0 0
        %2281 = vmatpush1.bf16.msra.mxu0 0
        %2282 = vmatprep.subr.bf16.mxu0 0
        %2283 = vmatpush1.bf16.msra.mxu0 0
        %2284 = vmatprep.subr.bf16.mxu0 0
        %2285 = vmatpush1.bf16.msra.mxu0 0
        %2286 = vmatprep.subr.bf16.mxu0 0
        %2287 = vmatpush1.bf16.msra.mxu0 0
        %2288 = vmatprep.subr.bf16.mxu0 0
        %2289 = vmatpush1.bf16.msra.mxu0 0
        %2290 = vmatprep.subr.bf16.mxu0 0
        %2291 = vmatpush1.bf16.msra.mxu0 0
        %2292 = vmatprep.subr.bf16.mxu0 0
        %2293 = vmatpush1.bf16.msra.mxu0 0
        %2294 = vmatprep.subr.bf16.mxu0 0
        %2295 = vmatpush1.bf16.msra.mxu0 0
        %2296 = vmatprep.subr.bf16.mxu0 0
        %2297 = vmatpush1.bf16.msra.mxu0 0
        %2298 = vmatprep.subr.bf16.mxu0 0
        %2299 = vmatpush1.bf16.msra.mxu0 0
        %2300 = vmatprep.mubr.bf16.mxu0 0
        %2301 = vmatmul.mubr.bf16.gmra.mrb[0].mxu0 %v637
        %v2302 = vpop.f32.mrb[0].mxu0
        %v2303 = vadd.f32 0.0, %v2302
        %v2304 = vpop.f32.mrb[0].mxu0
        %v2305 = vpop.f32.mrb[0].mxu0
        %v2306 = vpop.f32.mrb[0].mxu0
        %2307 = vdwg.mxu0
        %2308 = vst.msk [vmem:[#allocation3 + $0x58] sm:$0xf] %vm679, %v2303
        %s2309 = scalar_lea.vmem %s5, 736
        %v2310 = vld [vmem:[%s2309] sm:$0xf]
        %v2311 = vld [vmem:[%s2309 + $0x4] sm:$0xf]
        %v2312 = vld [vmem:[%s2309 + $0x8] sm:$0xf]
        %v2313 = vld [vmem:[%s2309 + $0xc] sm:$0xf]
        %v2314 = vld [vmem:[%s2309 + $0x10] sm:$0xf]
        %v2315 = vld [vmem:[%s2309 + $0x14] sm:$0xf]
        %v2316 = vld [vmem:[%s2309 + $0x18] sm:$0xf]
        %v2317 = vld [vmem:[%s2309 + $0x1c] sm:$0xf]
        %v2326 = vunpack.c.l.b16 %v2310
        %v2327 = vunpack.c.l.b16 %v2311
        %v2328 = vunpack.c.l.b16 %v2312
        %v2329 = vunpack.c.l.b16 %v2313
        %v2330 = vunpack.c.l.b16 %v2314
        %v2331 = vunpack.c.l.b16 %v2315
        %v2332 = vunpack.c.l.b16 %v2316
        %v2333 = vunpack.c.l.b16 %v2317
        %v2334 = vpack.c.b16 %v2327, %v2326
        %v2335 = vpack.c.b16 %v2329, %v2328
        %v2336 = vpack.c.b16 %v2331, %v2330
        %v2337 = vpack.c.b16 %v2333, %v2332
        %2342 = vmatprep.subr.bf16.mxu0 0
        %2343 = vmatpush1.bf16.msra.mxu0 %v2334
        %2344 = vmatprep.subr.bf16.mxu0 0
        %2345 = vmatpush1.bf16.msra.mxu0 %v2335
        %2346 = vmatprep.subr.bf16.mxu0 0
        %2347 = vmatpush1.bf16.msra.mxu0 %v2336
        %2348 = vmatprep.subr.bf16.mxu0 0
        %2349 = vmatpush1.bf16.msra.mxu0 %v2337
        %2350 = vmatprep.subr.bf16.mxu0 0
        %2351 = vmatpush1.bf16.msra.mxu0 0
        %2352 = vmatprep.subr.bf16.mxu0 0
        %2353 = vmatpush1.bf16.msra.mxu0 0
        %2354 = vmatprep.subr.bf16.mxu0 0
        %2355 = vmatpush1.bf16.msra.mxu0 0
        %2356 = vmatprep.subr.bf16.mxu0 0
        %2357 = vmatpush1.bf16.msra.mxu0 0
        %2358 = vmatprep.subr.bf16.mxu0 0
        %2359 = vmatpush1.bf16.msra.mxu0 0
        %2360 = vmatprep.subr.bf16.mxu0 0
        %2361 = vmatpush1.bf16.msra.mxu0 0
        %2362 = vmatprep.subr.bf16.mxu0 0
        %2363 = vmatpush1.bf16.msra.mxu0 0
        %2364 = vmatprep.subr.bf16.mxu0 0
        %2365 = vmatpush1.bf16.msra.mxu0 0
        %2366 = vmatprep.subr.bf16.mxu0 0
        %2367 = vmatpush1.bf16.msra.mxu0 0
        %2368 = vmatprep.subr.bf16.mxu0 0
        %2369 = vmatpush1.bf16.msra.mxu0 0
        %2370 = vmatprep.subr.bf16.mxu0 0
        %2371 = vmatpush1.bf16.msra.mxu0 0
        %2372 = vmatprep.subr.bf16.mxu0 0
        %2373 = vmatpush1.bf16.msra.mxu0 0
        %2374 = vmatprep.mubr.bf16.mxu0 0
        %2375 = vmatmul.mubr.bf16.gmra.mrb[0].mxu0 %v637
        %v2376 = vpop.f32.mrb[0].mxu0
        %v2377 = vadd.f32 0.0, %v2376
        %v2378 = vpop.f32.mrb[0].mxu0
        %v2379 = vpop.f32.mrb[0].mxu0
        %v2380 = vpop.f32.mrb[0].mxu0
        %2381 = vdwg.mxu0
        %2382 = vst.msk [vmem:[#allocation3 + $0x5c] sm:$0xf] %vm679, %v2377
        %s2383 = scalar_lea.vmem %s5, 768
        %v2384 = vld [vmem:[%s2383] sm:$0xf]
        %v2385 = vld [vmem:[%s2383 + $0x4] sm:$0xf]
        %v2386 = vld [vmem:[%s2383 + $0x8] sm:$0xf]
        %v2387 = vld [vmem:[%s2383 + $0xc] sm:$0xf]
        %v2388 = vld [vmem:[%s2383 + $0x10] sm:$0xf]
        %v2389 = vld [vmem:[%s2383 + $0x14] sm:$0xf]
        %v2390 = vld [vmem:[%s2383 + $0x18] sm:$0xf]
        %v2391 = vld [vmem:[%s2383 + $0x1c] sm:$0xf]
        %v2400 = vunpack.c.l.b16 %v2384
        %v2401 = vunpack.c.l.b16 %v2385
        %v2402 = vunpack.c.l.b16 %v2386
        %v2403 = vunpack.c.l.b16 %v2387
        %v2404 = vunpack.c.l.b16 %v2388
        %v2405 = vunpack.c.l.b16 %v2389
        %v2406 = vunpack.c.l.b16 %v2390
        %v2407 = vunpack.c.l.b16 %v2391
        %v2408 = vpack.c.b16 %v2401, %v2400
        %v2409 = vpack.c.b16 %v2403, %v2402
        %v2410 = vpack.c.b16 %v2405, %v2404
        %v2411 = vpack.c.b16 %v2407, %v2406
        %2416 = vmatprep.subr.bf16.mxu0 0
        %2417 = vmatpush1.bf16.msra.mxu0 %v2408
        %2418 = vmatprep.subr.bf16.mxu0 0
        %2419 = vmatpush1.bf16.msra.mxu0 %v2409
        %2420 = vmatprep.subr.bf16.mxu0 0
        %2421 = vmatpush1.bf16.msra.mxu0 %v2410
        %2422 = vmatprep.subr.bf16.mxu0 0
        %2423 = vmatpush1.bf16.msra.mxu0 %v2411
        %2424 = vmatprep.subr.bf16.mxu0 0
        %2425 = vmatpush1.bf16.msra.mxu0 0
        %2426 = vmatprep.subr.bf16.mxu0 0
        %2427 = vmatpush1.bf16.msra.mxu0 0
        %2428 = vmatprep.subr.bf16.mxu0 0
        %2429 = vmatpush1.bf16.msra.mxu0 0
        %2430 = vmatprep.subr.bf16.mxu0 0
        %2431 = vmatpush1.bf16.msra.mxu0 0
        %2432 = vmatprep.subr.bf16.mxu0 0
        %2433 = vmatpush1.bf16.msra.mxu0 0
        %2434 = vmatprep.subr.bf16.mxu0 0
        %2435 = vmatpush1.bf16.msra.mxu0 0
        %2436 = vmatprep.subr.bf16.mxu0 0
        %2437 = vmatpush1.bf16.msra.mxu0 0
        %2438 = vmatprep.subr.bf16.mxu0 0
        %2439 = vmatpush1.bf16.msra.mxu0 0
        %2440 = vmatprep.subr.bf16.mxu0 0
        %2441 = vmatpush1.bf16.msra.mxu0 0
        %2442 = vmatprep.subr.bf16.mxu0 0
        %2443 = vmatpush1.bf16.msra.mxu0 0
        %2444 = vmatprep.subr.bf16.mxu0 0
        %2445 = vmatpush1.bf16.msra.mxu0 0
        %2446 = vmatprep.subr.bf16.mxu0 0
        %2447 = vmatpush1.bf16.msra.mxu0 0
        %2448 = vmatprep.mubr.bf16.mxu0 0
        %2449 = vmatmul.mubr.bf16.gmra.mrb[0].mxu0 %v637
        %v2450 = vpop.f32.mrb[0].mxu0
        %v2451 = vadd.f32 0.0, %v2450
        %v2452 = vpop.f32.mrb[0].mxu0
        %v2453 = vpop.f32.mrb[0].mxu0
        %v2454 = vpop.f32.mrb[0].mxu0
        %2455 = vdwg.mxu0
        %2456 = vst.msk [vmem:[#allocation3 + $0x60] sm:$0xf] %vm679, %v2451
        %s2457 = scalar_lea.vmem %s5, 800
        %v2458 = vld [vmem:[%s2457] sm:$0xf]
        %v2459 = vld [vmem:[%s2457 + $0x4] sm:$0xf]
        %v2460 = vld [vmem:[%s2457 + $0x8] sm:$0xf]
        %v2461 = vld [vmem:[%s2457 + $0xc] sm:$0xf]
        %v2462 = vld [vmem:[%s2457 + $0x10] sm:$0xf]
        %v2463 = vld [vmem:[%s2457 + $0x14] sm:$0xf]
        %v2464 = vld [vmem:[%s2457 + $0x18] sm:$0xf]
        %v2465 = vld [vmem:[%s2457 + $0x1c] sm:$0xf]
        %v2474 = vunpack.c.l.b16 %v2458
        %v2475 = vunpack.c.l.b16 %v2459
        %v2476 = vunpack.c.l.b16 %v2460
        %v2477 = vunpack.c.l.b16 %v2461
        %v2478 = vunpack.c.l.b16 %v2462
        %v2479 = vunpack.c.l.b16 %v2463
        %v2480 = vunpack.c.l.b16 %v2464
        %v2481 = vunpack.c.l.b16 %v2465
        %v2482 = vpack.c.b16 %v2475, %v2474
        %v2483 = vpack.c.b16 %v2477, %v2476
        %v2484 = vpack.c.b16 %v2479, %v2478
        %v2485 = vpack.c.b16 %v2481, %v2480
        %2490 = vmatprep.subr.bf16.mxu0 0
        %2491 = vmatpush1.bf16.msra.mxu0 %v2482
        %2492 = vmatprep.subr.bf16.mxu0 0
        %2493 = vmatpush1.bf16.msra.mxu0 %v2483
        %2494 = vmatprep.subr.bf16.mxu0 0
        %2495 = vmatpush1.bf16.msra.mxu0 %v2484
        %2496 = vmatprep.subr.bf16.mxu0 0
        %2497 = vmatpush1.bf16.msra.mxu0 %v2485
        %2498 = vmatprep.subr.bf16.mxu0 0
        %2499 = vmatpush1.bf16.msra.mxu0 0
        %2500 = vmatprep.subr.bf16.mxu0 0
        %2501 = vmatpush1.bf16.msra.mxu0 0
        %2502 = vmatprep.subr.bf16.mxu0 0
        %2503 = vmatpush1.bf16.msra.mxu0 0
        %2504 = vmatprep.subr.bf16.mxu0 0
        %2505 = vmatpush1.bf16.msra.mxu0 0
        %2506 = vmatprep.subr.bf16.mxu0 0
        %2507 = vmatpush1.bf16.msra.mxu0 0
        %2508 = vmatprep.subr.bf16.mxu0 0
        %2509 = vmatpush1.bf16.msra.mxu0 0
        %2510 = vmatprep.subr.bf16.mxu0 0
        %2511 = vmatpush1.bf16.msra.mxu0 0
        %2512 = vmatprep.subr.bf16.mxu0 0
        %2513 = vmatpush1.bf16.msra.mxu0 0
        %2514 = vmatprep.subr.bf16.mxu0 0
        %2515 = vmatpush1.bf16.msra.mxu0 0
        %2516 = vmatprep.subr.bf16.mxu0 0
        %2517 = vmatpush1.bf16.msra.mxu0 0
        %2518 = vmatprep.subr.bf16.mxu0 0
        %2519 = vmatpush1.bf16.msra.mxu0 0
        %2520 = vmatprep.subr.bf16.mxu0 0
        %2521 = vmatpush1.bf16.msra.mxu0 0
        %2522 = vmatprep.mubr.bf16.mxu0 0
        %2523 = vmatmul.mubr.bf16.gmra.mrb[0].mxu0 %v637
        %v2524 = vpop.f32.mrb[0].mxu0
        %v2525 = vadd.f32 0.0, %v2524
        %v2526 = vpop.f32.mrb[0].mxu0
        %v2527 = vpop.f32.mrb[0].mxu0
        %v2528 = vpop.f32.mrb[0].mxu0
        %2529 = vdwg.mxu0
        %2530 = vst.msk [vmem:[#allocation3 + $0x64] sm:$0xf] %vm679, %v2525
        %s2531 = scalar_lea.vmem %s5, 832
        %v2532 = vld [vmem:[%s2531] sm:$0xf]
        %v2533 = vld [vmem:[%s2531 + $0x4] sm:$0xf]
        %v2534 = vld [vmem:[%s2531 + $0x8] sm:$0xf]
        %v2535 = vld [vmem:[%s2531 + $0xc] sm:$0xf]
        %v2536 = vld [vmem:[%s2531 + $0x10] sm:$0xf]
        %v2537 = vld [vmem:[%s2531 + $0x14] sm:$0xf]
        %v2538 = vld [vmem:[%s2531 + $0x18] sm:$0xf]
        %v2539 = vld [vmem:[%s2531 + $0x1c] sm:$0xf]
        %v2548 = vunpack.c.l.b16 %v2532
        %v2549 = vunpack.c.l.b16 %v2533
        %v2550 = vunpack.c.l.b16 %v2534
        %v2551 = vunpack.c.l.b16 %v2535
        %v2552 = vunpack.c.l.b16 %v2536
        %v2553 = vunpack.c.l.b16 %v2537
        %v2554 = vunpack.c.l.b16 %v2538
        %v2555 = vunpack.c.l.b16 %v2539
        %v2556 = vpack.c.b16 %v2549, %v2548
        %v2557 = vpack.c.b16 %v2551, %v2550
        %v2558 = vpack.c.b16 %v2553, %v2552
        %v2559 = vpack.c.b16 %v2555, %v2554
        %2564 = vmatprep.subr.bf16.mxu0 0
        %2565 = vmatpush1.bf16.msra.mxu0 %v2556
        %2566 = vmatprep.subr.bf16.mxu0 0
        %2567 = vmatpush1.bf16.msra.mxu0 %v2557
        %2568 = vmatprep.subr.bf16.mxu0 0
        %2569 = vmatpush1.bf16.msra.mxu0 %v2558
        %2570 = vmatprep.subr.bf16.mxu0 0
        %2571 = vmatpush1.bf16.msra.mxu0 %v2559
        %2572 = vmatprep.subr.bf16.mxu0 0
        %2573 = vmatpush1.bf16.msra.mxu0 0
        %2574 = vmatprep.subr.bf16.mxu0 0
        %2575 = vmatpush1.bf16.msra.mxu0 0
        %2576 = vmatprep.subr.bf16.mxu0 0
        %2577 = vmatpush1.bf16.msra.mxu0 0
        %2578 = vmatprep.subr.bf16.mxu0 0
        %2579 = vmatpush1.bf16.msra.mxu0 0
        %2580 = vmatprep.subr.bf16.mxu0 0
        %2581 = vmatpush1.bf16.msra.mxu0 0
        %2582 = vmatprep.subr.bf16.mxu0 0
        %2583 = vmatpush1.bf16.msra.mxu0 0
        %2584 = vmatprep.subr.bf16.mxu0 0
        %2585 = vmatpush1.bf16.msra.mxu0 0
        %2586 = vmatprep.subr.bf16.mxu0 0
        %2587 = vmatpush1.bf16.msra.mxu0 0
        %2588 = vmatprep.subr.bf16.mxu0 0
        %2589 = vmatpush1.bf16.msra.mxu0 0
        %2590 = vmatprep.subr.bf16.mxu0 0
        %2591 = vmatpush1.bf16.msra.mxu0 0
        %2592 = vmatprep.subr.bf16.mxu0 0
        %2593 = vmatpush1.bf16.msra.mxu0 0
        %2594 = vmatprep.subr.bf16.mxu0 0
        %2595 = vmatpush1.bf16.msra.mxu0 0
        %2596 = vmatprep.mubr.bf16.mxu0 0
        %2597 = vmatmul.mubr.bf16.gmra.mrb[0].mxu0 %v637
        %v2598 = vpop.f32.mrb[0].mxu0
        %v2599 = vadd.f32 0.0, %v2598
        %v2600 = vpop.f32.mrb[0].mxu0
        %v2601 = vpop.f32.mrb[0].mxu0
        %v2602 = vpop.f32.mrb[0].mxu0
        %2603 = vdwg.mxu0
        %2604 = vst.msk [vmem:[#allocation3 + $0x68] sm:$0xf] %vm679, %v2599
        %s2605 = scalar_lea.vmem %s5, 864
        %v2606 = vld [vmem:[%s2605] sm:$0xf]
        %v2607 = vld [vmem:[%s2605 + $0x4] sm:$0xf]
        %v2608 = vld [vmem:[%s2605 + $0x8] sm:$0xf]
        %v2609 = vld [vmem:[%s2605 + $0xc] sm:$0xf]
        %v2610 = vld [vmem:[%s2605 + $0x10] sm:$0xf]
        %v2611 = vld [vmem:[%s2605 + $0x14] sm:$0xf]
        %v2612 = vld [vmem:[%s2605 + $0x18] sm:$0xf]
        %v2613 = vld [vmem:[%s2605 + $0x1c] sm:$0xf]
        %v2622 = vunpack.c.l.b16 %v2606
        %v2623 = vunpack.c.l.b16 %v2607
        %v2624 = vunpack.c.l.b16 %v2608
        %v2625 = vunpack.c.l.b16 %v2609
        %v2626 = vunpack.c.l.b16 %v2610
        %v2627 = vunpack.c.l.b16 %v2611
        %v2628 = vunpack.c.l.b16 %v2612
        %v2629 = vunpack.c.l.b16 %v2613
        %v2630 = vpack.c.b16 %v2623, %v2622
        %v2631 = vpack.c.b16 %v2625, %v2624
        %v2632 = vpack.c.b16 %v2627, %v2626
        %v2633 = vpack.c.b16 %v2629, %v2628
        %2638 = vmatprep.subr.bf16.mxu0 0
        %2639 = vmatpush1.bf16.msra.mxu0 %v2630
        %2640 = vmatprep.subr.bf16.mxu0 0
        %2641 = vmatpush1.bf16.msra.mxu0 %v2631
        %2642 = vmatprep.subr.bf16.mxu0 0
        %2643 = vmatpush1.bf16.msra.mxu0 %v2632
        %2644 = vmatprep.subr.bf16.mxu0 0
        %2645 = vmatpush1.bf16.msra.mxu0 %v2633
        %2646 = vmatprep.subr.bf16.mxu0 0
        %2647 = vmatpush1.bf16.msra.mxu0 0
        %2648 = vmatprep.subr.bf16.mxu0 0
        %2649 = vmatpush1.bf16.msra.mxu0 0
        %2650 = vmatprep.subr.bf16.mxu0 0
        %2651 = vmatpush1.bf16.msra.mxu0 0
        %2652 = vmatprep.subr.bf16.mxu0 0
        %2653 = vmatpush1.bf16.msra.mxu0 0
        %2654 = vmatprep.subr.bf16.mxu0 0
        %2655 = vmatpush1.bf16.msra.mxu0 0
        %2656 = vmatprep.subr.bf16.mxu0 0
        %2657 = vmatpush1.bf16.msra.mxu0 0
        %2658 = vmatprep.subr.bf16.mxu0 0
        %2659 = vmatpush1.bf16.msra.mxu0 0
        %2660 = vmatprep.subr.bf16.mxu0 0
        %2661 = vmatpush1.bf16.msra.mxu0 0
        %2662 = vmatprep.subr.bf16.mxu0 0
        %2663 = vmatpush1.bf16.msra.mxu0 0
        %2664 = vmatprep.subr.bf16.mxu0 0
        %2665 = vmatpush1.bf16.msra.mxu0 0
        %2666 = vmatprep.subr.bf16.mxu0 0
        %2667 = vmatpush1.bf16.msra.mxu0 0
        %2668 = vmatprep.subr.bf16.mxu0 0
        %2669 = vmatpush1.bf16.msra.mxu0 0
        %2670 = vmatprep.mubr.bf16.mxu0 0
        %2671 = vmatmul.mubr.bf16.gmra.mrb[0].mxu0 %v637
        %v2672 = vpop.f32.mrb[0].mxu0
        %v2673 = vadd.f32 0.0, %v2672
        %v2674 = vpop.f32.mrb[0].mxu0
        %v2675 = vpop.f32.mrb[0].mxu0
        %v2676 = vpop.f32.mrb[0].mxu0
        %2677 = vdwg.mxu0
        %2678 = vst.msk [vmem:[#allocation3 + $0x6c] sm:$0xf] %vm679, %v2673
        %s2679 = scalar_lea.vmem %s5, 896
        %v2680 = vld [vmem:[%s2679] sm:$0xf]
        %v2681 = vld [vmem:[%s2679 + $0x4] sm:$0xf]
        %v2682 = vld [vmem:[%s2679 + $0x8] sm:$0xf]
        %v2683 = vld [vmem:[%s2679 + $0xc] sm:$0xf]
        %v2684 = vld [vmem:[%s2679 + $0x10] sm:$0xf]
        %v2685 = vld [vmem:[%s2679 + $0x14] sm:$0xf]
        %v2686 = vld [vmem:[%s2679 + $0x18] sm:$0xf]
        %v2687 = vld [vmem:[%s2679 + $0x1c] sm:$0xf]
        %v2696 = vunpack.c.l.b16 %v2680
        %v2697 = vunpack.c.l.b16 %v2681
        %v2698 = vunpack.c.l.b16 %v2682
        %v2699 = vunpack.c.l.b16 %v2683
        %v2700 = vunpack.c.l.b16 %v2684
        %v2701 = vunpack.c.l.b16 %v2685
        %v2702 = vunpack.c.l.b16 %v2686
        %v2703 = vunpack.c.l.b16 %v2687
        %v2704 = vpack.c.b16 %v2697, %v2696
        %v2705 = vpack.c.b16 %v2699, %v2698
        %v2706 = vpack.c.b16 %v2701, %v2700
        %v2707 = vpack.c.b16 %v2703, %v2702
        %2712 = vmatprep.subr.bf16.mxu0 0
        %2713 = vmatpush1.bf16.msra.mxu0 %v2704
        %2714 = vmatprep.subr.bf16.mxu0 0
        %2715 = vmatpush1.bf16.msra.mxu0 %v2705
        %2716 = vmatprep.subr.bf16.mxu0 0
        %2717 = vmatpush1.bf16.msra.mxu0 %v2706
        %2718 = vmatprep.subr.bf16.mxu0 0
        %2719 = vmatpush1.bf16.msra.mxu0 %v2707
        %2720 = vmatprep.subr.bf16.mxu0 0
        %2721 = vmatpush1.bf16.msra.mxu0 0
        %2722 = vmatprep.subr.bf16.mxu0 0
        %2723 = vmatpush1.bf16.msra.mxu0 0
        %2724 = vmatprep.subr.bf16.mxu0 0
        %2725 = vmatpush1.bf16.msra.mxu0 0
        %2726 = vmatprep.subr.bf16.mxu0 0
        %2727 = vmatpush1.bf16.msra.mxu0 0
        %2728 = vmatprep.subr.bf16.mxu0 0
        %2729 = vmatpush1.bf16.msra.mxu0 0
        %2730 = vmatprep.subr.bf16.mxu0 0
        %2731 = vmatpush1.bf16.msra.mxu0 0
        %2732 = vmatprep.subr.bf16.mxu0 0
        %2733 = vmatpush1.bf16.msra.mxu0 0
        %2734 = vmatprep.subr.bf16.mxu0 0
        %2735 = vmatpush1.bf16.msra.mxu0 0
        %2736 = vmatprep.subr.bf16.mxu0 0
        %2737 = vmatpush1.bf16.msra.mxu0 0
        %2738 = vmatprep.subr.bf16.mxu0 0
        %2739 = vmatpush1.bf16.msra.mxu0 0
        %2740 = vmatprep.subr.bf16.mxu0 0
        %2741 = vmatpush1.bf16.msra.mxu0 0
        %2742 = vmatprep.subr.bf16.mxu0 0
        %2743 = vmatpush1.bf16.msra.mxu0 0
        %2744 = vmatprep.mubr.bf16.mxu0 0
        %2745 = vmatmul.mubr.bf16.gmra.mrb[0].mxu0 %v637
        %v2746 = vpop.f32.mrb[0].mxu0
        %v2747 = vadd.f32 0.0, %v2746
        %v2748 = vpop.f32.mrb[0].mxu0
        %v2749 = vpop.f32.mrb[0].mxu0
        %v2750 = vpop.f32.mrb[0].mxu0
        %2751 = vdwg.mxu0
        %2752 = vst.msk [vmem:[#allocation3 + $0x70] sm:$0xf] %vm679, %v2747
        %s2753 = scalar_lea.vmem %s5, 928
        %v2754 = vld [vmem:[%s2753] sm:$0xf]
        %v2755 = vld [vmem:[%s2753 + $0x4] sm:$0xf]
        %v2756 = vld [vmem:[%s2753 + $0x8] sm:$0xf]
        %v2757 = vld [vmem:[%s2753 + $0xc] sm:$0xf]
        %v2758 = vld [vmem:[%s2753 + $0x10] sm:$0xf]
        %v2759 = vld [vmem:[%s2753 + $0x14] sm:$0xf]
        %v2760 = vld [vmem:[%s2753 + $0x18] sm:$0xf]
        %v2761 = vld [vmem:[%s2753 + $0x1c] sm:$0xf]
        %v2770 = vunpack.c.l.b16 %v2754
        %v2771 = vunpack.c.l.b16 %v2755
        %v2772 = vunpack.c.l.b16 %v2756
        %v2773 = vunpack.c.l.b16 %v2757
        %v2774 = vunpack.c.l.b16 %v2758
        %v2775 = vunpack.c.l.b16 %v2759
        %v2776 = vunpack.c.l.b16 %v2760
        %v2777 = vunpack.c.l.b16 %v2761
        %v2778 = vpack.c.b16 %v2771, %v2770
        %v2779 = vpack.c.b16 %v2773, %v2772
        %v2780 = vpack.c.b16 %v2775, %v2774
        %v2781 = vpack.c.b16 %v2777, %v2776
        %2786 = vmatprep.subr.bf16.mxu0 0
        %2787 = vmatpush1.bf16.msra.mxu0 %v2778
        %2788 = vmatprep.subr.bf16.mxu0 0
        %2789 = vmatpush1.bf16.msra.mxu0 %v2779
        %2790 = vmatprep.subr.bf16.mxu0 0
        %2791 = vmatpush1.bf16.msra.mxu0 %v2780
        %2792 = vmatprep.subr.bf16.mxu0 0
        %2793 = vmatpush1.bf16.msra.mxu0 %v2781
        %2794 = vmatprep.subr.bf16.mxu0 0
        %2795 = vmatpush1.bf16.msra.mxu0 0
        %2796 = vmatprep.subr.bf16.mxu0 0
        %2797 = vmatpush1.bf16.msra.mxu0 0
        %2798 = vmatprep.subr.bf16.mxu0 0
        %2799 = vmatpush1.bf16.msra.mxu0 0
        %2800 = vmatprep.subr.bf16.mxu0 0
        %2801 = vmatpush1.bf16.msra.mxu0 0
        %2802 = vmatprep.subr.bf16.mxu0 0
        %2803 = vmatpush1.bf16.msra.mxu0 0
        %2804 = vmatprep.subr.bf16.mxu0 0
        %2805 = vmatpush1.bf16.msra.mxu0 0
        %2806 = vmatprep.subr.bf16.mxu0 0
        %2807 = vmatpush1.bf16.msra.mxu0 0
        %2808 = vmatprep.subr.bf16.mxu0 0
        %2809 = vmatpush1.bf16.msra.mxu0 0
        %2810 = vmatprep.subr.bf16.mxu0 0
        %2811 = vmatpush1.bf16.msra.mxu0 0
        %2812 = vmatprep.subr.bf16.mxu0 0
        %2813 = vmatpush1.bf16.msra.mxu0 0
        %2814 = vmatprep.subr.bf16.mxu0 0
        %2815 = vmatpush1.bf16.msra.mxu0 0
        %2816 = vmatprep.subr.bf16.mxu0 0
        %2817 = vmatpush1.bf16.msra.mxu0 0
        %2818 = vmatprep.mubr.bf16.mxu0 0
        %2819 = vmatmul.mubr.bf16.gmra.mrb[0].mxu0 %v637
        %v2820 = vpop.f32.mrb[0].mxu0
        %v2821 = vadd.f32 0.0, %v2820
        %v2822 = vpop.f32.mrb[0].mxu0
        %v2823 = vpop.f32.mrb[0].mxu0
        %v2824 = vpop.f32.mrb[0].mxu0
        %2825 = vdwg.mxu0
        %2826 = vst.msk [vmem:[#allocation3 + $0x74] sm:$0xf] %vm679, %v2821
        %s2827 = scalar_lea.vmem %s5, 960
        %v2828 = vld [vmem:[%s2827] sm:$0xf]
        %v2829 = vld [vmem:[%s2827 + $0x4] sm:$0xf]
        %v2830 = vld [vmem:[%s2827 + $0x8] sm:$0xf]
        %v2831 = vld [vmem:[%s2827 + $0xc] sm:$0xf]
        %v2832 = vld [vmem:[%s2827 + $0x10] sm:$0xf]
        %v2833 = vld [vmem:[%s2827 + $0x14] sm:$0xf]
        %v2834 = vld [vmem:[%s2827 + $0x18] sm:$0xf]
        %v2835 = vld [vmem:[%s2827 + $0x1c] sm:$0xf]
        %v2844 = vunpack.c.l.b16 %v2828
        %v2845 = vunpack.c.l.b16 %v2829
        %v2846 = vunpack.c.l.b16 %v2830
        %v2847 = vunpack.c.l.b16 %v2831
        %v2848 = vunpack.c.l.b16 %v2832
        %v2849 = vunpack.c.l.b16 %v2833
        %v2850 = vunpack.c.l.b16 %v2834
        %v2851 = vunpack.c.l.b16 %v2835
        %v2852 = vpack.c.b16 %v2845, %v2844
        %v2853 = vpack.c.b16 %v2847, %v2846
        %v2854 = vpack.c.b16 %v2849, %v2848
        %v2855 = vpack.c.b16 %v2851, %v2850
        %2860 = vmatprep.subr.bf16.mxu0 0
        %2861 = vmatpush1.bf16.msra.mxu0 %v2852
        %2862 = vmatprep.subr.bf16.mxu0 0
        %2863 = vmatpush1.bf16.msra.mxu0 %v2853
        %2864 = vmatprep.subr.bf16.mxu0 0
        %2865 = vmatpush1.bf16.msra.mxu0 %v2854
        %2866 = vmatprep.subr.bf16.mxu0 0
        %2867 = vmatpush1.bf16.msra.mxu0 %v2855
        %2868 = vmatprep.subr.bf16.mxu0 0
        %2869 = vmatpush1.bf16.msra.mxu0 0
        %2870 = vmatprep.subr.bf16.mxu0 0
        %2871 = vmatpush1.bf16.msra.mxu0 0
        %2872 = vmatprep.subr.bf16.mxu0 0
        %2873 = vmatpush1.bf16.msra.mxu0 0
        %2874 = vmatprep.subr.bf16.mxu0 0
        %2875 = vmatpush1.bf16.msra.mxu0 0
        %2876 = vmatprep.subr.bf16.mxu0 0
        %2877 = vmatpush1.bf16.msra.mxu0 0
        %2878 = vmatprep.subr.bf16.mxu0 0
        %2879 = vmatpush1.bf16.msra.mxu0 0
        %2880 = vmatprep.subr.bf16.mxu0 0
        %2881 = vmatpush1.bf16.msra.mxu0 0
        %2882 = vmatprep.subr.bf16.mxu0 0
        %2883 = vmatpush1.bf16.msra.mxu0 0
        %2884 = vmatprep.subr.bf16.mxu0 0
        %2885 = vmatpush1.bf16.msra.mxu0 0
        %2886 = vmatprep.subr.bf16.mxu0 0
        %2887 = vmatpush1.bf16.msra.mxu0 0
        %2888 = vmatprep.subr.bf16.mxu0 0
        %2889 = vmatpush1.bf16.msra.mxu0 0
        %2890 = vmatprep.subr.bf16.mxu0 0
        %2891 = vmatpush1.bf16.msra.mxu0 0
        %2892 = vmatprep.mubr.bf16.mxu0 0
        %2893 = vmatmul.mubr.bf16.gmra.mrb[0].mxu0 %v637
        %v2894 = vpop.f32.mrb[0].mxu0
        %v2895 = vadd.f32 0.0, %v2894
        %v2896 = vpop.f32.mrb[0].mxu0
        %v2897 = vpop.f32.mrb[0].mxu0
        %v2898 = vpop.f32.mrb[0].mxu0
        %2899 = vdwg.mxu0
        %2900 = vst.msk [vmem:[#allocation3 + $0x78] sm:$0xf] %vm679, %v2895
        %s2901 = scalar_lea.vmem %s5, 992
        %v2902 = vld [vmem:[%s2901] sm:$0xf]
        %v2903 = vld [vmem:[%s2901 + $0x4] sm:$0xf]
        %v2904 = vld [vmem:[%s2901 + $0x8] sm:$0xf]
        %v2905 = vld [vmem:[%s2901 + $0xc] sm:$0xf]
        %v2906 = vld [vmem:[%s2901 + $0x10] sm:$0xf]
        %v2907 = vld [vmem:[%s2901 + $0x14] sm:$0xf]
        %v2908 = vld [vmem:[%s2901 + $0x18] sm:$0xf]
        %v2909 = vld [vmem:[%s2901 + $0x1c] sm:$0xf]
        %v2918 = vunpack.c.l.b16 %v2902
        %v2919 = vunpack.c.l.b16 %v2903
        %v2920 = vunpack.c.l.b16 %v2904
        %v2921 = vunpack.c.l.b16 %v2905
        %v2922 = vunpack.c.l.b16 %v2906
        %v2923 = vunpack.c.l.b16 %v2907
        %v2924 = vunpack.c.l.b16 %v2908
        %v2925 = vunpack.c.l.b16 %v2909
        %v2926 = vpack.c.b16 %v2919, %v2918
        %v2927 = vpack.c.b16 %v2921, %v2920
        %v2928 = vpack.c.b16 %v2923, %v2922
        %v2929 = vpack.c.b16 %v2925, %v2924
        %2934 = vmatprep.subr.bf16.mxu0 0
        %2935 = vmatpush1.bf16.msra.mxu0 %v2926
        %2936 = vmatprep.subr.bf16.mxu0 0
        %2937 = vmatpush1.bf16.msra.mxu0 %v2927
        %2938 = vmatprep.subr.bf16.mxu0 0
        %2939 = vmatpush1.bf16.msra.mxu0 %v2928
        %2940 = vmatprep.subr.bf16.mxu0 0
        %2941 = vmatpush1.bf16.msra.mxu0 %v2929
        %2942 = vmatprep.subr.bf16.mxu0 0
        %2943 = vmatpush1.bf16.msra.mxu0 0
        %2944 = vmatprep.subr.bf16.mxu0 0
        %2945 = vmatpush1.bf16.msra.mxu0 0
        %2946 = vmatprep.subr.bf16.mxu0 0
        %2947 = vmatpush1.bf16.msra.mxu0 0
        %2948 = vmatprep.subr.bf16.mxu0 0
        %2949 = vmatpush1.bf16.msra.mxu0 0
        %2950 = vmatprep.subr.bf16.mxu0 0
        %2951 = vmatpush1.bf16.msra.mxu0 0
        %2952 = vmatprep.subr.bf16.mxu0 0
        %2953 = vmatpush1.bf16.msra.mxu0 0
        %2954 = vmatprep.subr.bf16.mxu0 0
        %2955 = vmatpush1.bf16.msra.mxu0 0
        %2956 = vmatprep.subr.bf16.mxu0 0
        %2957 = vmatpush1.bf16.msra.mxu0 0
        %2958 = vmatprep.subr.bf16.mxu0 0
        %2959 = vmatpush1.bf16.msra.mxu0 0
        %2960 = vmatprep.subr.bf16.mxu0 0
        %2961 = vmatpush1.bf16.msra.mxu0 0
        %2962 = vmatprep.subr.bf16.mxu0 0
        %2963 = vmatpush1.bf16.msra.mxu0 0
        %2964 = vmatprep.subr.bf16.mxu0 0
        %2965 = vmatpush1.bf16.msra.mxu0 0
        %2966 = vmatprep.mubr.bf16.mxu0 0
        %2967 = vmatmul.mubr.bf16.gmra.mrb[0].mxu0 %v637
        %v2968 = vpop.f32.mrb[0].mxu0
        %v2969 = vadd.f32 0.0, %v2968
        %v2970 = vpop.f32.mrb[0].mxu0
        %v2971 = vpop.f32.mrb[0].mxu0
        %v2972 = vpop.f32.mrb[0].mxu0
        %2973 = vdwg.mxu0
        %2974 = vst.msk [vmem:[#allocation3 + $0x7c] sm:$0xf] %vm679, %v2969
        %s2975 = scalar_lea.vmem %s5, 1024
        %v2976 = vld [vmem:[%s2975] sm:$0xf]
        %v2977 = vld [vmem:[%s2975 + $0x4] sm:$0xf]
        %v2978 = vld [vmem:[%s2975 + $0x8] sm:$0xf]
        %v2979 = vld [vmem:[%s2975 + $0xc] sm:$0xf]
        %v2980 = vld [vmem:[%s2975 + $0x10] sm:$0xf]
        %v2981 = vld [vmem:[%s2975 + $0x14] sm:$0xf]
        %v2982 = vld [vmem:[%s2975 + $0x18] sm:$0xf]
        %v2983 = vld [vmem:[%s2975 + $0x1c] sm:$0xf]
        %v2992 = vunpack.c.l.b16 %v2976
        %v2993 = vunpack.c.l.b16 %v2977
        %v2994 = vunpack.c.l.b16 %v2978
        %v2995 = vunpack.c.l.b16 %v2979
        %v2996 = vunpack.c.l.b16 %v2980
        %v2997 = vunpack.c.l.b16 %v2981
        %v2998 = vunpack.c.l.b16 %v2982
        %v2999 = vunpack.c.l.b16 %v2983
        %v3000 = vpack.c.b16 %v2993, %v2992
        %v3001 = vpack.c.b16 %v2995, %v2994
        %v3002 = vpack.c.b16 %v2997, %v2996
        %v3003 = vpack.c.b16 %v2999, %v2998
        %3008 = vmatprep.subr.bf16.mxu0 0
        %3009 = vmatpush1.bf16.msra.mxu0 %v3000
        %3010 = vmatprep.subr.bf16.mxu0 0
        %3011 = vmatpush1.bf16.msra.mxu0 %v3001
        %3012 = vmatprep.subr.bf16.mxu0 0
        %3013 = vmatpush1.bf16.msra.mxu0 %v3002
        %3014 = vmatprep.subr.bf16.mxu0 0
        %3015 = vmatpush1.bf16.msra.mxu0 %v3003
        %3016 = vmatprep.subr.bf16.mxu0 0
        %3017 = vmatpush1.bf16.msra.mxu0 0
        %3018 = vmatprep.subr.bf16.mxu0 0
        %3019 = vmatpush1.bf16.msra.mxu0 0
        %3020 = vmatprep.subr.bf16.mxu0 0
        %3021 = vmatpush1.bf16.msra.mxu0 0
        %3022 = vmatprep.subr.bf16.mxu0 0
        %3023 = vmatpush1.bf16.msra.mxu0 0
        %3024 = vmatprep.subr.bf16.mxu0 0
        %3025 = vmatpush1.bf16.msra.mxu0 0
        %3026 = vmatprep.subr.bf16.mxu0 0
        %3027 = vmatpush1.bf16.msra.mxu0 0
        %3028 = vmatprep.subr.bf16.mxu0 0
        %3029 = vmatpush1.bf16.msra.mxu0 0
        %3030 = vmatprep.subr.bf16.mxu0 0
        %3031 = vmatpush1.bf16.msra.mxu0 0
        %3032 = vmatprep.subr.bf16.mxu0 0
        %3033 = vmatpush1.bf16.msra.mxu0 0
        %3034 = vmatprep.subr.bf16.mxu0 0
        %3035 = vmatpush1.bf16.msra.mxu0 0
        %3036 = vmatprep.subr.bf16.mxu0 0
        %3037 = vmatpush1.bf16.msra.mxu0 0
        %3038 = vmatprep.subr.bf16.mxu0 0
        %3039 = vmatpush1.bf16.msra.mxu0 0
        %3040 = vmatprep.mubr.bf16.mxu0 0
        %3041 = vmatmul.mubr.bf16.gmra.mrb[0].mxu0 %v637
        %v3042 = vpop.f32.mrb[0].mxu0
        %v3043 = vadd.f32 0.0, %v3042
        %v3044 = vpop.f32.mrb[0].mxu0
        %v3045 = vpop.f32.mrb[0].mxu0
        %v3046 = vpop.f32.mrb[0].mxu0
        %3047 = vdwg.mxu0
        %3048 = vst.msk [vmem:[#allocation3 + $0x80] sm:$0xf] %vm679, %v3043
        %s3049 = scalar_lea.vmem %s5, 1056
        %v3050 = vld [vmem:[%s3049] sm:$0xf]
        %v3051 = vld [vmem:[%s3049 + $0x4] sm:$0xf]
        %v3052 = vld [vmem:[%s3049 + $0x8] sm:$0xf]
        %v3053 = vld [vmem:[%s3049 + $0xc] sm:$0xf]
        %v3054 = vld [vmem:[%s3049 + $0x10] sm:$0xf]
        %v3055 = vld [vmem:[%s3049 + $0x14] sm:$0xf]
        %v3056 = vld [vmem:[%s3049 + $0x18] sm:$0xf]
        %v3057 = vld [vmem:[%s3049 + $0x1c] sm:$0xf]
        %v3066 = vunpack.c.l.b16 %v3050
        %v3067 = vunpack.c.l.b16 %v3051
        %v3068 = vunpack.c.l.b16 %v3052
        %v3069 = vunpack.c.l.b16 %v3053
        %v3070 = vunpack.c.l.b16 %v3054
        %v3071 = vunpack.c.l.b16 %v3055
        %v3072 = vunpack.c.l.b16 %v3056
        %v3073 = vunpack.c.l.b16 %v3057
        %v3074 = vpack.c.b16 %v3067, %v3066
        %v3075 = vpack.c.b16 %v3069, %v3068
        %v3076 = vpack.c.b16 %v3071, %v3070
        %v3077 = vpack.c.b16 %v3073, %v3072
        %3082 = vmatprep.subr.bf16.mxu0 0
        %3083 = vmatpush1.bf16.msra.mxu0 %v3074
        %3084 = vmatprep.subr.bf16.mxu0 0
        %3085 = vmatpush1.bf16.msra.mxu0 %v3075
        %3086 = vmatprep.subr.bf16.mxu0 0
        %3087 = vmatpush1.bf16.msra.mxu0 %v3076
        %3088 = vmatprep.subr.bf16.mxu0 0
        %3089 = vmatpush1.bf16.msra.mxu0 %v3077
        %3090 = vmatprep.subr.bf16.mxu0 0
        %3091 = vmatpush1.bf16.msra.mxu0 0
        %3092 = vmatprep.subr.bf16.mxu0 0
        %3093 = vmatpush1.bf16.msra.mxu0 0
        %3094 = vmatprep.subr.bf16.mxu0 0
        %3095 = vmatpush1.bf16.msra.mxu0 0
        %3096 = vmatprep.subr.bf16.mxu0 0
        %3097 = vmatpush1.bf16.msra.mxu0 0
        %3098 = vmatprep.subr.bf16.mxu0 0
        %3099 = vmatpush1.bf16.msra.mxu0 0
        %3100 = vmatprep.subr.bf16.mxu0 0
        %3101 = vmatpush1.bf16.msra.mxu0 0
        %3102 = vmatprep.subr.bf16.mxu0 0
        %3103 = vmatpush1.bf16.msra.mxu0 0
        %3104 = vmatprep.subr.bf16.mxu0 0
        %3105 = vmatpush1.bf16.msra.mxu0 0
        %3106 = vmatprep.subr.bf16.mxu0 0
        %3107 = vmatpush1.bf16.msra.mxu0 0
        %3108 = vmatprep.subr.bf16.mxu0 0
        %3109 = vmatpush1.bf16.msra.mxu0 0
        %3110 = vmatprep.subr.bf16.mxu0 0
        %3111 = vmatpush1.bf16.msra.mxu0 0
        %3112 = vmatprep.subr.bf16.mxu0 0
        %3113 = vmatpush1.bf16.msra.mxu0 0
        %3114 = vmatprep.mubr.bf16.mxu0 0
        %3115 = vmatmul.mubr.bf16.gmra.mrb[0].mxu0 %v637
        %v3116 = vpop.f32.mrb[0].mxu0
        %v3117 = vadd.f32 0.0, %v3116
        %v3118 = vpop.f32.mrb[0].mxu0
        %v3119 = vpop.f32.mrb[0].mxu0
        %v3120 = vpop.f32.mrb[0].mxu0
        %3121 = vdwg.mxu0
        %3122 = vst.msk [vmem:[#allocation3 + $0x84] sm:$0xf] %vm679, %v3117
        %s3123 = scalar_lea.vmem %s5, 1088
        %v3124 = vld [vmem:[%s3123] sm:$0xf]
        %v3125 = vld [vmem:[%s3123 + $0x4] sm:$0xf]
        %v3126 = vld [vmem:[%s3123 + $0x8] sm:$0xf]
        %v3127 = vld [vmem:[%s3123 + $0xc] sm:$0xf]
        %v3128 = vld [vmem:[%s3123 + $0x10] sm:$0xf]
        %v3129 = vld [vmem:[%s3123 + $0x14] sm:$0xf]
        %v3130 = vld [vmem:[%s3123 + $0x18] sm:$0xf]
        %v3131 = vld [vmem:[%s3123 + $0x1c] sm:$0xf]
        %v3140 = vunpack.c.l.b16 %v3124
        %v3141 = vunpack.c.l.b16 %v3125
        %v3142 = vunpack.c.l.b16 %v3126
        %v3143 = vunpack.c.l.b16 %v3127
        %v3144 = vunpack.c.l.b16 %v3128
        %v3145 = vunpack.c.l.b16 %v3129
        %v3146 = vunpack.c.l.b16 %v3130
        %v3147 = vunpack.c.l.b16 %v3131
        %v3148 = vpack.c.b16 %v3141, %v3140
        %v3149 = vpack.c.b16 %v3143, %v3142
        %v3150 = vpack.c.b16 %v3145, %v3144
        %v3151 = vpack.c.b16 %v3147, %v3146
        %3156 = vmatprep.subr.bf16.mxu0 0
        %3157 = vmatpush1.bf16.msra.mxu0 %v3148
        %3158 = vmatprep.subr.bf16.mxu0 0
        %3159 = vmatpush1.bf16.msra.mxu0 %v3149
        %3160 = vmatprep.subr.bf16.mxu0 0
        %3161 = vmatpush1.bf16.msra.mxu0 %v3150
        %3162 = vmatprep.subr.bf16.mxu0 0
        %3163 = vmatpush1.bf16.msra.mxu0 %v3151
        %3164 = vmatprep.subr.bf16.mxu0 0
        %3165 = vmatpush1.bf16.msra.mxu0 0
        %3166 = vmatprep.subr.bf16.mxu0 0
        %3167 = vmatpush1.bf16.msra.mxu0 0
        %3168 = vmatprep.subr.bf16.mxu0 0
        %3169 = vmatpush1.bf16.msra.mxu0 0
        %3170 = vmatprep.subr.bf16.mxu0 0
        %3171 = vmatpush1.bf16.msra.mxu0 0
        %3172 = vmatprep.subr.bf16.mxu0 0
        %3173 = vmatpush1.bf16.msra.mxu0 0
        %3174 = vmatprep.subr.bf16.mxu0 0
        %3175 = vmatpush1.bf16.msra.mxu0 0
        %3176 = vmatprep.subr.bf16.mxu0 0
        %3177 = vmatpush1.bf16.msra.mxu0 0
        %3178 = vmatprep.subr.bf16.mxu0 0
        %3179 = vmatpush1.bf16.msra.mxu0 0
        %3180 = vmatprep.subr.bf16.mxu0 0
        %3181 = vmatpush1.bf16.msra.mxu0 0
        %3182 = vmatprep.subr.bf16.mxu0 0
        %3183 = vmatpush1.bf16.msra.mxu0 0
        %3184 = vmatprep.subr.bf16.mxu0 0
        %3185 = vmatpush1.bf16.msra.mxu0 0
        %3186 = vmatprep.subr.bf16.mxu0 0
        %3187 = vmatpush1.bf16.msra.mxu0 0
        %3188 = vmatprep.mubr.bf16.mxu0 0
        %3189 = vmatmul.mubr.bf16.gmra.mrb[0].mxu0 %v637
        %v3190 = vpop.f32.mrb[0].mxu0
        %v3191 = vadd.f32 0.0, %v3190
        %v3192 = vpop.f32.mrb[0].mxu0
        %v3193 = vpop.f32.mrb[0].mxu0
        %v3194 = vpop.f32.mrb[0].mxu0
        %3195 = vdwg.mxu0
        %3196 = vst.msk [vmem:[#allocation3 + $0x88] sm:$0xf] %vm679, %v3191
        %s3197 = scalar_lea.vmem %s5, 1120
        %v3198 = vld [vmem:[%s3197] sm:$0xf]
        %v3199 = vld [vmem:[%s3197 + $0x4] sm:$0xf]
        %v3200 = vld [vmem:[%s3197 + $0x8] sm:$0xf]
        %v3201 = vld [vmem:[%s3197 + $0xc] sm:$0xf]
        %v3202 = vld [vmem:[%s3197 + $0x10] sm:$0xf]
        %v3203 = vld [vmem:[%s3197 + $0x14] sm:$0xf]
        %v3204 = vld [vmem:[%s3197 + $0x18] sm:$0xf]
        %v3205 = vld [vmem:[%s3197 + $0x1c] sm:$0xf]
        %v3214 = vunpack.c.l.b16 %v3198
        %v3215 = vunpack.c.l.b16 %v3199
        %v3216 = vunpack.c.l.b16 %v3200
        %v3217 = vunpack.c.l.b16 %v3201
        %v3218 = vunpack.c.l.b16 %v3202
        %v3219 = vunpack.c.l.b16 %v3203
        %v3220 = vunpack.c.l.b16 %v3204
        %v3221 = vunpack.c.l.b16 %v3205
        %v3222 = vpack.c.b16 %v3215, %v3214
        %v3223 = vpack.c.b16 %v3217, %v3216
        %v3224 = vpack.c.b16 %v3219, %v3218
        %v3225 = vpack.c.b16 %v3221, %v3220
        %3230 = vmatprep.subr.bf16.mxu0 0
        %3231 = vmatpush1.bf16.msra.mxu0 %v3222
        %3232 = vmatprep.subr.bf16.mxu0 0
        %3233 = vmatpush1.bf16.msra.mxu0 %v3223
        %3234 = vmatprep.subr.bf16.mxu0 0
        %3235 = vmatpush1.bf16.msra.mxu0 %v3224
        %3236 = vmatprep.subr.bf16.mxu0 0
        %3237 = vmatpush1.bf16.msra.mxu0 %v3225
        %3238 = vmatprep.subr.bf16.mxu0 0
        %3239 = vmatpush1.bf16.msra.mxu0 0
        %3240 = vmatprep.subr.bf16.mxu0 0
        %3241 = vmatpush1.bf16.msra.mxu0 0
        %3242 = vmatprep.subr.bf16.mxu0 0
        %3243 = vmatpush1.bf16.msra.mxu0 0
        %3244 = vmatprep.subr.bf16.mxu0 0
        %3245 = vmatpush1.bf16.msra.mxu0 0
        %3246 = vmatprep.subr.bf16.mxu0 0
        %3247 = vmatpush1.bf16.msra.mxu0 0
        %3248 = vmatprep.subr.bf16.mxu0 0
        %3249 = vmatpush1.bf16.msra.mxu0 0
        %3250 = vmatprep.subr.bf16.mxu0 0
        %3251 = vmatpush1.bf16.msra.mxu0 0
        %3252 = vmatprep.subr.bf16.mxu0 0
        %3253 = vmatpush1.bf16.msra.mxu0 0
        %3254 = vmatprep.subr.bf16.mxu0 0
        %3255 = vmatpush1.bf16.msra.mxu0 0
        %3256 = vmatprep.subr.bf16.mxu0 0
        %3257 = vmatpush1.bf16.msra.mxu0 0
        %3258 = vmatprep.subr.bf16.mxu0 0
        %3259 = vmatpush1.bf16.msra.mxu0 0
        %3260 = vmatprep.subr.bf16.mxu0 0
        %3261 = vmatpush1.bf16.msra.mxu0 0
        %3262 = vmatprep.mubr.bf16.mxu0 0
        %3263 = vmatmul.mubr.bf16.gmra.mrb[0].mxu0 %v637
        %v3264 = vpop.f32.mrb[0].mxu0
        %v3265 = vadd.f32 0.0, %v3264
        %v3266 = vpop.f32.mrb[0].mxu0
        %v3267 = vpop.f32.mrb[0].mxu0
        %v3268 = vpop.f32.mrb[0].mxu0
        %3269 = vdwg.mxu0
        %3270 = vst.msk [vmem:[#allocation3 + $0x8c] sm:$0xf] %vm679, %v3265
        %s3271 = scalar_lea.vmem %s5, 1152
        %v3272 = vld [vmem:[%s3271] sm:$0xf]
        %v3273 = vld [vmem:[%s3271 + $0x4] sm:$0xf]
        %v3274 = vld [vmem:[%s3271 + $0x8] sm:$0xf]
        %v3275 = vld [vmem:[%s3271 + $0xc] sm:$0xf]
        %v3276 = vld [vmem:[%s3271 + $0x10] sm:$0xf]
        %v3277 = vld [vmem:[%s3271 + $0x14] sm:$0xf]
        %v3278 = vld [vmem:[%s3271 + $0x18] sm:$0xf]
        %v3279 = vld [vmem:[%s3271 + $0x1c] sm:$0xf]
        %v3288 = vunpack.c.l.b16 %v3272
        %v3289 = vunpack.c.l.b16 %v3273
        %v3290 = vunpack.c.l.b16 %v3274
        %v3291 = vunpack.c.l.b16 %v3275
        %v3292 = vunpack.c.l.b16 %v3276
        %v3293 = vunpack.c.l.b16 %v3277
        %v3294 = vunpack.c.l.b16 %v3278
        %v3295 = vunpack.c.l.b16 %v3279
        %v3296 = vpack.c.b16 %v3289, %v3288
        %v3297 = vpack.c.b16 %v3291, %v3290
        %v3298 = vpack.c.b16 %v3293, %v3292
        %v3299 = vpack.c.b16 %v3295, %v3294
        %3304 = vmatprep.subr.bf16.mxu0 0
        %3305 = vmatpush1.bf16.msra.mxu0 %v3296
        %3306 = vmatprep.subr.bf16.mxu0 0
        %3307 = vmatpush1.bf16.msra.mxu0 %v3297
        %3308 = vmatprep.subr.bf16.mxu0 0
        %3309 = vmatpush1.bf16.msra.mxu0 %v3298
        %3310 = vmatprep.subr.bf16.mxu0 0
        %3311 = vmatpush1.bf16.msra.mxu0 %v3299
        %3312 = vmatprep.subr.bf16.mxu0 0
        %3313 = vmatpush1.bf16.msra.mxu0 0
        %3314 = vmatprep.subr.bf16.mxu0 0
        %3315 = vmatpush1.bf16.msra.mxu0 0
        %3316 = vmatprep.subr.bf16.mxu0 0
        %3317 = vmatpush1.bf16.msra.mxu0 0
        %3318 = vmatprep.subr.bf16.mxu0 0
        %3319 = vmatpush1.bf16.msra.mxu0 0
        %3320 = vmatprep.subr.bf16.mxu0 0
        %3321 = vmatpush1.bf16.msra.mxu0 0
        %3322 = vmatprep.subr.bf16.mxu0 0
        %3323 = vmatpush1.bf16.msra.mxu0 0
        %3324 = vmatprep.subr.bf16.mxu0 0
        %3325 = vmatpush1.bf16.msra.mxu0 0
        %3326 = vmatprep.subr.bf16.mxu0 0
        %3327 = vmatpush1.bf16.msra.mxu0 0
        %3328 = vmatprep.subr.bf16.mxu0 0
        %3329 = vmatpush1.bf16.msra.mxu0 0
        %3330 = vmatprep.subr.bf16.mxu0 0
        %3331 = vmatpush1.bf16.msra.mxu0 0
        %3332 = vmatprep.subr.bf16.mxu0 0
        %3333 = vmatpush1.bf16.msra.mxu0 0
        %3334 = vmatprep.subr.bf16.mxu0 0
        %3335 = vmatpush1.bf16.msra.mxu0 0
        %3336 = vmatprep.mubr.bf16.mxu0 0
        %3337 = vmatmul.mubr.bf16.gmra.mrb[0].mxu0 %v637
        %v3338 = vpop.f32.mrb[0].mxu0
        %v3339 = vadd.f32 0.0, %v3338
        %v3340 = vpop.f32.mrb[0].mxu0
        %v3341 = vpop.f32.mrb[0].mxu0
        %v3342 = vpop.f32.mrb[0].mxu0
        %3343 = vdwg.mxu0
        %3344 = vst.msk [vmem:[#allocation3 + $0x90] sm:$0xf] %vm679, %v3339
        %s3345 = scalar_lea.vmem %s5, 1184
        %v3346 = vld [vmem:[%s3345] sm:$0xf]
        %v3347 = vld [vmem:[%s3345 + $0x4] sm:$0xf]
        %v3348 = vld [vmem:[%s3345 + $0x8] sm:$0xf]
        %v3349 = vld [vmem:[%s3345 + $0xc] sm:$0xf]
        %v3350 = vld [vmem:[%s3345 + $0x10] sm:$0xf]
        %v3351 = vld [vmem:[%s3345 + $0x14] sm:$0xf]
        %v3352 = vld [vmem:[%s3345 + $0x18] sm:$0xf]
        %v3353 = vld [vmem:[%s3345 + $0x1c] sm:$0xf]
        %v3362 = vunpack.c.l.b16 %v3346
        %v3363 = vunpack.c.l.b16 %v3347
        %v3364 = vunpack.c.l.b16 %v3348
        %v3365 = vunpack.c.l.b16 %v3349
        %v3366 = vunpack.c.l.b16 %v3350
        %v3367 = vunpack.c.l.b16 %v3351
        %v3368 = vunpack.c.l.b16 %v3352
        %v3369 = vunpack.c.l.b16 %v3353
        %v3370 = vpack.c.b16 %v3363, %v3362
        %v3371 = vpack.c.b16 %v3365, %v3364
        %v3372 = vpack.c.b16 %v3367, %v3366
        %v3373 = vpack.c.b16 %v3369, %v3368
        %3378 = vmatprep.subr.bf16.mxu0 0
        %3379 = vmatpush1.bf16.msra.mxu0 %v3370
        %3380 = vmatprep.subr.bf16.mxu0 0
        %3381 = vmatpush1.bf16.msra.mxu0 %v3371
        %3382 = vmatprep.subr.bf16.mxu0 0
        %3383 = vmatpush1.bf16.msra.mxu0 %v3372
        %3384 = vmatprep.subr.bf16.mxu0 0
        %3385 = vmatpush1.bf16.msra.mxu0 %v3373
        %3386 = vmatprep.subr.bf16.mxu0 0
        %3387 = vmatpush1.bf16.msra.mxu0 0
        %3388 = vmatprep.subr.bf16.mxu0 0
        %3389 = vmatpush1.bf16.msra.mxu0 0
        %3390 = vmatprep.subr.bf16.mxu0 0
        %3391 = vmatpush1.bf16.msra.mxu0 0
        %3392 = vmatprep.subr.bf16.mxu0 0
        %3393 = vmatpush1.bf16.msra.mxu0 0
        %3394 = vmatprep.subr.bf16.mxu0 0
        %3395 = vmatpush1.bf16.msra.mxu0 0
        %3396 = vmatprep.subr.bf16.mxu0 0
        %3397 = vmatpush1.bf16.msra.mxu0 0
        %3398 = vmatprep.subr.bf16.mxu0 0
        %3399 = vmatpush1.bf16.msra.mxu0 0
        %3400 = vmatprep.subr.bf16.mxu0 0
        %3401 = vmatpush1.bf16.msra.mxu0 0
        %3402 = vmatprep.subr.bf16.mxu0 0
        %3403 = vmatpush1.bf16.msra.mxu0 0
        %3404 = vmatprep.subr.bf16.mxu0 0
        %3405 = vmatpush1.bf16.msra.mxu0 0
        %3406 = vmatprep.subr.bf16.mxu0 0
        %3407 = vmatpush1.bf16.msra.mxu0 0
        %3408 = vmatprep.subr.bf16.mxu0 0
        %3409 = vmatpush1.bf16.msra.mxu0 0
        %3410 = vmatprep.mubr.bf16.mxu0 0
        %3411 = vmatmul.mubr.bf16.gmra.mrb[0].mxu0 %v637
        %v3412 = vpop.f32.mrb[0].mxu0
        %v3413 = vadd.f32 0.0, %v3412
        %v3414 = vpop.f32.mrb[0].mxu0
        %v3415 = vpop.f32.mrb[0].mxu0
        %v3416 = vpop.f32.mrb[0].mxu0
        %3417 = vdwg.mxu0
        %3418 = vst.msk [vmem:[#allocation3 + $0x94] sm:$0xf] %vm679, %v3413
        %s3419 = scalar_lea.vmem %s5, 1216
        %v3420 = vld [vmem:[%s3419] sm:$0xf]
        %v3421 = vld [vmem:[%s3419 + $0x4] sm:$0xf]
        %v3422 = vld [vmem:[%s3419 + $0x8] sm:$0xf]
        %v3423 = vld [vmem:[%s3419 + $0xc] sm:$0xf]
        %v3424 = vld [vmem:[%s3419 + $0x10] sm:$0xf]
        %v3425 = vld [vmem:[%s3419 + $0x14] sm:$0xf]
        %v3426 = vld [vmem:[%s3419 + $0x18] sm:$0xf]
        %v3427 = vld [vmem:[%s3419 + $0x1c] sm:$0xf]
        %v3436 = vunpack.c.l.b16 %v3420
        %v3437 = vunpack.c.l.b16 %v3421
        %v3438 = vunpack.c.l.b16 %v3422
        %v3439 = vunpack.c.l.b16 %v3423
        %v3440 = vunpack.c.l.b16 %v3424
        %v3441 = vunpack.c.l.b16 %v3425
        %v3442 = vunpack.c.l.b16 %v3426
        %v3443 = vunpack.c.l.b16 %v3427
        %v3444 = vpack.c.b16 %v3437, %v3436
        %v3445 = vpack.c.b16 %v3439, %v3438
        %v3446 = vpack.c.b16 %v3441, %v3440
        %v3447 = vpack.c.b16 %v3443, %v3442
        %3452 = vmatprep.subr.bf16.mxu0 0
        %3453 = vmatpush1.bf16.msra.mxu0 %v3444
        %3454 = vmatprep.subr.bf16.mxu0 0
        %3455 = vmatpush1.bf16.msra.mxu0 %v3445
        %3456 = vmatprep.subr.bf16.mxu0 0
        %3457 = vmatpush1.bf16.msra.mxu0 %v3446
        %3458 = vmatprep.subr.bf16.mxu0 0
        %3459 = vmatpush1.bf16.msra.mxu0 %v3447
        %3460 = vmatprep.subr.bf16.mxu0 0
        %3461 = vmatpush1.bf16.msra.mxu0 0
        %3462 = vmatprep.subr.bf16.mxu0 0
        %3463 = vmatpush1.bf16.msra.mxu0 0
        %3464 = vmatprep.subr.bf16.mxu0 0
        %3465 = vmatpush1.bf16.msra.mxu0 0
        %3466 = vmatprep.subr.bf16.mxu0 0
        %3467 = vmatpush1.bf16.msra.mxu0 0
        %3468 = vmatprep.subr.bf16.mxu0 0
        %3469 = vmatpush1.bf16.msra.mxu0 0
        %3470 = vmatprep.subr.bf16.mxu0 0
        %3471 = vmatpush1.bf16.msra.mxu0 0
        %3472 = vmatprep.subr.bf16.mxu0 0
        %3473 = vmatpush1.bf16.msra.mxu0 0
        %3474 = vmatprep.subr.bf16.mxu0 0
        %3475 = vmatpush1.bf16.msra.mxu0 0
        %3476 = vmatprep.subr.bf16.mxu0 0
        %3477 = vmatpush1.bf16.msra.mxu0 0
        %3478 = vmatprep.subr.bf16.mxu0 0
        %3479 = vmatpush1.bf16.msra.mxu0 0
        %3480 = vmatprep.subr.bf16.mxu0 0
        %3481 = vmatpush1.bf16.msra.mxu0 0
        %3482 = vmatprep.subr.bf16.mxu0 0
        %3483 = vmatpush1.bf16.msra.mxu0 0
        %3484 = vmatprep.mubr.bf16.mxu0 0
        %3485 = vmatmul.mubr.bf16.gmra.mrb[0].mxu0 %v637
        %v3486 = vpop.f32.mrb[0].mxu0
        %v3487 = vadd.f32 0.0, %v3486
        %v3488 = vpop.f32.mrb[0].mxu0
        %v3489 = vpop.f32.mrb[0].mxu0
        %v3490 = vpop.f32.mrb[0].mxu0
        %3491 = vdwg.mxu0
        %3492 = vst.msk [vmem:[#allocation3 + $0x98] sm:$0xf] %vm679, %v3487
        %s3493 = scalar_lea.vmem %s5, 1248
        %v3494 = vld [vmem:[%s3493] sm:$0xf]
        %v3495 = vld [vmem:[%s3493 + $0x4] sm:$0xf]
        %v3496 = vld [vmem:[%s3493 + $0x8] sm:$0xf]
        %v3497 = vld [vmem:[%s3493 + $0xc] sm:$0xf]
        %v3498 = vld [vmem:[%s3493 + $0x10] sm:$0xf]
        %v3499 = vld [vmem:[%s3493 + $0x14] sm:$0xf]
        %v3500 = vld [vmem:[%s3493 + $0x18] sm:$0xf]
        %v3501 = vld [vmem:[%s3493 + $0x1c] sm:$0xf]
        %v3510 = vunpack.c.l.b16 %v3494
        %v3511 = vunpack.c.l.b16 %v3495
        %v3512 = vunpack.c.l.b16 %v3496
        %v3513 = vunpack.c.l.b16 %v3497
        %v3514 = vunpack.c.l.b16 %v3498
        %v3515 = vunpack.c.l.b16 %v3499
        %v3516 = vunpack.c.l.b16 %v3500
        %v3517 = vunpack.c.l.b16 %v3501
        %v3518 = vpack.c.b16 %v3511, %v3510
        %v3519 = vpack.c.b16 %v3513, %v3512
        %v3520 = vpack.c.b16 %v3515, %v3514
        %v3521 = vpack.c.b16 %v3517, %v3516
        %3526 = vmatprep.subr.bf16.mxu0 0
        %3527 = vmatpush1.bf16.msra.mxu0 %v3518
        %3528 = vmatprep.subr.bf16.mxu0 0
        %3529 = vmatpush1.bf16.msra.mxu0 %v3519
        %3530 = vmatprep.subr.bf16.mxu0 0
        %3531 = vmatpush1.bf16.msra.mxu0 %v3520
        %3532 = vmatprep.subr.bf16.mxu0 0
        %3533 = vmatpush1.bf16.msra.mxu0 %v3521
        %3534 = vmatprep.subr.bf16.mxu0 0
        %3535 = vmatpush1.bf16.msra.mxu0 0
        %3536 = vmatprep.subr.bf16.mxu0 0
        %3537 = vmatpush1.bf16.msra.mxu0 0
        %3538 = vmatprep.subr.bf16.mxu0 0
        %3539 = vmatpush1.bf16.msra.mxu0 0
        %3540 = vmatprep.subr.bf16.mxu0 0
        %3541 = vmatpush1.bf16.msra.mxu0 0
        %3542 = vmatprep.subr.bf16.mxu0 0
        %3543 = vmatpush1.bf16.msra.mxu0 0
        %3544 = vmatprep.subr.bf16.mxu0 0
        %3545 = vmatpush1.bf16.msra.mxu0 0
        %3546 = vmatprep.subr.bf16.mxu0 0
        %3547 = vmatpush1.bf16.msra.mxu0 0
        %3548 = vmatprep.subr.bf16.mxu0 0
        %3549 = vmatpush1.bf16.msra.mxu0 0
        %3550 = vmatprep.subr.bf16.mxu0 0
        %3551 = vmatpush1.bf16.msra.mxu0 0
        %3552 = vmatprep.subr.bf16.mxu0 0
        %3553 = vmatpush1.bf16.msra.mxu0 0
        %3554 = vmatprep.subr.bf16.mxu0 0
        %3555 = vmatpush1.bf16.msra.mxu0 0
        %3556 = vmatprep.subr.bf16.mxu0 0
        %3557 = vmatpush1.bf16.msra.mxu0 0
        %3558 = vmatprep.mubr.bf16.mxu0 0
        %3559 = vmatmul.mubr.bf16.gmra.mrb[0].mxu0 %v637
        %v3560 = vpop.f32.mrb[0].mxu0
        %v3561 = vadd.f32 0.0, %v3560
        %v3562 = vpop.f32.mrb[0].mxu0
        %v3563 = vpop.f32.mrb[0].mxu0
        %v3564 = vpop.f32.mrb[0].mxu0
        %3565 = vdwg.mxu0
        %3566 = vst.msk [vmem:[#allocation3 + $0x9c] sm:$0xf] %vm679, %v3561
        %s3567 = scalar_lea.vmem %s5, 1280
        %v3568 = vld [vmem:[%s3567] sm:$0xf]
        %v3569 = vld [vmem:[%s3567 + $0x4] sm:$0xf]
        %v3570 = vld [vmem:[%s3567 + $0x8] sm:$0xf]
        %v3571 = vld [vmem:[%s3567 + $0xc] sm:$0xf]
        %v3572 = vld [vmem:[%s3567 + $0x10] sm:$0xf]
        %v3573 = vld [vmem:[%s3567 + $0x14] sm:$0xf]
        %v3574 = vld [vmem:[%s3567 + $0x18] sm:$0xf]
        %v3575 = vld [vmem:[%s3567 + $0x1c] sm:$0xf]
        %v3584 = vunpack.c.l.b16 %v3568
        %v3585 = vunpack.c.l.b16 %v3569
        %v3586 = vunpack.c.l.b16 %v3570
        %v3587 = vunpack.c.l.b16 %v3571
        %v3588 = vunpack.c.l.b16 %v3572
        %v3589 = vunpack.c.l.b16 %v3573
        %v3590 = vunpack.c.l.b16 %v3574
        %v3591 = vunpack.c.l.b16 %v3575
        %v3592 = vpack.c.b16 %v3585, %v3584
        %v3593 = vpack.c.b16 %v3587, %v3586
        %v3594 = vpack.c.b16 %v3589, %v3588
        %v3595 = vpack.c.b16 %v3591, %v3590
        %3600 = vmatprep.subr.bf16.mxu0 0
        %3601 = vmatpush1.bf16.msra.mxu0 %v3592
        %3602 = vmatprep.subr.bf16.mxu0 0
        %3603 = vmatpush1.bf16.msra.mxu0 %v3593
        %3604 = vmatprep.subr.bf16.mxu0 0
        %3605 = vmatpush1.bf16.msra.mxu0 %v3594
        %3606 = vmatprep.subr.bf16.mxu0 0
        %3607 = vmatpush1.bf16.msra.mxu0 %v3595
        %3608 = vmatprep.subr.bf16.mxu0 0
        %3609 = vmatpush1.bf16.msra.mxu0 0
        %3610 = vmatprep.subr.bf16.mxu0 0
        %3611 = vmatpush1.bf16.msra.mxu0 0
        %3612 = vmatprep.subr.bf16.mxu0 0
        %3613 = vmatpush1.bf16.msra.mxu0 0
        %3614 = vmatprep.subr.bf16.mxu0 0
        %3615 = vmatpush1.bf16.msra.mxu0 0
        %3616 = vmatprep.subr.bf16.mxu0 0
        %3617 = vmatpush1.bf16.msra.mxu0 0
        %3618 = vmatprep.subr.bf16.mxu0 0
        %3619 = vmatpush1.bf16.msra.mxu0 0
        %3620 = vmatprep.subr.bf16.mxu0 0
        %3621 = vmatpush1.bf16.msra.mxu0 0
        %3622 = vmatprep.subr.bf16.mxu0 0
        %3623 = vmatpush1.bf16.msra.mxu0 0
        %3624 = vmatprep.subr.bf16.mxu0 0
        %3625 = vmatpush1.bf16.msra.mxu0 0
        %3626 = vmatprep.subr.bf16.mxu0 0
        %3627 = vmatpush1.bf16.msra.mxu0 0
        %3628 = vmatprep.subr.bf16.mxu0 0
        %3629 = vmatpush1.bf16.msra.mxu0 0
        %3630 = vmatprep.subr.bf16.mxu0 0
        %3631 = vmatpush1.bf16.msra.mxu0 0
        %3632 = vmatprep.mubr.bf16.mxu0 0
        %3633 = vmatmul.mubr.bf16.gmra.mrb[0].mxu0 %v637
        %v3634 = vpop.f32.mrb[0].mxu0
        %v3635 = vadd.f32 0.0, %v3634
        %v3636 = vpop.f32.mrb[0].mxu0
        %v3637 = vpop.f32.mrb[0].mxu0
        %v3638 = vpop.f32.mrb[0].mxu0
        %3639 = vdwg.mxu0
        %3640 = vst.msk [vmem:[#allocation3 + $0xa0] sm:$0xf] %vm679, %v3635
        %s3641 = scalar_lea.vmem %s5, 1312
        %v3642 = vld [vmem:[%s3641] sm:$0xf]
        %v3643 = vld [vmem:[%s3641 + $0x4] sm:$0xf]
        %v3644 = vld [vmem:[%s3641 + $0x8] sm:$0xf]
        %v3645 = vld [vmem:[%s3641 + $0xc] sm:$0xf]
        %v3646 = vld [vmem:[%s3641 + $0x10] sm:$0xf]
        %v3647 = vld [vmem:[%s3641 + $0x14] sm:$0xf]
        %v3648 = vld [vmem:[%s3641 + $0x18] sm:$0xf]
        %v3649 = vld [vmem:[%s3641 + $0x1c] sm:$0xf]
        %v3658 = vunpack.c.l.b16 %v3642
        %v3659 = vunpack.c.l.b16 %v3643
        %v3660 = vunpack.c.l.b16 %v3644
        %v3661 = vunpack.c.l.b16 %v3645
        %v3662 = vunpack.c.l.b16 %v3646
        %v3663 = vunpack.c.l.b16 %v3647
        %v3664 = vunpack.c.l.b16 %v3648
        %v3665 = vunpack.c.l.b16 %v3649
        %v3666 = vpack.c.b16 %v3659, %v3658
        %v3667 = vpack.c.b16 %v3661, %v3660
        %v3668 = vpack.c.b16 %v3663, %v3662
        %v3669 = vpack.c.b16 %v3665, %v3664
        %3674 = vmatprep.subr.bf16.mxu0 0
        %3675 = vmatpush1.bf16.msra.mxu0 %v3666
        %3676 = vmatprep.subr.bf16.mxu0 0
        %3677 = vmatpush1.bf16.msra.mxu0 %v3667
        %3678 = vmatprep.subr.bf16.mxu0 0
        %3679 = vmatpush1.bf16.msra.mxu0 %v3668
        %3680 = vmatprep.subr.bf16.mxu0 0
        %3681 = vmatpush1.bf16.msra.mxu0 %v3669
        %3682 = vmatprep.subr.bf16.mxu0 0
        %3683 = vmatpush1.bf16.msra.mxu0 0
        %3684 = vmatprep.subr.bf16.mxu0 0
        %3685 = vmatpush1.bf16.msra.mxu0 0
        %3686 = vmatprep.subr.bf16.mxu0 0
        %3687 = vmatpush1.bf16.msra.mxu0 0
        %3688 = vmatprep.subr.bf16.mxu0 0
        %3689 = vmatpush1.bf16.msra.mxu0 0
        %3690 = vmatprep.subr.bf16.mxu0 0
        %3691 = vmatpush1.bf16.msra.mxu0 0
        %3692 = vmatprep.subr.bf16.mxu0 0
        %3693 = vmatpush1.bf16.msra.mxu0 0
        %3694 = vmatprep.subr.bf16.mxu0 0
        %3695 = vmatpush1.bf16.msra.mxu0 0
        %3696 = vmatprep.subr.bf16.mxu0 0
        %3697 = vmatpush1.bf16.msra.mxu0 0
        %3698 = vmatprep.subr.bf16.mxu0 0
        %3699 = vmatpush1.bf16.msra.mxu0 0
        %3700 = vmatprep.subr.bf16.mxu0 0
        %3701 = vmatpush1.bf16.msra.mxu0 0
        %3702 = vmatprep.subr.bf16.mxu0 0
        %3703 = vmatpush1.bf16.msra.mxu0 0
        %3704 = vmatprep.subr.bf16.mxu0 0
        %3705 = vmatpush1.bf16.msra.mxu0 0
        %3706 = vmatprep.mubr.bf16.mxu0 0
        %3707 = vmatmul.mubr.bf16.gmra.mrb[0].mxu0 %v637
        %v3708 = vpop.f32.mrb[0].mxu0
        %v3709 = vadd.f32 0.0, %v3708
        %v3710 = vpop.f32.mrb[0].mxu0
        %v3711 = vpop.f32.mrb[0].mxu0
        %v3712 = vpop.f32.mrb[0].mxu0
        %3713 = vdwg.mxu0
        %3714 = vst.msk [vmem:[#allocation3 + $0xa4] sm:$0xf] %vm679, %v3709
        %s3715 = scalar_lea.vmem %s5, 1344
        %v3716 = vld [vmem:[%s3715] sm:$0xf]
        %v3717 = vld [vmem:[%s3715 + $0x4] sm:$0xf]
        %v3718 = vld [vmem:[%s3715 + $0x8] sm:$0xf]
        %v3719 = vld [vmem:[%s3715 + $0xc] sm:$0xf]
        %v3720 = vld [vmem:[%s3715 + $0x10] sm:$0xf]
        %v3721 = vld [vmem:[%s3715 + $0x14] sm:$0xf]
        %v3722 = vld [vmem:[%s3715 + $0x18] sm:$0xf]
        %v3723 = vld [vmem:[%s3715 + $0x1c] sm:$0xf]
        %v3732 = vunpack.c.l.b16 %v3716
        %v3733 = vunpack.c.l.b16 %v3717
        %v3734 = vunpack.c.l.b16 %v3718
        %v3735 = vunpack.c.l.b16 %v3719
        %v3736 = vunpack.c.l.b16 %v3720
        %v3737 = vunpack.c.l.b16 %v3721
        %v3738 = vunpack.c.l.b16 %v3722
        %v3739 = vunpack.c.l.b16 %v3723
        %v3740 = vpack.c.b16 %v3733, %v3732
        %v3741 = vpack.c.b16 %v3735, %v3734
        %v3742 = vpack.c.b16 %v3737, %v3736
        %v3743 = vpack.c.b16 %v3739, %v3738
        %3748 = vmatprep.subr.bf16.mxu0 0
        %3749 = vmatpush1.bf16.msra.mxu0 %v3740
        %3750 = vmatprep.subr.bf16.mxu0 0
        %3751 = vmatpush1.bf16.msra.mxu0 %v3741
        %3752 = vmatprep.subr.bf16.mxu0 0
        %3753 = vmatpush1.bf16.msra.mxu0 %v3742
        %3754 = vmatprep.subr.bf16.mxu0 0
        %3755 = vmatpush1.bf16.msra.mxu0 %v3743
        %3756 = vmatprep.subr.bf16.mxu0 0
        %3757 = vmatpush1.bf16.msra.mxu0 0
        %3758 = vmatprep.subr.bf16.mxu0 0
        %3759 = vmatpush1.bf16.msra.mxu0 0
        %3760 = vmatprep.subr.bf16.mxu0 0
        %3761 = vmatpush1.bf16.msra.mxu0 0
        %3762 = vmatprep.subr.bf16.mxu0 0
        %3763 = vmatpush1.bf16.msra.mxu0 0
        %3764 = vmatprep.subr.bf16.mxu0 0
        %3765 = vmatpush1.bf16.msra.mxu0 0
        %3766 = vmatprep.subr.bf16.mxu0 0
        %3767 = vmatpush1.bf16.msra.mxu0 0
        %3768 = vmatprep.subr.bf16.mxu0 0
        %3769 = vmatpush1.bf16.msra.mxu0 0
        %3770 = vmatprep.subr.bf16.mxu0 0
        %3771 = vmatpush1.bf16.msra.mxu0 0
        %3772 = vmatprep.subr.bf16.mxu0 0
        %3773 = vmatpush1.bf16.msra.mxu0 0
        %3774 = vmatprep.subr.bf16.mxu0 0
        %3775 = vmatpush1.bf16.msra.mxu0 0
        %3776 = vmatprep.subr.bf16.mxu0 0
        %3777 = vmatpush1.bf16.msra.mxu0 0
        %3778 = vmatprep.subr.bf16.mxu0 0
        %3779 = vmatpush1.bf16.msra.mxu0 0
        %3780 = vmatprep.mubr.bf16.mxu0 0
        %3781 = vmatmul.mubr.bf16.gmra.mrb[0].mxu0 %v637
        %v3782 = vpop.f32.mrb[0].mxu0
        %v3783 = vadd.f32 0.0, %v3782
        %v3784 = vpop.f32.mrb[0].mxu0
        %v3785 = vpop.f32.mrb[0].mxu0
        %v3786 = vpop.f32.mrb[0].mxu0
        %3787 = vdwg.mxu0
        %3788 = vst.msk [vmem:[#allocation3 + $0xa8] sm:$0xf] %vm679, %v3783
        %s3789 = scalar_lea.vmem %s5, 1376
        %v3790 = vld [vmem:[%s3789] sm:$0xf]
        %v3791 = vld [vmem:[%s3789 + $0x4] sm:$0xf]
        %v3792 = vld [vmem:[%s3789 + $0x8] sm:$0xf]
        %v3793 = vld [vmem:[%s3789 + $0xc] sm:$0xf]
        %v3794 = vld [vmem:[%s3789 + $0x10] sm:$0xf]
        %v3795 = vld [vmem:[%s3789 + $0x14] sm:$0xf]
        %v3796 = vld [vmem:[%s3789 + $0x18] sm:$0xf]
        %v3797 = vld [vmem:[%s3789 + $0x1c] sm:$0xf]
        %v3806 = vunpack.c.l.b16 %v3790
        %v3807 = vunpack.c.l.b16 %v3791
        %v3808 = vunpack.c.l.b16 %v3792
        %v3809 = vunpack.c.l.b16 %v3793
        %v3810 = vunpack.c.l.b16 %v3794
        %v3811 = vunpack.c.l.b16 %v3795
        %v3812 = vunpack.c.l.b16 %v3796
        %v3813 = vunpack.c.l.b16 %v3797
        %v3814 = vpack.c.b16 %v3807, %v3806
        %v3815 = vpack.c.b16 %v3809, %v3808
        %v3816 = vpack.c.b16 %v3811, %v3810
        %v3817 = vpack.c.b16 %v3813, %v3812
        %3822 = vmatprep.subr.bf16.mxu0 0
        %3823 = vmatpush1.bf16.msra.mxu0 %v3814
        %3824 = vmatprep.subr.bf16.mxu0 0
        %3825 = vmatpush1.bf16.msra.mxu0 %v3815
        %3826 = vmatprep.subr.bf16.mxu0 0
        %3827 = vmatpush1.bf16.msra.mxu0 %v3816
        %3828 = vmatprep.subr.bf16.mxu0 0
        %3829 = vmatpush1.bf16.msra.mxu0 %v3817
        %3830 = vmatprep.subr.bf16.mxu0 0
        %3831 = vmatpush1.bf16.msra.mxu0 0
        %3832 = vmatprep.subr.bf16.mxu0 0
        %3833 = vmatpush1.bf16.msra.mxu0 0
        %3834 = vmatprep.subr.bf16.mxu0 0
        %3835 = vmatpush1.bf16.msra.mxu0 0
        %3836 = vmatprep.subr.bf16.mxu0 0
        %3837 = vmatpush1.bf16.msra.mxu0 0
        %3838 = vmatprep.subr.bf16.mxu0 0
        %3839 = vmatpush1.bf16.msra.mxu0 0
        %3840 = vmatprep.subr.bf16.mxu0 0
        %3841 = vmatpush1.bf16.msra.mxu0 0
        %3842 = vmatprep.subr.bf16.mxu0 0
        %3843 = vmatpush1.bf16.msra.mxu0 0
        %3844 = vmatprep.subr.bf16.mxu0 0
        %3845 = vmatpush1.bf16.msra.mxu0 0
        %3846 = vmatprep.subr.bf16.mxu0 0
        %3847 = vmatpush1.bf16.msra.mxu0 0
        %3848 = vmatprep.subr.bf16.mxu0 0
        %3849 = vmatpush1.bf16.msra.mxu0 0
        %3850 = vmatprep.subr.bf16.mxu0 0
        %3851 = vmatpush1.bf16.msra.mxu0 0
        %3852 = vmatprep.subr.bf16.mxu0 0
        %3853 = vmatpush1.bf16.msra.mxu0 0
        %3854 = vmatprep.mubr.bf16.mxu0 0
        %3855 = vmatmul.mubr.bf16.gmra.mrb[0].mxu0 %v637
        %v3856 = vpop.f32.mrb[0].mxu0
        %v3857 = vadd.f32 0.0, %v3856
        %v3858 = vpop.f32.mrb[0].mxu0
        %v3859 = vpop.f32.mrb[0].mxu0
        %v3860 = vpop.f32.mrb[0].mxu0
        %3861 = vdwg.mxu0
        %3862 = vst.msk [vmem:[#allocation3 + $0xac] sm:$0xf] %vm679, %v3857
        %s3863 = scalar_lea.vmem %s5, 1408
        %v3864 = vld [vmem:[%s3863] sm:$0xf]
        %v3865 = vld [vmem:[%s3863 + $0x4] sm:$0xf]
        %v3866 = vld [vmem:[%s3863 + $0x8] sm:$0xf]
        %v3867 = vld [vmem:[%s3863 + $0xc] sm:$0xf]
        %v3868 = vld [vmem:[%s3863 + $0x10] sm:$0xf]
        %v3869 = vld [vmem:[%s3863 + $0x14] sm:$0xf]
        %v3870 = vld [vmem:[%s3863 + $0x18] sm:$0xf]
        %v3871 = vld [vmem:[%s3863 + $0x1c] sm:$0xf]
        %v3880 = vunpack.c.l.b16 %v3864
        %v3881 = vunpack.c.l.b16 %v3865
        %v3882 = vunpack.c.l.b16 %v3866
        %v3883 = vunpack.c.l.b16 %v3867
        %v3884 = vunpack.c.l.b16 %v3868
        %v3885 = vunpack.c.l.b16 %v3869
        %v3886 = vunpack.c.l.b16 %v3870
        %v3887 = vunpack.c.l.b16 %v3871
        %v3888 = vpack.c.b16 %v3881, %v3880
        %v3889 = vpack.c.b16 %v3883, %v3882
        %v3890 = vpack.c.b16 %v3885, %v3884
        %v3891 = vpack.c.b16 %v3887, %v3886
        %3896 = vmatprep.subr.bf16.mxu0 0
        %3897 = vmatpush1.bf16.msra.mxu0 %v3888
        %3898 = vmatprep.subr.bf16.mxu0 0
        %3899 = vmatpush1.bf16.msra.mxu0 %v3889
        %3900 = vmatprep.subr.bf16.mxu0 0
        %3901 = vmatpush1.bf16.msra.mxu0 %v3890
        %3902 = vmatprep.subr.bf16.mxu0 0
        %3903 = vmatpush1.bf16.msra.mxu0 %v3891
        %3904 = vmatprep.subr.bf16.mxu0 0
        %3905 = vmatpush1.bf16.msra.mxu0 0
        %3906 = vmatprep.subr.bf16.mxu0 0
        %3907 = vmatpush1.bf16.msra.mxu0 0
        %3908 = vmatprep.subr.bf16.mxu0 0
        %3909 = vmatpush1.bf16.msra.mxu0 0
        %3910 = vmatprep.subr.bf16.mxu0 0
        %3911 = vmatpush1.bf16.msra.mxu0 0
        %3912 = vmatprep.subr.bf16.mxu0 0
        %3913 = vmatpush1.bf16.msra.mxu0 0
        %3914 = vmatprep.subr.bf16.mxu0 0
        %3915 = vmatpush1.bf16.msra.mxu0 0
        %3916 = vmatprep.subr.bf16.mxu0 0
        %3917 = vmatpush1.bf16.msra.mxu0 0
        %3918 = vmatprep.subr.bf16.mxu0 0
        %3919 = vmatpush1.bf16.msra.mxu0 0
        %3920 = vmatprep.subr.bf16.mxu0 0
        %3921 = vmatpush1.bf16.msra.mxu0 0
        %3922 = vmatprep.subr.bf16.mxu0 0
        %3923 = vmatpush1.bf16.msra.mxu0 0
        %3924 = vmatprep.subr.bf16.mxu0 0
        %3925 = vmatpush1.bf16.msra.mxu0 0
        %3926 = vmatprep.subr.bf16.mxu0 0
        %3927 = vmatpush1.bf16.msra.mxu0 0
        %3928 = vmatprep.mubr.bf16.mxu0 0
        %3929 = vmatmul.mubr.bf16.gmra.mrb[0].mxu0 %v637
        %v3930 = vpop.f32.mrb[0].mxu0
        %v3931 = vadd.f32 0.0, %v3930
        %v3932 = vpop.f32.mrb[0].mxu0
        %v3933 = vpop.f32.mrb[0].mxu0
        %v3934 = vpop.f32.mrb[0].mxu0
        %3935 = vdwg.mxu0
        %3936 = vst.msk [vmem:[#allocation3 + $0xb0] sm:$0xf] %vm679, %v3931
        %s3937 = scalar_lea.vmem %s5, 1440
        %v3938 = vld [vmem:[%s3937] sm:$0xf]
        %v3939 = vld [vmem:[%s3937 + $0x4] sm:$0xf]
        %v3940 = vld [vmem:[%s3937 + $0x8] sm:$0xf]
        %v3941 = vld [vmem:[%s3937 + $0xc] sm:$0xf]
        %v3942 = vld [vmem:[%s3937 + $0x10] sm:$0xf]
        %v3943 = vld [vmem:[%s3937 + $0x14] sm:$0xf]
        %v3944 = vld [vmem:[%s3937 + $0x18] sm:$0xf]
        %v3945 = vld [vmem:[%s3937 + $0x1c] sm:$0xf]
        %v3954 = vunpack.c.l.b16 %v3938
        %v3955 = vunpack.c.l.b16 %v3939
        %v3956 = vunpack.c.l.b16 %v3940
        %v3957 = vunpack.c.l.b16 %v3941
        %v3958 = vunpack.c.l.b16 %v3942
        %v3959 = vunpack.c.l.b16 %v3943
        %v3960 = vunpack.c.l.b16 %v3944
        %v3961 = vunpack.c.l.b16 %v3945
        %v3962 = vpack.c.b16 %v3955, %v3954
        %v3963 = vpack.c.b16 %v3957, %v3956
        %v3964 = vpack.c.b16 %v3959, %v3958
        %v3965 = vpack.c.b16 %v3961, %v3960
        %3970 = vmatprep.subr.bf16.mxu0 0
        %3971 = vmatpush1.bf16.msra.mxu0 %v3962
        %3972 = vmatprep.subr.bf16.mxu0 0
        %3973 = vmatpush1.bf16.msra.mxu0 %v3963
        %3974 = vmatprep.subr.bf16.mxu0 0
        %3975 = vmatpush1.bf16.msra.mxu0 %v3964
        %3976 = vmatprep.subr.bf16.mxu0 0
        %3977 = vmatpush1.bf16.msra.mxu0 %v3965
        %3978 = vmatprep.subr.bf16.mxu0 0
        %3979 = vmatpush1.bf16.msra.mxu0 0
        %3980 = vmatprep.subr.bf16.mxu0 0
        %3981 = vmatpush1.bf16.msra.mxu0 0
        %3982 = vmatprep.subr.bf16.mxu0 0
        %3983 = vmatpush1.bf16.msra.mxu0 0
        %3984 = vmatprep.subr.bf16.mxu0 0
        %3985 = vmatpush1.bf16.msra.mxu0 0
        %3986 = vmatprep.subr.bf16.mxu0 0
        %3987 = vmatpush1.bf16.msra.mxu0 0
        %3988 = vmatprep.subr.bf16.mxu0 0
        %3989 = vmatpush1.bf16.msra.mxu0 0
        %3990 = vmatprep.subr.bf16.mxu0 0
        %3991 = vmatpush1.bf16.msra.mxu0 0
        %3992 = vmatprep.subr.bf16.mxu0 0
        %3993 = vmatpush1.bf16.msra.mxu0 0
        %3994 = vmatprep.subr.bf16.mxu0 0
        %3995 = vmatpush1.bf16.msra.mxu0 0
        %3996 = vmatprep.subr.bf16.mxu0 0
        %3997 = vmatpush1.bf16.msra.mxu0 0
        %3998 = vmatprep.subr.bf16.mxu0 0
        %3999 = vmatpush1.bf16.msra.mxu0 0
        %4000 = vmatprep.subr.bf16.mxu0 0
        %4001 = vmatpush1.bf16.msra.mxu0 0
        %4002 = vmatprep.mubr.bf16.mxu0 0
        %4003 = vmatmul.mubr.bf16.gmra.mrb[0].mxu0 %v637
        %v4004 = vpop.f32.mrb[0].mxu0
        %v4005 = vadd.f32 0.0, %v4004
        %v4006 = vpop.f32.mrb[0].mxu0
        %v4007 = vpop.f32.mrb[0].mxu0
        %v4008 = vpop.f32.mrb[0].mxu0
        %4009 = vdwg.mxu0
        %4010 = vst.msk [vmem:[#allocation3 + $0xb4] sm:$0xf] %vm679, %v4005
        %s4011 = scalar_lea.vmem %s5, 1472
        %v4012 = vld [vmem:[%s4011] sm:$0xf]
        %v4013 = vld [vmem:[%s4011 + $0x4] sm:$0xf]
        %v4014 = vld [vmem:[%s4011 + $0x8] sm:$0xf]
        %v4015 = vld [vmem:[%s4011 + $0xc] sm:$0xf]
        %v4016 = vld [vmem:[%s4011 + $0x10] sm:$0xf]
        %v4017 = vld [vmem:[%s4011 + $0x14] sm:$0xf]
        %v4018 = vld [vmem:[%s4011 + $0x18] sm:$0xf]
        %v4019 = vld [vmem:[%s4011 + $0x1c] sm:$0xf]
        %v4028 = vunpack.c.l.b16 %v4012
        %v4029 = vunpack.c.l.b16 %v4013
        %v4030 = vunpack.c.l.b16 %v4014
        %v4031 = vunpack.c.l.b16 %v4015
        %v4032 = vunpack.c.l.b16 %v4016
        %v4033 = vunpack.c.l.b16 %v4017
        %v4034 = vunpack.c.l.b16 %v4018
        %v4035 = vunpack.c.l.b16 %v4019
        %v4036 = vpack.c.b16 %v4029, %v4028
        %v4037 = vpack.c.b16 %v4031, %v4030
        %v4038 = vpack.c.b16 %v4033, %v4032
        %v4039 = vpack.c.b16 %v4035, %v4034
        %4044 = vmatprep.subr.bf16.mxu0 0
        %4045 = vmatpush1.bf16.msra.mxu0 %v4036
        %4046 = vmatprep.subr.bf16.mxu0 0
        %4047 = vmatpush1.bf16.msra.mxu0 %v4037
        %4048 = vmatprep.subr.bf16.mxu0 0
        %4049 = vmatpush1.bf16.msra.mxu0 %v4038
        %4050 = vmatprep.subr.bf16.mxu0 0
        %4051 = vmatpush1.bf16.msra.mxu0 %v4039
        %4052 = vmatprep.subr.bf16.mxu0 0
        %4053 = vmatpush1.bf16.msra.mxu0 0
        %4054 = vmatprep.subr.bf16.mxu0 0
        %4055 = vmatpush1.bf16.msra.mxu0 0
        %4056 = vmatprep.subr.bf16.mxu0 0
        %4057 = vmatpush1.bf16.msra.mxu0 0
        %4058 = vmatprep.subr.bf16.mxu0 0
        %4059 = vmatpush1.bf16.msra.mxu0 0
        %4060 = vmatprep.subr.bf16.mxu0 0
        %4061 = vmatpush1.bf16.msra.mxu0 0
        %4062 = vmatprep.subr.bf16.mxu0 0
        %4063 = vmatpush1.bf16.msra.mxu0 0
        %4064 = vmatprep.subr.bf16.mxu0 0
        %4065 = vmatpush1.bf16.msra.mxu0 0
        %4066 = vmatprep.subr.bf16.mxu0 0
        %4067 = vmatpush1.bf16.msra.mxu0 0
        %4068 = vmatprep.subr.bf16.mxu0 0
        %4069 = vmatpush1.bf16.msra.mxu0 0
        %4070 = vmatprep.subr.bf16.mxu0 0
        %4071 = vmatpush1.bf16.msra.mxu0 0
        %4072 = vmatprep.subr.bf16.mxu0 0
        %4073 = vmatpush1.bf16.msra.mxu0 0
        %4074 = vmatprep.subr.bf16.mxu0 0
        %4075 = vmatpush1.bf16.msra.mxu0 0
        %4076 = vmatprep.mubr.bf16.mxu0 0
        %4077 = vmatmul.mubr.bf16.gmra.mrb[0].mxu0 %v637
        %v4078 = vpop.f32.mrb[0].mxu0
        %v4079 = vadd.f32 0.0, %v4078
        %v4080 = vpop.f32.mrb[0].mxu0
        %v4081 = vpop.f32.mrb[0].mxu0
        %v4082 = vpop.f32.mrb[0].mxu0
        %4083 = vdwg.mxu0
        %4084 = vst.msk [vmem:[#allocation3 + $0xb8] sm:$0xf] %vm679, %v4079
        %s4085 = scalar_lea.vmem %s5, 1504
        %v4086 = vld [vmem:[%s4085] sm:$0xf]
        %v4087 = vld [vmem:[%s4085 + $0x4] sm:$0xf]
        %v4088 = vld [vmem:[%s4085 + $0x8] sm:$0xf]
        %v4089 = vld [vmem:[%s4085 + $0xc] sm:$0xf]
        %v4090 = vld [vmem:[%s4085 + $0x10] sm:$0xf]
        %v4091 = vld [vmem:[%s4085 + $0x14] sm:$0xf]
        %v4092 = vld [vmem:[%s4085 + $0x18] sm:$0xf]
        %v4093 = vld [vmem:[%s4085 + $0x1c] sm:$0xf]
        %v4102 = vunpack.c.l.b16 %v4086
        %v4103 = vunpack.c.l.b16 %v4087
        %v4104 = vunpack.c.l.b16 %v4088
        %v4105 = vunpack.c.l.b16 %v4089
        %v4106 = vunpack.c.l.b16 %v4090
        %v4107 = vunpack.c.l.b16 %v4091
        %v4108 = vunpack.c.l.b16 %v4092
        %v4109 = vunpack.c.l.b16 %v4093
        %v4110 = vpack.c.b16 %v4103, %v4102
        %v4111 = vpack.c.b16 %v4105, %v4104
        %v4112 = vpack.c.b16 %v4107, %v4106
        %v4113 = vpack.c.b16 %v4109, %v4108
        %4118 = vmatprep.subr.bf16.mxu0 0
        %4119 = vmatpush1.bf16.msra.mxu0 %v4110
        %4120 = vmatprep.subr.bf16.mxu0 0
        %4121 = vmatpush1.bf16.msra.mxu0 %v4111
        %4122 = vmatprep.subr.bf16.mxu0 0
        %4123 = vmatpush1.bf16.msra.mxu0 %v4112
        %4124 = vmatprep.subr.bf16.mxu0 0
        %4125 = vmatpush1.bf16.msra.mxu0 %v4113
        %4126 = vmatprep.subr.bf16.mxu0 0
        %4127 = vmatpush1.bf16.msra.mxu0 0
        %4128 = vmatprep.subr.bf16.mxu0 0
        %4129 = vmatpush1.bf16.msra.mxu0 0
        %4130 = vmatprep.subr.bf16.mxu0 0
        %4131 = vmatpush1.bf16.msra.mxu0 0
        %4132 = vmatprep.subr.bf16.mxu0 0
        %4133 = vmatpush1.bf16.msra.mxu0 0
        %4134 = vmatprep.subr.bf16.mxu0 0
        %4135 = vmatpush1.bf16.msra.mxu0 0
        %4136 = vmatprep.subr.bf16.mxu0 0
        %4137 = vmatpush1.bf16.msra.mxu0 0
        %4138 = vmatprep.subr.bf16.mxu0 0
        %4139 = vmatpush1.bf16.msra.mxu0 0
        %4140 = vmatprep.subr.bf16.mxu0 0
        %4141 = vmatpush1.bf16.msra.mxu0 0
        %4142 = vmatprep.subr.bf16.mxu0 0
        %4143 = vmatpush1.bf16.msra.mxu0 0
        %4144 = vmatprep.subr.bf16.mxu0 0
        %4145 = vmatpush1.bf16.msra.mxu0 0
        %4146 = vmatprep.subr.bf16.mxu0 0
        %4147 = vmatpush1.bf16.msra.mxu0 0
        %4148 = vmatprep.subr.bf16.mxu0 0
        %4149 = vmatpush1.bf16.msra.mxu0 0
        %4150 = vmatprep.mubr.bf16.mxu0 0
        %4151 = vmatmul.mubr.bf16.gmra.mrb[0].mxu0 %v637
        %v4152 = vpop.f32.mrb[0].mxu0
        %v4153 = vadd.f32 0.0, %v4152
        %v4154 = vpop.f32.mrb[0].mxu0
        %v4155 = vpop.f32.mrb[0].mxu0
        %v4156 = vpop.f32.mrb[0].mxu0
        %4157 = vdwg.mxu0
        %4158 = vst.msk [vmem:[#allocation3 + $0xbc] sm:$0xf] %vm679, %v4153
        %s4159 = scalar_lea.vmem %s5, 1536
        %v4160 = vld [vmem:[%s4159] sm:$0xf]
        %v4161 = vld [vmem:[%s4159 + $0x4] sm:$0xf]
        %v4162 = vld [vmem:[%s4159 + $0x8] sm:$0xf]
        %v4163 = vld [vmem:[%s4159 + $0xc] sm:$0xf]
        %v4164 = vld [vmem:[%s4159 + $0x10] sm:$0xf]
        %v4165 = vld [vmem:[%s4159 + $0x14] sm:$0xf]
        %v4166 = vld [vmem:[%s4159 + $0x18] sm:$0xf]
        %v4167 = vld [vmem:[%s4159 + $0x1c] sm:$0xf]
        %v4176 = vunpack.c.l.b16 %v4160
        %v4177 = vunpack.c.l.b16 %v4161
        %v4178 = vunpack.c.l.b16 %v4162
        %v4179 = vunpack.c.l.b16 %v4163
        %v4180 = vunpack.c.l.b16 %v4164
        %v4181 = vunpack.c.l.b16 %v4165
        %v4182 = vunpack.c.l.b16 %v4166
        %v4183 = vunpack.c.l.b16 %v4167
        %v4184 = vpack.c.b16 %v4177, %v4176
        %v4185 = vpack.c.b16 %v4179, %v4178
        %v4186 = vpack.c.b16 %v4181, %v4180
        %v4187 = vpack.c.b16 %v4183, %v4182
        %4192 = vmatprep.subr.bf16.mxu0 0
        %4193 = vmatpush1.bf16.msra.mxu0 %v4184
        %4194 = vmatprep.subr.bf16.mxu0 0
        %4195 = vmatpush1.bf16.msra.mxu0 %v4185
        %4196 = vmatprep.subr.bf16.mxu0 0
        %4197 = vmatpush1.bf16.msra.mxu0 %v4186
        %4198 = vmatprep.subr.bf16.mxu0 0
        %4199 = vmatpush1.bf16.msra.mxu0 %v4187
        %4200 = vmatprep.subr.bf16.mxu0 0
        %4201 = vmatpush1.bf16.msra.mxu0 0
        %4202 = vmatprep.subr.bf16.mxu0 0
        %4203 = vmatpush1.bf16.msra.mxu0 0
        %4204 = vmatprep.subr.bf16.mxu0 0
        %4205 = vmatpush1.bf16.msra.mxu0 0
        %4206 = vmatprep.subr.bf16.mxu0 0
        %4207 = vmatpush1.bf16.msra.mxu0 0
        %4208 = vmatprep.subr.bf16.mxu0 0
        %4209 = vmatpush1.bf16.msra.mxu0 0
        %4210 = vmatprep.subr.bf16.mxu0 0
        %4211 = vmatpush1.bf16.msra.mxu0 0
        %4212 = vmatprep.subr.bf16.mxu0 0
        %4213 = vmatpush1.bf16.msra.mxu0 0
        %4214 = vmatprep.subr.bf16.mxu0 0
        %4215 = vmatpush1.bf16.msra.mxu0 0
        %4216 = vmatprep.subr.bf16.mxu0 0
        %4217 = vmatpush1.bf16.msra.mxu0 0
        %4218 = vmatprep.subr.bf16.mxu0 0
        %4219 = vmatpush1.bf16.msra.mxu0 0
        %4220 = vmatprep.subr.bf16.mxu0 0
        %4221 = vmatpush1.bf16.msra.mxu0 0
        %4222 = vmatprep.subr.bf16.mxu0 0
        %4223 = vmatpush1.bf16.msra.mxu0 0
        %4224 = vmatprep.mubr.bf16.mxu0 0
        %4225 = vmatmul.mubr.bf16.gmra.mrb[0].mxu0 %v637
        %v4226 = vpop.f32.mrb[0].mxu0
        %v4227 = vadd.f32 0.0, %v4226
        %v4228 = vpop.f32.mrb[0].mxu0
        %v4229 = vpop.f32.mrb[0].mxu0
        %v4230 = vpop.f32.mrb[0].mxu0
        %4231 = vdwg.mxu0
        %4232 = vst.msk [vmem:[#allocation3 + $0xc0] sm:$0xf] %vm679, %v4227
        %v4233 = vld [vmem:[#allocation6] sm:$0xff]
        %v4234 = vld [vmem:[#allocation3] sm:$0xff]
        %v4235 = vld [vmem:[#allocation3 + $0x8] sm:$0xff]
        %v4236 = vld [vmem:[#allocation3 + $0x10] sm:$0xff]
        %v4237 = vld [vmem:[#allocation3 + $0x18] sm:$0xff]
        %v4238 = vld [vmem:[#allocation3 + $0x20] sm:$0xff]
        %v4239 = vld [vmem:[#allocation3 + $0x28] sm:$0xff]
        %v4240 = vld [vmem:[#allocation3 + $0x30] sm:$0xff]
        %v4241 = vld [vmem:[#allocation3 + $0x38] sm:$0xff]
        %v4242 = vld [vmem:[#allocation3 + $0x40] sm:$0xff]
        %v4243 = vld [vmem:[#allocation3 + $0x48] sm:$0xff]
        %v4244 = vld [vmem:[#allocation3 + $0x50] sm:$0xff]
        %v4245 = vld [vmem:[#allocation3 + $0x58] sm:$0xff]
        %v4246 = vld [vmem:[#allocation3 + $0x60] sm:$0xff]
        %v4247 = vld [vmem:[#allocation3 + $0x68] sm:$0xff]
        %v4248 = vld [vmem:[#allocation3 + $0x70] sm:$0xff]
        %v4249 = vld [vmem:[#allocation3 + $0x78] sm:$0xff]
        %v4250 = vld [vmem:[#allocation3 + $0x80] sm:$0xff]
        %v4251 = vld [vmem:[#allocation3 + $0x88] sm:$0xff]
        %v4252 = vld [vmem:[#allocation3 + $0x90] sm:$0xff]
        %v4253 = vld [vmem:[#allocation3 + $0x98] sm:$0xff]
        %v4254 = vld [vmem:[#allocation3 + $0xa0] sm:$0xff]
        %v4255 = vld [vmem:[#allocation3 + $0xa8] sm:$0xff]
        %v4256 = vld [vmem:[#allocation3 + $0xb0] sm:$0xff]
        %v4257 = vld [vmem:[#allocation3 + $0xb8] sm:$0xff]
        %v4258 = vld [vmem:[#allocation3 + $0xc0] sm:$0xf]
        %v4259 = vpack.c.bf16 %v4235, %v4234
        %v4260 = vpack.c.bf16 %v4237, %v4236
        %v4261 = vpack.c.bf16 %v4239, %v4238
        %v4262 = vpack.c.bf16 %v4241, %v4240
        %v4263 = vpack.c.bf16 %v4243, %v4242
        %v4264 = vpack.c.bf16 %v4245, %v4244
        %v4265 = vpack.c.bf16 %v4247, %v4246
        %v4266 = vpack.c.bf16 %v4249, %v4248
        %v4267 = vpack.c.bf16 %v4251, %v4250
        %v4268 = vpack.c.bf16 %v4253, %v4252
        %v4269 = vpack.c.bf16 %v4255, %v4254
        %v4270 = vpack.c.bf16 %v4257, %v4256
        %v4271 = vpack.c.bf16 %v4258, %v4258
        %v4273 = vunpack.c.l.b16 %v4233
        %v4274 = vunpack.c.h.b16 %v4233
        %v4275 = vpack.c.b16 %v4273, %v4273
        %v4276 = vpack.c.b16 %v4274, %v4274
        %vm4278 = vcmask 556032
        %v4280 = vsel %vm4278, %v4276, 0
        %vm4282 = vcmask 1041408
        %v4284 = vsel %vm4282, %v4271, 0
        %4286 = vmatprep.subr.bf16.mxu0 0
        %4287 = vmatpush1.bf16.msra.mxu0 %v4259
        %4288 = vmatprep.subr.bf16.mxu0 0
        %4289 = vmatpush1.bf16.msra.mxu0 %v4260
        %4290 = vmatprep.subr.bf16.mxu0 0
        %4291 = vmatpush1.bf16.msra.mxu0 %v4261
        %4292 = vmatprep.subr.bf16.mxu0 0
        %4293 = vmatpush1.bf16.msra.mxu0 %v4262
        %4294 = vmatprep.subr.bf16.mxu0 0
        %4295 = vmatpush1.bf16.msra.mxu0 %v4263
        %4296 = vmatprep.subr.bf16.mxu0 0
        %4297 = vmatpush1.bf16.msra.mxu0 %v4264
        %4298 = vmatprep.subr.bf16.mxu0 0
        %4299 = vmatpush1.bf16.msra.mxu0 %v4265
        %4300 = vmatprep.subr.bf16.mxu0 0
        %4301 = vmatpush1.bf16.msra.mxu0 %v4266
        %4302 = vmatprep.subr.bf16.mxu0 0
        %4303 = vmatpush1.bf16.msra.mxu0 %v4267
        %4304 = vmatprep.subr.bf16.mxu0 0
        %4305 = vmatpush1.bf16.msra.mxu0 %v4268
        %4306 = vmatprep.subr.bf16.mxu0 0
        %4307 = vmatpush1.bf16.msra.mxu0 %v4269
        %4308 = vmatprep.subr.bf16.mxu0 0
        %4309 = vmatpush1.bf16.msra.mxu0 %v4270
        %4310 = vmatprep.subr.bf16.mxu0 0
        %4311 = vmatpush1.bf16.msra.mxu0 %v4284
        %4312 = vmatprep.subr.bf16.mxu0 0
        %4313 = vmatpush1.bf16.msra.mxu0 0
        %4314 = vmatprep.subr.bf16.mxu0 0
        %4315 = vmatpush1.bf16.msra.mxu0 0
        %4316 = vmatprep.subr.bf16.mxu0 0
        %4317 = vmatpush1.bf16.msra.mxu0 0
        %4318 = vmatprep.mubr.bf16.mxu0 %v4280
        %4319 = vmatmul.mubr.bf16.gmra.mrb[0].mxu0 %v4275
        %v4320 = vpop.f32.mrb[0].mxu0
        %v4321 = vadd.f32 0.0, %v4320
        %v4322 = vpop.f32.mrb[0].mxu0
        %v4323 = vpop.f32.mrb[0].mxu0
        %v4324 = vpop.f32.mrb[0].mxu0
        %4325 = vdwg.mxu0
        %4327 = vset.pattern.permute.xlu0 0
        %4328 = vperm.xlu0 %4327, %v574
        %v4329 = vpop.permute.xlu0 %4328
        %v4331 = vmul.f32 %v4321, %v4329
        %4332 = vset.pattern.permute.xlu0 1
        %4333 = vperm.xlu0 %4332, %v574
        %v4334 = vpop.permute.xlu0 %4333
        %v4336 = vadd.f32 %v4331, %v4334
        %v4337 = vmax.f32 %v4336, 0.0
        %v4338 = vld [vmem:[%s10] sm:$0xff]
        %v4339 = vld [vmem:[%s10 + $0x8] sm:$0xff]
        %v4340 = vld [vmem:[%s10 + $0x10] sm:$0xff]
        %v4341 = vld [vmem:[%s10 + $0x18] sm:$0xff]
        %v4342 = vld [vmem:[%s10 + $0x20] sm:$0xff]
        %v4343 = vld [vmem:[%s10 + $0x28] sm:$0xff]
        %v4344 = vld [vmem:[%s10 + $0x30] sm:$0xff]
        %v4345 = vld [vmem:[%s10 + $0x38] sm:$0xff]
        %v4346 = vld [vmem:[%s10 + $0x40] sm:$0xff]
        %v4347 = vld [vmem:[%s10 + $0x48] sm:$0xff]
        %v4348 = vld [vmem:[%s10 + $0x50] sm:$0xff]
        %v4349 = vld [vmem:[%s10 + $0x58] sm:$0xff]
        %v4350 = vld [vmem:[%s10 + $0x60] sm:$0xff]
        %v4351 = vld [vmem:[%s10 + $0x68] sm:$0xff]
        %v4352 = vld [vmem:[%s10 + $0x70] sm:$0xff]
        %v4353 = vld [vmem:[%s10 + $0x78] sm:$0xff]
        %v4354 = vld [vmem:[%s10 + $0x80] sm:$0xff]
        %v4355 = vld [vmem:[%s10 + $0x88] sm:$0xff]
        %v4356 = vld [vmem:[%s10 + $0x90] sm:$0xff]
        %v4357 = vld [vmem:[%s10 + $0x98] sm:$0xff]
        %v4358 = vld [vmem:[%s10 + $0xa0] sm:$0xff]
        %v4359 = vld [vmem:[%s10 + $0xa8] sm:$0xff]
        %v4360 = vld [vmem:[%s10 + $0xb0] sm:$0xff]
        %v4361 = vld [vmem:[%s10 + $0xb8] sm:$0xff]
        %v4362 = vld [vmem:[%s10 + $0xc0] sm:$0xff]
        %v4363 = vld [vmem:[%s10 + $0xc8] sm:$0xff]
        %v4364 = vld [vmem:[%s10 + $0xd0] sm:$0xff]
        %v4365 = vld [vmem:[%s10 + $0xd8] sm:$0xff]
        %v4366 = vld [vmem:[%s10 + $0xe0] sm:$0xff]
        %v4367 = vld [vmem:[%s10 + $0xe8] sm:$0xff]
        %v4368 = vld [vmem:[%s10 + $0xf0] sm:$0xff]
        %v4369 = vld [vmem:[%s10 + $0xf8] sm:$0xff]
        %v4370 = vld [vmem:[%s10 + $0x100] sm:$0xff]
        %v4371 = vld [vmem:[%s10 + $0x108] sm:$0xff]
        %v4372 = vld [vmem:[%s10 + $0x110] sm:$0xff]
        %v4373 = vld [vmem:[%s10 + $0x118] sm:$0xff]
        %v4374 = vld [vmem:[%s560] sm:$0xf]
        %v4375 = vld [vmem:[%s560 + $0x4] sm:$0xf]
        %v4376 = vld [vmem:[%s560 + $0x8] sm:$0xf]
        %v4377 = vld [vmem:[%s560 + $0xc] sm:$0xf]
        %v4378 = vld [vmem:[%s560 + $0x10] sm:$0xf]
        %v4379 = vld [vmem:[%s560 + $0x14] sm:$0xf]
        %v4380 = vld [vmem:[%s560 + $0x18] sm:$0xf]
        %v4381 = vld [vmem:[%s560 + $0x1c] sm:$0xf]
        %v4382 = vld [vmem:[%s560 + $0x20] sm:$0xf]
        %v4383 = vld [vmem:[%s560 + $0x24] sm:$0xf]
        %v4384 = vld [vmem:[%s560 + $0x28] sm:$0xf]
        %v4385 = vld [vmem:[%s560 + $0x2c] sm:$0xf]
        %v4386 = vld [vmem:[%s560 + $0x30] sm:$0xf]
        %v4387 = vld [vmem:[%s560 + $0x34] sm:$0xf]
        %v4388 = vld [vmem:[%s560 + $0x38] sm:$0xf]
        %v4389 = vld [vmem:[%s560 + $0x3c] sm:$0xf]
        %v4390 = vld [vmem:[%s560 + $0x40] sm:$0xf]
        %v4391 = vld [vmem:[%s560 + $0x44] sm:$0xf]
        %v4392 = vld [vmem:[%s560 + $0x48] sm:$0xf]
        %v4393 = vld [vmem:[%s560 + $0x4c] sm:$0xf]
        %v4394 = vld [vmem:[%s560 + $0x50] sm:$0xf]
        %v4395 = vld [vmem:[%s560 + $0x54] sm:$0xf]
        %v4396 = vld [vmem:[%s560 + $0x58] sm:$0xf]
        %v4397 = vld [vmem:[%s560 + $0x5c] sm:$0xf]
        %v4398 = vld [vmem:[%s560 + $0x60] sm:$0xf]
        %v4399 = vld [vmem:[%s560 + $0x64] sm:$0xf]
        %v4400 = vld [vmem:[%s560 + $0x68] sm:$0xf]
        %v4401 = vld [vmem:[%s560 + $0x6c] sm:$0xf]
        %v4402 = vld [vmem:[%s560 + $0x70] sm:$0xf]
        %v4403 = vld [vmem:[%s560 + $0x74] sm:$0xf]
        %v4404 = vld [vmem:[%s560 + $0x78] sm:$0xf]
        %v4405 = vld [vmem:[%s560 + $0x7c] sm:$0xf]
        %v4406 = vld [vmem:[%s560 + $0x80] sm:$0xf]
        %v4407 = vld [vmem:[%s560 + $0x84] sm:$0xf]
        %v4408 = vld [vmem:[%s560 + $0x88] sm:$0xf]
        %v4409 = vld [vmem:[%s560 + $0x8c] sm:$0xf]
        %v4410 = vld [vmem:[%s560 + $0x90] sm:$0xf]
        %v4411 = vld [vmem:[%s560 + $0x94] sm:$0xf]
        %v4412 = vld [vmem:[%s560 + $0x98] sm:$0xf]
        %v4413 = vld [vmem:[%s560 + $0x9c] sm:$0xf]
        %v4414 = vld [vmem:[%s560 + $0xa0] sm:$0xf]
        %v4415 = vld [vmem:[%s560 + $0xa4] sm:$0xf]
        %v4416 = vld [vmem:[%s560 + $0xa8] sm:$0xf]
        %v4417 = vld [vmem:[%s560 + $0xac] sm:$0xf]
        %v4418 = vld [vmem:[%s560 + $0xb0] sm:$0xf]
        %v4419 = vld [vmem:[%s560 + $0xb4] sm:$0xf]
        %v4420 = vld [vmem:[%s560 + $0xb8] sm:$0xf]
        %v4421 = vld [vmem:[%s560 + $0xbc] sm:$0xf]
        %v4422 = vld [vmem:[%s560 + $0xc0] sm:$0xf]
        %v4423 = vld [vmem:[%s560 + $0xc4] sm:$0xf]
        %v4424 = vld [vmem:[%s560 + $0xc8] sm:$0xf]
        %v4425 = vld [vmem:[%s560 + $0xcc] sm:$0xf]
        %v4426 = vld [vmem:[%s560 + $0xd0] sm:$0xf]
        %v4427 = vld [vmem:[%s560 + $0xd4] sm:$0xf]
        %v4428 = vld [vmem:[%s560 + $0xd8] sm:$0xf]
        %v4429 = vld [vmem:[%s560 + $0xdc] sm:$0xf]
        %v4430 = vld [vmem:[%s560 + $0xe0] sm:$0xf]
        %v4431 = vld [vmem:[%s560 + $0xe4] sm:$0xf]
        %v4432 = vld [vmem:[%s560 + $0xe8] sm:$0xf]
        %v4433 = vld [vmem:[%s560 + $0xec] sm:$0xf]
        %v4434 = vld [vmem:[%s560 + $0xf0] sm:$0xf]
        %v4435 = vld [vmem:[%s560 + $0xf4] sm:$0xf]
        %v4436 = vld [vmem:[%s560 + $0xf8] sm:$0xf]
        %v4437 = vld [vmem:[%s560 + $0xfc] sm:$0xf]
        %v4474 = vunpack.c.l.b16 %v4338
        %v4475 = vunpack.c.h.b16 %v4338
        %v4476 = vunpack.c.l.b16 %v4339
        %v4477 = vunpack.c.h.b16 %v4339
        %v4478 = vunpack.c.l.b16 %v4340
        %v4479 = vunpack.c.h.b16 %v4340
        %v4480 = vunpack.c.l.b16 %v4341
        %v4481 = vunpack.c.h.b16 %v4341
        %v4482 = vunpack.c.l.b16 %v4342
        %v4483 = vunpack.c.h.b16 %v4342
        %v4484 = vunpack.c.l.b16 %v4343
        %v4485 = vunpack.c.h.b16 %v4343
        %v4486 = vunpack.c.l.b16 %v4344
        %v4487 = vunpack.c.h.b16 %v4344
        %v4488 = vunpack.c.l.b16 %v4345
        %v4489 = vunpack.c.h.b16 %v4345
        %v4490 = vunpack.c.l.b16 %v4346
        %v4491 = vunpack.c.h.b16 %v4346
        %v4492 = vunpack.c.l.b16 %v4347
        %v4493 = vunpack.c.h.b16 %v4347
        %v4494 = vunpack.c.l.b16 %v4348
        %v4495 = vunpack.c.h.b16 %v4348
        %v4496 = vunpack.c.l.b16 %v4349
        %v4497 = vunpack.c.h.b16 %v4349
        %v4498 = vunpack.c.l.b16 %v4350
        %v4499 = vunpack.c.h.b16 %v4350
        %v4500 = vunpack.c.l.b16 %v4351
        %v4501 = vunpack.c.h.b16 %v4351
        %v4502 = vunpack.c.l.b16 %v4352
        %v4503 = vunpack.c.h.b16 %v4352
        %v4504 = vunpack.c.l.b16 %v4353
        %v4505 = vunpack.c.h.b16 %v4353
        %v4506 = vunpack.c.l.b16 %v4354
        %v4507 = vunpack.c.h.b16 %v4354
        %v4508 = vunpack.c.l.b16 %v4355
        %v4509 = vunpack.c.h.b16 %v4355
        %v4510 = vunpack.c.l.b16 %v4356
        %v4511 = vunpack.c.h.b16 %v4356
        %v4512 = vunpack.c.l.b16 %v4357
        %v4513 = vunpack.c.h.b16 %v4357
        %v4514 = vunpack.c.l.b16 %v4358
        %v4515 = vunpack.c.h.b16 %v4358
        %v4516 = vunpack.c.l.b16 %v4359
        %v4517 = vunpack.c.h.b16 %v4359
        %v4518 = vunpack.c.l.b16 %v4360
        %v4519 = vunpack.c.h.b16 %v4360
        %v4520 = vunpack.c.l.b16 %v4361
        %v4521 = vunpack.c.h.b16 %v4361
        %v4522 = vunpack.c.l.b16 %v4362
        %v4523 = vunpack.c.h.b16 %v4362
        %v4524 = vunpack.c.l.b16 %v4363
        %v4525 = vunpack.c.h.b16 %v4363
        %v4526 = vunpack.c.l.b16 %v4364
        %v4527 = vunpack.c.h.b16 %v4364
        %v4528 = vunpack.c.l.b16 %v4365
        %v4529 = vunpack.c.h.b16 %v4365
        %v4530 = vunpack.c.l.b16 %v4366
        %v4531 = vunpack.c.h.b16 %v4366
        %v4532 = vunpack.c.l.b16 %v4367
        %v4533 = vunpack.c.h.b16 %v4367
        %v4534 = vunpack.c.l.b16 %v4368
        %v4535 = vunpack.c.h.b16 %v4368
        %v4536 = vunpack.c.l.b16 %v4369
        %v4537 = vunpack.c.h.b16 %v4369
        %v4538 = vunpack.c.l.b16 %v4370
        %v4539 = vunpack.c.h.b16 %v4370
        %v4540 = vunpack.c.l.b16 %v4371
        %v4541 = vunpack.c.h.b16 %v4371
        %v4542 = vunpack.c.l.b16 %v4372
        %v4543 = vunpack.c.h.b16 %v4372
        %v4544 = vunpack.c.l.b16 %v4373
        %v4545 = vunpack.c.h.b16 %v4373
        %v4546 = vpack.c.b16 %v4478, %v4474
        %v4547 = vpack.c.b16 %v4479, %v4475
        %v4548 = vpack.c.b16 %v4480, %v4476
        %v4549 = vpack.c.b16 %v4481, %v4477
        %v4550 = vpack.c.b16 %v4486, %v4482
        %v4551 = vpack.c.b16 %v4487, %v4483
        %v4552 = vpack.c.b16 %v4488, %v4484
        %v4553 = vpack.c.b16 %v4489, %v4485
        %v4554 = vpack.c.b16 %v4494, %v4490
        %v4555 = vpack.c.b16 %v4495, %v4491
        %v4556 = vpack.c.b16 %v4496, %v4492
        %v4557 = vpack.c.b16 %v4497, %v4493
        %v4558 = vpack.c.b16 %v4502, %v4498
        %v4559 = vpack.c.b16 %v4503, %v4499
        %v4560 = vpack.c.b16 %v4504, %v4500
        %v4561 = vpack.c.b16 %v4505, %v4501
        %v4562 = vpack.c.b16 %v4510, %v4506
        %v4563 = vpack.c.b16 %v4511, %v4507
        %v4564 = vpack.c.b16 %v4512, %v4508
        %v4565 = vpack.c.b16 %v4513, %v4509
        %v4566 = vpack.c.b16 %v4518, %v4514
        %v4567 = vpack.c.b16 %v4519, %v4515
        %v4568 = vpack.c.b16 %v4520, %v4516
        %v4569 = vpack.c.b16 %v4521, %v4517
        %v4570 = vpack.c.b16 %v4526, %v4522
        %v4571 = vpack.c.b16 %v4527, %v4523
        %v4572 = vpack.c.b16 %v4528, %v4524
        %v4573 = vpack.c.b16 %v4529, %v4525
        %v4574 = vpack.c.b16 %v4534, %v4530
        %v4575 = vpack.c.b16 %v4535, %v4531
        %v4576 = vpack.c.b16 %v4536, %v4532
        %v4577 = vpack.c.b16 %v4537, %v4533
        %v4578 = vpack.c.b16 %v4542, %v4538
        %v4579 = vpack.c.b16 %v4543, %v4539
        %v4580 = vpack.c.b16 %v4544, %v4540
        %v4581 = vpack.c.b16 %v4545, %v4541
        %v4682 = vunpack.c.l.b16 %v4374
        %v4683 = vunpack.c.l.b16 %v4375
        %v4684 = vunpack.c.l.b16 %v4376
        %v4685 = vunpack.c.l.b16 %v4377
        %v4686 = vunpack.c.l.b16 %v4378
        %v4687 = vunpack.c.l.b16 %v4379
        %v4688 = vunpack.c.l.b16 %v4380
        %v4689 = vunpack.c.l.b16 %v4381
        %v4690 = vunpack.c.l.b16 %v4382
        %v4691 = vunpack.c.l.b16 %v4383
        %v4692 = vunpack.c.l.b16 %v4384
        %v4693 = vunpack.c.l.b16 %v4385
        %v4694 = vunpack.c.l.b16 %v4386
        %v4695 = vunpack.c.l.b16 %v4387
        %v4696 = vunpack.c.l.b16 %v4388
        %v4697 = vunpack.c.l.b16 %v4389
        %v4698 = vunpack.c.l.b16 %v4390
        %v4699 = vunpack.c.l.b16 %v4391
        %v4700 = vunpack.c.l.b16 %v4392
        %v4701 = vunpack.c.l.b16 %v4393
        %v4702 = vunpack.c.l.b16 %v4394
        %v4703 = vunpack.c.l.b16 %v4395
        %v4704 = vunpack.c.l.b16 %v4396
        %v4705 = vunpack.c.l.b16 %v4397
        %v4706 = vunpack.c.l.b16 %v4398
        %v4707 = vunpack.c.l.b16 %v4399
        %v4708 = vunpack.c.l.b16 %v4400
        %v4709 = vunpack.c.l.b16 %v4401
        %v4710 = vunpack.c.l.b16 %v4402
        %v4711 = vunpack.c.l.b16 %v4403
        %v4712 = vunpack.c.l.b16 %v4404
        %v4713 = vunpack.c.l.b16 %v4405
        %v4714 = vunpack.c.l.b16 %v4406
        %v4715 = vunpack.c.l.b16 %v4407
        %v4716 = vunpack.c.l.b16 %v4408
        %v4717 = vunpack.c.l.b16 %v4409
        %v4718 = vunpack.c.l.b16 %v4410
        %v4719 = vunpack.c.l.b16 %v4411
        %v4720 = vunpack.c.l.b16 %v4412
        %v4721 = vunpack.c.l.b16 %v4413
        %v4722 = vunpack.c.l.b16 %v4414
        %v4723 = vunpack.c.l.b16 %v4415
        %v4724 = vunpack.c.l.b16 %v4416
        %v4725 = vunpack.c.l.b16 %v4417
        %v4726 = vunpack.c.l.b16 %v4418
        %v4727 = vunpack.c.l.b16 %v4419
        %v4728 = vunpack.c.l.b16 %v4420
        %v4729 = vunpack.c.l.b16 %v4421
        %v4730 = vunpack.c.l.b16 %v4422
        %v4731 = vunpack.c.l.b16 %v4423
        %v4732 = vunpack.c.l.b16 %v4424
        %v4733 = vunpack.c.l.b16 %v4425
        %v4734 = vunpack.c.l.b16 %v4426
        %v4735 = vunpack.c.l.b16 %v4427
        %v4736 = vunpack.c.l.b16 %v4428
        %v4737 = vunpack.c.l.b16 %v4429
        %v4738 = vunpack.c.l.b16 %v4430
        %v4739 = vunpack.c.l.b16 %v4431
        %v4740 = vunpack.c.l.b16 %v4432
        %v4741 = vunpack.c.l.b16 %v4433
        %v4742 = vunpack.c.l.b16 %v4434
        %v4743 = vunpack.c.l.b16 %v4435
        %v4744 = vunpack.c.l.b16 %v4436
        %v4745 = vunpack.c.l.b16 %v4437
        %v4746 = vpack.c.b16 %v4683, %v4682
        %v4747 = vpack.c.b16 %v4685, %v4684
        %v4748 = vpack.c.b16 %v4687, %v4686
        %v4749 = vpack.c.b16 %v4689, %v4688
        %v4750 = vpack.c.b16 %v4691, %v4690
        %v4751 = vpack.c.b16 %v4693, %v4692
        %v4752 = vpack.c.b16 %v4695, %v4694
        %v4753 = vpack.c.b16 %v4697, %v4696
        %v4754 = vpack.c.b16 %v4699, %v4698
        %v4755 = vpack.c.b16 %v4701, %v4700
        %v4756 = vpack.c.b16 %v4703, %v4702
        %v4757 = vpack.c.b16 %v4705, %v4704
        %v4758 = vpack.c.b16 %v4707, %v4706
        %v4759 = vpack.c.b16 %v4709, %v4708
        %v4760 = vpack.c.b16 %v4711, %v4710
        %v4761 = vpack.c.b16 %v4713, %v4712
        %v4762 = vpack.c.b16 %v4715, %v4714
        %v4763 = vpack.c.b16 %v4717, %v4716
        %v4764 = vpack.c.b16 %v4719, %v4718
        %v4765 = vpack.c.b16 %v4721, %v4720
        %v4766 = vpack.c.b16 %v4723, %v4722
        %v4767 = vpack.c.b16 %v4725, %v4724
        %v4768 = vpack.c.b16 %v4727, %v4726
        %v4769 = vpack.c.b16 %v4729, %v4728
        %v4770 = vpack.c.b16 %v4731, %v4730
        %v4771 = vpack.c.b16 %v4733, %v4732
        %v4772 = vpack.c.b16 %v4735, %v4734
        %v4773 = vpack.c.b16 %v4737, %v4736
        %v4774 = vpack.c.b16 %v4739, %v4738
        %v4775 = vpack.c.b16 %v4741, %v4740
        %v4776 = vpack.c.b16 %v4743, %v4742
        %v4777 = vpack.c.b16 %v4745, %v4744
        %4810 = vmatprep.subr.bf16.mxu0 0
        %4811 = vmatpush1.bf16.msra.mxu0 %v4746
        %4812 = vmatprep.subr.bf16.mxu0 0
        %4813 = vmatpush1.bf16.msra.mxu0 %v4747
        %4814 = vmatprep.subr.bf16.mxu0 0
        %4815 = vmatpush1.bf16.msra.mxu0 %v4748
        %4816 = vmatprep.subr.bf16.mxu0 0
        %4817 = vmatpush1.bf16.msra.mxu0 %v4749
        %4818 = vmatprep.subr.bf16.mxu0 0
        %4819 = vmatpush1.bf16.msra.mxu0 %v4750
        %4820 = vmatprep.subr.bf16.mxu0 0
        %4821 = vmatpush1.bf16.msra.mxu0 %v4751
        %4822 = vmatprep.subr.bf16.mxu0 0
        %4823 = vmatpush1.bf16.msra.mxu0 %v4752
        %4824 = vmatprep.subr.bf16.mxu0 0
        %4825 = vmatpush1.bf16.msra.mxu0 %v4753
        %4826 = vmatprep.subr.bf16.mxu0 0
        %4827 = vmatpush1.bf16.msra.mxu0 %v4754
        %4828 = vmatprep.subr.bf16.mxu0 0
        %4829 = vmatpush1.bf16.msra.mxu0 %v4755
        %4830 = vmatprep.subr.bf16.mxu0 0
        %4831 = vmatpush1.bf16.msra.mxu0 %v4756
        %4832 = vmatprep.subr.bf16.mxu0 0
        %4833 = vmatpush1.bf16.msra.mxu0 %v4757
        %4834 = vmatprep.subr.bf16.mxu0 0
        %4835 = vmatpush1.bf16.msra.mxu0 %v4758
        %4836 = vmatprep.subr.bf16.mxu0 0
        %4837 = vmatpush1.bf16.msra.mxu0 %v4759
        %4838 = vmatprep.subr.bf16.mxu0 0
        %4839 = vmatpush1.bf16.msra.mxu0 %v4760
        %4840 = vmatprep.subr.bf16.mxu0 0
        %4841 = vmatpush1.bf16.msra.mxu0 %v4761
        %4842 = vmatprep.mubr.bf16.mxu0 %v4547
        %4843 = vmatmul.mubr.bf16.gmra.mrb[0].mxu0 %v4546
        %v4844 = vpop.f32.mrb[0].mxu0
        %v4845 = vadd.f32 0.0, %v4844
        %v4846 = vpop.f32.mrb[0].mxu0
        %v4847 = vpop.f32.mrb[0].mxu0
        %v4848 = vadd.f32 0.0, %v4847
        %v4849 = vpop.f32.mrb[0].mxu0
        %4850 = vmatprep.mubr.bf16.mxu0 %v4551
        %4851 = vmatmul.mubr.bf16.gmra.mrb[0].mxu0 %v4550
        %v4852 = vpop.f32.mrb[0].mxu0
        %v4853 = vadd.f32 0.0, %v4852
        %v4854 = vpop.f32.mrb[0].mxu0
        %v4855 = vpop.f32.mrb[0].mxu0
        %v4856 = vadd.f32 0.0, %v4855
        %v4857 = vpop.f32.mrb[0].mxu0
        %4858 = vmatprep.mubr.bf16.mxu0 %v4555
        %4859 = vmatmul.mubr.bf16.gmra.mrb[0].mxu0 %v4554
        %v4860 = vpop.f32.mrb[0].mxu0
        %v4861 = vadd.f32 0.0, %v4860
        %v4862 = vpop.f32.mrb[0].mxu0
        %v4863 = vpop.f32.mrb[0].mxu0
        %v4864 = vadd.f32 0.0, %v4863
        %v4865 = vpop.f32.mrb[0].mxu0
        %4866 = vmatprep.mubr.bf16.mxu0 %v4559
        %4867 = vmatmul.mubr.bf16.gmra.mrb[0].mxu0 %v4558
        %v4868 = vpop.f32.mrb[0].mxu0
        %v4869 = vadd.f32 0.0, %v4868
        %v4870 = vpop.f32.mrb[0].mxu0
        %v4871 = vpop.f32.mrb[0].mxu0
        %v4872 = vadd.f32 0.0, %v4871
        %v4873 = vpop.f32.mrb[0].mxu0
        %4874 = vmatprep.mubr.bf16.mxu0 %v4563
        %4875 = vmatmul.mubr.bf16.gmra.mrb[0].mxu0 %v4562
        %v4876 = vpop.f32.mrb[0].mxu0
        %v4877 = vadd.f32 0.0, %v4876
        %v4878 = vpop.f32.mrb[0].mxu0
        %v4879 = vpop.f32.mrb[0].mxu0
        %v4880 = vadd.f32 0.0, %v4879
        %v4881 = vpop.f32.mrb[0].mxu0
        %4882 = vmatprep.mubr.bf16.mxu0 %v4567
        %4883 = vmatmul.mubr.bf16.gmra.mrb[0].mxu0 %v4566
        %v4884 = vpop.f32.mrb[0].mxu0
        %v4885 = vadd.f32 0.0, %v4884
        %v4886 = vpop.f32.mrb[0].mxu0
        %v4887 = vpop.f32.mrb[0].mxu0
        %v4888 = vadd.f32 0.0, %v4887
        %v4889 = vpop.f32.mrb[0].mxu0
        %4890 = vmatprep.mubr.bf16.mxu0 %v4571
        %4891 = vmatmul.mubr.bf16.gmra.mrb[0].mxu0 %v4570
        %v4892 = vpop.f32.mrb[0].mxu0
        %v4893 = vadd.f32 0.0, %v4892
        %v4894 = vpop.f32.mrb[0].mxu0
        %v4895 = vpop.f32.mrb[0].mxu0
        %v4896 = vadd.f32 0.0, %v4895
        %v4897 = vpop.f32.mrb[0].mxu0
        %4898 = vmatprep.mubr.bf16.mxu0 %v4575
        %4899 = vmatmul.mubr.bf16.gmra.mrb[0].mxu0 %v4574
        %v4900 = vpop.f32.mrb[0].mxu0
        %v4901 = vadd.f32 0.0, %v4900
        %v4902 = vpop.f32.mrb[0].mxu0
        %v4903 = vpop.f32.mrb[0].mxu0
        %v4904 = vadd.f32 0.0, %v4903
        %v4905 = vpop.f32.mrb[0].mxu0
        %4906 = vmatprep.mubr.bf16.mxu0 %v4579
        %4907 = vmatmul.mubr.bf16.gmra.mrb[0].mxu0 %v4578
        %v4908 = vpop.f32.mrb[0].mxu0
        %v4909 = vadd.f32 0.0, %v4908
        %v4910 = vpop.f32.mrb[0].mxu0
        %v4911 = vpop.f32.mrb[0].mxu0
        %v4912 = vadd.f32 0.0, %v4911
        %v4913 = vpop.f32.mrb[0].mxu0
        %4914 = vdwg.mxu0
        %4915 = vmatprep.subr.bf16.mxu0 0
        %4916 = vmatpush1.bf16.msra.mxu0 %v4762
        %4917 = vmatprep.subr.bf16.mxu0 0
        %4918 = vmatpush1.bf16.msra.mxu0 %v4763
        %4919 = vmatprep.subr.bf16.mxu0 0
        %4920 = vmatpush1.bf16.msra.mxu0 %v4764
        %4921 = vmatprep.subr.bf16.mxu0 0
        %4922 = vmatpush1.bf16.msra.mxu0 %v4765
        %4923 = vmatprep.subr.bf16.mxu0 0
        %4924 = vmatpush1.bf16.msra.mxu0 %v4766
        %4925 = vmatprep.subr.bf16.mxu0 0
        %4926 = vmatpush1.bf16.msra.mxu0 %v4767
        %4927 = vmatprep.subr.bf16.mxu0 0
        %4928 = vmatpush1.bf16.msra.mxu0 %v4768
        %4929 = vmatprep.subr.bf16.mxu0 0
        %4930 = vmatpush1.bf16.msra.mxu0 %v4769
        %4931 = vmatprep.subr.bf16.mxu0 0
        %4932 = vmatpush1.bf16.msra.mxu0 %v4770
        %4933 = vmatprep.subr.bf16.mxu0 0
        %4934 = vmatpush1.bf16.msra.mxu0 %v4771
        %4935 = vmatprep.subr.bf16.mxu0 0
        %4936 = vmatpush1.bf16.msra.mxu0 %v4772
        %4937 = vmatprep.subr.bf16.mxu0 0
        %4938 = vmatpush1.bf16.msra.mxu0 %v4773
        %4939 = vmatprep.subr.bf16.mxu0 0
        %4940 = vmatpush1.bf16.msra.mxu0 %v4774
        %4941 = vmatprep.subr.bf16.mxu0 0
        %4942 = vmatpush1.bf16.msra.mxu0 %v4775
        %4943 = vmatprep.subr.bf16.mxu0 0
        %4944 = vmatpush1.bf16.msra.mxu0 %v4776
        %4945 = vmatprep.subr.bf16.mxu0 0
        %4946 = vmatpush1.bf16.msra.mxu0 %v4777
        %4947 = vmatprep.mubr.bf16.mxu0 %v4549
        %4948 = vmatmul.mubr.bf16.gmra.mrb[0].mxu0 %v4548
        %v4949 = vpop.f32.mrb[0].mxu0
        %v4950 = vadd.f32 %v4845, %v4949
        %v4951 = vpop.f32.mrb[0].mxu0
        %v4952 = vpop.f32.mrb[0].mxu0
        %v4953 = vadd.f32 %v4848, %v4952
        %v4954 = vpop.f32.mrb[0].mxu0
        %4955 = vmatprep.mubr.bf16.mxu0 %v4553
        %4956 = vmatmul.mubr.bf16.gmra.mrb[0].mxu0 %v4552
        %v4957 = vpop.f32.mrb[0].mxu0
        %v4958 = vadd.f32 %v4853, %v4957
        %v4959 = vpop.f32.mrb[0].mxu0
        %v4960 = vpop.f32.mrb[0].mxu0
        %v4961 = vadd.f32 %v4856, %v4960
        %v4962 = vpop.f32.mrb[0].mxu0
        %4963 = vmatprep.mubr.bf16.mxu0 %v4557
        %4964 = vmatmul.mubr.bf16.gmra.mrb[0].mxu0 %v4556
        %v4965 = vpop.f32.mrb[0].mxu0
        %v4966 = vadd.f32 %v4861, %v4965
        %v4967 = vpop.f32.mrb[0].mxu0
        %v4968 = vpop.f32.mrb[0].mxu0
        %v4969 = vadd.f32 %v4864, %v4968
        %v4970 = vpop.f32.mrb[0].mxu0
        %4971 = vmatprep.mubr.bf16.mxu0 %v4561
        %4972 = vmatmul.mubr.bf16.gmra.mrb[0].mxu0 %v4560
        %v4973 = vpop.f32.mrb[0].mxu0
        %v4974 = vadd.f32 %v4869, %v4973
        %v4975 = vpop.f32.mrb[0].mxu0
        %v4976 = vpop.f32.mrb[0].mxu0
        %v4977 = vadd.f32 %v4872, %v4976
        %v4978 = vpop.f32.mrb[0].mxu0
        %4979 = vmatprep.mubr.bf16.mxu0 %v4565
        %4980 = vmatmul.mubr.bf16.gmra.mrb[0].mxu0 %v4564
        %v4981 = vpop.f32.mrb[0].mxu0
        %v4982 = vadd.f32 %v4877, %v4981
        %v4983 = vpop.f32.mrb[0].mxu0
        %v4984 = vpop.f32.mrb[0].mxu0
        %v4985 = vadd.f32 %v4880, %v4984
        %v4986 = vpop.f32.mrb[0].mxu0
        %4987 = vmatprep.mubr.bf16.mxu0 %v4569
        %4988 = vmatmul.mubr.bf16.gmra.mrb[0].mxu0 %v4568
        %v4989 = vpop.f32.mrb[0].mxu0
        %v4990 = vadd.f32 %v4885, %v4989
        %v4991 = vpop.f32.mrb[0].mxu0
        %v4992 = vpop.f32.mrb[0].mxu0
        %v4993 = vadd.f32 %v4888, %v4992
        %v4994 = vpop.f32.mrb[0].mxu0
        %4995 = vmatprep.mubr.bf16.mxu0 %v4573
        %4996 = vmatmul.mubr.bf16.gmra.mrb[0].mxu0 %v4572
        %v4997 = vpop.f32.mrb[0].mxu0
        %v4998 = vadd.f32 %v4893, %v4997
        %v4999 = vpop.f32.mrb[0].mxu0
        %v5000 = vpop.f32.mrb[0].mxu0
        %v5001 = vadd.f32 %v4896, %v5000
        %v5002 = vpop.f32.mrb[0].mxu0
        %5003 = vmatprep.mubr.bf16.mxu0 %v4577
        %5004 = vmatmul.mubr.bf16.gmra.mrb[0].mxu0 %v4576
        %v5005 = vpop.f32.mrb[0].mxu0
        %v5006 = vadd.f32 %v4901, %v5005
        %v5007 = vpop.f32.mrb[0].mxu0
        %v5008 = vpop.f32.mrb[0].mxu0
        %v5009 = vadd.f32 %v4904, %v5008
        %v5010 = vpop.f32.mrb[0].mxu0
        %5011 = vmatprep.mubr.bf16.mxu0 %v4581
        %5012 = vmatmul.mubr.bf16.gmra.mrb[0].mxu0 %v4580
        %v5013 = vpop.f32.mrb[0].mxu0
        %v5014 = vadd.f32 %v4909, %v5013
        %v5015 = vpop.f32.mrb[0].mxu0
        %v5016 = vpop.f32.mrb[0].mxu0
        %v5017 = vadd.f32 %v4912, %v5016
        %v5018 = vpop.f32.mrb[0].mxu0
        %5019 = vdwg.mxu0
        %5020 = vst.msk [vmem:[#allocation2] sm:$0xff] %vm635, %v4950
        %5021 = vst.msk [vmem:[#allocation2 + $0x8] sm:$0xff] %vm635, %v4953
        %5022 = vst.msk [vmem:[#allocation2 + $0x10] sm:$0xff] %vm635, %v4958
        %5023 = vst.msk [vmem:[#allocation2 + $0x18] sm:$0xff] %vm635, %v4961
        %5024 = vst.msk [vmem:[#allocation2 + $0x20] sm:$0xff] %vm635, %v4966
        %5025 = vst.msk [vmem:[#allocation2 + $0x28] sm:$0xff] %vm635, %v4969
        %5026 = vst.msk [vmem:[#allocation2 + $0x30] sm:$0xff] %vm635, %v4974
        %5027 = vst.msk [vmem:[#allocation2 + $0x38] sm:$0xff] %vm635, %v4977
        %5028 = vst.msk [vmem:[#allocation2 + $0x40] sm:$0xff] %vm635, %v4982
        %5029 = vst.msk [vmem:[#allocation2 + $0x48] sm:$0xff] %vm635, %v4985
        %5030 = vst.msk [vmem:[#allocation2 + $0x50] sm:$0xff] %vm635, %v4990
        %5031 = vst.msk [vmem:[#allocation2 + $0x58] sm:$0xff] %vm635, %v4993
        %5032 = vst.msk [vmem:[#allocation2 + $0x60] sm:$0xff] %vm635, %v4998
        %5033 = vst.msk [vmem:[#allocation2 + $0x68] sm:$0xff] %vm635, %v5001
        %5034 = vst.msk [vmem:[#allocation2 + $0x70] sm:$0xff] %vm635, %v5006
        %5035 = vst.msk [vmem:[#allocation2 + $0x78] sm:$0xff] %vm635, %v5009
        %5036 = vst.msk [vmem:[#allocation2 + $0x80] sm:$0xff] %vm635, %v5014
        %5037 = vst.msk [vmem:[#allocation2 + $0x88] sm:$0xff] %vm635, %v5017
        %5038 = vst.msk [vmem:[#allocation2 + $0x90] sm:$0xff] %vm635, %v4337
        %vm5039 = vcmask 516096
        %5040 = vst.msk [vmem:[#allocation2 + $0x98] sm:$0x1] %vm5039, %v573
        %v5041 = vld [vmem:[#allocation2] sm:$0xff]
        %v5042 = vld [vmem:[#allocation2 + $0x8] sm:$0xff]
        %v5043 = vld [vmem:[#allocation2 + $0x10] sm:$0xff]
        %v5044 = vld [vmem:[#allocation2 + $0x18] sm:$0xff]
        %v5045 = vld [vmem:[#allocation2 + $0x20] sm:$0xff]
        %v5046 = vld [vmem:[#allocation2 + $0x28] sm:$0xff]
        %v5047 = vld [vmem:[#allocation2 + $0x30] sm:$0xff]
        %v5048 = vld [vmem:[#allocation2 + $0x38] sm:$0xff]
        %v5049 = vld [vmem:[#allocation2 + $0x40] sm:$0xff]
        %v5050 = vld [vmem:[#allocation2 + $0x48] sm:$0xff]
        %v5051 = vld [vmem:[#allocation2 + $0x50] sm:$0xff]
        %v5052 = vld [vmem:[#allocation2 + $0x58] sm:$0xff]
        %v5053 = vld [vmem:[#allocation2 + $0x60] sm:$0xff]
        %v5054 = vld [vmem:[#allocation2 + $0x68] sm:$0xff]
        %v5055 = vld [vmem:[#allocation2 + $0x70] sm:$0xff]
        %v5056 = vld [vmem:[#allocation2 + $0x78] sm:$0xff]
        %v5057 = vld [vmem:[#allocation2 + $0x80] sm:$0xff]
        %v5058 = vld [vmem:[#allocation2 + $0x88] sm:$0xff]
        %v5059 = vld [vmem:[#allocation2 + $0x90] sm:$0xff]
        %v5060 = vld [vmem:[#allocation2 + $0x98] sm:$0x1]
        %v5061 = vpack.c.bf16 %v5042, %v5041
        %v5062 = vpack.c.bf16 %v5044, %v5043
        %v5063 = vpack.c.bf16 %v5046, %v5045
        %v5064 = vpack.c.bf16 %v5048, %v5047
        %v5065 = vpack.c.bf16 %v5050, %v5049
        %v5066 = vpack.c.bf16 %v5052, %v5051
        %v5067 = vpack.c.bf16 %v5054, %v5053
        %v5068 = vpack.c.bf16 %v5056, %v5055
        %v5069 = vpack.c.bf16 %v5058, %v5057
        %v5070 = vpack.c.bf16 %v5060, %v5059
        %v5079 = vunpack.c.l.b16 %v593
        %v5080 = vunpack.c.h.b16 %v593
        %v5081 = vunpack.c.l.b16 %v594
        %v5082 = vunpack.c.h.b16 %v594
        %v5083 = vunpack.c.l.b16 %v595
        %v5084 = vunpack.c.h.b16 %v595
        %v5085 = vunpack.c.l.b16 %v596
        %v5086 = vunpack.c.h.b16 %v596
        %v5087 = vunpack.c.l.b16 %v597
        %v5088 = vunpack.c.h.b16 %v597
        %v5089 = vunpack.c.l.b16 %v598
        %v5090 = vunpack.c.h.b16 %v598
        %v5091 = vunpack.c.l.b16 %v599
        %v5092 = vunpack.c.h.b16 %v599
        %v5093 = vunpack.c.l.b16 %v600
        %v5094 = vunpack.c.h.b16 %v600
        %v5095 = vpack.c.b16 %v5081, %v5079
        %v5096 = vpack.c.b16 %v5082, %v5080
        %v5097 = vpack.c.b16 %v5085, %v5083
        %v5098 = vpack.c.b16 %v5086, %v5084
        %v5099 = vpack.c.b16 %v5089, %v5087
        %v5100 = vpack.c.b16 %v5090, %v5088
        %v5101 = vpack.c.b16 %v5093, %v5091
        %v5102 = vpack.c.b16 %v5094, %v5092
        %v5112 = vsel %vm635, %v5061, 0
        %v5115 = vsel %vm635, %v5062, 0
        %v5118 = vsel %vm635, %v5063, 0
        %v5121 = vsel %vm635, %v5064, 0
        %v5124 = vsel %vm635, %v5065, 0
        %v5127 = vsel %vm635, %v5066, 0
        %v5130 = vsel %vm635, %v5067, 0
        %v5133 = vsel %vm635, %v5068, 0
        %v5136 = vsel %vm635, %v5069, 0
        %v5139 = vsel %vm635, %v5070, 0
        %5141 = vmatprep.subr.bf16.mxu0 %v5096
        %5142 = vmatpush1.bf16.msra.mxu0 %v5095
        %5143 = vmatprep.subr.bf16.mxu0 %v5098
        %5144 = vmatpush1.bf16.msra.mxu0 %v5097
        %5145 = vmatprep.subr.bf16.mxu0 %v5100
        %5146 = vmatpush1.bf16.msra.mxu0 %v5099
        %5147 = vmatprep.subr.bf16.mxu0 %v5102
        %5148 = vmatpush1.bf16.msra.mxu0 %v5101
        %5149 = vmatprep.subr.bf16.mxu0 0
        %5150 = vmatpush1.bf16.msra.mxu0 0
        %5151 = vmatprep.subr.bf16.mxu0 0
        %5152 = vmatpush1.bf16.msra.mxu0 0
        %5153 = vmatprep.subr.bf16.mxu0 0
        %5154 = vmatpush1.bf16.msra.mxu0 0
        %5155 = vmatprep.subr.bf16.mxu0 0
        %5156 = vmatpush1.bf16.msra.mxu0 0
        %5157 = vmatprep.subr.bf16.mxu0 0
        %5158 = vmatpush1.bf16.msra.mxu0 0
        %5159 = vmatprep.subr.bf16.mxu0 0
        %5160 = vmatpush1.bf16.msra.mxu0 0
        %5161 = vmatprep.subr.bf16.mxu0 0
        %5162 = vmatpush1.bf16.msra.mxu0 0
        %5163 = vmatprep.subr.bf16.mxu0 0
        %5164 = vmatpush1.bf16.msra.mxu0 0
        %5165 = vmatprep.subr.bf16.mxu0 0
        %5166 = vmatpush1.bf16.msra.mxu0 0
        %5167 = vmatprep.subr.bf16.mxu0 0
        %5168 = vmatpush1.bf16.msra.mxu0 0
        %5169 = vmatprep.subr.bf16.mxu0 0
        %5170 = vmatpush1.bf16.msra.mxu0 0
        %5171 = vmatprep.subr.bf16.mxu0 0
        %5172 = vmatpush1.bf16.msra.mxu0 0
        %5173 = vmatprep.mubr.bf16.mxu0 0
        %5174 = vmatmul.mubr.bf16.gmra.mrb[0].mxu0 %v5112
        %v5175 = vpop.f32.mrb[0].mxu0
        %v5176 = vadd.f32 0.0, %v5175
        %v5177 = vpop.f32.mrb[0].mxu0
        %v5178 = vadd.f32 0.0, %v5177
        %v5179 = vpop.f32.mrb[0].mxu0
        %v5180 = vadd.f32 0.0, %v5179
        %v5181 = vpop.f32.mrb[0].mxu0
        %v5182 = vadd.f32 0.0, %v5181
        %5183 = vmatprep.mubr.bf16.mxu0 0
        %5184 = vmatmul.mubr.bf16.gmra.mrb[0].mxu0 %v5115
        %v5185 = vpop.f32.mrb[0].mxu0
        %v5186 = vadd.f32 0.0, %v5185
        %v5187 = vpop.f32.mrb[0].mxu0
        %v5188 = vadd.f32 0.0, %v5187
        %v5189 = vpop.f32.mrb[0].mxu0
        %v5190 = vadd.f32 0.0, %v5189
        %v5191 = vpop.f32.mrb[0].mxu0
        %v5192 = vadd.f32 0.0, %v5191
        %5193 = vmatprep.mubr.bf16.mxu0 0
        %5194 = vmatmul.mubr.bf16.gmra.mrb[0].mxu0 %v5118
        %v5195 = vpop.f32.mrb[0].mxu0
        %v5196 = vadd.f32 0.0, %v5195
        %v5197 = vpop.f32.mrb[0].mxu0
        %v5198 = vadd.f32 0.0, %v5197
        %v5199 = vpop.f32.mrb[0].mxu0
        %v5200 = vadd.f32 0.0, %v5199
        %v5201 = vpop.f32.mrb[0].mxu0
        %v5202 = vadd.f32 0.0, %v5201
        %5203 = vmatprep.mubr.bf16.mxu0 0
        %5204 = vmatmul.mubr.bf16.gmra.mrb[0].mxu0 %v5121
        %v5205 = vpop.f32.mrb[0].mxu0
        %v5206 = vadd.f32 0.0, %v5205
        %v5207 = vpop.f32.mrb[0].mxu0
        %v5208 = vadd.f32 0.0, %v5207
        %v5209 = vpop.f32.mrb[0].mxu0
        %v5210 = vadd.f32 0.0, %v5209
        %v5211 = vpop.f32.mrb[0].mxu0
        %v5212 = vadd.f32 0.0, %v5211
        %5213 = vmatprep.mubr.bf16.mxu0 0
        %5214 = vmatmul.mubr.bf16.gmra.mrb[0].mxu0 %v5124
        %v5215 = vpop.f32.mrb[0].mxu0
        %v5216 = vadd.f32 0.0, %v5215
        %v5217 = vpop.f32.mrb[0].mxu0
        %v5218 = vadd.f32 0.0, %v5217
        %v5219 = vpop.f32.mrb[0].mxu0
        %v5220 = vadd.f32 0.0, %v5219
        %v5221 = vpop.f32.mrb[0].mxu0
        %v5222 = vadd.f32 0.0, %v5221
        %5223 = vmatprep.mubr.bf16.mxu0 0
        %5224 = vmatmul.mubr.bf16.gmra.mrb[0].mxu0 %v5127
        %v5225 = vpop.f32.mrb[0].mxu0
        %v5226 = vadd.f32 0.0, %v5225
        %v5227 = vpop.f32.mrb[0].mxu0
        %v5228 = vadd.f32 0.0, %v5227
        %v5229 = vpop.f32.mrb[0].mxu0
        %v5230 = vadd.f32 0.0, %v5229
        %v5231 = vpop.f32.mrb[0].mxu0
        %v5232 = vadd.f32 0.0, %v5231
        %5233 = vmatprep.mubr.bf16.mxu0 0
        %5234 = vmatmul.mubr.bf16.gmra.mrb[0].mxu0 %v5130
        %v5235 = vpop.f32.mrb[0].mxu0
        %v5236 = vadd.f32 0.0, %v5235
        %v5237 = vpop.f32.mrb[0].mxu0
        %v5238 = vadd.f32 0.0, %v5237
        %v5239 = vpop.f32.mrb[0].mxu0
        %v5240 = vadd.f32 0.0, %v5239
        %v5241 = vpop.f32.mrb[0].mxu0
        %v5242 = vadd.f32 0.0, %v5241
        %5243 = vmatprep.mubr.bf16.mxu0 0
        %5244 = vmatmul.mubr.bf16.gmra.mrb[0].mxu0 %v5133
        %v5245 = vpop.f32.mrb[0].mxu0
        %v5246 = vadd.f32 0.0, %v5245
        %v5247 = vpop.f32.mrb[0].mxu0
        %v5248 = vadd.f32 0.0, %v5247
        %v5249 = vpop.f32.mrb[0].mxu0
        %v5250 = vadd.f32 0.0, %v5249
        %v5251 = vpop.f32.mrb[0].mxu0
        %v5252 = vadd.f32 0.0, %v5251
        %5253 = vmatprep.mubr.bf16.mxu0 0
        %5254 = vmatmul.mubr.bf16.gmra.mrb[0].mxu0 %v5136
        %v5255 = vpop.f32.mrb[0].mxu0
        %v5256 = vadd.f32 0.0, %v5255
        %v5257 = vpop.f32.mrb[0].mxu0
        %v5258 = vadd.f32 0.0, %v5257
        %v5259 = vpop.f32.mrb[0].mxu0
        %v5260 = vadd.f32 0.0, %v5259
        %v5261 = vpop.f32.mrb[0].mxu0
        %v5262 = vadd.f32 0.0, %v5261
        %5263 = vmatprep.mubr.bf16.mxu0 0
        %5264 = vmatmul.mubr.bf16.gmra.mrb[0].mxu0 %v5139
        %v5265 = vpop.f32.mrb[0].mxu0
        %v5266 = vadd.f32 0.0, %v5265
        %v5267 = vpop.f32.mrb[0].mxu0
        %v5268 = vadd.f32 0.0, %v5267
        %v5269 = vpop.f32.mrb[0].mxu0
        %v5270 = vadd.f32 0.0, %v5269
        %v5271 = vpop.f32.mrb[0].mxu0
        %v5272 = vadd.f32 0.0, %v5271
        %5273 = vdwg.mxu0
        %v5274 = vadd.f32 %v571, %v5266
        %v5275 = vadd.f32 %v572, %v5268
        %v5276 = vxor.u32 %v5270, 2147483648
        %v5277 = vxor.u32 %v5272, 2147483648
        %v5278 = vmul.f32 %v5276, 1.442695
        %v5279 = vpow.pop %v5278
        %v5280 = vmul.f32 %v5277, 1.442695
        %v5281 = vpow.pop %v5280
        %v5282 = vadd.f32 %v5279, 1.0
        %v5283 = vadd.f32 %v5281, 1.0
        %v5284 = vrcp.pop %v5282
        %v5285 = vmul.f32 1.0, %v5284
        %v5286 = vrcp.pop %v5283
        %v5287 = vmul.f32 1.0, %v5286
        %v5288 = vlaneseq
        %v5289 = vshrl.u32 %v5288, 7
        %v5290 = vsub.s32 0, %v5289
        %v5291 = vrot.slane %v5285, %v5290
        %v5292 = vlaneseq
        %v5293 = vshrl.u32 %v5292, 7
        %v5294 = vsub.s32 0, %v5293
        %v5295 = vrot.slane %v5287, %v5294
        %v5296 = vmul.f32 %v571, %v5291
        %v5297 = vmul.f32 %v572, %v5295
        %v5298 = vld [vmem:[%s9] sm:$0xf]
        %v5299 = vld [vmem:[%s9 + $0x4] sm:$0xf]
        %v5300 = vld [vmem:[%s9 + $0x8] sm:$0xf]
        %v5301 = vld [vmem:[%s9 + $0xc] sm:$0xf]
        %v5302 = vld [vmem:[%s9 + $0x10] sm:$0xf]
        %v5303 = vld [vmem:[%s9 + $0x14] sm:$0xf]
        %v5304 = vld [vmem:[%s9 + $0x18] sm:$0xf]
        %v5305 = vld [vmem:[%s9 + $0x1c] sm:$0xf]
        %v5306 = vld [vmem:[%s9 + $0x20] sm:$0xf]
        %v5307 = vpack.c.bf16 %v5274, %v5274
        %v5308 = vpack.c.bf16 %v5275, %v5275
        %v5318 = vunpack.c.l.b16 %v5298
        %v5319 = vunpack.c.l.b16 %v5299
        %v5320 = vunpack.c.l.b16 %v5300
        %v5321 = vunpack.c.l.b16 %v5301
        %v5322 = vunpack.c.l.b16 %v5302
        %v5323 = vunpack.c.l.b16 %v5303
        %v5324 = vunpack.c.l.b16 %v5304
        %v5325 = vunpack.c.l.b16 %v5305
        %v5326 = vunpack.c.l.b16 %v5306
        %v5327 = vpack.c.b16 %v5319, %v5318
        %v5328 = vpack.c.b16 %v5321, %v5320
        %v5329 = vpack.c.b16 %v5323, %v5322
        %v5330 = vpack.c.b16 %v5325, %v5324
        %v5331 = vpack.c.b16 %v5326, %v5326
        %vm5332 = vcmask 64512
        %v5334 = vsel %vm5332, %v5327, 0
        %v5337 = vsel %vm5332, %v5328, 0
        %v5340 = vsel %vm5332, %v5329, 0
        %v5343 = vsel %vm5332, %v5330, 0
        %v5346 = vsel %vm5332, %v5331, 0
        %vm5348 = vcmask 1043456
        %v5350 = vsel %vm5348, %v5307, 0
        %v5353 = vsel %vm5348, %v5308, 0
        %5355 = vmatprep.subr.bf16.mxu0 %v5353
        %5356 = vmatpush1.bf16.msra.mxu0 %v5350
        %5357 = vmatprep.subr.bf16.mxu0 0
        %5358 = vmatpush1.bf16.msra.mxu0 0
        %5359 = vmatprep.subr.bf16.mxu0 0
        %5360 = vmatpush1.bf16.msra.mxu0 0
        %5361 = vmatprep.subr.bf16.mxu0 0
        %5362 = vmatpush1.bf16.msra.mxu0 0
        %5363 = vmatprep.subr.bf16.mxu0 0
        %5364 = vmatpush1.bf16.msra.mxu0 0
        %5365 = vmatprep.subr.bf16.mxu0 0
        %5366 = vmatpush1.bf16.msra.mxu0 0
        %5367 = vmatprep.subr.bf16.mxu0 0
        %5368 = vmatpush1.bf16.msra.mxu0 0
        %5369 = vmatprep.subr.bf16.mxu0 0
        %5370 = vmatpush1.bf16.msra.mxu0 0
        %5371 = vmatprep.subr.bf16.mxu0 0
        %5372 = vmatpush1.bf16.msra.mxu0 0
        %5373 = vmatprep.subr.bf16.mxu0 0
        %5374 = vmatpush1.bf16.msra.mxu0 0
        %5375 = vmatprep.subr.bf16.mxu0 0
        %5376 = vmatpush1.bf16.msra.mxu0 0
        %5377 = vmatprep.subr.bf16.mxu0 0
        %5378 = vmatpush1.bf16.msra.mxu0 0
        %5379 = vmatprep.subr.bf16.mxu0 0
        %5380 = vmatpush1.bf16.msra.mxu0 0
        %5381 = vmatprep.subr.bf16.mxu0 0
        %5382 = vmatpush1.bf16.msra.mxu0 0
        %5383 = vmatprep.subr.bf16.mxu0 0
        %5384 = vmatpush1.bf16.msra.mxu0 0
        %5385 = vmatprep.subr.bf16.mxu0 0
        %5386 = vmatpush1.bf16.msra.mxu0 0
        %5387 = vmatprep.mubr.bf16.mxu0 0
        %5388 = vmatmul.mubr.bf16.gmra.mrb[0].mxu0 %v5334
        %v5389 = vpop.f32.mrb[0].mxu0
        %v5390 = vadd.f32 0.0, %v5389
        %v5391 = vpop.f32.mrb[0].mxu0
        %v5392 = vadd.f32 0.0, %v5391
        %v5393 = vpop.f32.mrb[0].mxu0
        %v5394 = vadd.f32 0.0, %v5393
        %v5395 = vpop.f32.mrb[0].mxu0
        %v5396 = vadd.f32 0.0, %v5395
        %5397 = vmatprep.mubr.bf16.mxu0 0
        %5398 = vmatmul.mubr.bf16.gmra.mrb[0].mxu0 %v5337
        %v5399 = vpop.f32.mrb[0].mxu0
        %v5400 = vadd.f32 0.0, %v5399
        %v5401 = vpop.f32.mrb[0].mxu0
        %v5402 = vadd.f32 0.0, %v5401
        %v5403 = vpop.f32.mrb[0].mxu0
        %v5404 = vadd.f32 0.0, %v5403
        %v5405 = vpop.f32.mrb[0].mxu0
        %v5406 = vadd.f32 0.0, %v5405
        %5407 = vmatprep.mubr.bf16.mxu0 0
        %5408 = vmatmul.mubr.bf16.gmra.mrb[0].mxu0 %v5340
        %v5409 = vpop.f32.mrb[0].mxu0
        %v5410 = vadd.f32 0.0, %v5409
        %v5411 = vpop.f32.mrb[0].mxu0
        %v5412 = vadd.f32 0.0, %v5411
        %v5413 = vpop.f32.mrb[0].mxu0
        %v5414 = vadd.f32 0.0, %v5413
        %v5415 = vpop.f32.mrb[0].mxu0
        %v5416 = vadd.f32 0.0, %v5415
        %5417 = vmatprep.mubr.bf16.mxu0 0
        %5418 = vmatmul.mubr.bf16.gmra.mrb[0].mxu0 %v5343
        %v5419 = vpop.f32.mrb[0].mxu0
        %v5420 = vadd.f32 0.0, %v5419
        %v5421 = vpop.f32.mrb[0].mxu0
        %v5422 = vadd.f32 0.0, %v5421
        %v5423 = vpop.f32.mrb[0].mxu0
        %v5424 = vadd.f32 0.0, %v5423
        %v5425 = vpop.f32.mrb[0].mxu0
        %v5426 = vadd.f32 0.0, %v5425
        %5427 = vmatprep.mubr.bf16.mxu0 0
        %5428 = vmatmul.mubr.bf16.gmra.mrb[0].mxu0 %v5346
        %v5429 = vpop.f32.mrb[0].mxu0
        %v5430 = vadd.f32 0.0, %v5429
        %v5431 = vpop.f32.mrb[0].mxu0
        %v5432 = vadd.f32 0.0, %v5431
        %v5433 = vpop.f32.mrb[0].mxu0
        %v5434 = vpop.f32.mrb[0].mxu0
        %5435 = vdwg.mxu0
        %5436 = vrot.lane.b32.xlu0 %v5390, 17
        %v5437 = vpop.permute.xlu0 %5436
        %5438 = vrot.lane.b32.xlu0 %v5392, 17
        %v5439 = vpop.permute.xlu0 %5438
        %v5440 = vlaneseq
        %v5441 = vand.u32 %v5440, 127
        %vm5442 = vcmp.lt.s32.totalorder %v5441, 17
        %v5443 = vsel %vm5442, %v5437, %v5439
        %v5444 = vsel %vm5442, %v5439, %v5437
        %v5445 = vlaneseq
        %v5446 = vshrl.u32 %v5445, 7
        %v5447 = vsub.s32 0, %v5446
        %v5448 = vrot.slane %v575, %v5447
        %v5449 = vlaneseq
        %v5450 = vshrl.u32 %v5449, 7
        %v5451 = vsub.s32 0, %v5450
        %v5452 = vrot.slane %v576, %v5451
        %v5453 = vmul.f32 %v5444, %v5448
        %v5454 = vmul.f32 %v5443, %v5452
        %v5455 = vadd.f32 %v5453, 0.0
        %v5456 = vadd.f32 %v5454, 0.0
        %5457 = vrot.lane.b32.xlu0 %v5394, 16
        %v5458 = vpop.permute.xlu0 %5457
        %5459 = vrot.lane.b32.xlu0 %v5396, 16
        %v5460 = vpop.permute.xlu0 %5459
        %vm5461 = vcmp.lt.s32.totalorder %v5441, 16
        %v5462 = vsel %vm5461, %v5458, %v5460
        %v5463 = vsel %vm5461, %v5460, %v5458
        %v5464 = vlaneseq
        %v5465 = vshrl.u32 %v5464, 7
        %v5466 = vsub.s32 1, %v5465
        %v5467 = vrot.slane %v575, %v5466
        %v5468 = vlaneseq
        %v5469 = vshrl.u32 %v5468, 7
        %v5470 = vsub.s32 1, %v5469
        %v5471 = vrot.slane %v576, %v5470
        %v5472 = vmul.f32 %v5463, %v5467
        %v5473 = vmul.f32 %v5462, %v5471
        %v5474 = vadd.f32 %v5455, %v5472
        %v5475 = vadd.f32 %v5456, %v5473
        %5476 = vrot.lane.b32.xlu0 %v5400, 15
        %v5477 = vpop.permute.xlu0 %5476
        %5478 = vrot.lane.b32.xlu0 %v5402, 15
        %v5479 = vpop.permute.xlu0 %5478
        %vm5480 = vcmp.lt.s32.totalorder %v5441, 15
        %v5481 = vsel %vm5480, %v5477, %v5479
        %v5482 = vsel %vm5480, %v5479, %v5477
        %v5483 = vlaneseq
        %v5484 = vshrl.u32 %v5483, 7
        %v5485 = vsub.s32 2, %v5484
        %v5486 = vrot.slane %v575, %v5485
        %v5487 = vlaneseq
        %v5488 = vshrl.u32 %v5487, 7
        %v5489 = vsub.s32 2, %v5488
        %v5490 = vrot.slane %v576, %v5489
        %v5491 = vmul.f32 %v5482, %v5486
        %v5492 = vmul.f32 %v5481, %v5490
        %v5493 = vadd.f32 %v5474, %v5491
        %v5494 = vadd.f32 %v5475, %v5492
        %5495 = vrot.lane.b32.xlu0 %v5404, 1
        %v5496 = vpop.permute.xlu0 %5495
        %5497 = vrot.lane.b32.xlu0 %v5406, 1
        %v5498 = vpop.permute.xlu0 %5497
        %vm5499 = vcmp.lt.s32.totalorder %v5441, 1
        %v5500 = vsel %vm5499, %v5496, %v5498
        %v5501 = vsel %vm5499, %v5498, %v5496
        %v5502 = vlaneseq
        %v5503 = vshrl.u32 %v5502, 7
        %v5504 = vsub.s32 3, %v5503
        %v5505 = vrot.slane %v575, %v5504
        %v5506 = vlaneseq
        %v5507 = vshrl.u32 %v5506, 7
        %v5508 = vsub.s32 3, %v5507
        %v5509 = vrot.slane %v576, %v5508
        %v5510 = vmul.f32 %v5501, %v5505
        %v5511 = vmul.f32 %v5500, %v5509
        %v5512 = vadd.f32 %v5493, %v5510
        %v5513 = vadd.f32 %v5494, %v5511
        %v5514 = vadd.f32 %v5512, %v5410
        %v5515 = vadd.f32 %v5513, %v5412
        %5516 = vrot.lane.b32.xlu0 %v5414, 127
        %v5517 = vpop.permute.xlu0 %5516
        %5518 = vrot.lane.b32.xlu0 %v5416, 127
        %v5519 = vpop.permute.xlu0 %5518
        %vm5520 = vcmp.lt.s32.totalorder %v5441, 127
        %v5521 = vsel %vm5520, %v5517, %v5519
        %v5522 = vsel %vm5520, %v5519, %v5517
        %v5523 = vlaneseq
        %v5524 = vshrl.u32 %v5523, 7
        %v5525 = vsub.s32 5, %v5524
        %v5526 = vrot.slane %v575, %v5525
        %v5527 = vlaneseq
        %v5528 = vshrl.u32 %v5527, 7
        %v5529 = vsub.s32 5, %v5528
        %v5530 = vrot.slane %v576, %v5529
        %v5531 = vmul.f32 %v5521, %v5526
        %v5532 = vmul.f32 %v5522, %v5530
        %v5533 = vadd.f32 %v5514, %v5531
        %v5534 = vadd.f32 %v5515, %v5532
        %5535 = vrot.lane.b32.xlu0 %v5420, 113
        %v5536 = vpop.permute.xlu0 %5535
        %5537 = vrot.lane.b32.xlu0 %v5422, 113
        %v5538 = vpop.permute.xlu0 %5537
        %vm5539 = vcmp.lt.s32.totalorder %v5441, 113
        %v5540 = vsel %vm5539, %v5536, %v5538
        %v5541 = vsel %vm5539, %v5538, %v5536
        %v5542 = vlaneseq
        %v5543 = vshrl.u32 %v5542, 7
        %v5544 = vsub.s32 6, %v5543
        %v5545 = vrot.slane %v575, %v5544
        %v5546 = vlaneseq
        %v5547 = vshrl.u32 %v5546, 7
        %v5548 = vsub.s32 6, %v5547
        %v5549 = vrot.slane %v576, %v5548
        %v5550 = vmul.f32 %v5540, %v5545
        %v5551 = vmul.f32 %v5541, %v5549
        %v5552 = vadd.f32 %v5533, %v5550
        %v5553 = vadd.f32 %v5534, %v5551
        %5554 = vrot.lane.b32.xlu0 %v5424, 112
        %v5555 = vpop.permute.xlu0 %5554
        %5556 = vrot.lane.b32.xlu0 %v5426, 112
        %v5557 = vpop.permute.xlu0 %5556
        %vm5558 = vcmp.lt.s32.totalorder %v5441, 112
        %v5559 = vsel %vm5558, %v5555, %v5557
        %v5560 = vsel %vm5558, %v5557, %v5555
        %v5561 = vlaneseq
        %v5562 = vshrl.u32 %v5561, 7
        %v5563 = vsub.s32 7, %v5562
        %v5564 = vrot.slane %v575, %v5563
        %v5565 = vlaneseq
        %v5566 = vshrl.u32 %v5565, 7
        %v5567 = vsub.s32 7, %v5566
        %v5568 = vrot.slane %v576, %v5567
        %v5569 = vmul.f32 %v5559, %v5564
        %v5570 = vmul.f32 %v5560, %v5568
        %v5571 = vadd.f32 %v5552, %v5569
        %v5572 = vadd.f32 %v5553, %v5570
        %5573 = vrot.lane.b32.xlu0 %v5430, 111
        %v5574 = vpop.permute.xlu0 %5573
        %5575 = vrot.lane.b32.xlu0 %v5432, 111
        %v5576 = vpop.permute.xlu0 %5575
        %vm5577 = vcmp.lt.s32.totalorder %v5441, 111
        %v5578 = vsel %vm5577, %v5574, %v5576
        %v5579 = vsel %vm5577, %v5576, %v5574
        %v5580 = vlaneseq
        %v5581 = vshrl.u32 %v5580, 7
        %v5582 = vsub.s32 0, %v5581
        %v5583 = vrot.slane %v577, %v5582
        %v5584 = vlaneseq
        %v5585 = vshrl.u32 %v5584, 7
        %v5586 = vsub.s32 0, %v5585
        %v5587 = vrot.slane %v578, %v5586
        %v5588 = vmul.f32 %v5578, %v5583
        %v5589 = vmul.f32 %v5579, %v5587
        %v5590 = vadd.f32 %v5571, %v5588
        %v5591 = vadd.f32 %v5572, %v5589
        %s5592 = scalar_lea.vmem %s9, 36
        %v5593 = vld [vmem:[%s5592] sm:$0xf]
        %v5594 = vld [vmem:[%s5592 + $0x4] sm:$0xf]
        %v5595 = vld [vmem:[%s5592 + $0x8] sm:$0xf]
        %v5596 = vld [vmem:[%s5592 + $0xc] sm:$0xf]
        %v5597 = vld [vmem:[%s5592 + $0x10] sm:$0xf]
        %v5598 = vld [vmem:[%s5592 + $0x14] sm:$0xf]
        %v5599 = vld [vmem:[%s5592 + $0x18] sm:$0xf]
        %v5600 = vld [vmem:[%s5592 + $0x1c] sm:$0xf]
        %v5601 = vld [vmem:[%s5592 + $0x20] sm:$0xf]
        %v5602 = vpack.c.bf16 %v5296, %v5296
        %v5603 = vpack.c.bf16 %v5297, %v5297
        %v5613 = vunpack.c.l.b16 %v5593
        %v5614 = vunpack.c.l.b16 %v5594
        %v5615 = vunpack.c.l.b16 %v5595
        %v5616 = vunpack.c.l.b16 %v5596
        %v5617 = vunpack.c.l.b16 %v5597
        %v5618 = vunpack.c.l.b16 %v5598
        %v5619 = vunpack.c.l.b16 %v5599
        %v5620 = vunpack.c.l.b16 %v5600
        %v5621 = vunpack.c.l.b16 %v5601
        %v5622 = vpack.c.b16 %v5614, %v5613
        %v5623 = vpack.c.b16 %v5616, %v5615
        %v5624 = vpack.c.b16 %v5618, %v5617
        %v5625 = vpack.c.b16 %v5620, %v5619
        %v5626 = vpack.c.b16 %v5621, %v5621
        %v5628 = vsel %vm5332, %v5622, 0
        %v5631 = vsel %vm5332, %v5623, 0
        %v5634 = vsel %vm5332, %v5624, 0
        %v5637 = vsel %vm5332, %v5625, 0
        %v5640 = vsel %vm5332, %v5626, 0
        %v5643 = vsel %vm5348, %v5602, 0
        %v5646 = vsel %vm5348, %v5603, 0
        %5648 = vmatprep.subr.bf16.mxu0 %v5646
        %5649 = vmatpush1.bf16.msra.mxu0 %v5643
        %5650 = vmatprep.subr.bf16.mxu0 0
        %5651 = vmatpush1.bf16.msra.mxu0 0
        %5652 = vmatprep.subr.bf16.mxu0 0
        %5653 = vmatpush1.bf16.msra.mxu0 0
        %5654 = vmatprep.subr.bf16.mxu0 0
        %5655 = vmatpush1.bf16.msra.mxu0 0
        %5656 = vmatprep.subr.bf16.mxu0 0
        %5657 = vmatpush1.bf16.msra.mxu0 0
        %5658 = vmatprep.subr.bf16.mxu0 0
        %5659 = vmatpush1.bf16.msra.mxu0 0
        %5660 = vmatprep.subr.bf16.mxu0 0
        %5661 = vmatpush1.bf16.msra.mxu0 0
        %5662 = vmatprep.subr.bf16.mxu0 0
        %5663 = vmatpush1.bf16.msra.mxu0 0
        %5664 = vmatprep.subr.bf16.mxu0 0
        %5665 = vmatpush1.bf16.msra.mxu0 0
        %5666 = vmatprep.subr.bf16.mxu0 0
        %5667 = vmatpush1.bf16.msra.mxu0 0
        %5668 = vmatprep.subr.bf16.mxu0 0
        %5669 = vmatpush1.bf16.msra.mxu0 0
        %5670 = vmatprep.subr.bf16.mxu0 0
        %5671 = vmatpush1.bf16.msra.mxu0 0
        %5672 = vmatprep.subr.bf16.mxu0 0
        %5673 = vmatpush1.bf16.msra.mxu0 0
        %5674 = vmatprep.subr.bf16.mxu0 0
        %5675 = vmatpush1.bf16.msra.mxu0 0
        %5676 = vmatprep.subr.bf16.mxu0 0
        %5677 = vmatpush1.bf16.msra.mxu0 0
        %5678 = vmatprep.subr.bf16.mxu0 0
        %5679 = vmatpush1.bf16.msra.mxu0 0
        %5680 = vmatprep.mubr.bf16.mxu0 0
        %5681 = vmatmul.mubr.bf16.gmra.mrb[0].mxu0 %v5628
        %v5682 = vpop.f32.mrb[0].mxu0
        %v5683 = vadd.f32 0.0, %v5682
        %v5684 = vpop.f32.mrb[0].mxu0
        %v5685 = vadd.f32 0.0, %v5684
        %v5686 = vpop.f32.mrb[0].mxu0
        %v5687 = vadd.f32 0.0, %v5686
        %v5688 = vpop.f32.mrb[0].mxu0
        %v5689 = vadd.f32 0.0, %v5688
        %5690 = vmatprep.mubr.bf16.mxu0 0
        %5691 = vmatmul.mubr.bf16.gmra.mrb[0].mxu0 %v5631
        %v5692 = vpop.f32.mrb[0].mxu0
        %v5693 = vadd.f32 0.0, %v5692
        %v5694 = vpop.f32.mrb[0].mxu0
        %v5695 = vadd.f32 0.0, %v5694
        %v5696 = vpop.f32.mrb[0].mxu0
        %v5697 = vadd.f32 0.0, %v5696
        %v5698 = vpop.f32.mrb[0].mxu0
        %v5699 = vadd.f32 0.0, %v5698
        %5700 = vmatprep.mubr.bf16.mxu0 0
        %5701 = vmatmul.mubr.bf16.gmra.mrb[0].mxu0 %v5634
        %v5702 = vpop.f32.mrb[0].mxu0
        %v5703 = vadd.f32 0.0, %v5702
        %v5704 = vpop.f32.mrb[0].mxu0
        %v5705 = vadd.f32 0.0, %v5704
        %v5706 = vpop.f32.mrb[0].mxu0
        %v5707 = vadd.f32 0.0, %v5706
        %v5708 = vpop.f32.mrb[0].mxu0
        %v5709 = vadd.f32 0.0, %v5708
        %5710 = vmatprep.mubr.bf16.mxu0 0
        %5711 = vmatmul.mubr.bf16.gmra.mrb[0].mxu0 %v5637
        %v5712 = vpop.f32.mrb[0].mxu0
        %v5713 = vadd.f32 0.0, %v5712
        %v5714 = vpop.f32.mrb[0].mxu0
        %v5715 = vadd.f32 0.0, %v5714
        %v5716 = vpop.f32.mrb[0].mxu0
        %v5717 = vadd.f32 0.0, %v5716
        %v5718 = vpop.f32.mrb[0].mxu0
        %v5719 = vadd.f32 0.0, %v5718
        %5720 = vmatprep.mubr.bf16.mxu0 0
        %5721 = vmatmul.mubr.bf16.gmra.mrb[0].mxu0 %v5640
        %v5722 = vpop.f32.mrb[0].mxu0
        %v5723 = vadd.f32 0.0, %v5722
        %v5724 = vpop.f32.mrb[0].mxu0
        %v5725 = vadd.f32 0.0, %v5724
        %v5726 = vpop.f32.mrb[0].mxu0
        %v5727 = vpop.f32.mrb[0].mxu0
        %5728 = vdwg.mxu0
        %5729 = vrot.lane.b32.xlu0 %v5683, 17
        %v5730 = vpop.permute.xlu0 %5729
        %5731 = vrot.lane.b32.xlu0 %v5685, 17
        %v5732 = vpop.permute.xlu0 %5731
        %v5733 = vsel %vm5442, %v5730, %v5732
        %v5734 = vsel %vm5442, %v5732, %v5730
        %v5735 = vmul.f32 %v5734, %v5448
        %v5736 = vmul.f32 %v5733, %v5452
        %v5737 = vadd.f32 %v5735, 0.0
        %v5738 = vadd.f32 %v5736, 0.0
        %5739 = vrot.lane.b32.xlu0 %v5687, 16
        %v5740 = vpop.permute.xlu0 %5739
        %5741 = vrot.lane.b32.xlu0 %v5689, 16
        %v5742 = vpop.permute.xlu0 %5741
        %v5743 = vsel %vm5461, %v5740, %v5742
        %v5744 = vsel %vm5461, %v5742, %v5740
        %v5745 = vmul.f32 %v5744, %v5467
        %v5746 = vmul.f32 %v5743, %v5471
        %v5747 = vadd.f32 %v5737, %v5745
        %v5748 = vadd.f32 %v5738, %v5746
        %5749 = vrot.lane.b32.xlu0 %v5693, 15
        %v5750 = vpop.permute.xlu0 %5749
        %5751 = vrot.lane.b32.xlu0 %v5695, 15
        %v5752 = vpop.permute.xlu0 %5751
        %v5753 = vsel %vm5480, %v5750, %v5752
        %v5754 = vsel %vm5480, %v5752, %v5750
        %v5755 = vmul.f32 %v5754, %v5486
        %v5756 = vmul.f32 %v5753, %v5490
        %v5757 = vadd.f32 %v5747, %v5755
        %v5758 = vadd.f32 %v5748, %v5756
        %5759 = vrot.lane.b32.xlu0 %v5697, 1
        %v5760 = vpop.permute.xlu0 %5759
        %5761 = vrot.lane.b32.xlu0 %v5699, 1
        %v5762 = vpop.permute.xlu0 %5761
        %v5763 = vsel %vm5499, %v5760, %v5762
        %v5764 = vsel %vm5499, %v5762, %v5760
        %v5765 = vmul.f32 %v5764, %v5505
        %v5766 = vmul.f32 %v5763, %v5509
        %v5767 = vadd.f32 %v5757, %v5765
        %v5768 = vadd.f32 %v5758, %v5766
        %v5769 = vadd.f32 %v5767, %v5703
        %v5770 = vadd.f32 %v5768, %v5705
        %5771 = vrot.lane.b32.xlu0 %v5707, 127
        %v5772 = vpop.permute.xlu0 %5771
        %5773 = vrot.lane.b32.xlu0 %v5709, 127
        %v5774 = vpop.permute.xlu0 %5773
        %v5775 = vsel %vm5520, %v5772, %v5774
        %v5776 = vsel %vm5520, %v5774, %v5772
        %v5777 = vmul.f32 %v5775, %v5526
        %v5778 = vmul.f32 %v5776, %v5530
        %v5779 = vadd.f32 %v5769, %v5777
        %v5780 = vadd.f32 %v5770, %v5778
        %5781 = vrot.lane.b32.xlu0 %v5713, 113
        %v5782 = vpop.permute.xlu0 %5781
        %5783 = vrot.lane.b32.xlu0 %v5715, 113
        %v5784 = vpop.permute.xlu0 %5783
        %v5785 = vsel %vm5539, %v5782, %v5784
        %v5786 = vsel %vm5539, %v5784, %v5782
        %v5787 = vmul.f32 %v5785, %v5545
        %v5788 = vmul.f32 %v5786, %v5549
        %v5789 = vadd.f32 %v5779, %v5787
        %v5790 = vadd.f32 %v5780, %v5788
        %5791 = vrot.lane.b32.xlu0 %v5717, 112
        %v5792 = vpop.permute.xlu0 %5791
        %5793 = vrot.lane.b32.xlu0 %v5719, 112
        %v5794 = vpop.permute.xlu0 %5793
        %v5795 = vsel %vm5558, %v5792, %v5794
        %v5796 = vsel %vm5558, %v5794, %v5792
        %v5797 = vmul.f32 %v5795, %v5564
        %v5798 = vmul.f32 %v5796, %v5568
        %v5799 = vadd.f32 %v5789, %v5797
        %v5800 = vadd.f32 %v5790, %v5798
        %5801 = vrot.lane.b32.xlu0 %v5723, 111
        %v5802 = vpop.permute.xlu0 %5801
        %5803 = vrot.lane.b32.xlu0 %v5725, 111
        %v5804 = vpop.permute.xlu0 %5803
        %v5805 = vsel %vm5577, %v5802, %v5804
        %v5806 = vsel %vm5577, %v5804, %v5802
        %v5807 = vmul.f32 %v5805, %v5583
        %v5808 = vmul.f32 %v5806, %v5587
        %v5809 = vadd.f32 %v5799, %v5807
        %v5810 = vadd.f32 %v5800, %v5808
        %v5811 = vadd.f32 %v5590, %v5274
        %v5812 = vadd.f32 %v5591, %v5275
        %s5813 = scalar_lea.vmem %s9, 72
        %v5814 = vld [vmem:[%s5813] sm:$0xf]
        %v5815 = vld [vmem:[%s5813 + $0x4] sm:$0xf]
        %v5816 = vld [vmem:[%s5813 + $0x8] sm:$0xf]
        %v5817 = vld [vmem:[%s5813 + $0xc] sm:$0xf]
        %v5818 = vld [vmem:[%s5813 + $0x10] sm:$0xf]
        %v5819 = vld [vmem:[%s5813 + $0x14] sm:$0xf]
        %v5820 = vld [vmem:[%s5813 + $0x18] sm:$0xf]
        %v5821 = vld [vmem:[%s5813 + $0x1c] sm:$0xf]
        %v5822 = vld [vmem:[%s5813 + $0x20] sm:$0xf]
        %v5823 = vpack.c.bf16 %v5811, %v5811
        %v5824 = vpack.c.bf16 %v5812, %v5812
        %v5834 = vunpack.c.l.b16 %v5814
        %v5835 = vunpack.c.l.b16 %v5815
        %v5836 = vunpack.c.l.b16 %v5816
        %v5837 = vunpack.c.l.b16 %v5817
        %v5838 = vunpack.c.l.b16 %v5818
        %v5839 = vunpack.c.l.b16 %v5819
        %v5840 = vunpack.c.l.b16 %v5820
        %v5841 = vunpack.c.l.b16 %v5821
        %v5842 = vunpack.c.l.b16 %v5822
        %v5843 = vpack.c.b16 %v5835, %v5834
        %v5844 = vpack.c.b16 %v5837, %v5836
        %v5845 = vpack.c.b16 %v5839, %v5838
        %v5846 = vpack.c.b16 %v5841, %v5840
        %v5847 = vpack.c.b16 %v5842, %v5842
        %v5849 = vsel %vm5332, %v5843, 0
        %v5852 = vsel %vm5332, %v5844, 0
        %v5855 = vsel %vm5332, %v5845, 0
        %v5858 = vsel %vm5332, %v5846, 0
        %v5861 = vsel %vm5332, %v5847, 0
        %v5864 = vsel %vm5348, %v5823, 0
        %v5867 = vsel %vm5348, %v5824, 0
        %5869 = vmatprep.subr.bf16.mxu0 %v5867
        %5870 = vmatpush1.bf16.msra.mxu0 %v5864
        %5871 = vmatprep.subr.bf16.mxu0 0
        %5872 = vmatpush1.bf16.msra.mxu0 0
        %5873 = vmatprep.subr.bf16.mxu0 0
        %5874 = vmatpush1.bf16.msra.mxu0 0
        %5875 = vmatprep.subr.bf16.mxu0 0
        %5876 = vmatpush1.bf16.msra.mxu0 0
        %5877 = vmatprep.subr.bf16.mxu0 0
        %5878 = vmatpush1.bf16.msra.mxu0 0
        %5879 = vmatprep.subr.bf16.mxu0 0
        %5880 = vmatpush1.bf16.msra.mxu0 0
        %5881 = vmatprep.subr.bf16.mxu0 0
        %5882 = vmatpush1.bf16.msra.mxu0 0
        %5883 = vmatprep.subr.bf16.mxu0 0
        %5884 = vmatpush1.bf16.msra.mxu0 0
        %5885 = vmatprep.subr.bf16.mxu0 0
        %5886 = vmatpush1.bf16.msra.mxu0 0
        %5887 = vmatprep.subr.bf16.mxu0 0
        %5888 = vmatpush1.bf16.msra.mxu0 0
        %5889 = vmatprep.subr.bf16.mxu0 0
        %5890 = vmatpush1.bf16.msra.mxu0 0
        %5891 = vmatprep.subr.bf16.mxu0 0
        %5892 = vmatpush1.bf16.msra.mxu0 0
        %5893 = vmatprep.subr.bf16.mxu0 0
        %5894 = vmatpush1.bf16.msra.mxu0 0
        %5895 = vmatprep.subr.bf16.mxu0 0
        %5896 = vmatpush1.bf16.msra.mxu0 0
        %5897 = vmatprep.subr.bf16.mxu0 0
        %5898 = vmatpush1.bf16.msra.mxu0 0
        %5899 = vmatprep.subr.bf16.mxu0 0
        %5900 = vmatpush1.bf16.msra.mxu0 0
        %5901 = vmatprep.mubr.bf16.mxu0 0
        %5902 = vmatmul.mubr.bf16.gmra.mrb[0].mxu0 %v5849
        %v5903 = vpop.f32.mrb[0].mxu0
        %v5904 = vadd.f32 0.0, %v5903
        %v5905 = vpop.f32.mrb[0].mxu0
        %v5906 = vadd.f32 0.0, %v5905
        %v5907 = vpop.f32.mrb[0].mxu0
        %v5908 = vadd.f32 0.0, %v5907
        %v5909 = vpop.f32.mrb[0].mxu0
        %v5910 = vadd.f32 0.0, %v5909
        %5911 = vmatprep.mubr.bf16.mxu0 0
        %5912 = vmatmul.mubr.bf16.gmra.mrb[0].mxu0 %v5852
        %v5913 = vpop.f32.mrb[0].mxu0
        %v5914 = vadd.f32 0.0, %v5913
        %v5915 = vpop.f32.mrb[0].mxu0
        %v5916 = vadd.f32 0.0, %v5915
        %v5917 = vpop.f32.mrb[0].mxu0
        %v5918 = vadd.f32 0.0, %v5917
        %v5919 = vpop.f32.mrb[0].mxu0
        %v5920 = vadd.f32 0.0, %v5919
        %5921 = vmatprep.mubr.bf16.mxu0 0
        %5922 = vmatmul.mubr.bf16.gmra.mrb[0].mxu0 %v5855
        %v5923 = vpop.f32.mrb[0].mxu0
        %v5924 = vadd.f32 0.0, %v5923
        %v5925 = vpop.f32.mrb[0].mxu0
        %v5926 = vadd.f32 0.0, %v5925
        %v5927 = vpop.f32.mrb[0].mxu0
        %v5928 = vadd.f32 0.0, %v5927
        %v5929 = vpop.f32.mrb[0].mxu0
        %v5930 = vadd.f32 0.0, %v5929
        %5931 = vmatprep.mubr.bf16.mxu0 0
        %5932 = vmatmul.mubr.bf16.gmra.mrb[0].mxu0 %v5858
        %v5933 = vpop.f32.mrb[0].mxu0
        %v5934 = vadd.f32 0.0, %v5933
        %v5935 = vpop.f32.mrb[0].mxu0
        %v5936 = vadd.f32 0.0, %v5935
        %v5937 = vpop.f32.mrb[0].mxu0
        %v5938 = vadd.f32 0.0, %v5937
        %v5939 = vpop.f32.mrb[0].mxu0
        %v5940 = vadd.f32 0.0, %v5939
        %5941 = vmatprep.mubr.bf16.mxu0 0
        %5942 = vmatmul.mubr.bf16.gmra.mrb[0].mxu0 %v5861
        %v5943 = vpop.f32.mrb[0].mxu0
        %v5944 = vadd.f32 0.0, %v5943
        %v5945 = vpop.f32.mrb[0].mxu0
        %v5946 = vadd.f32 0.0, %v5945
        %v5947 = vpop.f32.mrb[0].mxu0
        %v5948 = vpop.f32.mrb[0].mxu0
        %5949 = vdwg.mxu0
        %5950 = vrot.lane.b32.xlu0 %v5904, 17
        %v5951 = vpop.permute.xlu0 %5950
        %5952 = vrot.lane.b32.xlu0 %v5906, 17
        %v5953 = vpop.permute.xlu0 %5952
        %v5954 = vsel %vm5442, %v5951, %v5953
        %v5955 = vsel %vm5442, %v5953, %v5951
        %v5956 = vmul.f32 %v5955, %v5448
        %v5957 = vmul.f32 %v5954, %v5452
        %v5958 = vadd.f32 %v5956, 0.0
        %v5959 = vadd.f32 %v5957, 0.0
        %5960 = vrot.lane.b32.xlu0 %v5908, 16
        %v5961 = vpop.permute.xlu0 %5960
        %5962 = vrot.lane.b32.xlu0 %v5910, 16
        %v5963 = vpop.permute.xlu0 %5962
        %v5964 = vsel %vm5461, %v5961, %v5963
        %v5965 = vsel %vm5461, %v5963, %v5961
        %v5966 = vmul.f32 %v5965, %v5467
        %v5967 = vmul.f32 %v5964, %v5471
        %v5968 = vadd.f32 %v5958, %v5966
        %v5969 = vadd.f32 %v5959, %v5967
        %5970 = vrot.lane.b32.xlu0 %v5914, 15
        %v5971 = vpop.permute.xlu0 %5970
        %5972 = vrot.lane.b32.xlu0 %v5916, 15
        %v5973 = vpop.permute.xlu0 %5972
        %v5974 = vsel %vm5480, %v5971, %v5973
        %v5975 = vsel %vm5480, %v5973, %v5971
        %v5976 = vmul.f32 %v5975, %v5486
        %v5977 = vmul.f32 %v5974, %v5490
        %v5978 = vadd.f32 %v5968, %v5976
        %v5979 = vadd.f32 %v5969, %v5977
        %5980 = vrot.lane.b32.xlu0 %v5918, 1
        %v5981 = vpop.permute.xlu0 %5980
        %5982 = vrot.lane.b32.xlu0 %v5920, 1
        %v5983 = vpop.permute.xlu0 %5982
        %v5984 = vsel %vm5499, %v5981, %v5983
        %v5985 = vsel %vm5499, %v5983, %v5981
        %v5986 = vmul.f32 %v5985, %v5505
        %v5987 = vmul.f32 %v5984, %v5509
        %v5988 = vadd.f32 %v5978, %v5986
        %v5989 = vadd.f32 %v5979, %v5987
        %v5990 = vadd.f32 %v5988, %v5924
        %v5991 = vadd.f32 %v5989, %v5926
        %5992 = vrot.lane.b32.xlu0 %v5928, 127
        %v5993 = vpop.permute.xlu0 %5992
        %5994 = vrot.lane.b32.xlu0 %v5930, 127
        %v5995 = vpop.permute.xlu0 %5994
        %v5996 = vsel %vm5520, %v5993, %v5995
        %v5997 = vsel %vm5520, %v5995, %v5993
        %v5998 = vmul.f32 %v5996, %v5526
        %v5999 = vmul.f32 %v5997, %v5530
        %v6000 = vadd.f32 %v5990, %v5998
        %v6001 = vadd.f32 %v5991, %v5999
        %6002 = vrot.lane.b32.xlu0 %v5934, 113
        %v6003 = vpop.permute.xlu0 %6002
        %6004 = vrot.lane.b32.xlu0 %v5936, 113
        %v6005 = vpop.permute.xlu0 %6004
        %v6006 = vsel %vm5539, %v6003, %v6005
        %v6007 = vsel %vm5539, %v6005, %v6003
        %v6008 = vmul.f32 %v6006, %v5545
        %v6009 = vmul.f32 %v6007, %v5549
        %v6010 = vadd.f32 %v6000, %v6008
        %v6011 = vadd.f32 %v6001, %v6009
        %6012 = vrot.lane.b32.xlu0 %v5938, 112
        %v6013 = vpop.permute.xlu0 %6012
        %6014 = vrot.lane.b32.xlu0 %v5940, 112
        %v6015 = vpop.permute.xlu0 %6014
        %v6016 = vsel %vm5558, %v6013, %v6015
        %v6017 = vsel %vm5558, %v6015, %v6013
        %v6018 = vmul.f32 %v6016, %v5564
        %v6019 = vmul.f32 %v6017, %v5568
        %v6020 = vadd.f32 %v6010, %v6018
        %v6021 = vadd.f32 %v6011, %v6019
        %6022 = vrot.lane.b32.xlu0 %v5944, 111
        %v6023 = vpop.permute.xlu0 %6022
        %6024 = vrot.lane.b32.xlu0 %v5946, 111
        %v6025 = vpop.permute.xlu0 %6024
        %v6026 = vsel %vm5577, %v6023, %v6025
        %v6027 = vsel %vm5577, %v6025, %v6023
        %v6028 = vmul.f32 %v6026, %v5583
        %v6029 = vmul.f32 %v6027, %v5587
        %v6030 = vadd.f32 %v6020, %v6028
        %v6031 = vadd.f32 %v6021, %v6029
        %6032 = vset.pattern.permute.xlu0 2
        %6033 = vperm.xlu0 %6032, %v574
        %v6034 = vpop.permute.xlu0 %6033
        %v6036 = vmul.f32 %v6030, %v6034
        %v6037 = vmul.f32 %v6031, %v6034
        %6038 = vset.pattern.permute.xlu0 3
        %6039 = vperm.xlu0 %6038, %v574
        %v6040 = vpop.permute.xlu0 %6039
        %v6042 = vadd.f32 %v6036, %v6040
        %v6043 = vadd.f32 %v6037, %v6040
        %v6044 = vmax.f32 %v6042, 0.0
        %v6045 = vmax.f32 %v6043, 0.0
        %v6046 = vadd.f32 %v5809, %v5296
        %v6047 = vadd.f32 %v5810, %v5297
        %s6048 = scalar_lea.vmem %s9, 108
        %v6049 = vld [vmem:[%s6048] sm:$0xf]
        %v6050 = vld [vmem:[%s6048 + $0x4] sm:$0xf]
        %v6051 = vld [vmem:[%s6048 + $0x8] sm:$0xf]
        %v6052 = vld [vmem:[%s6048 + $0xc] sm:$0xf]
        %v6053 = vld [vmem:[%s6048 + $0x10] sm:$0xf]
        %v6054 = vld [vmem:[%s6048 + $0x14] sm:$0xf]
        %v6055 = vld [vmem:[%s6048 + $0x18] sm:$0xf]
        %v6056 = vld [vmem:[%s6048 + $0x1c] sm:$0xf]
        %v6057 = vld [vmem:[%s6048 + $0x20] sm:$0xf]
        %v6058 = vpack.c.bf16 %v6046, %v6046
        %v6059 = vpack.c.bf16 %v6047, %v6047
        %v6069 = vunpack.c.l.b16 %v6049
        %v6070 = vunpack.c.l.b16 %v6050
        %v6071 = vunpack.c.l.b16 %v6051
        %v6072 = vunpack.c.l.b16 %v6052
        %v6073 = vunpack.c.l.b16 %v6053
        %v6074 = vunpack.c.l.b16 %v6054
        %v6075 = vunpack.c.l.b16 %v6055
        %v6076 = vunpack.c.l.b16 %v6056
        %v6077 = vunpack.c.l.b16 %v6057
        %v6078 = vpack.c.b16 %v6070, %v6069
        %v6079 = vpack.c.b16 %v6072, %v6071
        %v6080 = vpack.c.b16 %v6074, %v6073
        %v6081 = vpack.c.b16 %v6076, %v6075
        %v6082 = vpack.c.b16 %v6077, %v6077
        %v6084 = vsel %vm5332, %v6078, 0
        %v6087 = vsel %vm5332, %v6079, 0
        %v6090 = vsel %vm5332, %v6080, 0
        %v6093 = vsel %vm5332, %v6081, 0
        %v6096 = vsel %vm5332, %v6082, 0
        %v6099 = vsel %vm5348, %v6058, 0
        %v6102 = vsel %vm5348, %v6059, 0
        %6104 = vmatprep.subr.bf16.mxu0 %v6102
        %6105 = vmatpush1.bf16.msra.mxu0 %v6099
        %6106 = vmatprep.subr.bf16.mxu0 0
        %6107 = vmatpush1.bf16.msra.mxu0 0
        %6108 = vmatprep.subr.bf16.mxu0 0
        %6109 = vmatpush1.bf16.msra.mxu0 0
        %6110 = vmatprep.subr.bf16.mxu0 0
        %6111 = vmatpush1.bf16.msra.mxu0 0
        %6112 = vmatprep.subr.bf16.mxu0 0
        %6113 = vmatpush1.bf16.msra.mxu0 0
        %6114 = vmatprep.subr.bf16.mxu0 0
        %6115 = vmatpush1.bf16.msra.mxu0 0
        %6116 = vmatprep.subr.bf16.mxu0 0
        %6117 = vmatpush1.bf16.msra.mxu0 0
        %6118 = vmatprep.subr.bf16.mxu0 0
        %6119 = vmatpush1.bf16.msra.mxu0 0
        %6120 = vmatprep.subr.bf16.mxu0 0
        %6121 = vmatpush1.bf16.msra.mxu0 0
        %6122 = vmatprep.subr.bf16.mxu0 0
        %6123 = vmatpush1.bf16.msra.mxu0 0
        %6124 = vmatprep.subr.bf16.mxu0 0
        %6125 = vmatpush1.bf16.msra.mxu0 0
        %6126 = vmatprep.subr.bf16.mxu0 0
        %6127 = vmatpush1.bf16.msra.mxu0 0
        %6128 = vmatprep.subr.bf16.mxu0 0
        %6129 = vmatpush1.bf16.msra.mxu0 0
        %6130 = vmatprep.subr.bf16.mxu0 0
        %6131 = vmatpush1.bf16.msra.mxu0 0
        %6132 = vmatprep.subr.bf16.mxu0 0
        %6133 = vmatpush1.bf16.msra.mxu0 0
        %6134 = vmatprep.subr.bf16.mxu0 0
        %6135 = vmatpush1.bf16.msra.mxu0 0
        %6136 = vmatprep.mubr.bf16.mxu0 0
        %6137 = vmatmul.mubr.bf16.gmra.mrb[0].mxu0 %v6084
        %v6138 = vpop.f32.mrb[0].mxu0
        %v6139 = vadd.f32 0.0, %v6138
        %v6140 = vpop.f32.mrb[0].mxu0
        %v6141 = vadd.f32 0.0, %v6140
        %v6142 = vpop.f32.mrb[0].mxu0
        %v6143 = vadd.f32 0.0, %v6142
        %v6144 = vpop.f32.mrb[0].mxu0
        %v6145 = vadd.f32 0.0, %v6144
        %6146 = vmatprep.mubr.bf16.mxu0 0
        %6147 = vmatmul.mubr.bf16.gmra.mrb[0].mxu0 %v6087
        %v6148 = vpop.f32.mrb[0].mxu0
        %v6149 = vadd.f32 0.0, %v6148
        %v6150 = vpop.f32.mrb[0].mxu0
        %v6151 = vadd.f32 0.0, %v6150
        %v6152 = vpop.f32.mrb[0].mxu0
        %v6153 = vadd.f32 0.0, %v6152
        %v6154 = vpop.f32.mrb[0].mxu0
        %v6155 = vadd.f32 0.0, %v6154
        %6156 = vmatprep.mubr.bf16.mxu0 0
        %6157 = vmatmul.mubr.bf16.gmra.mrb[0].mxu0 %v6090
        %v6158 = vpop.f32.mrb[0].mxu0
        %v6159 = vadd.f32 0.0, %v6158
        %v6160 = vpop.f32.mrb[0].mxu0
        %v6161 = vadd.f32 0.0, %v6160
        %v6162 = vpop.f32.mrb[0].mxu0
        %v6163 = vadd.f32 0.0, %v6162
        %v6164 = vpop.f32.mrb[0].mxu0
        %v6165 = vadd.f32 0.0, %v6164
        %6166 = vmatprep.mubr.bf16.mxu0 0
        %6167 = vmatmul.mubr.bf16.gmra.mrb[0].mxu0 %v6093
        %v6168 = vpop.f32.mrb[0].mxu0
        %v6169 = vadd.f32 0.0, %v6168
        %v6170 = vpop.f32.mrb[0].mxu0
        %v6171 = vadd.f32 0.0, %v6170
        %v6172 = vpop.f32.mrb[0].mxu0
        %v6173 = vadd.f32 0.0, %v6172
        %v6174 = vpop.f32.mrb[0].mxu0
        %v6175 = vadd.f32 0.0, %v6174
        %6176 = vmatprep.mubr.bf16.mxu0 0
        %6177 = vmatmul.mubr.bf16.gmra.mrb[0].mxu0 %v6096
        %v6178 = vpop.f32.mrb[0].mxu0
        %v6179 = vadd.f32 0.0, %v6178
        %v6180 = vpop.f32.mrb[0].mxu0
        %v6181 = vadd.f32 0.0, %v6180
        %v6182 = vpop.f32.mrb[0].mxu0
        %v6183 = vpop.f32.mrb[0].mxu0
        %6184 = vdwg.mxu0
        %6185 = vrot.lane.b32.xlu0 %v6139, 17
        %v6186 = vpop.permute.xlu0 %6185
        %6187 = vrot.lane.b32.xlu0 %v6141, 17
        %v6188 = vpop.permute.xlu0 %6187
        %v6189 = vsel %vm5442, %v6186, %v6188
        %v6190 = vsel %vm5442, %v6188, %v6186
        %v6191 = vmul.f32 %v6190, %v5448
        %v6192 = vmul.f32 %v6189, %v5452
        %v6193 = vadd.f32 %v6191, 0.0
        %v6194 = vadd.f32 %v6192, 0.0
        %6195 = vrot.lane.b32.xlu0 %v6143, 16
        %v6196 = vpop.permute.xlu0 %6195
        %6197 = vrot.lane.b32.xlu0 %v6145, 16
        %v6198 = vpop.permute.xlu0 %6197
        %v6199 = vsel %vm5461, %v6196, %v6198
        %v6200 = vsel %vm5461, %v6198, %v6196
        %v6201 = vmul.f32 %v6200, %v5467
        %v6202 = vmul.f32 %v6199, %v5471
        %v6203 = vadd.f32 %v6193, %v6201
        %v6204 = vadd.f32 %v6194, %v6202
        %6205 = vrot.lane.b32.xlu0 %v6149, 15
        %v6206 = vpop.permute.xlu0 %6205
        %6207 = vrot.lane.b32.xlu0 %v6151, 15
        %v6208 = vpop.permute.xlu0 %6207
        %v6209 = vsel %vm5480, %v6206, %v6208
        %v6210 = vsel %vm5480, %v6208, %v6206
        %v6211 = vmul.f32 %v6210, %v5486
        %v6212 = vmul.f32 %v6209, %v5490
        %v6213 = vadd.f32 %v6203, %v6211
        %v6214 = vadd.f32 %v6204, %v6212
        %6215 = vrot.lane.b32.xlu0 %v6153, 1
        %v6216 = vpop.permute.xlu0 %6215
        %6217 = vrot.lane.b32.xlu0 %v6155, 1
        %v6218 = vpop.permute.xlu0 %6217
        %v6219 = vsel %vm5499, %v6216, %v6218
        %v6220 = vsel %vm5499, %v6218, %v6216
        %v6221 = vmul.f32 %v6220, %v5505
        %v6222 = vmul.f32 %v6219, %v5509
        %v6223 = vadd.f32 %v6213, %v6221
        %v6224 = vadd.f32 %v6214, %v6222
        %v6225 = vadd.f32 %v6223, %v6159
        %v6226 = vadd.f32 %v6224, %v6161
        %6227 = vrot.lane.b32.xlu0 %v6163, 127
        %v6228 = vpop.permute.xlu0 %6227
        %6229 = vrot.lane.b32.xlu0 %v6165, 127
        %v6230 = vpop.permute.xlu0 %6229
        %v6231 = vsel %vm5520, %v6228, %v6230
        %v6232 = vsel %vm5520, %v6230, %v6228
        %v6233 = vmul.f32 %v6231, %v5526
        %v6234 = vmul.f32 %v6232, %v5530
        %v6235 = vadd.f32 %v6225, %v6233
        %v6236 = vadd.f32 %v6226, %v6234
        %6237 = vrot.lane.b32.xlu0 %v6169, 113
        %v6238 = vpop.permute.xlu0 %6237
        %6239 = vrot.lane.b32.xlu0 %v6171, 113
        %v6240 = vpop.permute.xlu0 %6239
        %v6241 = vsel %vm5539, %v6238, %v6240
        %v6242 = vsel %vm5539, %v6240, %v6238
        %v6243 = vmul.f32 %v6241, %v5545
        %v6244 = vmul.f32 %v6242, %v5549
        %v6245 = vadd.f32 %v6235, %v6243
        %v6246 = vadd.f32 %v6236, %v6244
        %6247 = vrot.lane.b32.xlu0 %v6173, 112
        %v6248 = vpop.permute.xlu0 %6247
        %6249 = vrot.lane.b32.xlu0 %v6175, 112
        %v6250 = vpop.permute.xlu0 %6249
        %v6251 = vsel %vm5558, %v6248, %v6250
        %v6252 = vsel %vm5558, %v6250, %v6248
        %v6253 = vmul.f32 %v6251, %v5564
        %v6254 = vmul.f32 %v6252, %v5568
        %v6255 = vadd.f32 %v6245, %v6253
        %v6256 = vadd.f32 %v6246, %v6254
        %6257 = vrot.lane.b32.xlu0 %v6179, 111
        %v6258 = vpop.permute.xlu0 %6257
        %6259 = vrot.lane.b32.xlu0 %v6181, 111
        %v6260 = vpop.permute.xlu0 %6259
        %v6261 = vsel %vm5577, %v6258, %v6260
        %v6262 = vsel %vm5577, %v6260, %v6258
        %v6263 = vmul.f32 %v6261, %v5583
        %v6264 = vmul.f32 %v6262, %v5587
        %v6265 = vadd.f32 %v6255, %v6263
        %v6266 = vadd.f32 %v6256, %v6264
        %6267 = vset.pattern.permute.xlu0 4
        %6268 = vperm.xlu0 %6267, %v574
        %v6269 = vpop.permute.xlu0 %6268
        %v6271 = vmul.f32 %v6265, %v6269
        %v6272 = vmul.f32 %v6266, %v6269
        %6273 = vset.pattern.permute.xlu0 5
        %6274 = vperm.xlu0 %6273, %v574
        %v6275 = vpop.permute.xlu0 %6274
        %v6277 = vadd.f32 %v6271, %v6275
        %v6278 = vadd.f32 %v6272, %v6275
        %v6279 = vmax.f32 %v6277, 0.0
        %v6280 = vmax.f32 %v6278, 0.0
        %6281 = vrot.lane.b32.xlu0 %v5176, 17
        %v6282 = vpop.permute.xlu0 %6281
        %6283 = vrot.lane.b32.xlu0 %v5180, 17
        %v6284 = vpop.permute.xlu0 %6283
        %6285 = vrot.lane.b32.xlu0 %v5178, 17
        %v6286 = vpop.permute.xlu0 %6285
        %6287 = vrot.lane.b32.xlu0 %v5182, 17
        %v6288 = vpop.permute.xlu0 %6287
        %v6289 = vsel %vm5442, %v6282, %v6286
        %v6290 = vsel %vm5442, %v6284, %v6288
        %v6291 = vsel %vm5442, %v6286, %v6282
        %v6292 = vsel %vm5442, %v6288, %v6284
        %v6293 = vmul.f32 %v6291, %v5448
        %v6294 = vmul.f32 %v6289, %v5452
        %v6295 = vmul.f32 %v6292, %v5448
        %v6296 = vmul.f32 %v6290, %v5452
        %v6297 = vadd.f32 %v6293, 0.0
        %v6298 = vadd.f32 %v6294, 0.0
        %v6299 = vadd.f32 %v6295, 0.0
        %v6300 = vadd.f32 %v6296, 0.0
        %6301 = vrot.lane.b32.xlu0 %v5186, 16
        %v6302 = vpop.permute.xlu0 %6301
        %6303 = vrot.lane.b32.xlu0 %v5190, 16
        %v6304 = vpop.permute.xlu0 %6303
        %6305 = vrot.lane.b32.xlu0 %v5188, 16
        %v6306 = vpop.permute.xlu0 %6305
        %6307 = vrot.lane.b32.xlu0 %v5192, 16
        %v6308 = vpop.permute.xlu0 %6307
        %v6309 = vsel %vm5461, %v6302, %v6306
        %v6310 = vsel %vm5461, %v6304, %v6308
        %v6311 = vsel %vm5461, %v6306, %v6302
        %v6312 = vsel %vm5461, %v6308, %v6304
        %v6313 = vmul.f32 %v6311, %v5467
        %v6314 = vmul.f32 %v6309, %v5471
        %v6315 = vmul.f32 %v6312, %v5467
        %v6316 = vmul.f32 %v6310, %v5471
        %v6317 = vadd.f32 %v6297, %v6313
        %v6318 = vadd.f32 %v6298, %v6314
        %v6319 = vadd.f32 %v6299, %v6315
        %v6320 = vadd.f32 %v6300, %v6316
        %6321 = vrot.lane.b32.xlu0 %v5196, 15
        %v6322 = vpop.permute.xlu0 %6321
        %6323 = vrot.lane.b32.xlu0 %v5200, 15
        %v6324 = vpop.permute.xlu0 %6323
        %6325 = vrot.lane.b32.xlu0 %v5198, 15
        %v6326 = vpop.permute.xlu0 %6325
        %6327 = vrot.lane.b32.xlu0 %v5202, 15
        %v6328 = vpop.permute.xlu0 %6327
        %v6329 = vsel %vm5480, %v6322, %v6326
        %v6330 = vsel %vm5480, %v6324, %v6328
        %v6331 = vsel %vm5480, %v6326, %v6322
        %v6332 = vsel %vm5480, %v6328, %v6324
        %v6333 = vmul.f32 %v6331, %v5486
        %v6334 = vmul.f32 %v6329, %v5490
        %v6335 = vmul.f32 %v6332, %v5486
        %v6336 = vmul.f32 %v6330, %v5490
        %v6337 = vadd.f32 %v6317, %v6333
        %v6338 = vadd.f32 %v6318, %v6334
        %v6339 = vadd.f32 %v6319, %v6335
        %v6340 = vadd.f32 %v6320, %v6336
        %6341 = vrot.lane.b32.xlu0 %v5206, 1
        %v6342 = vpop.permute.xlu0 %6341
        %6343 = vrot.lane.b32.xlu0 %v5210, 1
        %v6344 = vpop.permute.xlu0 %6343
        %6345 = vrot.lane.b32.xlu0 %v5208, 1
        %v6346 = vpop.permute.xlu0 %6345
        %6347 = vrot.lane.b32.xlu0 %v5212, 1
        %v6348 = vpop.permute.xlu0 %6347
        %v6349 = vsel %vm5499, %v6342, %v6346
        %v6350 = vsel %vm5499, %v6344, %v6348
        %v6351 = vsel %vm5499, %v6346, %v6342
        %v6352 = vsel %vm5499, %v6348, %v6344
        %v6353 = vmul.f32 %v6351, %v5505
        %v6354 = vmul.f32 %v6349, %v5509
        %v6355 = vmul.f32 %v6352, %v5505
        %v6356 = vmul.f32 %v6350, %v5509
        %v6357 = vadd.f32 %v6337, %v6353
        %v6358 = vadd.f32 %v6338, %v6354
        %v6359 = vadd.f32 %v6339, %v6355
        %v6360 = vadd.f32 %v6340, %v6356
        %v6361 = vadd.f32 %v6357, %v5216
        %v6362 = vadd.f32 %v6358, %v5218
        %v6363 = vadd.f32 %v6359, %v5220
        %v6364 = vadd.f32 %v6360, %v5222
        %6365 = vrot.lane.b32.xlu0 %v5226, 127
        %v6366 = vpop.permute.xlu0 %6365
        %6367 = vrot.lane.b32.xlu0 %v5230, 127
        %v6368 = vpop.permute.xlu0 %6367
        %6369 = vrot.lane.b32.xlu0 %v5228, 127
        %v6370 = vpop.permute.xlu0 %6369
        %6371 = vrot.lane.b32.xlu0 %v5232, 127
        %v6372 = vpop.permute.xlu0 %6371
        %v6373 = vsel %vm5520, %v6366, %v6370
        %v6374 = vsel %vm5520, %v6368, %v6372
        %v6375 = vsel %vm5520, %v6370, %v6366
        %v6376 = vsel %vm5520, %v6372, %v6368
        %v6377 = vmul.f32 %v6373, %v5526
        %v6378 = vmul.f32 %v6375, %v5530
        %v6379 = vmul.f32 %v6374, %v5526
        %v6380 = vmul.f32 %v6376, %v5530
        %v6381 = vadd.f32 %v6361, %v6377
        %v6382 = vadd.f32 %v6362, %v6378
        %v6383 = vadd.f32 %v6363, %v6379
        %v6384 = vadd.f32 %v6364, %v6380
        %6385 = vrot.lane.b32.xlu0 %v5236, 113
        %v6386 = vpop.permute.xlu0 %6385
        %6387 = vrot.lane.b32.xlu0 %v5240, 113
        %v6388 = vpop.permute.xlu0 %6387
        %6389 = vrot.lane.b32.xlu0 %v5238, 113
        %v6390 = vpop.permute.xlu0 %6389
        %6391 = vrot.lane.b32.xlu0 %v5242, 113
        %v6392 = vpop.permute.xlu0 %6391
        %v6393 = vsel %vm5539, %v6386, %v6390
        %v6394 = vsel %vm5539, %v6388, %v6392
        %v6395 = vsel %vm5539, %v6390, %v6386
        %v6396 = vsel %vm5539, %v6392, %v6388
        %v6397 = vmul.f32 %v6393, %v5545
        %v6398 = vmul.f32 %v6395, %v5549
        %v6399 = vmul.f32 %v6394, %v5545
        %v6400 = vmul.f32 %v6396, %v5549
        %v6401 = vadd.f32 %v6381, %v6397
        %v6402 = vadd.f32 %v6382, %v6398
        %v6403 = vadd.f32 %v6383, %v6399
        %v6404 = vadd.f32 %v6384, %v6400
        %6405 = vrot.lane.b32.xlu0 %v5246, 112
        %v6406 = vpop.permute.xlu0 %6405
        %6407 = vrot.lane.b32.xlu0 %v5250, 112
        %v6408 = vpop.permute.xlu0 %6407
        %6409 = vrot.lane.b32.xlu0 %v5248, 112
        %v6410 = vpop.permute.xlu0 %6409
        %6411 = vrot.lane.b32.xlu0 %v5252, 112
        %v6412 = vpop.permute.xlu0 %6411
        %v6413 = vsel %vm5558, %v6406, %v6410
        %v6414 = vsel %vm5558, %v6408, %v6412
        %v6415 = vsel %vm5558, %v6410, %v6406
        %v6416 = vsel %vm5558, %v6412, %v6408
        %v6417 = vmul.f32 %v6413, %v5564
        %v6418 = vmul.f32 %v6415, %v5568
        %v6419 = vmul.f32 %v6414, %v5564
        %v6420 = vmul.f32 %v6416, %v5568
        %v6421 = vadd.f32 %v6401, %v6417
        %v6422 = vadd.f32 %v6402, %v6418
        %v6423 = vadd.f32 %v6403, %v6419
        %v6424 = vadd.f32 %v6404, %v6420
        %6425 = vrot.lane.b32.xlu0 %v5256, 111
        %v6426 = vpop.permute.xlu0 %6425
        %6427 = vrot.lane.b32.xlu0 %v5260, 111
        %v6428 = vpop.permute.xlu0 %6427
        %6429 = vrot.lane.b32.xlu0 %v5258, 111
        %v6430 = vpop.permute.xlu0 %6429
        %6431 = vrot.lane.b32.xlu0 %v5262, 111
        %v6432 = vpop.permute.xlu0 %6431
        %v6433 = vsel %vm5577, %v6426, %v6430
        %v6434 = vsel %vm5577, %v6428, %v6432
        %v6435 = vsel %vm5577, %v6430, %v6426
        %v6436 = vsel %vm5577, %v6432, %v6428
        %v6437 = vmul.f32 %v6433, %v5583
        %v6438 = vmul.f32 %v6435, %v5587
        %v6439 = vmul.f32 %v6434, %v5583
        %v6440 = vmul.f32 %v6436, %v5587
        %v6441 = vadd.f32 %v6421, %v6437
        %v6442 = vadd.f32 %v6422, %v6438
        %v6443 = vadd.f32 %v6423, %v6439
        %v6444 = vadd.f32 %v6424, %v6440
        %s6445 = scalar_lea.vmem %s9, 144
        %v6446 = vld [vmem:[%s6445] sm:$0xf]
        %v6447 = vld [vmem:[%s6445 + $0x4] sm:$0xf]
        %v6448 = vld [vmem:[%s6445 + $0x8] sm:$0xf]
        %v6449 = vld [vmem:[%s6445 + $0xc] sm:$0xf]
        %v6450 = vld [vmem:[%s6445 + $0x10] sm:$0xf]
        %v6451 = vld [vmem:[%s6445 + $0x14] sm:$0xf]
        %v6452 = vld [vmem:[%s6445 + $0x18] sm:$0xf]
        %v6453 = vld [vmem:[%s6445 + $0x1c] sm:$0xf]
        %v6454 = vld [vmem:[%s6445 + $0x20] sm:$0xf]
        %v6455 = vpack.c.bf16 %v6044, %v6044
        %v6456 = vpack.c.bf16 %v6045, %v6045
        %v6466 = vunpack.c.l.b16 %v6446
        %v6467 = vunpack.c.l.b16 %v6447
        %v6468 = vunpack.c.l.b16 %v6448
        %v6469 = vunpack.c.l.b16 %v6449
        %v6470 = vunpack.c.l.b16 %v6450
        %v6471 = vunpack.c.l.b16 %v6451
        %v6472 = vunpack.c.l.b16 %v6452
        %v6473 = vunpack.c.l.b16 %v6453
        %v6474 = vunpack.c.l.b16 %v6454
        %v6475 = vpack.c.b16 %v6467, %v6466
        %v6476 = vpack.c.b16 %v6469, %v6468
        %v6477 = vpack.c.b16 %v6471, %v6470
        %v6478 = vpack.c.b16 %v6473, %v6472
        %v6479 = vpack.c.b16 %v6474, %v6474
        %v6481 = vsel %vm5332, %v6475, 0
        %v6484 = vsel %vm5332, %v6476, 0
        %v6487 = vsel %vm5332, %v6477, 0
        %v6490 = vsel %vm5332, %v6478, 0
        %v6493 = vsel %vm5332, %v6479, 0
        %v6496 = vsel %vm5348, %v6455, 0
        %v6499 = vsel %vm5348, %v6456, 0
        %6501 = vmatprep.subr.bf16.mxu0 %v6499
        %6502 = vmatpush1.bf16.msra.mxu0 %v6496
        %6503 = vmatprep.subr.bf16.mxu0 0
        %6504 = vmatpush1.bf16.msra.mxu0 0
        %6505 = vmatprep.subr.bf16.mxu0 0
        %6506 = vmatpush1.bf16.msra.mxu0 0
        %6507 = vmatprep.subr.bf16.mxu0 0
        %6508 = vmatpush1.bf16.msra.mxu0 0
        %6509 = vmatprep.subr.bf16.mxu0 0
        %6510 = vmatpush1.bf16.msra.mxu0 0
        %6511 = vmatprep.subr.bf16.mxu0 0
        %6512 = vmatpush1.bf16.msra.mxu0 0
        %6513 = vmatprep.subr.bf16.mxu0 0
        %6514 = vmatpush1.bf16.msra.mxu0 0
        %6515 = vmatprep.subr.bf16.mxu0 0
        %6516 = vmatpush1.bf16.msra.mxu0 0
        %6517 = vmatprep.subr.bf16.mxu0 0
        %6518 = vmatpush1.bf16.msra.mxu0 0
        %6519 = vmatprep.subr.bf16.mxu0 0
        %6520 = vmatpush1.bf16.msra.mxu0 0
        %6521 = vmatprep.subr.bf16.mxu0 0
        %6522 = vmatpush1.bf16.msra.mxu0 0
        %6523 = vmatprep.subr.bf16.mxu0 0
        %6524 = vmatpush1.bf16.msra.mxu0 0
        %6525 = vmatprep.subr.bf16.mxu0 0
        %6526 = vmatpush1.bf16.msra.mxu0 0
        %6527 = vmatprep.subr.bf16.mxu0 0
        %6528 = vmatpush1.bf16.msra.mxu0 0
        %6529 = vmatprep.subr.bf16.mxu0 0
        %6530 = vmatpush1.bf16.msra.mxu0 0
        %6531 = vmatprep.subr.bf16.mxu0 0
        %6532 = vmatpush1.bf16.msra.mxu0 0
        %6533 = vmatprep.mubr.bf16.mxu0 0
        %6534 = vmatmul.mubr.bf16.gmra.mrb[0].mxu0 %v6481
        %v6535 = vpop.f32.mrb[0].mxu0
        %v6536 = vadd.f32 0.0, %v6535
        %v6537 = vpop.f32.mrb[0].mxu0
        %v6538 = vadd.f32 0.0, %v6537
        %v6539 = vpop.f32.mrb[0].mxu0
        %v6540 = vadd.f32 0.0, %v6539
        %v6541 = vpop.f32.mrb[0].mxu0
        %v6542 = vadd.f32 0.0, %v6541
        %6543 = vmatprep.mubr.bf16.mxu0 0
        %6544 = vmatmul.mubr.bf16.gmra.mrb[0].mxu0 %v6484
        %v6545 = vpop.f32.mrb[0].mxu0
        %v6546 = vadd.f32 0.0, %v6545
        %v6547 = vpop.f32.mrb[0].mxu0
        %v6548 = vadd.f32 0.0, %v6547
        %v6549 = vpop.f32.mrb[0].mxu0
        %v6550 = vadd.f32 0.0, %v6549
        %v6551 = vpop.f32.mrb[0].mxu0
        %v6552 = vadd.f32 0.0, %v6551
        %6553 = vmatprep.mubr.bf16.mxu0 0
        %6554 = vmatmul.mubr.bf16.gmra.mrb[0].mxu0 %v6487
        %v6555 = vpop.f32.mrb[0].mxu0
        %v6556 = vadd.f32 0.0, %v6555
        %v6557 = vpop.f32.mrb[0].mxu0
        %v6558 = vadd.f32 0.0, %v6557
        %v6559 = vpop.f32.mrb[0].mxu0
        %v6560 = vadd.f32 0.0, %v6559
        %v6561 = vpop.f32.mrb[0].mxu0
        %v6562 = vadd.f32 0.0, %v6561
        %6563 = vmatprep.mubr.bf16.mxu0 0
        %6564 = vmatmul.mubr.bf16.gmra.mrb[0].mxu0 %v6490
        %v6565 = vpop.f32.mrb[0].mxu0
        %v6566 = vadd.f32 0.0, %v6565
        %v6567 = vpop.f32.mrb[0].mxu0
        %v6568 = vadd.f32 0.0, %v6567
        %v6569 = vpop.f32.mrb[0].mxu0
        %v6570 = vadd.f32 0.0, %v6569
        %v6571 = vpop.f32.mrb[0].mxu0
        %v6572 = vadd.f32 0.0, %v6571
        %6573 = vmatprep.mubr.bf16.mxu0 0
        %6574 = vmatmul.mubr.bf16.gmra.mrb[0].mxu0 %v6493
        %v6575 = vpop.f32.mrb[0].mxu0
        %v6576 = vadd.f32 0.0, %v6575
        %v6577 = vpop.f32.mrb[0].mxu0
        %v6578 = vadd.f32 0.0, %v6577
        %v6579 = vpop.f32.mrb[0].mxu0
        %v6580 = vpop.f32.mrb[0].mxu0
        %6581 = vdwg.mxu0
        %6582 = vrot.lane.b32.xlu0 %v6536, 17
        %v6583 = vpop.permute.xlu0 %6582
        %6584 = vrot.lane.b32.xlu0 %v6538, 17
        %v6585 = vpop.permute.xlu0 %6584
        %v6586 = vsel %vm5442, %v6583, %v6585
        %v6587 = vsel %vm5442, %v6585, %v6583
        %v6588 = vmul.f32 %v6587, %v5448
        %v6589 = vmul.f32 %v6586, %v5452
        %v6590 = vadd.f32 %v6588, 0.0
        %v6591 = vadd.f32 %v6589, 0.0
        %6592 = vrot.lane.b32.xlu0 %v6540, 16
        %v6593 = vpop.permute.xlu0 %6592
        %6594 = vrot.lane.b32.xlu0 %v6542, 16
        %v6595 = vpop.permute.xlu0 %6594
        %v6596 = vsel %vm5461, %v6593, %v6595
        %v6597 = vsel %vm5461, %v6595, %v6593
        %v6598 = vmul.f32 %v6597, %v5467
        %v6599 = vmul.f32 %v6596, %v5471
        %v6600 = vadd.f32 %v6590, %v6598
        %v6601 = vadd.f32 %v6591, %v6599
        %6602 = vrot.lane.b32.xlu0 %v6546, 15
        %v6603 = vpop.permute.xlu0 %6602
        %6604 = vrot.lane.b32.xlu0 %v6548, 15
        %v6605 = vpop.permute.xlu0 %6604
        %v6606 = vsel %vm5480, %v6603, %v6605
        %v6607 = vsel %vm5480, %v6605, %v6603
        %v6608 = vmul.f32 %v6607, %v5486
        %v6609 = vmul.f32 %v6606, %v5490
        %v6610 = vadd.f32 %v6600, %v6608
        %v6611 = vadd.f32 %v6601, %v6609
        %6612 = vrot.lane.b32.xlu0 %v6550, 1
        %v6613 = vpop.permute.xlu0 %6612
        %6614 = vrot.lane.b32.xlu0 %v6552, 1
        %v6615 = vpop.permute.xlu0 %6614
        %v6616 = vsel %vm5499, %v6613, %v6615
        %v6617 = vsel %vm5499, %v6615, %v6613
        %v6618 = vmul.f32 %v6617, %v5505
        %v6619 = vmul.f32 %v6616, %v5509
        %v6620 = vadd.f32 %v6610, %v6618
        %v6621 = vadd.f32 %v6611, %v6619
        %v6622 = vadd.f32 %v6620, %v6556
        %v6623 = vadd.f32 %v6621, %v6558
        %6624 = vrot.lane.b32.xlu0 %v6560, 127
        %v6625 = vpop.permute.xlu0 %6624
        %6626 = vrot.lane.b32.xlu0 %v6562, 127
        %v6627 = vpop.permute.xlu0 %6626
        %v6628 = vsel %vm5520, %v6625, %v6627
        %v6629 = vsel %vm5520, %v6627, %v6625
        %v6630 = vmul.f32 %v6628, %v5526
        %v6631 = vmul.f32 %v6629, %v5530
        %v6632 = vadd.f32 %v6622, %v6630
        %v6633 = vadd.f32 %v6623, %v6631
        %6634 = vrot.lane.b32.xlu0 %v6566, 113
        %v6635 = vpop.permute.xlu0 %6634
        %6636 = vrot.lane.b32.xlu0 %v6568, 113
        %v6637 = vpop.permute.xlu0 %6636
        %v6638 = vsel %vm5539, %v6635, %v6637
        %v6639 = vsel %vm5539, %v6637, %v6635
        %v6640 = vmul.f32 %v6638, %v5545
        %v6641 = vmul.f32 %v6639, %v5549
        %v6642 = vadd.f32 %v6632, %v6640
        %v6643 = vadd.f32 %v6633, %v6641
        %6644 = vrot.lane.b32.xlu0 %v6570, 112
        %v6645 = vpop.permute.xlu0 %6644
        %6646 = vrot.lane.b32.xlu0 %v6572, 112
        %v6647 = vpop.permute.xlu0 %6646
        %v6648 = vsel %vm5558, %v6645, %v6647
        %v6649 = vsel %vm5558, %v6647, %v6645
        %v6650 = vmul.f32 %v6648, %v5564
        %v6651 = vmul.f32 %v6649, %v5568
        %v6652 = vadd.f32 %v6642, %v6650
        %v6653 = vadd.f32 %v6643, %v6651
        %6654 = vrot.lane.b32.xlu0 %v6576, 111
        %v6655 = vpop.permute.xlu0 %6654
        %6656 = vrot.lane.b32.xlu0 %v6578, 111
        %v6657 = vpop.permute.xlu0 %6656
        %v6658 = vsel %vm5577, %v6655, %v6657
        %v6659 = vsel %vm5577, %v6657, %v6655
        %v6660 = vmul.f32 %v6658, %v5583
        %v6661 = vmul.f32 %v6659, %v5587
        %v6662 = vadd.f32 %v6652, %v6660
        %v6663 = vadd.f32 %v6653, %v6661
        %v6664 = vadd.f32 %v6662, %v6441
        %v6665 = vadd.f32 %v6663, %v6442
        %6666 = vset.pattern.permute.xlu0 6
        %6667 = vperm.xlu0 %6666, %v574
        %v6668 = vpop.permute.xlu0 %6667
        %v6670 = vmul.f32 %v6664, %v6668
        %v6671 = vmul.f32 %v6665, %v6668
        %6672 = vset.pattern.permute.xlu0 7
        %6673 = vperm.xlu0 %6672, %v574
        %v6674 = vpop.permute.xlu0 %6673
        %v6676 = vadd.f32 %v6670, %v6674
        %v6677 = vadd.f32 %v6671, %v6674
        %v6678 = vmax.f32 %v6676, 0.0
        %v6679 = vmax.f32 %v6677, 0.0
        %s6680 = scalar_lea.vmem %s9, 180
        %v6681 = vld [vmem:[%s6680] sm:$0xf]
        %v6682 = vld [vmem:[%s6680 + $0x4] sm:$0xf]
        %v6683 = vld [vmem:[%s6680 + $0x8] sm:$0xf]
        %v6684 = vld [vmem:[%s6680 + $0xc] sm:$0xf]
        %v6685 = vld [vmem:[%s6680 + $0x10] sm:$0xf]
        %v6686 = vld [vmem:[%s6680 + $0x14] sm:$0xf]
        %v6687 = vld [vmem:[%s6680 + $0x18] sm:$0xf]
        %v6688 = vld [vmem:[%s6680 + $0x1c] sm:$0xf]
        %v6689 = vld [vmem:[%s6680 + $0x20] sm:$0xf]
        %v6690 = vpack.c.bf16 %v6279, %v6279
        %v6691 = vpack.c.bf16 %v6280, %v6280
        %v6701 = vunpack.c.l.b16 %v6681
        %v6702 = vunpack.c.l.b16 %v6682
        %v6703 = vunpack.c.l.b16 %v6683
        %v6704 = vunpack.c.l.b16 %v6684
        %v6705 = vunpack.c.l.b16 %v6685
        %v6706 = vunpack.c.l.b16 %v6686
        %v6707 = vunpack.c.l.b16 %v6687
        %v6708 = vunpack.c.l.b16 %v6688
        %v6709 = vunpack.c.l.b16 %v6689
        %v6710 = vpack.c.b16 %v6702, %v6701
        %v6711 = vpack.c.b16 %v6704, %v6703
        %v6712 = vpack.c.b16 %v6706, %v6705
        %v6713 = vpack.c.b16 %v6708, %v6707
        %v6714 = vpack.c.b16 %v6709, %v6709
        %v6716 = vsel %vm5332, %v6710, 0
        %v6719 = vsel %vm5332, %v6711, 0
        %v6722 = vsel %vm5332, %v6712, 0
        %v6725 = vsel %vm5332, %v6713, 0
        %v6728 = vsel %vm5332, %v6714, 0
        %v6731 = vsel %vm5348, %v6690, 0
        %v6734 = vsel %vm5348, %v6691, 0
        %6736 = vmatprep.subr.bf16.mxu0 %v6734
        %6737 = vmatpush1.bf16.msra.mxu0 %v6731
        %6738 = vmatprep.subr.bf16.mxu0 0
        %6739 = vmatpush1.bf16.msra.mxu0 0
        %6740 = vmatprep.subr.bf16.mxu0 0
        %6741 = vmatpush1.bf16.msra.mxu0 0
        %6742 = vmatprep.subr.bf16.mxu0 0
        %6743 = vmatpush1.bf16.msra.mxu0 0
        %6744 = vmatprep.subr.bf16.mxu0 0
        %6745 = vmatpush1.bf16.msra.mxu0 0
        %6746 = vmatprep.subr.bf16.mxu0 0
        %6747 = vmatpush1.bf16.msra.mxu0 0
        %6748 = vmatprep.subr.bf16.mxu0 0
        %6749 = vmatpush1.bf16.msra.mxu0 0
        %6750 = vmatprep.subr.bf16.mxu0 0
        %6751 = vmatpush1.bf16.msra.mxu0 0
        %6752 = vmatprep.subr.bf16.mxu0 0
        %6753 = vmatpush1.bf16.msra.mxu0 0
        %6754 = vmatprep.subr.bf16.mxu0 0
        %6755 = vmatpush1.bf16.msra.mxu0 0
        %6756 = vmatprep.subr.bf16.mxu0 0
        %6757 = vmatpush1.bf16.msra.mxu0 0
        %6758 = vmatprep.subr.bf16.mxu0 0
        %6759 = vmatpush1.bf16.msra.mxu0 0
        %6760 = vmatprep.subr.bf16.mxu0 0
        %6761 = vmatpush1.bf16.msra.mxu0 0
        %6762 = vmatprep.subr.bf16.mxu0 0
        %6763 = vmatpush1.bf16.msra.mxu0 0
        %6764 = vmatprep.subr.bf16.mxu0 0
        %6765 = vmatpush1.bf16.msra.mxu0 0
        %6766 = vmatprep.subr.bf16.mxu0 0
        %6767 = vmatpush1.bf16.msra.mxu0 0
        %6768 = vmatprep.mubr.bf16.mxu0 0
        %6769 = vmatmul.mubr.bf16.gmra.mrb[0].mxu0 %v6716
        %v6770 = vpop.f32.mrb[0].mxu0
        %v6771 = vadd.f32 0.0, %v6770
        %v6772 = vpop.f32.mrb[0].mxu0
        %v6773 = vadd.f32 0.0, %v6772
        %v6774 = vpop.f32.mrb[0].mxu0
        %v6775 = vadd.f32 0.0, %v6774
        %v6776 = vpop.f32.mrb[0].mxu0
        %v6777 = vadd.f32 0.0, %v6776
        %6778 = vmatprep.mubr.bf16.mxu0 0
        %6779 = vmatmul.mubr.bf16.gmra.mrb[0].mxu0 %v6719
        %v6780 = vpop.f32.mrb[0].mxu0
        %v6781 = vadd.f32 0.0, %v6780
        %v6782 = vpop.f32.mrb[0].mxu0
        %v6783 = vadd.f32 0.0, %v6782
        %v6784 = vpop.f32.mrb[0].mxu0
        %v6785 = vadd.f32 0.0, %v6784
        %v6786 = vpop.f32.mrb[0].mxu0
        %v6787 = vadd.f32 0.0, %v6786
        %6788 = vmatprep.mubr.bf16.mxu0 0
        %6789 = vmatmul.mubr.bf16.gmra.mrb[0].mxu0 %v6722
        %v6790 = vpop.f32.mrb[0].mxu0
        %v6791 = vadd.f32 0.0, %v6790
        %v6792 = vpop.f32.mrb[0].mxu0
        %v6793 = vadd.f32 0.0, %v6792
        %v6794 = vpop.f32.mrb[0].mxu0
        %v6795 = vadd.f32 0.0, %v6794
        %v6796 = vpop.f32.mrb[0].mxu0
        %v6797 = vadd.f32 0.0, %v6796
        %6798 = vmatprep.mubr.bf16.mxu0 0
        %6799 = vmatmul.mubr.bf16.gmra.mrb[0].mxu0 %v6725
        %v6800 = vpop.f32.mrb[0].mxu0
        %v6801 = vadd.f32 0.0, %v6800
        %v6802 = vpop.f32.mrb[0].mxu0
        %v6803 = vadd.f32 0.0, %v6802
        %v6804 = vpop.f32.mrb[0].mxu0
        %v6805 = vadd.f32 0.0, %v6804
        %v6806 = vpop.f32.mrb[0].mxu0
        %v6807 = vadd.f32 0.0, %v6806
        %6808 = vmatprep.mubr.bf16.mxu0 0
        %6809 = vmatmul.mubr.bf16.gmra.mrb[0].mxu0 %v6728
        %v6810 = vpop.f32.mrb[0].mxu0
        %v6811 = vadd.f32 0.0, %v6810
        %v6812 = vpop.f32.mrb[0].mxu0
        %v6813 = vadd.f32 0.0, %v6812
        %v6814 = vpop.f32.mrb[0].mxu0
        %v6815 = vpop.f32.mrb[0].mxu0
        %6816 = vdwg.mxu0
        %6817 = vrot.lane.b32.xlu0 %v6771, 17
        %v6818 = vpop.permute.xlu0 %6817
        %6819 = vrot.lane.b32.xlu0 %v6773, 17
        %v6820 = vpop.permute.xlu0 %6819
        %v6821 = vsel %vm5442, %v6818, %v6820
        %v6822 = vsel %vm5442, %v6820, %v6818
        %v6823 = vmul.f32 %v6822, %v5448
        %v6824 = vmul.f32 %v6821, %v5452
        %v6825 = vadd.f32 %v6823, 0.0
        %v6826 = vadd.f32 %v6824, 0.0
        %6827 = vrot.lane.b32.xlu0 %v6775, 16
        %v6828 = vpop.permute.xlu0 %6827
        %6829 = vrot.lane.b32.xlu0 %v6777, 16
        %v6830 = vpop.permute.xlu0 %6829
        %v6831 = vsel %vm5461, %v6828, %v6830
        %v6832 = vsel %vm5461, %v6830, %v6828
        %v6833 = vmul.f32 %v6832, %v5467
        %v6834 = vmul.f32 %v6831, %v5471
        %v6835 = vadd.f32 %v6825, %v6833
        %v6836 = vadd.f32 %v6826, %v6834
        %6837 = vrot.lane.b32.xlu0 %v6781, 15
        %v6838 = vpop.permute.xlu0 %6837
        %6839 = vrot.lane.b32.xlu0 %v6783, 15
        %v6840 = vpop.permute.xlu0 %6839
        %v6841 = vsel %vm5480, %v6838, %v6840
        %v6842 = vsel %vm5480, %v6840, %v6838
        %v6843 = vmul.f32 %v6842, %v5486
        %v6844 = vmul.f32 %v6841, %v5490
        %v6845 = vadd.f32 %v6835, %v6843
        %v6846 = vadd.f32 %v6836, %v6844
        %6847 = vrot.lane.b32.xlu0 %v6785, 1
        %v6848 = vpop.permute.xlu0 %6847
        %6849 = vrot.lane.b32.xlu0 %v6787, 1
        %v6850 = vpop.permute.xlu0 %6849
        %v6851 = vsel %vm5499, %v6848, %v6850
        %v6852 = vsel %vm5499, %v6850, %v6848
        %v6853 = vmul.f32 %v6852, %v5505
        %v6854 = vmul.f32 %v6851, %v5509
        %v6855 = vadd.f32 %v6845, %v6853
        %v6856 = vadd.f32 %v6846, %v6854
        %v6857 = vadd.f32 %v6855, %v6791
        %v6858 = vadd.f32 %v6856, %v6793
        %6859 = vrot.lane.b32.xlu0 %v6795, 127
        %v6860 = vpop.permute.xlu0 %6859
        %6861 = vrot.lane.b32.xlu0 %v6797, 127
        %v6862 = vpop.permute.xlu0 %6861
        %v6863 = vsel %vm5520, %v6860, %v6862
        %v6864 = vsel %vm5520, %v6862, %v6860
        %v6865 = vmul.f32 %v6863, %v5526
        %v6866 = vmul.f32 %v6864, %v5530
        %v6867 = vadd.f32 %v6857, %v6865
        %v6868 = vadd.f32 %v6858, %v6866
        %6869 = vrot.lane.b32.xlu0 %v6801, 113
        %v6870 = vpop.permute.xlu0 %6869
        %6871 = vrot.lane.b32.xlu0 %v6803, 113
        %v6872 = vpop.permute.xlu0 %6871
        %v6873 = vsel %vm5539, %v6870, %v6872
        %v6874 = vsel %vm5539, %v6872, %v6870
        %v6875 = vmul.f32 %v6873, %v5545
        %v6876 = vmul.f32 %v6874, %v5549
        %v6877 = vadd.f32 %v6867, %v6875
        %v6878 = vadd.f32 %v6868, %v6876
        %6879 = vrot.lane.b32.xlu0 %v6805, 112
        %v6880 = vpop.permute.xlu0 %6879
        %6881 = vrot.lane.b32.xlu0 %v6807, 112
        %v6882 = vpop.permute.xlu0 %6881
        %v6883 = vsel %vm5558, %v6880, %v6882
        %v6884 = vsel %vm5558, %v6882, %v6880
        %v6885 = vmul.f32 %v6883, %v5564
        %v6886 = vmul.f32 %v6884, %v5568
        %v6887 = vadd.f32 %v6877, %v6885
        %v6888 = vadd.f32 %v6878, %v6886
        %6889 = vrot.lane.b32.xlu0 %v6811, 111
        %v6890 = vpop.permute.xlu0 %6889
        %6891 = vrot.lane.b32.xlu0 %v6813, 111
        %v6892 = vpop.permute.xlu0 %6891
        %v6893 = vsel %vm5577, %v6890, %v6892
        %v6894 = vsel %vm5577, %v6892, %v6890
        %v6895 = vmul.f32 %v6893, %v5583
        %v6896 = vmul.f32 %v6894, %v5587
        %v6897 = vadd.f32 %v6887, %v6895
        %v6898 = vadd.f32 %v6888, %v6896
        %v6899 = vadd.f32 %v6897, %v6443
        %v6900 = vadd.f32 %v6898, %v6444
        %6901 = vset.pattern.permute.xlu0 8
        %6902 = vperm.xlu0 %6901, %v574
        %v6903 = vpop.permute.xlu0 %6902
        %v6905 = vmul.f32 %v6899, %v6903
        %v6906 = vmul.f32 %v6900, %v6903
        %6907 = vset.pattern.permute.xlu0 9
        %6908 = vperm.xlu0 %6907, %v574
        %v6909 = vpop.permute.xlu0 %6908
        %v6911 = vadd.f32 %v6905, %v6909
        %v6912 = vadd.f32 %v6906, %v6909
        %v6913 = vmax.f32 %v6911, 0.0
        %v6914 = vmax.f32 %v6912, 0.0
        %6915 = vset.pattern.permute.xlu0 10
        %6916 = vperm.xlu0 %6915, %v574
        %v6917 = vpop.permute.xlu0 %6916
        %v6919 = vmul.f32 %v6678, %v6917
        %v6920 = vmul.f32 %v6679, %v6917
        %6921 = vset.pattern.permute.xlu0 11
        %6922 = vperm.xlu0 %6921, %v574
        %v6923 = vpop.permute.xlu0 %6922
        %v6925 = vadd.f32 %v6919, %v6923
        %v6926 = vadd.f32 %v6920, %v6923
        %v6927 = vmax.f32 %v6925, 0.0
        %v6928 = vmax.f32 %v6926, 0.0
        %6929 = vset.pattern.permute.xlu0 12
        %6930 = vperm.xlu0 %6929, %v574
        %v6931 = vpop.permute.xlu0 %6930
        %v6933 = vmul.f32 %v6913, %v6931
        %v6934 = vmul.f32 %v6914, %v6931
        %6935 = vset.pattern.permute.xlu0 13
        %6936 = vperm.xlu0 %6935, %v574
        %v6937 = vpop.permute.xlu0 %6936
        %v6939 = vadd.f32 %v6933, %v6937
        %v6940 = vadd.f32 %v6934, %v6937
        %v6941 = vmax.f32 %v6939, 0.0
        %v6942 = vmax.f32 %v6940, 0.0
        %6943 = vst [vmem:[%s565] sm:$0xff] %v6941
        %6944 = vst [vmem:[%s565 + $0x8] sm:$0xff] %v6942
        %v6945 = vld [vmem:[%s11] sm:$0xf]
        %v6946 = vld [vmem:[%s11 + $0x4] sm:$0xf]
        %v6947 = vld [vmem:[%s11 + $0x8] sm:$0xf]
        %v6948 = vld [vmem:[%s11 + $0xc] sm:$0xf]
        %v6949 = vld [vmem:[%s11 + $0x10] sm:$0xf]
        %v6950 = vld [vmem:[%s11 + $0x14] sm:$0xf]
        %v6951 = vld [vmem:[%s11 + $0x18] sm:$0x1]
        %v6952 = vadd.f32 %v6927, %v6941
        %v6953 = vadd.f32 %v6928, %v6942
        %v6954 = vpack.c.bf16 %v6952, %v6952
        %v6955 = vpack.c.bf16 %v6953, %v6953
        %v6963 = vunpack.c.l.b16 %v6945
        %v6964 = vunpack.c.l.b16 %v6946
        %v6965 = vunpack.c.l.b16 %v6947
        %v6966 = vunpack.c.l.b16 %v6948
        %v6967 = vunpack.c.l.b16 %v6949
        %v6968 = vunpack.c.l.b16 %v6950
        %v6969 = vunpack.c.l.b16 %v6951
        %v6970 = vpack.c.b16 %v6964, %v6963
        %v6971 = vpack.c.b16 %v6966, %v6965
        %v6972 = vpack.c.b16 %v6968, %v6967
        %v6973 = vpack.c.b16 %v6969, %v6969
        %v6975 = vsel %vm5332, %v6970, 0
        %v6978 = vsel %vm5332, %v6971, 0
        %v6981 = vsel %vm5332, %v6972, 0
        %v6984 = vsel %vm5332, %v6973, 0
        %v6987 = vsel %vm5348, %v6954, 0
        %v6990 = vsel %vm5348, %v6955, 0
        %6992 = vmatprep.subr.bf16.mxu0 %v6990
        %6993 = vmatpush1.bf16.msra.mxu0 %v6987
        %6994 = vmatprep.subr.bf16.mxu0 0
        %6995 = vmatpush1.bf16.msra.mxu0 0
        %6996 = vmatprep.subr.bf16.mxu0 0
        %6997 = vmatpush1.bf16.msra.mxu0 0
        %6998 = vmatprep.subr.bf16.mxu0 0
        %6999 = vmatpush1.bf16.msra.mxu0 0
        %7000 = vmatprep.subr.bf16.mxu0 0
        %7001 = vmatpush1.bf16.msra.mxu0 0
        %7002 = vmatprep.subr.bf16.mxu0 0
        %7003 = vmatpush1.bf16.msra.mxu0 0
        %7004 = vmatprep.subr.bf16.mxu0 0
        %7005 = vmatpush1.bf16.msra.mxu0 0
        %7006 = vmatprep.subr.bf16.mxu0 0
        %7007 = vmatpush1.bf16.msra.mxu0 0
        %7008 = vmatprep.subr.bf16.mxu0 0
        %7009 = vmatpush1.bf16.msra.mxu0 0
        %7010 = vmatprep.subr.bf16.mxu0 0
        %7011 = vmatpush1.bf16.msra.mxu0 0
        %7012 = vmatprep.subr.bf16.mxu0 0
        %7013 = vmatpush1.bf16.msra.mxu0 0
        %7014 = vmatprep.subr.bf16.mxu0 0
        %7015 = vmatpush1.bf16.msra.mxu0 0
        %7016 = vmatprep.subr.bf16.mxu0 0
        %7017 = vmatpush1.bf16.msra.mxu0 0
        %7018 = vmatprep.subr.bf16.mxu0 0
        %7019 = vmatpush1.bf16.msra.mxu0 0
        %7020 = vmatprep.subr.bf16.mxu0 0
        %7021 = vmatpush1.bf16.msra.mxu0 0
        %7022 = vmatprep.subr.bf16.mxu0 0
        %7023 = vmatpush1.bf16.msra.mxu0 0
        %7024 = vmatprep.mubr.bf16.mxu0 0
        %7025 = vmatmul.mubr.bf16.gmra.mrb[0].mxu0 %v6975
        %v7026 = vpop.f32.mrb[0].mxu0
        %v7027 = vadd.f32 0.0, %v7026
        %v7028 = vpop.f32.mrb[0].mxu0
        %v7029 = vadd.f32 0.0, %v7028
        %v7030 = vpop.f32.mrb[0].mxu0
        %v7031 = vadd.f32 0.0, %v7030
        %v7032 = vpop.f32.mrb[0].mxu0
        %v7033 = vadd.f32 0.0, %v7032
        %7034 = vmatprep.mubr.bf16.mxu0 0
        %7035 = vmatmul.mubr.bf16.gmra.mrb[0].mxu0 %v6978
        %v7036 = vpop.f32.mrb[0].mxu0
        %v7037 = vadd.f32 0.0, %v7036
        %v7038 = vpop.f32.mrb[0].mxu0
        %v7039 = vadd.f32 0.0, %v7038
        %v7040 = vpop.f32.mrb[0].mxu0
        %v7041 = vadd.f32 0.0, %v7040
        %v7042 = vpop.f32.mrb[0].mxu0
        %v7043 = vadd.f32 0.0, %v7042
        %7044 = vmatprep.mubr.bf16.mxu0 0
        %7045 = vmatmul.mubr.bf16.gmra.mrb[0].mxu0 %v6981
        %v7046 = vpop.f32.mrb[0].mxu0
        %v7047 = vadd.f32 0.0, %v7046
        %v7048 = vpop.f32.mrb[0].mxu0
        %v7049 = vadd.f32 0.0, %v7048
        %v7050 = vpop.f32.mrb[0].mxu0
        %v7051 = vadd.f32 0.0, %v7050
        %v7052 = vpop.f32.mrb[0].mxu0
        %v7053 = vadd.f32 0.0, %v7052
        %7054 = vmatprep.mubr.bf16.mxu0 0
        %7055 = vmatmul.mubr.bf16.gmra.mrb[0].mxu0 %v6984
        %v7056 = vpop.f32.mrb[0].mxu0
        %v7057 = vadd.f32 0.0, %v7056
        %v7058 = vpop.f32.mrb[0].mxu0
        %v7059 = vadd.f32 0.0, %v7058
        %v7060 = vpop.f32.mrb[0].mxu0
        %v7061 = vpop.f32.mrb[0].mxu0
        %7062 = vdwg.mxu0
        %7063 = vrot.lane.b32.xlu0 %v7027, 51
        %v7064 = vpop.permute.xlu0 %7063
        %7065 = vrot.lane.b32.xlu0 %v7029, 51
        %v7066 = vpop.permute.xlu0 %7065
        %vm7067 = vcmp.lt.s32.totalorder %v5441, 51
        %v7068 = vsel %vm7067, %v7064, %v7066
        %v7069 = vsel %vm7067, %v7066, %v7064
        %v7070 = vmul.f32 %v7069, %v579
        %v7071 = vmul.f32 %v7068, %v580
        %v7072 = vadd.f32 %v7070, 0.0
        %v7073 = vadd.f32 %v7071, 0.0
        %v7076 = vrot.slane %v7027, 1
        %v7077 = vrot.slane %v7029, 1
        %7080 = vrot.lane.b32.xlu0 %v7076, 50
        %v7081 = vpop.permute.xlu0 %7080
        %7082 = vrot.lane.b32.xlu0 %v7077, 50
        %v7083 = vpop.permute.xlu0 %7082
        %vm7084 = vcmp.lt.s32.totalorder %v5441, 50
        %v7085 = vsel %vm7084, %v7081, %v7083
        %v7086 = vsel %vm7084, %v7083, %v7081
        %v7089 = vrot.slane %v579, 1
        %v7090 = vrot.slane %v580, 1
        %v7093 = vmul.f32 %v7086, %v7089
        %v7094 = vmul.f32 %v7085, %v7090
        %v7095 = vadd.f32 %v7072, %v7093
        %v7096 = vadd.f32 %v7073, %v7094
        %v7097 = vrot.slane %v7027, 2
        %v7098 = vrot.slane %v7029, 2
        %7101 = vrot.lane.b32.xlu0 %v7097, 49
        %v7102 = vpop.permute.xlu0 %7101
        %7103 = vrot.lane.b32.xlu0 %v7098, 49
        %v7104 = vpop.permute.xlu0 %7103
        %vm7105 = vcmp.lt.s32.totalorder %v5441, 49
        %v7106 = vsel %vm7105, %v7102, %v7104
        %v7107 = vsel %vm7105, %v7104, %v7102
        %v7108 = vrot.slane %v579, 2
        %v7109 = vrot.slane %v580, 2
        %v7112 = vmul.f32 %v7107, %v7108
        %v7113 = vmul.f32 %v7106, %v7109
        %v7114 = vadd.f32 %v7095, %v7112
        %v7115 = vadd.f32 %v7096, %v7113
        %v7116 = vrot.slane %v7027, 3
        %v7117 = vrot.slane %v7029, 3
        %7120 = vrot.lane.b32.xlu0 %v7116, 48
        %v7121 = vpop.permute.xlu0 %7120
        %7122 = vrot.lane.b32.xlu0 %v7117, 48
        %v7123 = vpop.permute.xlu0 %7122
        %vm7124 = vcmp.lt.s32.totalorder %v5441, 48
        %v7125 = vsel %vm7124, %v7121, %v7123
        %v7126 = vsel %vm7124, %v7123, %v7121
        %v7127 = vrot.slane %v579, 3
        %v7128 = vrot.slane %v580, 3
        %v7131 = vmul.f32 %v7126, %v7127
        %v7132 = vmul.f32 %v7125, %v7128
        %v7133 = vadd.f32 %v7114, %v7131
        %v7134 = vadd.f32 %v7115, %v7132
        %v7135 = vrot.slane %v7027, 4
        %v7136 = vrot.slane %v7029, 4
        %7139 = vrot.lane.b32.xlu0 %v7135, 47
        %v7140 = vpop.permute.xlu0 %7139
        %7141 = vrot.lane.b32.xlu0 %v7136, 47
        %v7142 = vpop.permute.xlu0 %7141
        %vm7143 = vcmp.lt.s32.totalorder %v5441, 47
        %v7144 = vsel %vm7143, %v7140, %v7142
        %v7145 = vsel %vm7143, %v7142, %v7140
        %v7146 = vrot.slane %v579, 4
        %v7147 = vrot.slane %v580, 4
        %v7150 = vmul.f32 %v7145, %v7146
        %v7151 = vmul.f32 %v7144, %v7147
        %v7152 = vadd.f32 %v7133, %v7150
        %v7153 = vadd.f32 %v7134, %v7151
        %v7154 = vrot.slane %v7027, 5
        %v7155 = vrot.slane %v7029, 5
        %7158 = vrot.lane.b32.xlu0 %v7154, 46
        %v7159 = vpop.permute.xlu0 %7158
        %7160 = vrot.lane.b32.xlu0 %v7155, 46
        %v7161 = vpop.permute.xlu0 %7160
        %vm7162 = vcmp.lt.s32.totalorder %v5441, 46
        %v7163 = vsel %vm7162, %v7159, %v7161
        %v7164 = vsel %vm7162, %v7161, %v7159
        %v7165 = vrot.slane %v579, 5
        %v7166 = vrot.slane %v580, 5
        %v7169 = vmul.f32 %v7164, %v7165
        %v7170 = vmul.f32 %v7163, %v7166
        %v7171 = vadd.f32 %v7152, %v7169
        %v7172 = vadd.f32 %v7153, %v7170
        %v7173 = vrot.slane %v7027, 6
        %v7174 = vrot.slane %v7029, 6
        %7177 = vrot.lane.b32.xlu0 %v7173, 45
        %v7178 = vpop.permute.xlu0 %7177
        %7179 = vrot.lane.b32.xlu0 %v7174, 45
        %v7180 = vpop.permute.xlu0 %7179
        %vm7181 = vcmp.lt.s32.totalorder %v5441, 45
        %v7182 = vsel %vm7181, %v7178, %v7180
        %v7183 = vsel %vm7181, %v7180, %v7178
        %v7184 = vrot.slane %v579, 6
        %v7185 = vrot.slane %v580, 6
        %v7188 = vmul.f32 %v7183, %v7184
        %v7189 = vmul.f32 %v7182, %v7185
        %v7190 = vadd.f32 %v7171, %v7188
        %v7191 = vadd.f32 %v7172, %v7189
        %v7192 = vrot.slane %v7027, 7
        %v7193 = vrot.slane %v7029, 7
        %7196 = vrot.lane.b32.xlu0 %v7192, 35
        %v7197 = vpop.permute.xlu0 %7196
        %7198 = vrot.lane.b32.xlu0 %v7193, 35
        %v7199 = vpop.permute.xlu0 %7198
        %vm7200 = vcmp.lt.s32.totalorder %v5441, 35
        %v7201 = vsel %vm7200, %v7197, %v7199
        %v7202 = vsel %vm7200, %v7199, %v7197
        %v7203 = vrot.slane %v579, 7
        %v7204 = vrot.slane %v580, 7
        %v7207 = vmul.f32 %v7202, %v7203
        %v7208 = vmul.f32 %v7201, %v7204
        %v7209 = vadd.f32 %v7190, %v7207
        %v7210 = vadd.f32 %v7191, %v7208
        %7211 = vrot.lane.b32.xlu0 %v7031, 34
        %v7212 = vpop.permute.xlu0 %7211
        %7213 = vrot.lane.b32.xlu0 %v7033, 34
        %v7214 = vpop.permute.xlu0 %7213
        %vm7215 = vcmp.lt.s32.totalorder %v5441, 34
        %v7216 = vsel %vm7215, %v7212, %v7214
        %v7217 = vsel %vm7215, %v7214, %v7212
        %v7218 = vmul.f32 %v7217, %v581
        %v7219 = vmul.f32 %v7216, %v582
        %v7220 = vadd.f32 %v7209, %v7218
        %v7221 = vadd.f32 %v7210, %v7219
        %v7224 = vrot.slane %v7031, 1
        %v7225 = vrot.slane %v7033, 1
        %7228 = vrot.lane.b32.xlu0 %v7224, 33
        %v7229 = vpop.permute.xlu0 %7228
        %7230 = vrot.lane.b32.xlu0 %v7225, 33
        %v7231 = vpop.permute.xlu0 %7230
        %vm7232 = vcmp.lt.s32.totalorder %v5441, 33
        %v7233 = vsel %vm7232, %v7229, %v7231
        %v7234 = vsel %vm7232, %v7231, %v7229
        %v7237 = vrot.slane %v581, 1
        %v7238 = vrot.slane %v582, 1
        %v7241 = vmul.f32 %v7234, %v7237
        %v7242 = vmul.f32 %v7233, %v7238
        %v7243 = vadd.f32 %v7220, %v7241
        %v7244 = vadd.f32 %v7221, %v7242
        %v7245 = vrot.slane %v7031, 2
        %v7246 = vrot.slane %v7033, 2
        %7249 = vrot.lane.b32.xlu0 %v7245, 32
        %v7250 = vpop.permute.xlu0 %7249
        %7251 = vrot.lane.b32.xlu0 %v7246, 32
        %v7252 = vpop.permute.xlu0 %7251
        %vm7253 = vcmp.lt.s32.totalorder %v5441, 32
        %v7254 = vsel %vm7253, %v7250, %v7252
        %v7255 = vsel %vm7253, %v7252, %v7250
        %v7256 = vrot.slane %v581, 2
        %v7257 = vrot.slane %v582, 2
        %v7260 = vmul.f32 %v7255, %v7256
        %v7261 = vmul.f32 %v7254, %v7257
        %v7262 = vadd.f32 %v7243, %v7260
        %v7263 = vadd.f32 %v7244, %v7261
        %v7264 = vrot.slane %v7031, 3
        %v7265 = vrot.slane %v7033, 3
        %7268 = vrot.lane.b32.xlu0 %v7264, 31
        %v7269 = vpop.permute.xlu0 %7268
        %7270 = vrot.lane.b32.xlu0 %v7265, 31
        %v7271 = vpop.permute.xlu0 %7270
        %vm7272 = vcmp.lt.s32.totalorder %v5441, 31
        %v7273 = vsel %vm7272, %v7269, %v7271
        %v7274 = vsel %vm7272, %v7271, %v7269
        %v7275 = vrot.slane %v581, 3
        %v7276 = vrot.slane %v582, 3
        %v7279 = vmul.f32 %v7274, %v7275
        %v7280 = vmul.f32 %v7273, %v7276
        %v7281 = vadd.f32 %v7262, %v7279
        %v7282 = vadd.f32 %v7263, %v7280
        %v7283 = vrot.slane %v7031, 4
        %v7284 = vrot.slane %v7033, 4
        %7287 = vrot.lane.b32.xlu0 %v7283, 30
        %v7288 = vpop.permute.xlu0 %7287
        %7289 = vrot.lane.b32.xlu0 %v7284, 30
        %v7290 = vpop.permute.xlu0 %7289
        %vm7291 = vcmp.lt.s32.totalorder %v5441, 30
        %v7292 = vsel %vm7291, %v7288, %v7290
        %v7293 = vsel %vm7291, %v7290, %v7288
        %v7294 = vrot.slane %v581, 4
        %v7295 = vrot.slane %v582, 4
        %v7298 = vmul.f32 %v7293, %v7294
        %v7299 = vmul.f32 %v7292, %v7295
        %v7300 = vadd.f32 %v7281, %v7298
        %v7301 = vadd.f32 %v7282, %v7299
        %v7302 = vrot.slane %v7031, 5
        %v7303 = vrot.slane %v7033, 5
        %7306 = vrot.lane.b32.xlu0 %v7302, 29
        %v7307 = vpop.permute.xlu0 %7306
        %7308 = vrot.lane.b32.xlu0 %v7303, 29
        %v7309 = vpop.permute.xlu0 %7308
        %vm7310 = vcmp.lt.s32.totalorder %v5441, 29
        %v7311 = vsel %vm7310, %v7307, %v7309
        %v7312 = vsel %vm7310, %v7309, %v7307
        %v7313 = vrot.slane %v581, 5
        %v7314 = vrot.slane %v582, 5
        %v7317 = vmul.f32 %v7312, %v7313
        %v7318 = vmul.f32 %v7311, %v7314
        %v7319 = vadd.f32 %v7300, %v7317
        %v7320 = vadd.f32 %v7301, %v7318
        %v7321 = vrot.slane %v7031, 6
        %v7322 = vrot.slane %v7033, 6
        %7325 = vrot.lane.b32.xlu0 %v7321, 19
        %v7326 = vpop.permute.xlu0 %7325
        %7327 = vrot.lane.b32.xlu0 %v7322, 19
        %v7328 = vpop.permute.xlu0 %7327
        %vm7329 = vcmp.lt.s32.totalorder %v5441, 19
        %v7330 = vsel %vm7329, %v7326, %v7328
        %v7331 = vsel %vm7329, %v7328, %v7326
        %v7332 = vrot.slane %v581, 6
        %v7333 = vrot.slane %v582, 6
        %v7336 = vmul.f32 %v7331, %v7332
        %v7337 = vmul.f32 %v7330, %v7333
        %v7338 = vadd.f32 %v7319, %v7336
        %v7339 = vadd.f32 %v7320, %v7337
        %v7340 = vrot.slane %v7031, 7
        %v7341 = vrot.slane %v7033, 7
        %7344 = vrot.lane.b32.xlu0 %v7340, 18
        %v7345 = vpop.permute.xlu0 %7344
        %7346 = vrot.lane.b32.xlu0 %v7341, 18
        %v7347 = vpop.permute.xlu0 %7346
        %vm7348 = vcmp.lt.s32.totalorder %v5441, 18
        %v7349 = vsel %vm7348, %v7345, %v7347
        %v7350 = vsel %vm7348, %v7347, %v7345
        %v7351 = vrot.slane %v581, 7
        %v7352 = vrot.slane %v582, 7
        %v7355 = vmul.f32 %v7350, %v7351
        %v7356 = vmul.f32 %v7349, %v7352
        %v7357 = vadd.f32 %v7338, %v7355
        %v7358 = vadd.f32 %v7339, %v7356
        %7359 = vrot.lane.b32.xlu0 %v7037, 17
        %v7360 = vpop.permute.xlu0 %7359
        %7361 = vrot.lane.b32.xlu0 %v7039, 17
        %v7362 = vpop.permute.xlu0 %7361
        %v7363 = vsel %vm5442, %v7360, %v7362
        %v7364 = vsel %vm5442, %v7362, %v7360
        %v7365 = vmul.f32 %v7364, %v583
        %v7366 = vmul.f32 %v7363, %v584
        %v7367 = vadd.f32 %v7357, %v7365
        %v7368 = vadd.f32 %v7358, %v7366
        %v7371 = vrot.slane %v7037, 1
        %v7372 = vrot.slane %v7039, 1
        %7375 = vrot.lane.b32.xlu0 %v7371, 16
        %v7376 = vpop.permute.xlu0 %7375
        %7377 = vrot.lane.b32.xlu0 %v7372, 16
        %v7378 = vpop.permute.xlu0 %7377
        %v7379 = vsel %vm5461, %v7376, %v7378
        %v7380 = vsel %vm5461, %v7378, %v7376
        %v7383 = vrot.slane %v583, 1
        %v7384 = vrot.slane %v584, 1
        %v7387 = vmul.f32 %v7380, %v7383
        %v7388 = vmul.f32 %v7379, %v7384
        %v7389 = vadd.f32 %v7367, %v7387
        %v7390 = vadd.f32 %v7368, %v7388
        %v7391 = vrot.slane %v7037, 2
        %v7392 = vrot.slane %v7039, 2
        %7395 = vrot.lane.b32.xlu0 %v7391, 15
        %v7396 = vpop.permute.xlu0 %7395
        %7397 = vrot.lane.b32.xlu0 %v7392, 15
        %v7398 = vpop.permute.xlu0 %7397
        %v7399 = vsel %vm5480, %v7396, %v7398
        %v7400 = vsel %vm5480, %v7398, %v7396
        %v7401 = vrot.slane %v583, 2
        %v7402 = vrot.slane %v584, 2
        %v7405 = vmul.f32 %v7400, %v7401
        %v7406 = vmul.f32 %v7399, %v7402
        %v7407 = vadd.f32 %v7389, %v7405
        %v7408 = vadd.f32 %v7390, %v7406
        %v7409 = vrot.slane %v7037, 3
        %v7410 = vrot.slane %v7039, 3
        %7413 = vrot.lane.b32.xlu0 %v7409, 14
        %v7414 = vpop.permute.xlu0 %7413
        %7415 = vrot.lane.b32.xlu0 %v7410, 14
        %v7416 = vpop.permute.xlu0 %7415
        %vm7417 = vcmp.lt.s32.totalorder %v5441, 14
        %v7418 = vsel %vm7417, %v7414, %v7416
        %v7419 = vsel %vm7417, %v7416, %v7414
        %v7420 = vrot.slane %v583, 3
        %v7421 = vrot.slane %v584, 3
        %v7424 = vmul.f32 %v7419, %v7420
        %v7425 = vmul.f32 %v7418, %v7421
        %v7426 = vadd.f32 %v7407, %v7424
        %v7427 = vadd.f32 %v7408, %v7425
        %v7428 = vrot.slane %v7037, 4
        %v7429 = vrot.slane %v7039, 4
        %7432 = vrot.lane.b32.xlu0 %v7428, 13
        %v7433 = vpop.permute.xlu0 %7432
        %7434 = vrot.lane.b32.xlu0 %v7429, 13
        %v7435 = vpop.permute.xlu0 %7434
        %vm7436 = vcmp.lt.s32.totalorder %v5441, 13
        %v7437 = vsel %vm7436, %v7433, %v7435
        %v7438 = vsel %vm7436, %v7435, %v7433
        %v7439 = vrot.slane %v583, 4
        %v7440 = vrot.slane %v584, 4
        %v7443 = vmul.f32 %v7438, %v7439
        %v7444 = vmul.f32 %v7437, %v7440
        %v7445 = vadd.f32 %v7426, %v7443
        %v7446 = vadd.f32 %v7427, %v7444
        %v7447 = vrot.slane %v7037, 5
        %v7448 = vrot.slane %v7039, 5
        %7451 = vrot.lane.b32.xlu0 %v7447, 3
        %v7452 = vpop.permute.xlu0 %7451
        %7453 = vrot.lane.b32.xlu0 %v7448, 3
        %v7454 = vpop.permute.xlu0 %7453
        %vm7455 = vcmp.lt.s32.totalorder %v5441, 3
        %v7456 = vsel %vm7455, %v7452, %v7454
        %v7457 = vsel %vm7455, %v7454, %v7452
        %v7458 = vrot.slane %v583, 5
        %v7459 = vrot.slane %v584, 5
        %v7462 = vmul.f32 %v7457, %v7458
        %v7463 = vmul.f32 %v7456, %v7459
        %v7464 = vadd.f32 %v7445, %v7462
        %v7465 = vadd.f32 %v7446, %v7463
        %v7466 = vrot.slane %v7037, 6
        %v7467 = vrot.slane %v7039, 6
        %7470 = vrot.lane.b32.xlu0 %v7466, 2
        %v7471 = vpop.permute.xlu0 %7470
        %7472 = vrot.lane.b32.xlu0 %v7467, 2
        %v7473 = vpop.permute.xlu0 %7472
        %vm7474 = vcmp.lt.s32.totalorder %v5441, 2
        %v7475 = vsel %vm7474, %v7471, %v7473
        %v7476 = vsel %vm7474, %v7473, %v7471
        %v7477 = vrot.slane %v583, 6
        %v7478 = vrot.slane %v584, 6
        %v7481 = vmul.f32 %v7476, %v7477
        %v7482 = vmul.f32 %v7475, %v7478
        %v7483 = vadd.f32 %v7464, %v7481
        %v7484 = vadd.f32 %v7465, %v7482
        %v7485 = vrot.slane %v7037, 7
        %v7486 = vrot.slane %v7039, 7
        %7489 = vrot.lane.b32.xlu0 %v7485, 1
        %v7490 = vpop.permute.xlu0 %7489
        %7491 = vrot.lane.b32.xlu0 %v7486, 1
        %v7492 = vpop.permute.xlu0 %7491
        %v7493 = vsel %vm5499, %v7490, %v7492
        %v7494 = vsel %vm5499, %v7492, %v7490
        %v7495 = vrot.slane %v583, 7
        %v7496 = vrot.slane %v584, 7
        %v7499 = vmul.f32 %v7494, %v7495
        %v7500 = vmul.f32 %v7493, %v7496
        %v7501 = vadd.f32 %v7483, %v7499
        %v7502 = vadd.f32 %v7484, %v7500
        %v7503 = vadd.f32 %v7501, %v7041
        %v7504 = vadd.f32 %v7502, %v7043
        %v7507 = vrot.slane %v7041, 1
        %v7508 = vrot.slane %v7043, 1
        %7511 = vrot.lane.b32.xlu0 %v7507, 127
        %v7512 = vpop.permute.xlu0 %7511
        %7513 = vrot.lane.b32.xlu0 %v7508, 127
        %v7514 = vpop.permute.xlu0 %7513
        %v7515 = vsel %vm5520, %v7512, %v7514
        %v7516 = vsel %vm5520, %v7514, %v7512
        %v7519 = vrot.slane %v585, 1
        %v7520 = vrot.slane %v586, 1
        %v7523 = vmul.f32 %v7515, %v7519
        %v7524 = vmul.f32 %v7516, %v7520
        %v7525 = vadd.f32 %v7503, %v7523
        %v7526 = vadd.f32 %v7504, %v7524
        %v7527 = vrot.slane %v7041, 2
        %v7528 = vrot.slane %v7043, 2
        %7531 = vrot.lane.b32.xlu0 %v7527, 126
        %v7532 = vpop.permute.xlu0 %7531
        %7533 = vrot.lane.b32.xlu0 %v7528, 126
        %v7534 = vpop.permute.xlu0 %7533
        %vm7535 = vcmp.lt.s32.totalorder %v5441, 126
        %v7536 = vsel %vm7535, %v7532, %v7534
        %v7537 = vsel %vm7535, %v7534, %v7532
        %v7538 = vrot.slane %v585, 2
        %v7539 = vrot.slane %v586, 2
        %v7542 = vmul.f32 %v7536, %v7538
        %v7543 = vmul.f32 %v7537, %v7539
        %v7544 = vadd.f32 %v7525, %v7542
        %v7545 = vadd.f32 %v7526, %v7543
        %v7546 = vrot.slane %v7041, 3
        %v7547 = vrot.slane %v7043, 3
        %7550 = vrot.lane.b32.xlu0 %v7546, 125
        %v7551 = vpop.permute.xlu0 %7550
        %7552 = vrot.lane.b32.xlu0 %v7547, 125
        %v7553 = vpop.permute.xlu0 %7552
        %vm7554 = vcmp.lt.s32.totalorder %v5441, 125
        %v7555 = vsel %vm7554, %v7551, %v7553
        %v7556 = vsel %vm7554, %v7553, %v7551
        %v7557 = vrot.slane %v585, 3
        %v7558 = vrot.slane %v586, 3
        %v7561 = vmul.f32 %v7555, %v7557
        %v7562 = vmul.f32 %v7556, %v7558
        %v7563 = vadd.f32 %v7544, %v7561
        %v7564 = vadd.f32 %v7545, %v7562
        %v7565 = vrot.slane %v7041, 4
        %v7566 = vrot.slane %v7043, 4
        %7569 = vrot.lane.b32.xlu0 %v7565, 115
        %v7570 = vpop.permute.xlu0 %7569
        %7571 = vrot.lane.b32.xlu0 %v7566, 115
        %v7572 = vpop.permute.xlu0 %7571
        %vm7573 = vcmp.lt.s32.totalorder %v5441, 115
        %v7574 = vsel %vm7573, %v7570, %v7572
        %v7575 = vsel %vm7573, %v7572, %v7570
        %v7576 = vrot.slane %v585, 4
        %v7577 = vrot.slane %v586, 4
        %v7580 = vmul.f32 %v7574, %v7576
        %v7581 = vmul.f32 %v7575, %v7577
        %v7582 = vadd.f32 %v7563, %v7580
        %v7583 = vadd.f32 %v7564, %v7581
        %v7584 = vrot.slane %v7041, 5
        %v7585 = vrot.slane %v7043, 5
        %7588 = vrot.lane.b32.xlu0 %v7584, 114
        %v7589 = vpop.permute.xlu0 %7588
        %7590 = vrot.lane.b32.xlu0 %v7585, 114
        %v7591 = vpop.permute.xlu0 %7590
        %vm7592 = vcmp.lt.s32.totalorder %v5441, 114
        %v7593 = vsel %vm7592, %v7589, %v7591
        %v7594 = vsel %vm7592, %v7591, %v7589
        %v7595 = vrot.slane %v585, 5
        %v7596 = vrot.slane %v586, 5
        %v7599 = vmul.f32 %v7593, %v7595
        %v7600 = vmul.f32 %v7594, %v7596
        %v7601 = vadd.f32 %v7582, %v7599
        %v7602 = vadd.f32 %v7583, %v7600
        %v7603 = vrot.slane %v7041, 6
        %v7604 = vrot.slane %v7043, 6
        %7607 = vrot.lane.b32.xlu0 %v7603, 113
        %v7608 = vpop.permute.xlu0 %7607
        %7609 = vrot.lane.b32.xlu0 %v7604, 113
        %v7610 = vpop.permute.xlu0 %7609
        %v7611 = vsel %vm5539, %v7608, %v7610
        %v7612 = vsel %vm5539, %v7610, %v7608
        %v7613 = vrot.slane %v585, 6
        %v7614 = vrot.slane %v586, 6
        %v7617 = vmul.f32 %v7611, %v7613
        %v7618 = vmul.f32 %v7612, %v7614
        %v7619 = vadd.f32 %v7601, %v7617
        %v7620 = vadd.f32 %v7602, %v7618
        %v7621 = vrot.slane %v7041, 7
        %v7622 = vrot.slane %v7043, 7
        %7625 = vrot.lane.b32.xlu0 %v7621, 112
        %v7626 = vpop.permute.xlu0 %7625
        %7627 = vrot.lane.b32.xlu0 %v7622, 112
        %v7628 = vpop.permute.xlu0 %7627
        %v7629 = vsel %vm5558, %v7626, %v7628
        %v7630 = vsel %vm5558, %v7628, %v7626
        %v7631 = vrot.slane %v585, 7
        %v7632 = vrot.slane %v586, 7
        %v7635 = vmul.f32 %v7629, %v7631
        %v7636 = vmul.f32 %v7630, %v7632
        %v7637 = vadd.f32 %v7619, %v7635
        %v7638 = vadd.f32 %v7620, %v7636
        %7639 = vrot.lane.b32.xlu0 %v7047, 111
        %v7640 = vpop.permute.xlu0 %7639
        %7641 = vrot.lane.b32.xlu0 %v7049, 111
        %v7642 = vpop.permute.xlu0 %7641
        %v7643 = vsel %vm5577, %v7640, %v7642
        %v7644 = vsel %vm5577, %v7642, %v7640
        %v7645 = vmul.f32 %v7643, %v587
        %v7646 = vmul.f32 %v7644, %v588
        %v7647 = vadd.f32 %v7637, %v7645
        %v7648 = vadd.f32 %v7638, %v7646
        %v7651 = vrot.slane %v7047, 1
        %v7652 = vrot.slane %v7049, 1
        %7655 = vrot.lane.b32.xlu0 %v7651, 110
        %v7656 = vpop.permute.xlu0 %7655
        %7657 = vrot.lane.b32.xlu0 %v7652, 110
        %v7658 = vpop.permute.xlu0 %7657
        %vm7659 = vcmp.lt.s32.totalorder %v5441, 110
        %v7660 = vsel %vm7659, %v7656, %v7658
        %v7661 = vsel %vm7659, %v7658, %v7656
        %v7664 = vrot.slane %v587, 1
        %v7665 = vrot.slane %v588, 1
        %v7668 = vmul.f32 %v7660, %v7664
        %v7669 = vmul.f32 %v7661, %v7665
        %v7670 = vadd.f32 %v7647, %v7668
        %v7671 = vadd.f32 %v7648, %v7669
        %v7672 = vrot.slane %v7047, 2
        %v7673 = vrot.slane %v7049, 2
        %7676 = vrot.lane.b32.xlu0 %v7672, 109
        %v7677 = vpop.permute.xlu0 %7676
        %7678 = vrot.lane.b32.xlu0 %v7673, 109
        %v7679 = vpop.permute.xlu0 %7678
        %vm7680 = vcmp.lt.s32.totalorder %v5441, 109
        %v7681 = vsel %vm7680, %v7677, %v7679
        %v7682 = vsel %vm7680, %v7679, %v7677
        %v7683 = vrot.slane %v587, 2
        %v7684 = vrot.slane %v588, 2
        %v7687 = vmul.f32 %v7681, %v7683
        %v7688 = vmul.f32 %v7682, %v7684
        %v7689 = vadd.f32 %v7670, %v7687
        %v7690 = vadd.f32 %v7671, %v7688
        %v7691 = vrot.slane %v7047, 3
        %v7692 = vrot.slane %v7049, 3
        %7695 = vrot.lane.b32.xlu0 %v7691, 99
        %v7696 = vpop.permute.xlu0 %7695
        %7697 = vrot.lane.b32.xlu0 %v7692, 99
        %v7698 = vpop.permute.xlu0 %7697
        %vm7699 = vcmp.lt.s32.totalorder %v5441, 99
        %v7700 = vsel %vm7699, %v7696, %v7698
        %v7701 = vsel %vm7699, %v7698, %v7696
        %v7702 = vrot.slane %v587, 3
        %v7703 = vrot.slane %v588, 3
        %v7706 = vmul.f32 %v7700, %v7702
        %v7707 = vmul.f32 %v7701, %v7703
        %v7708 = vadd.f32 %v7689, %v7706
        %v7709 = vadd.f32 %v7690, %v7707
        %v7710 = vrot.slane %v7047, 4
        %v7711 = vrot.slane %v7049, 4
        %7714 = vrot.lane.b32.xlu0 %v7710, 98
        %v7715 = vpop.permute.xlu0 %7714
        %7716 = vrot.lane.b32.xlu0 %v7711, 98
        %v7717 = vpop.permute.xlu0 %7716
        %vm7718 = vcmp.lt.s32.totalorder %v5441, 98
        %v7719 = vsel %vm7718, %v7715, %v7717
        %v7720 = vsel %vm7718, %v7717, %v7715
        %v7721 = vrot.slane %v587, 4
        %v7722 = vrot.slane %v588, 4
        %v7725 = vmul.f32 %v7719, %v7721
        %v7726 = vmul.f32 %v7720, %v7722
        %v7727 = vadd.f32 %v7708, %v7725
        %v7728 = vadd.f32 %v7709, %v7726
        %v7729 = vrot.slane %v7047, 5
        %v7730 = vrot.slane %v7049, 5
        %7733 = vrot.lane.b32.xlu0 %v7729, 97
        %v7734 = vpop.permute.xlu0 %7733
        %7735 = vrot.lane.b32.xlu0 %v7730, 97
        %v7736 = vpop.permute.xlu0 %7735
        %vm7737 = vcmp.lt.s32.totalorder %v5441, 97
        %v7738 = vsel %vm7737, %v7734, %v7736
        %v7739 = vsel %vm7737, %v7736, %v7734
        %v7740 = vrot.slane %v587, 5
        %v7741 = vrot.slane %v588, 5
        %v7744 = vmul.f32 %v7738, %v7740
        %v7745 = vmul.f32 %v7739, %v7741
        %v7746 = vadd.f32 %v7727, %v7744
        %v7747 = vadd.f32 %v7728, %v7745
        %v7748 = vrot.slane %v7047, 6
        %v7749 = vrot.slane %v7049, 6
        %7752 = vrot.lane.b32.xlu0 %v7748, 96
        %v7753 = vpop.permute.xlu0 %7752
        %7754 = vrot.lane.b32.xlu0 %v7749, 96
        %v7755 = vpop.permute.xlu0 %7754
        %vm7756 = vcmp.lt.s32.totalorder %v5441, 96
        %v7757 = vsel %vm7756, %v7753, %v7755
        %v7758 = vsel %vm7756, %v7755, %v7753
        %v7759 = vrot.slane %v587, 6
        %v7760 = vrot.slane %v588, 6
        %v7763 = vmul.f32 %v7757, %v7759
        %v7764 = vmul.f32 %v7758, %v7760
        %v7765 = vadd.f32 %v7746, %v7763
        %v7766 = vadd.f32 %v7747, %v7764
        %v7767 = vrot.slane %v7047, 7
        %v7768 = vrot.slane %v7049, 7
        %7771 = vrot.lane.b32.xlu0 %v7767, 95
        %v7772 = vpop.permute.xlu0 %7771
        %7773 = vrot.lane.b32.xlu0 %v7768, 95
        %v7774 = vpop.permute.xlu0 %7773
        %vm7775 = vcmp.lt.s32.totalorder %v5441, 95
        %v7776 = vsel %vm7775, %v7772, %v7774
        %v7777 = vsel %vm7775, %v7774, %v7772
        %v7778 = vrot.slane %v587, 7
        %v7779 = vrot.slane %v588, 7
        %v7782 = vmul.f32 %v7776, %v7778
        %v7783 = vmul.f32 %v7777, %v7779
        %v7784 = vadd.f32 %v7765, %v7782
        %v7785 = vadd.f32 %v7766, %v7783
        %7786 = vrot.lane.b32.xlu0 %v7051, 94
        %v7787 = vpop.permute.xlu0 %7786
        %7788 = vrot.lane.b32.xlu0 %v7053, 94
        %v7789 = vpop.permute.xlu0 %7788
        %vm7790 = vcmp.lt.s32.totalorder %v5441, 94
        %v7791 = vsel %vm7790, %v7787, %v7789
        %v7792 = vsel %vm7790, %v7789, %v7787
        %v7793 = vmul.f32 %v7791, %v589
        %v7794 = vmul.f32 %v7792, %v590
        %v7795 = vadd.f32 %v7784, %v7793
        %v7796 = vadd.f32 %v7785, %v7794
        %v7799 = vrot.slane %v7051, 1
        %v7800 = vrot.slane %v7053, 1
        %7803 = vrot.lane.b32.xlu0 %v7799, 93
        %v7804 = vpop.permute.xlu0 %7803
        %7805 = vrot.lane.b32.xlu0 %v7800, 93
        %v7806 = vpop.permute.xlu0 %7805
        %vm7807 = vcmp.lt.s32.totalorder %v5441, 93
        %v7808 = vsel %vm7807, %v7804, %v7806
        %v7809 = vsel %vm7807, %v7806, %v7804
        %v7812 = vrot.slane %v589, 1
        %v7813 = vrot.slane %v590, 1
        %v7816 = vmul.f32 %v7808, %v7812
        %v7817 = vmul.f32 %v7809, %v7813
        %v7818 = vadd.f32 %v7795, %v7816
        %v7819 = vadd.f32 %v7796, %v7817
        %v7820 = vrot.slane %v7051, 2
        %v7821 = vrot.slane %v7053, 2
        %7824 = vrot.lane.b32.xlu0 %v7820, 83
        %v7825 = vpop.permute.xlu0 %7824
        %7826 = vrot.lane.b32.xlu0 %v7821, 83
        %v7827 = vpop.permute.xlu0 %7826
        %vm7828 = vcmp.lt.s32.totalorder %v5441, 83
        %v7829 = vsel %vm7828, %v7825, %v7827
        %v7830 = vsel %vm7828, %v7827, %v7825
        %v7831 = vrot.slane %v589, 2
        %v7832 = vrot.slane %v590, 2
        %v7835 = vmul.f32 %v7829, %v7831
        %v7836 = vmul.f32 %v7830, %v7832
        %v7837 = vadd.f32 %v7818, %v7835
        %v7838 = vadd.f32 %v7819, %v7836
        %v7839 = vrot.slane %v7051, 3
        %v7840 = vrot.slane %v7053, 3
        %7843 = vrot.lane.b32.xlu0 %v7839, 82
        %v7844 = vpop.permute.xlu0 %7843
        %7845 = vrot.lane.b32.xlu0 %v7840, 82
        %v7846 = vpop.permute.xlu0 %7845
        %vm7847 = vcmp.lt.s32.totalorder %v5441, 82
        %v7848 = vsel %vm7847, %v7844, %v7846
        %v7849 = vsel %vm7847, %v7846, %v7844
        %v7850 = vrot.slane %v589, 3
        %v7851 = vrot.slane %v590, 3
        %v7854 = vmul.f32 %v7848, %v7850
        %v7855 = vmul.f32 %v7849, %v7851
        %v7856 = vadd.f32 %v7837, %v7854
        %v7857 = vadd.f32 %v7838, %v7855
        %v7858 = vrot.slane %v7051, 4
        %v7859 = vrot.slane %v7053, 4
        %7862 = vrot.lane.b32.xlu0 %v7858, 81
        %v7863 = vpop.permute.xlu0 %7862
        %7864 = vrot.lane.b32.xlu0 %v7859, 81
        %v7865 = vpop.permute.xlu0 %7864
        %vm7866 = vcmp.lt.s32.totalorder %v5441, 81
        %v7867 = vsel %vm7866, %v7863, %v7865
        %v7868 = vsel %vm7866, %v7865, %v7863
        %v7869 = vrot.slane %v589, 4
        %v7870 = vrot.slane %v590, 4
        %v7873 = vmul.f32 %v7867, %v7869
        %v7874 = vmul.f32 %v7868, %v7870
        %v7875 = vadd.f32 %v7856, %v7873
        %v7876 = vadd.f32 %v7857, %v7874
        %v7877 = vrot.slane %v7051, 5
        %v7878 = vrot.slane %v7053, 5
        %7881 = vrot.lane.b32.xlu0 %v7877, 80
        %v7882 = vpop.permute.xlu0 %7881
        %7883 = vrot.lane.b32.xlu0 %v7878, 80
        %v7884 = vpop.permute.xlu0 %7883
        %vm7885 = vcmp.lt.s32.totalorder %v5441, 80
        %v7886 = vsel %vm7885, %v7882, %v7884
        %v7887 = vsel %vm7885, %v7884, %v7882
        %v7888 = vrot.slane %v589, 5
        %v7889 = vrot.slane %v590, 5
        %v7892 = vmul.f32 %v7886, %v7888
        %v7893 = vmul.f32 %v7887, %v7889
        %v7894 = vadd.f32 %v7875, %v7892
        %v7895 = vadd.f32 %v7876, %v7893
        %v7896 = vrot.slane %v7051, 6
        %v7897 = vrot.slane %v7053, 6
        %7900 = vrot.lane.b32.xlu0 %v7896, 79
        %v7901 = vpop.permute.xlu0 %7900
        %7902 = vrot.lane.b32.xlu0 %v7897, 79
        %v7903 = vpop.permute.xlu0 %7902
        %vm7904 = vcmp.lt.s32.totalorder %v5441, 79
        %v7905 = vsel %vm7904, %v7901, %v7903
        %v7906 = vsel %vm7904, %v7903, %v7901
        %v7907 = vrot.slane %v589, 6
        %v7908 = vrot.slane %v590, 6
        %v7911 = vmul.f32 %v7905, %v7907
        %v7912 = vmul.f32 %v7906, %v7908
        %v7913 = vadd.f32 %v7894, %v7911
        %v7914 = vadd.f32 %v7895, %v7912
        %v7915 = vrot.slane %v7051, 7
        %v7916 = vrot.slane %v7053, 7
        %7919 = vrot.lane.b32.xlu0 %v7915, 78
        %v7920 = vpop.permute.xlu0 %7919
        %7921 = vrot.lane.b32.xlu0 %v7916, 78
        %v7922 = vpop.permute.xlu0 %7921
        %vm7923 = vcmp.lt.s32.totalorder %v5441, 78
        %v7924 = vsel %vm7923, %v7920, %v7922
        %v7925 = vsel %vm7923, %v7922, %v7920
        %v7926 = vrot.slane %v589, 7
        %v7927 = vrot.slane %v590, 7
        %v7930 = vmul.f32 %v7924, %v7926
        %v7931 = vmul.f32 %v7925, %v7927
        %v7932 = vadd.f32 %v7913, %v7930
        %v7933 = vadd.f32 %v7914, %v7931
        %7934 = vrot.lane.b32.xlu0 %v7057, 77
        %v7935 = vpop.permute.xlu0 %7934
        %7936 = vrot.lane.b32.xlu0 %v7059, 77
        %v7937 = vpop.permute.xlu0 %7936
        %vm7938 = vcmp.lt.s32.totalorder %v5441, 77
        %v7939 = vsel %vm7938, %v7935, %v7937
        %v7940 = vsel %vm7938, %v7937, %v7935
        %v7941 = vmul.f32 %v7939, %v591
        %v7942 = vmul.f32 %v7940, %v592
        %v7943 = vadd.f32 %v7932, %v7941
        %v7944 = vadd.f32 %v7933, %v7942
        %7945 = vset.pattern.permute.xlu0 14
        %7946 = vperm.xlu0 %7945, %v574
        %v7947 = vpop.permute.xlu0 %7946
        %v7949 = vadd.f32 %v7943, %v7947
        %v7950 = vadd.f32 %v7944, %v7947
        %v7953 = vcombine.low %v7949, %v7950
        %v7955 = vunpack.c.l.s4 1966171168
        %v7956 = vunpack.c.0.s8 %v7955
        %v7957 = vlaneseq
        %v7958 = vshrl.u32 %v7957, 7
        %v7959 = vsub.s32 %v7956, %v7958
        %v7960 = vrot.slane %v7953, %v7959
        %v7962 = vunpack.c.l.s4 1966171168
        %v7963 = vunpack.c.0.s8 %v7962
        %v7964 = vlaneseq
        %v7965 = vshrl.u32 %v7964, 7
        %v7966 = vsub.s32 %v7963, %v7965
        %v7967 = vrot.slane %v7960, %v7966
        %v7969 = vlaneseq
        %vm7970 = vcmp.ge.s32.totalorder %v7969, 0
        %vm7971 = vcmp.lt.s32.totalorder %v7969, 256
        %vm7972 = vmand %vm7970, %vm7971
        %7973 = vst.msk [vmem:[%s569] sm:$0x3] %vm7972, %v7967
        %p7974 = scmp.lt.s32.totalorder %s28, 1
        %s7975 = scalar_select %p7974, %s28, 1
        %s7976 = smul.addr %s7975, 2
        %s7977 = smul.addr %s7976, 8
        %s7978 = scalar_lea.vmem %s13, %s7977
        %p7979 = scmp.lt.s32.totalorder %s28, 1
        %s7980 = scalar_select %p7979, %s28, 1
        %s7981 = smul.addr %s7980, 2
        %s7982 = scalar_lea.vmem %s14, %s7981
        // Predicated region
        $region85: #{focus1_forward.1} parent=71 // pred_check
          %p7983 = pneg %p339
        $region86: #{focus1_forward.1} parent=71 // pred_check_branch
          %7985 = sbr.rel (%p7983) target = $region88
        $region87: #{focus1_forward.1} parent=71 // pred_region
          _
        $region88: #{focus1_forward.1} parent=71 // pred_fallthru
          _
        // Predicated region
        $region89: #{focus1_forward.1} parent=71 // pred_check
          %p7986 = pneg %p365
        $region90: #{focus1_forward.1} parent=71 // pred_check_branch
          %7988 = sbr.rel (%p7986) target = $region92
        $region91: #{focus1_forward.1} parent=71 // pred_region
          _
        $region92: #{focus1_forward.1} parent=71 // pred_fallthru
          _
      $region72: #{focus1_forward.1} parent=5 // pred_fallthru
        _
      %p7989 = scmp.le.s32.totalorder 2, %s23
      // Predicated region
      $region93: #{focus1_forward.1} parent=5 // pred_check
        %p7990 = pneg %p7989
      $region94: #{focus1_forward.1} parent=5 // pred_check_branch
        %7992 = sbr.rel (%p7990) target = $region96
      $region95: #{focus1_forward.1} parent=5 // pred_region
        %s7993 = ssub.s32 %s23, 2
        // Predicated region
        $region97: #{focus1_forward.1} parent=95 // pred_check
          %p7994 = pneg %p345
        $region98: #{focus1_forward.1} parent=95 // pred_check_branch
          %7996 = sbr.rel (%p7994) target = $region100
        $region99: #{focus1_forward.1} parent=95 // pred_region
          %p7997 = scmp.lt.s32.totalorder %s29, 1
          %s7998 = scalar_select %p7997, %s29, 1
          %s7999 = smul.addr %s7998, 2
          %s8000 = smul.addr %s7999, 8
          %s8001 = scalar_lea.vmem %s13, %s8000
        $region100: #{focus1_forward.1} parent=95 // pred_fallthru
          _
        // Predicated region
        $region101: #{focus1_forward.1} parent=95 // pred_check
          %p8002 = pneg %p371
        $region102: #{focus1_forward.1} parent=95 // pred_check_branch
          %8004 = sbr.rel (%p8002) target = $region104
        $region103: #{focus1_forward.1} parent=95 // pred_region
          %p8005 = scmp.lt.s32.totalorder %s29, 1
          %s8006 = scalar_select %p8005, %s29, 1
          %s8007 = smul.addr %s8006, 2
          %s8008 = scalar_lea.vmem %s14, %s8007
        $region104: #{focus1_forward.1} parent=95 // pred_fallthru
          _
      $region96: #{focus1_forward.1} parent=5 // pred_fallthru
        _
    $region6: #{focus1_forward.1} parent=1 // loop_footer
      %s27 = sadd.s32 1, %s23
    $region7: #{focus1_forward.1} parent=1 // loop_footer_branch
      %22 = sbr.rel target = $region3
    $region8: #{focus1_forward.1} parent=1 // loop_exit
      _
    %8009 = vsyncpa [#allocation5], 1
    %s8010 = scalar_lea.sflag [#allocation5], 1
    %8011 = vsyncpa %s8010, 1
    %8012 = vsyncpa [#allocation7], 1

</llo_original>
